<compile_context>
chip_gen: v6e
topology: v6e:2x2x1
jax: 0.10.0
libtpu: 0.0.40
codegen_flags: <defaults>
</compile_context>

<pallas_src>
import functools

import jax
import jax.numpy as jnp
from jax.experimental import pallas as pl
from jax.experimental.pallas import tpu as pltpu


def _gff_pair_kernel(xp_ref, b_ref, phase_ref, out_ref):
    # xp_ref:    (tm, 2*dim)          two consecutive points per row
    # b_ref:     (dim, 2*nb)          [2*pi*B | 2*pi*B]   (resident constant)
    # phase_ref: (1, 2*nb)            [0..0 | pi/2..pi/2] (resident constant)
    # out_ref:   (tm, 2*(dim + 2*nb)) [feat(pt A) | feat(pt B)] per row
    dim = b_ref.shape[0]
    nb2 = b_ref.shape[1]                      # 2 * num_bands
    xf = xp_ref[...].astype(jnp.float32)
    b = b_ref[...]
    ph = phase_ref[...]

    def project(xpt):
        # xpt: (tm, dim) -> angles (tm, 2*nb).  K = dim is tiny, so explicit
        # f32 FMAs on the VPU are exact and essentially free next to the sin.
        ang = ph + xpt[:, 0:1] * b[0:1, :]
        for k in range(1, dim):
            ang = ang + xpt[:, k:k + 1] * b[k:k + 1, :]
        return ang

    xa = xf[:, :dim]
    xb = xf[:, dim:]
    # (tm, 4*nb) == (tm, 128) for nb=32: the single sin pass below runs at
    # full 128-lane density (the lane concat is cheap XLU work).
    angles = jnp.concatenate([project(xa), project(xb)], axis=-1)
    sincos = jnp.sin(angles)                  # sin AND cos (phase-shifted lanes)

    out = jnp.concatenate(
        [xa, sincos[:, :nb2], xb, sincos[:, nb2:]], axis=-1)
    out_ref[...] = out.astype(out_ref.dtype)


def _round_up(v, m):
    return -(-v // m) * m


@functools.partial(
    jax.jit, static_argnames=("tile_rows", "out_dtype", "min_rows_for_kernel"))
def gaussian_fourier_features(x, B, *, tile_rows=8192, out_dtype=None,
                              min_rows_for_kernel=512):
    """x: [..., dim], B: [dim, num_bands] -> [..., dim + 2*num_bands]."""
    dim = x.shape[-1]
    nb = B.shape[-1]
    out_dim = dim + 2 * nb
    odt = x.dtype if out_dtype is None else jax.dtypes.canonicalize_dtype(out_dtype)

    lead_shape = x.shape[:-1]
    x2d = x.reshape(-1, dim)
    n = x2d.shape[0]

    # Plain-JAX path for tiny inputs (launch/prologue dominates) and odd row
    # counts (cannot pair-pack without an extra HBM pass over the output).
    # TODO(synk): a masked-tail kernel variant would cover large odd n too.
    if n < min_rows_for_kernel or n % 2 != 0:
        proj = 2.0 * jnp.pi * jnp.matmul(
            x.astype(jnp.float32), B.astype(jnp.float32),
            precision=jax.lax.Precision.HIGHEST)
        out = jnp.concatenate(
            [x.astype(jnp.float32), jnp.sin(proj), jnp.cos(proj)], axis=-1)
        return out.astype(odt)

    # Constants (built once, a few hundred bytes): duplicated 2*pi-scaled
    # weight and the pi/2 phase that turns the second nb lanes into cos.
    b2pi = (2.0 * jnp.pi) * B.astype(jnp.float32)             # (dim, nb)
    bdup = jnp.concatenate([b2pi, b2pi], axis=-1)             # (dim, 2*nb)
    phase = jnp.concatenate(
        [jnp.zeros((1, nb), jnp.float32),
         jnp.full((1, nb), 0.5 * jnp.pi, dtype=jnp.float32)], axis=-1)

    # Pair-packed view: metadata-only reshape of the contiguous row-major x.
    npairs = n // 2
    xp = x2d.reshape(npairs, 2 * dim)

    # Tile sizing: one big tile when it fits; otherwise an even count of
    # near-equal tiles (balanced across v7x's two TensorCores).  Lane-padded
    # VMEM at the 4096-pair cap is ~20 MiB including double buffering.
    cap_pairs = max(8, _round_up(max(int(tile_rows), 16) // 2, 8))
    steps = -(-npairs // cap_pairs)
    if steps > 1 and steps % 2 != 0:
        steps += 1
    tm2 = max(8, _round_up(-(-npairs // steps), 8))
    grid = (pl.cdiv(npairs, tm2),)

    cost = pl.CostEstimate(
        flops=2 * n * dim * (2 * nb) + n * (2 * nb),
        transcendentals=n * (2 * nb),
        bytes_accessed=(n * dim * x.dtype.itemsize
                        + (bdup.size + phase.size) * 4
                        + n * out_dim * jnp.dtype(odt).itemsize),
    )

    out_pairs = pl.pallas_call(
        _gff_pair_kernel,
        out_shape=jax.ShapeDtypeStruct((npairs, 2 * out_dim), odt),
        grid_spec=pltpu.PrefetchScalarGridSpec(
            num_scalar_prefetch=0,
            grid=grid,
            in_specs=[
                pl.BlockSpec((tm2, 2 * dim), lambda i: (i, 0)),
                pl.BlockSpec((dim, 2 * nb), lambda i: (0, 0)),   # constant block
                pl.BlockSpec((1, 2 * nb), lambda i: (0, 0)),     # constant block
            ],
            out_specs=pl.BlockSpec((tm2, 2 * out_dim), lambda i: (i, 0)),
        ),
        compiler_params=pltpu.CompilerParams(
            dimension_semantics=("parallel",),
            vmem_limit_bytes=48 * 1024 * 1024),
        cost_estimate=cost,
    )(xp, bdup, phase)

    # Metadata-only: (npairs, 2*out_dim) rows are exactly two point-features.
    return out_pairs.reshape(*lead_shape, out_dim)


if __name__ == "__main__":
    # Config: pos_input_dim=3, pos_encoding_band=32, pos_encoding_freq=10.0
    dim = 3
    num_bands = 32
    freq = 10.0

    key = jax.random.PRNGKey(0)
    k_b, k_x = jax.random.split(key)

    # Deterministic stand-in for torch.randn([dim, num_bands]) * freq.
    B = jax.random.normal(k_b, (dim, num_bands), dtype=jnp.float32) * freq

    # Example input: batch=2 point clouds of 512 points each, 3-D coords
    # (1024 rows -> exercises the Pallas kernel path).
    x = jax.random.normal(k_x, (2, 512, dim), dtype=jnp.float32)

    out = gaussian_fourier_features(x, B)
    out = jax.block_until_ready(out)

    # Plain-JAX reference (the PyTorch forward), with an f32-accurate matmul
    # so the comparison is not polluted by XLA's default TPU dot precision.
    proj = 2.0 * jnp.pi * jnp.matmul(x, B, precision=jax.lax.Precision.HIGHEST)
    ref = jnp.concatenate([x, jnp.sin(proj), jnp.cos(proj)], axis=-1)

    assert out.shape == (2, 512, dim + 2 * num_bands), out.shape
    max_err = float(jnp.max(jnp.abs(out - ref)))
    # |proj| reaches a few hundred; folding 2*pi into B and computing cos(t)
    # as sin(t + pi/2) differ from the reference by O(eps * |proj|) ~ 1e-4.
    assert max_err < 2e-3, max_err

    print("KERNEL_OK")
</pallas_src>

<mosaic_0001>
module attributes {stable_mosaic.version = 11 : i64} {
  func.func @_gff_pair_kernel(%arg0: i32, %arg1: memref<512x6xf32, #tpu.memory_space<vmem>>, %arg2: memref<3x64xf32, #tpu.memory_space<vmem>>, %arg3: memref<1x64xf32, #tpu.memory_space<vmem>>, %arg4: memref<512x134xf32, #tpu.memory_space<vmem>>) attributes {dimension_semantics = [#tpu.dimension_semantics<parallel>], iteration_bounds = array<i64: 1>, scalar_prefetch = 0 : i64, scratch_operands = 0 : i64, tpu.core_type = #tpu.core_type<tc>, window_params = [{transform_indices = @transform_0, window_bounds = array<i64: 512, 6>}, {pipeline_mode = #tpu.pipeline_mode<synchronous>, transform_indices = @transform_1, window_bounds = array<i64: 3, 64>}, {pipeline_mode = #tpu.pipeline_mode<synchronous>, transform_indices = @transform_2, window_bounds = array<i64: 1, 64>}, {transform_indices = @transform_3, window_bounds = array<i64: 512, 134>}]} {
    %c0 = arith.constant 0 : index
    %c0_0 = arith.constant 0 : index
    %0 = vector.load %arg1[%c0, %c0_0] : memref<512x6xf32, #tpu.memory_space<vmem>>, vector<512x6xf32>
    %c0_1 = arith.constant 0 : index
    %c0_2 = arith.constant 0 : index
    %1 = vector.load %arg2[%c0_1, %c0_2] : memref<3x64xf32, #tpu.memory_space<vmem>>, vector<3x64xf32>
    %c0_3 = arith.constant 0 : index
    %c0_4 = arith.constant 0 : index
    %2 = vector.load %arg3[%c0_3, %c0_4] : memref<1x64xf32, #tpu.memory_space<vmem>>, vector<1x64xf32>
    %3 = vector.extract_strided_slice %0 {offsets = [0, 0], sizes = [512, 3], strides = [1, 1]} : vector<512x6xf32> to vector<512x3xf32>
    %4 = vector.extract_strided_slice %0 {offsets = [0, 3], sizes = [512, 3], strides = [1, 1]} : vector<512x6xf32> to vector<512x3xf32>
    %5 = vector.extract_strided_slice %3 {offsets = [0, 0], sizes = [512, 1], strides = [1, 1]} : vector<512x3xf32> to vector<512x1xf32>
    %6 = vector.extract_strided_slice %1 {offsets = [0, 0], sizes = [1, 64], strides = [1, 1]} : vector<3x64xf32> to vector<1x64xf32>
    %7 = vector.broadcast %5 : vector<512x1xf32> to vector<512x64xf32>
    %8 = vector.broadcast %6 : vector<1x64xf32> to vector<512x64xf32>
    %9 = arith.mulf %7, %8 : vector<512x64xf32>
    %10 = vector.broadcast %2 : vector<1x64xf32> to vector<512x64xf32>
    %11 = arith.addf %10, %9 : vector<512x64xf32>
    %12 = vector.extract_strided_slice %3 {offsets = [0, 1], sizes = [512, 1], strides = [1, 1]} : vector<512x3xf32> to vector<512x1xf32>
    %13 = vector.extract_strided_slice %1 {offsets = [1, 0], sizes = [1, 64], strides = [1, 1]} : vector<3x64xf32> to vector<1x64xf32>
    %14 = vector.broadcast %12 : vector<512x1xf32> to vector<512x64xf32>
    %15 = vector.broadcast %13 : vector<1x64xf32> to vector<512x64xf32>
    %16 = arith.mulf %14, %15 : vector<512x64xf32>
    %17 = arith.addf %11, %16 : vector<512x64xf32>
    %18 = vector.extract_strided_slice %3 {offsets = [0, 2], sizes = [512, 1], strides = [1, 1]} : vector<512x3xf32> to vector<512x1xf32>
    %19 = vector.extract_strided_slice %1 {offsets = [2, 0], sizes = [1, 64], strides = [1, 1]} : vector<3x64xf32> to vector<1x64xf32>
    %20 = vector.broadcast %18 : vector<512x1xf32> to vector<512x64xf32>
    %21 = vector.broadcast %19 : vector<1x64xf32> to vector<512x64xf32>
    %22 = arith.mulf %20, %21 : vector<512x64xf32>
    %23 = arith.addf %17, %22 : vector<512x64xf32>
    %24 = vector.extract_strided_slice %4 {offsets = [0, 0], sizes = [512, 1], strides = [1, 1]} : vector<512x3xf32> to vector<512x1xf32>
    %25 = vector.extract_strided_slice %1 {offsets = [0, 0], sizes = [1, 64], strides = [1, 1]} : vector<3x64xf32> to vector<1x64xf32>
    %26 = vector.broadcast %24 : vector<512x1xf32> to vector<512x64xf32>
    %27 = vector.broadcast %25 : vector<1x64xf32> to vector<512x64xf32>
    %28 = arith.mulf %26, %27 : vector<512x64xf32>
    %29 = vector.broadcast %2 : vector<1x64xf32> to vector<512x64xf32>
    %30 = arith.addf %29, %28 : vector<512x64xf32>
    %31 = vector.extract_strided_slice %4 {offsets = [0, 1], sizes = [512, 1], strides = [1, 1]} : vector<512x3xf32> to vector<512x1xf32>
    %32 = vector.extract_strided_slice %1 {offsets = [1, 0], sizes = [1, 64], strides = [1, 1]} : vector<3x64xf32> to vector<1x64xf32>
    %33 = vector.broadcast %31 : vector<512x1xf32> to vector<512x64xf32>
    %34 = vector.broadcast %32 : vector<1x64xf32> to vector<512x64xf32>
    %35 = arith.mulf %33, %34 : vector<512x64xf32>
    %36 = arith.addf %30, %35 : vector<512x64xf32>
    %37 = vector.extract_strided_slice %4 {offsets = [0, 2], sizes = [512, 1], strides = [1, 1]} : vector<512x3xf32> to vector<512x1xf32>
    %38 = vector.extract_strided_slice %1 {offsets = [2, 0], sizes = [1, 64], strides = [1, 1]} : vector<3x64xf32> to vector<1x64xf32>
    %39 = vector.broadcast %37 : vector<512x1xf32> to vector<512x64xf32>
    %40 = vector.broadcast %38 : vector<1x64xf32> to vector<512x64xf32>
    %41 = arith.mulf %39, %40 : vector<512x64xf32>
    %42 = arith.addf %36, %41 : vector<512x64xf32>
    %43 = tpu.concatenate %23, %42 in 1 : vector<512x64xf32>, vector<512x64xf32> -> vector<512x128xf32>
    %44 = math.sin %43 : vector<512x128xf32>
    %45 = vector.extract_strided_slice %44 {offsets = [0, 0], sizes = [512, 64], strides = [1, 1]} : vector<512x128xf32> to vector<512x64xf32>
    %46 = vector.extract_strided_slice %44 {offsets = [0, 64], sizes = [512, 64], strides = [1, 1]} : vector<512x128xf32> to vector<512x64xf32>
    %47 = tpu.concatenate %3, %45, %4, %46 in 1 : vector<512x3xf32>, vector<512x64xf32>, vector<512x3xf32>, vector<512x64xf32> -> vector<512x134xf32>
    %c0_5 = arith.constant 0 : index
    %c0_6 = arith.constant 0 : index
    %48 = vector.load %arg4[%c0_5, %c0_6] : memref<512x134xf32, #tpu.memory_space<vmem>>, vector<512x134xf32>
    tpu.vector_store %arg4[%c0_5, %c0_6], %47 {strides = array<i32>} : memref<512x134xf32, #tpu.memory_space<vmem>>, vector<512x134xf32>,
    return
  }
  func.func @transform_0(%arg0: i32) -> (i32, i32) {
    %c0_i32 = arith.constant 0 : i32
    %c0_i32_0 = arith.constant 0 : i32
    return %arg0, %c0_i32 : i32, i32
  }
  func.func @transform_1(%arg0: i32) -> (i32, i32) {
    %c0_i32 = arith.constant 0 : i32
    %c0_i32_0 = arith.constant 0 : i32
    %c0_i32_1 = arith.constant 0 : i32
    return %c0_i32, %c0_i32_0 : i32, i32
  }
  func.func @transform_2(%arg0: i32) -> (i32, i32) {
    %c0_i32 = arith.constant 0 : i32
    %c0_i32_0 = arith.constant 0 : i32
    %c0_i32_1 = arith.constant 0 : i32
    return %c0_i32, %c0_i32_0 : i32, i32
  }
  func.func @transform_3(%arg0: i32) -> (i32, i32) {
    %c0_i32 = arith.constant 0 : i32
    %c0_i32_0 = arith.constant 0 : i32
    return %arg0, %c0_i32 : i32, i32
  }
}

</mosaic_0001>

<llo_original>
// kernel: gaussian_fourier_features.1
$region0: #{gaussian_fourier_features.1}
  #allocation0 [shape = 'u32[]', space=smem, size = 0x4, offset = 0x4, fixed_abs, tag = 'smem constant byte address 0x4 - core index']
  #allocation1 [shape = 'u32[144,128]{1,0:T(1,128)}', space=vmem, size = 0x12000, scoped, tag = 'internal scratch']
  %s0 = inlined_call_operand.vmem [shape: f32[512,6], index: 0, kind: input, shape index: {}]
  %s1 = inlined_call_operand.vmem [shape: f32[3,64], index: 1, kind: input, shape index: {}]
  %s2 = inlined_call_operand.vmem [shape: f32[1,64], index: 2, kind: input, shape index: {}]
  %s3 = inlined_call_operand.vmem [shape: f32[512,134], index: 3, kind: output, shape index: {}]
  %s4 = sld [smem:[#allocation0]]
  $region22: #{gaussian_fourier_features.1} parent=0
    _
  %s6 = ssub.s32 1, %s4
  %s7 = scalar_select 0, %s6, %s4
  // Predicated region
  $region2: #{gaussian_fourier_features.1} parent=0 // pred_check
    _
  $region3: #{gaussian_fourier_features.1} parent=0 // pred_check_branch
    %9 = sbr.rel (0) target = $region5
  $region4: #{gaussian_fourier_features.1} parent=0 // pred_region
    _
  $region5: #{gaussian_fourier_features.1} parent=0 // pred_fallthru
    _
  // Predicated region
  $region6: #{gaussian_fourier_features.1} parent=0 // pred_check
    _
  $region7: #{gaussian_fourier_features.1} parent=0 // pred_check_branch
    %11 = sbr.rel (0) target = $region9
  $region8: #{gaussian_fourier_features.1} parent=0 // pred_region
    _
  $region9: #{gaussian_fourier_features.1} parent=0 // pred_fallthru
    _
  // Predicated region
  $region10: #{gaussian_fourier_features.1} parent=0 // pred_check
    _
  $region11: #{gaussian_fourier_features.1} parent=0 // pred_check_branch
    %13 = sbr.rel (0) target = $region13
  $region12: #{gaussian_fourier_features.1} parent=0 // pred_region
    _
  $region13: #{gaussian_fourier_features.1} parent=0 // pred_fallthru
    _
  %v14 = vld [vmem:[%s0] sm:$0xff]
  %v15 = vld [vmem:[%s0 + $0x8] sm:$0xff]
  %v16 = vld [vmem:[%s0 + $0x10] sm:$0xff]
  %v17 = vld [vmem:[%s0 + $0x18] sm:$0xff]
  %v18 = vld [vmem:[%s0 + $0x20] sm:$0xff]
  %v19 = vld [vmem:[%s0 + $0x28] sm:$0xff]
  %v20 = vld [vmem:[%s0 + $0x30] sm:$0xff]
  %v21 = vld [vmem:[%s0 + $0x38] sm:$0xff]
  %v22 = vld [vmem:[%s0 + $0x40] sm:$0xff]
  %v23 = vld [vmem:[%s0 + $0x48] sm:$0xff]
  %v24 = vld [vmem:[%s0 + $0x50] sm:$0xff]
  %v25 = vld [vmem:[%s0 + $0x58] sm:$0xff]
  %v26 = vld [vmem:[%s0 + $0x60] sm:$0xff]
  %v27 = vld [vmem:[%s0 + $0x68] sm:$0xff]
  %v28 = vld [vmem:[%s0 + $0x70] sm:$0xff]
  %v29 = vld [vmem:[%s0 + $0x78] sm:$0xff]
  %v30 = vld [vmem:[%s0 + $0x80] sm:$0xff]
  %v31 = vld [vmem:[%s0 + $0x88] sm:$0xff]
  %v32 = vld [vmem:[%s0 + $0x90] sm:$0xff]
  %v33 = vld [vmem:[%s0 + $0x98] sm:$0xff]
  %v34 = vld [vmem:[%s0 + $0xa0] sm:$0xff]
  %v35 = vld [vmem:[%s0 + $0xa8] sm:$0xff]
  %v36 = vld [vmem:[%s0 + $0xb0] sm:$0xff]
  %v37 = vld [vmem:[%s0 + $0xb8] sm:$0xff]
  %v38 = vld [vmem:[%s0 + $0xc0] sm:$0xff]
  %v39 = vld [vmem:[%s0 + $0xc8] sm:$0xff]
  %v40 = vld [vmem:[%s0 + $0xd0] sm:$0xff]
  %v41 = vld [vmem:[%s0 + $0xd8] sm:$0xff]
  %v42 = vld [vmem:[%s0 + $0xe0] sm:$0xff]
  %v43 = vld [vmem:[%s0 + $0xe8] sm:$0xff]
  %v44 = vld [vmem:[%s0 + $0xf0] sm:$0xff]
  %v45 = vld [vmem:[%s0 + $0xf8] sm:$0xff]
  %v46 = vld [vmem:[%s0 + $0x100] sm:$0xff]
  %v47 = vld [vmem:[%s0 + $0x108] sm:$0xff]
  %v48 = vld [vmem:[%s0 + $0x110] sm:$0xff]
  %v49 = vld [vmem:[%s0 + $0x118] sm:$0xff]
  %v50 = vld [vmem:[%s0 + $0x120] sm:$0xff]
  %v51 = vld [vmem:[%s0 + $0x128] sm:$0xff]
  %v52 = vld [vmem:[%s0 + $0x130] sm:$0xff]
  %v53 = vld [vmem:[%s0 + $0x138] sm:$0xff]
  %v54 = vld [vmem:[%s0 + $0x140] sm:$0xff]
  %v55 = vld [vmem:[%s0 + $0x148] sm:$0xff]
  %v56 = vld [vmem:[%s0 + $0x150] sm:$0xff]
  %v57 = vld [vmem:[%s0 + $0x158] sm:$0xff]
  %v58 = vld [vmem:[%s0 + $0x160] sm:$0xff]
  %v59 = vld [vmem:[%s0 + $0x168] sm:$0xff]
  %v60 = vld [vmem:[%s0 + $0x170] sm:$0xff]
  %v61 = vld [vmem:[%s0 + $0x178] sm:$0xff]
  %v62 = vld [vmem:[%s0 + $0x180] sm:$0xff]
  %v63 = vld [vmem:[%s0 + $0x188] sm:$0xff]
  %v64 = vld [vmem:[%s0 + $0x190] sm:$0xff]
  %v65 = vld [vmem:[%s0 + $0x198] sm:$0xff]
  %v66 = vld [vmem:[%s0 + $0x1a0] sm:$0xff]
  %v67 = vld [vmem:[%s0 + $0x1a8] sm:$0xff]
  %v68 = vld [vmem:[%s0 + $0x1b0] sm:$0xff]
  %v69 = vld [vmem:[%s0 + $0x1b8] sm:$0xff]
  %v70 = vld [vmem:[%s0 + $0x1c0] sm:$0xff]
  %v71 = vld [vmem:[%s0 + $0x1c8] sm:$0xff]
  %v72 = vld [vmem:[%s0 + $0x1d0] sm:$0xff]
  %v73 = vld [vmem:[%s0 + $0x1d8] sm:$0xff]
  %v74 = vld [vmem:[%s0 + $0x1e0] sm:$0xff]
  %v75 = vld [vmem:[%s0 + $0x1e8] sm:$0xff]
  %v76 = vld [vmem:[%s0 + $0x1f0] sm:$0xff]
  %v77 = vld [vmem:[%s0 + $0x1f8] sm:$0xff]
  %v78 = vld [vmem:[%s1] sm:$0x7]
  %v79 = vld [vmem:[%s2] sm:$0x1]
  %81 = vset.pattern.permute.xlu0 0
  %82 = vperm.xlu0 %81, %v14
  %v83 = vpop.permute.xlu0 %82
  %86 = vset.pattern.permute.xlu0 0
  %87 = vperm.xlu0 %86, %v15
  %v88 = vpop.permute.xlu0 %87
  %91 = vset.pattern.permute.xlu0 0
  %92 = vperm.xlu0 %91, %v16
  %v93 = vpop.permute.xlu0 %92
  %96 = vset.pattern.permute.xlu0 0
  %97 = vperm.xlu0 %96, %v17
  %v98 = vpop.permute.xlu0 %97
  %101 = vset.pattern.permute.xlu0 0
  %102 = vperm.xlu0 %101, %v18
  %v103 = vpop.permute.xlu0 %102
  %106 = vset.pattern.permute.xlu0 0
  %107 = vperm.xlu0 %106, %v19
  %v108 = vpop.permute.xlu0 %107
  %111 = vset.pattern.permute.xlu0 0
  %112 = vperm.xlu0 %111, %v20
  %v113 = vpop.permute.xlu0 %112
  %116 = vset.pattern.permute.xlu0 0
  %117 = vperm.xlu0 %116, %v21
  %v118 = vpop.permute.xlu0 %117
  %121 = vset.pattern.permute.xlu0 0
  %122 = vperm.xlu0 %121, %v22
  %v123 = vpop.permute.xlu0 %122
  %126 = vset.pattern.permute.xlu0 0
  %127 = vperm.xlu0 %126, %v23
  %v128 = vpop.permute.xlu0 %127
  %131 = vset.pattern.permute.xlu0 0
  %132 = vperm.xlu0 %131, %v24
  %v133 = vpop.permute.xlu0 %132
  %136 = vset.pattern.permute.xlu0 0
  %137 = vperm.xlu0 %136, %v25
  %v138 = vpop.permute.xlu0 %137
  %141 = vset.pattern.permute.xlu0 0
  %142 = vperm.xlu0 %141, %v26
  %v143 = vpop.permute.xlu0 %142
  %146 = vset.pattern.permute.xlu0 0
  %147 = vperm.xlu0 %146, %v27
  %v148 = vpop.permute.xlu0 %147
  %151 = vset.pattern.permute.xlu0 0
  %152 = vperm.xlu0 %151, %v28
  %v153 = vpop.permute.xlu0 %152
  %156 = vset.pattern.permute.xlu0 0
  %157 = vperm.xlu0 %156, %v29
  %v158 = vpop.permute.xlu0 %157
  %161 = vset.pattern.permute.xlu0 0
  %162 = vperm.xlu0 %161, %v30
  %v163 = vpop.permute.xlu0 %162
  %166 = vset.pattern.permute.xlu0 0
  %167 = vperm.xlu0 %166, %v31
  %v168 = vpop.permute.xlu0 %167
  %171 = vset.pattern.permute.xlu0 0
  %172 = vperm.xlu0 %171, %v32
  %v173 = vpop.permute.xlu0 %172
  %176 = vset.pattern.permute.xlu0 0
  %177 = vperm.xlu0 %176, %v33
  %v178 = vpop.permute.xlu0 %177
  %181 = vset.pattern.permute.xlu0 0
  %182 = vperm.xlu0 %181, %v34
  %v183 = vpop.permute.xlu0 %182
  %186 = vset.pattern.permute.xlu0 0
  %187 = vperm.xlu0 %186, %v35
  %v188 = vpop.permute.xlu0 %187
  %191 = vset.pattern.permute.xlu0 0
  %192 = vperm.xlu0 %191, %v36
  %v193 = vpop.permute.xlu0 %192
  %196 = vset.pattern.permute.xlu0 0
  %197 = vperm.xlu0 %196, %v37
  %v198 = vpop.permute.xlu0 %197
  %201 = vset.pattern.permute.xlu0 0
  %202 = vperm.xlu0 %201, %v38
  %v203 = vpop.permute.xlu0 %202
  %206 = vset.pattern.permute.xlu0 0
  %207 = vperm.xlu0 %206, %v39
  %v208 = vpop.permute.xlu0 %207
  %211 = vset.pattern.permute.xlu0 0
  %212 = vperm.xlu0 %211, %v40
  %v213 = vpop.permute.xlu0 %212
  %216 = vset.pattern.permute.xlu0 0
  %217 = vperm.xlu0 %216, %v41
  %v218 = vpop.permute.xlu0 %217
  %221 = vset.pattern.permute.xlu0 0
  %222 = vperm.xlu0 %221, %v42
  %v223 = vpop.permute.xlu0 %222
  %226 = vset.pattern.permute.xlu0 0
  %227 = vperm.xlu0 %226, %v43
  %v228 = vpop.permute.xlu0 %227
  %231 = vset.pattern.permute.xlu0 0
  %232 = vperm.xlu0 %231, %v44
  %v233 = vpop.permute.xlu0 %232
  %236 = vset.pattern.permute.xlu0 0
  %237 = vperm.xlu0 %236, %v45
  %v238 = vpop.permute.xlu0 %237
  %241 = vset.pattern.permute.xlu0 0
  %242 = vperm.xlu0 %241, %v46
  %v243 = vpop.permute.xlu0 %242
  %246 = vset.pattern.permute.xlu0 0
  %247 = vperm.xlu0 %246, %v47
  %v248 = vpop.permute.xlu0 %247
  %251 = vset.pattern.permute.xlu0 0
  %252 = vperm.xlu0 %251, %v48
  %v253 = vpop.permute.xlu0 %252
  %256 = vset.pattern.permute.xlu0 0
  %257 = vperm.xlu0 %256, %v49
  %v258 = vpop.permute.xlu0 %257
  %261 = vset.pattern.permute.xlu0 0
  %262 = vperm.xlu0 %261, %v50
  %v263 = vpop.permute.xlu0 %262
  %266 = vset.pattern.permute.xlu0 0
  %267 = vperm.xlu0 %266, %v51
  %v268 = vpop.permute.xlu0 %267
  %271 = vset.pattern.permute.xlu0 0
  %272 = vperm.xlu0 %271, %v52
  %v273 = vpop.permute.xlu0 %272
  %276 = vset.pattern.permute.xlu0 0
  %277 = vperm.xlu0 %276, %v53
  %v278 = vpop.permute.xlu0 %277
  %281 = vset.pattern.permute.xlu0 0
  %282 = vperm.xlu0 %281, %v54
  %v283 = vpop.permute.xlu0 %282
  %286 = vset.pattern.permute.xlu0 0
  %287 = vperm.xlu0 %286, %v55
  %v288 = vpop.permute.xlu0 %287
  %291 = vset.pattern.permute.xlu0 0
  %292 = vperm.xlu0 %291, %v56
  %v293 = vpop.permute.xlu0 %292
  %296 = vset.pattern.permute.xlu0 0
  %297 = vperm.xlu0 %296, %v57
  %v298 = vpop.permute.xlu0 %297
  %301 = vset.pattern.permute.xlu0 0
  %302 = vperm.xlu0 %301, %v58
  %v303 = vpop.permute.xlu0 %302
  %306 = vset.pattern.permute.xlu0 0
  %307 = vperm.xlu0 %306, %v59
  %v308 = vpop.permute.xlu0 %307
  %311 = vset.pattern.permute.xlu0 0
  %312 = vperm.xlu0 %311, %v60
  %v313 = vpop.permute.xlu0 %312
  %316 = vset.pattern.permute.xlu0 0
  %317 = vperm.xlu0 %316, %v61
  %v318 = vpop.permute.xlu0 %317
  %321 = vset.pattern.permute.xlu0 0
  %322 = vperm.xlu0 %321, %v62
  %v323 = vpop.permute.xlu0 %322
  %326 = vset.pattern.permute.xlu0 0
  %327 = vperm.xlu0 %326, %v63
  %v328 = vpop.permute.xlu0 %327
  %331 = vset.pattern.permute.xlu0 0
  %332 = vperm.xlu0 %331, %v64
  %v333 = vpop.permute.xlu0 %332
  %336 = vset.pattern.permute.xlu0 0
  %337 = vperm.xlu0 %336, %v65
  %v338 = vpop.permute.xlu0 %337
  %341 = vset.pattern.permute.xlu0 0
  %342 = vperm.xlu0 %341, %v66
  %v343 = vpop.permute.xlu0 %342
  %346 = vset.pattern.permute.xlu0 0
  %347 = vperm.xlu0 %346, %v67
  %v348 = vpop.permute.xlu0 %347
  %351 = vset.pattern.permute.xlu0 0
  %352 = vperm.xlu0 %351, %v68
  %v353 = vpop.permute.xlu0 %352
  %356 = vset.pattern.permute.xlu0 0
  %357 = vperm.xlu0 %356, %v69
  %v358 = vpop.permute.xlu0 %357
  %361 = vset.pattern.permute.xlu0 0
  %362 = vperm.xlu0 %361, %v70
  %v363 = vpop.permute.xlu0 %362
  %366 = vset.pattern.permute.xlu0 0
  %367 = vperm.xlu0 %366, %v71
  %v368 = vpop.permute.xlu0 %367
  %371 = vset.pattern.permute.xlu0 0
  %372 = vperm.xlu0 %371, %v72
  %v373 = vpop.permute.xlu0 %372
  %376 = vset.pattern.permute.xlu0 0
  %377 = vperm.xlu0 %376, %v73
  %v378 = vpop.permute.xlu0 %377
  %381 = vset.pattern.permute.xlu0 0
  %382 = vperm.xlu0 %381, %v74
  %v383 = vpop.permute.xlu0 %382
  %386 = vset.pattern.permute.xlu0 0
  %387 = vperm.xlu0 %386, %v75
  %v388 = vpop.permute.xlu0 %387
  %391 = vset.pattern.permute.xlu0 0
  %392 = vperm.xlu0 %391, %v76
  %v393 = vpop.permute.xlu0 %392
  %396 = vset.pattern.permute.xlu0 0
  %397 = vperm.xlu0 %396, %v77
  %v398 = vpop.permute.xlu0 %397
  %v400 = vlaneseq
  %v401 = vshrl.u32 %v400, 7
  %v402 = vsub.s32 0, %v401
  %v403 = vrot.slane %v78, %v402
  %v404 = vmul.f32 %v83, %v403
  %v405 = vmul.f32 %v88, %v403
  %v406 = vmul.f32 %v93, %v403
  %v407 = vmul.f32 %v98, %v403
  %v408 = vmul.f32 %v103, %v403
  %v409 = vmul.f32 %v108, %v403
  %v410 = vmul.f32 %v113, %v403
  %v411 = vmul.f32 %v118, %v403
  %v412 = vmul.f32 %v123, %v403
  %v413 = vmul.f32 %v128, %v403
  %v414 = vmul.f32 %v133, %v403
  %v415 = vmul.f32 %v138, %v403
  %v416 = vmul.f32 %v143, %v403
  %v417 = vmul.f32 %v148, %v403
  %v418 = vmul.f32 %v153, %v403
  %v419 = vmul.f32 %v158, %v403
  %v420 = vmul.f32 %v163, %v403
  %v421 = vmul.f32 %v168, %v403
  %v422 = vmul.f32 %v173, %v403
  %v423 = vmul.f32 %v178, %v403
  %v424 = vmul.f32 %v183, %v403
  %v425 = vmul.f32 %v188, %v403
  %v426 = vmul.f32 %v193, %v403
  %v427 = vmul.f32 %v198, %v403
  %v428 = vmul.f32 %v203, %v403
  %v429 = vmul.f32 %v208, %v403
  %v430 = vmul.f32 %v213, %v403
  %v431 = vmul.f32 %v218, %v403
  %v432 = vmul.f32 %v223, %v403
  %v433 = vmul.f32 %v228, %v403
  %v434 = vmul.f32 %v233, %v403
  %v435 = vmul.f32 %v238, %v403
  %v436 = vmul.f32 %v243, %v403
  %v437 = vmul.f32 %v248, %v403
  %v438 = vmul.f32 %v253, %v403
  %v439 = vmul.f32 %v258, %v403
  %v440 = vmul.f32 %v263, %v403
  %v441 = vmul.f32 %v268, %v403
  %v442 = vmul.f32 %v273, %v403
  %v443 = vmul.f32 %v278, %v403
  %v444 = vmul.f32 %v283, %v403
  %v445 = vmul.f32 %v288, %v403
  %v446 = vmul.f32 %v293, %v403
  %v447 = vmul.f32 %v298, %v403
  %v448 = vmul.f32 %v303, %v403
  %v449 = vmul.f32 %v308, %v403
  %v450 = vmul.f32 %v313, %v403
  %v451 = vmul.f32 %v318, %v403
  %v452 = vmul.f32 %v323, %v403
  %v453 = vmul.f32 %v328, %v403
  %v454 = vmul.f32 %v333, %v403
  %v455 = vmul.f32 %v338, %v403
  %v456 = vmul.f32 %v343, %v403
  %v457 = vmul.f32 %v348, %v403
  %v458 = vmul.f32 %v353, %v403
  %v459 = vmul.f32 %v358, %v403
  %v460 = vmul.f32 %v363, %v403
  %v461 = vmul.f32 %v368, %v403
  %v462 = vmul.f32 %v373, %v403
  %v463 = vmul.f32 %v378, %v403
  %v464 = vmul.f32 %v383, %v403
  %v465 = vmul.f32 %v388, %v403
  %v466 = vmul.f32 %v393, %v403
  %v467 = vmul.f32 %v398, %v403
  %v469 = vlaneseq
  %v470 = vshrl.u32 %v469, 7
  %v471 = vsub.s32 0, %v470
  %v472 = vrot.slane %v79, %v471
  %v474 = vadd.f32 %v472, %v404
  %v475 = vadd.f32 %v472, %v405
  %v476 = vadd.f32 %v472, %v406
  %v477 = vadd.f32 %v472, %v407
  %v478 = vadd.f32 %v472, %v408
  %v479 = vadd.f32 %v472, %v409
  %v480 = vadd.f32 %v472, %v410
  %v481 = vadd.f32 %v472, %v411
  %v482 = vadd.f32 %v472, %v412
  %v483 = vadd.f32 %v472, %v413
  %v484 = vadd.f32 %v472, %v414
  %v485 = vadd.f32 %v472, %v415
  %v486 = vadd.f32 %v472, %v416
  %v487 = vadd.f32 %v472, %v417
  %v488 = vadd.f32 %v472, %v418
  %v489 = vadd.f32 %v472, %v419
  %v490 = vadd.f32 %v472, %v420
  %v491 = vadd.f32 %v472, %v421
  %v492 = vadd.f32 %v472, %v422
  %v493 = vadd.f32 %v472, %v423
  %v494 = vadd.f32 %v472, %v424
  %v495 = vadd.f32 %v472, %v425
  %v496 = vadd.f32 %v472, %v426
  %v497 = vadd.f32 %v472, %v427
  %v498 = vadd.f32 %v472, %v428
  %v499 = vadd.f32 %v472, %v429
  %v500 = vadd.f32 %v472, %v430
  %v501 = vadd.f32 %v472, %v431
  %v502 = vadd.f32 %v472, %v432
  %v503 = vadd.f32 %v472, %v433
  %v504 = vadd.f32 %v472, %v434
  %v505 = vadd.f32 %v472, %v435
  %v506 = vadd.f32 %v472, %v436
  %v507 = vadd.f32 %v472, %v437
  %v508 = vadd.f32 %v472, %v438
  %v509 = vadd.f32 %v472, %v439
  %v510 = vadd.f32 %v472, %v440
  %v511 = vadd.f32 %v472, %v441
  %v512 = vadd.f32 %v472, %v442
  %v513 = vadd.f32 %v472, %v443
  %v514 = vadd.f32 %v472, %v444
  %v515 = vadd.f32 %v472, %v445
  %v516 = vadd.f32 %v472, %v446
  %v517 = vadd.f32 %v472, %v447
  %v518 = vadd.f32 %v472, %v448
  %v519 = vadd.f32 %v472, %v449
  %v520 = vadd.f32 %v472, %v450
  %v521 = vadd.f32 %v472, %v451
  %v522 = vadd.f32 %v472, %v452
  %v523 = vadd.f32 %v472, %v453
  %v524 = vadd.f32 %v472, %v454
  %v525 = vadd.f32 %v472, %v455
  %v526 = vadd.f32 %v472, %v456
  %v527 = vadd.f32 %v472, %v457
  %v528 = vadd.f32 %v472, %v458
  %v529 = vadd.f32 %v472, %v459
  %v530 = vadd.f32 %v472, %v460
  %v531 = vadd.f32 %v472, %v461
  %v532 = vadd.f32 %v472, %v462
  %v533 = vadd.f32 %v472, %v463
  %v534 = vadd.f32 %v472, %v464
  %v535 = vadd.f32 %v472, %v465
  %v536 = vadd.f32 %v472, %v466
  %v537 = vadd.f32 %v472, %v467
  %538 = vset.pattern.permute.xlu0 1
  %539 = vperm.xlu0 %538, %v14
  %v540 = vpop.permute.xlu0 %539
  %542 = vset.pattern.permute.xlu0 1
  %543 = vperm.xlu0 %542, %v15
  %v544 = vpop.permute.xlu0 %543
  %546 = vset.pattern.permute.xlu0 1
  %547 = vperm.xlu0 %546, %v16
  %v548 = vpop.permute.xlu0 %547
  %550 = vset.pattern.permute.xlu0 1
  %551 = vperm.xlu0 %550, %v17
  %v552 = vpop.permute.xlu0 %551
  %554 = vset.pattern.permute.xlu0 1
  %555 = vperm.xlu0 %554, %v18
  %v556 = vpop.permute.xlu0 %555
  %558 = vset.pattern.permute.xlu0 1
  %559 = vperm.xlu0 %558, %v19
  %v560 = vpop.permute.xlu0 %559
  %562 = vset.pattern.permute.xlu0 1
  %563 = vperm.xlu0 %562, %v20
  %v564 = vpop.permute.xlu0 %563
  %566 = vset.pattern.permute.xlu0 1
  %567 = vperm.xlu0 %566, %v21
  %v568 = vpop.permute.xlu0 %567
  %570 = vset.pattern.permute.xlu0 1
  %571 = vperm.xlu0 %570, %v22
  %v572 = vpop.permute.xlu0 %571
  %574 = vset.pattern.permute.xlu0 1
  %575 = vperm.xlu0 %574, %v23
  %v576 = vpop.permute.xlu0 %575
  %578 = vset.pattern.permute.xlu0 1
  %579 = vperm.xlu0 %578, %v24
  %v580 = vpop.permute.xlu0 %579
  %582 = vset.pattern.permute.xlu0 1
  %583 = vperm.xlu0 %582, %v25
  %v584 = vpop.permute.xlu0 %583
  %586 = vset.pattern.permute.xlu0 1
  %587 = vperm.xlu0 %586, %v26
  %v588 = vpop.permute.xlu0 %587
  %590 = vset.pattern.permute.xlu0 1
  %591 = vperm.xlu0 %590, %v27
  %v592 = vpop.permute.xlu0 %591
  %594 = vset.pattern.permute.xlu0 1
  %595 = vperm.xlu0 %594, %v28
  %v596 = vpop.permute.xlu0 %595
  %598 = vset.pattern.permute.xlu0 1
  %599 = vperm.xlu0 %598, %v29
  %v600 = vpop.permute.xlu0 %599
  %602 = vset.pattern.permute.xlu0 1
  %603 = vperm.xlu0 %602, %v30
  %v604 = vpop.permute.xlu0 %603
  %606 = vset.pattern.permute.xlu0 1
  %607 = vperm.xlu0 %606, %v31
  %v608 = vpop.permute.xlu0 %607
  %610 = vset.pattern.permute.xlu0 1
  %611 = vperm.xlu0 %610, %v32
  %v612 = vpop.permute.xlu0 %611
  %614 = vset.pattern.permute.xlu0 1
  %615 = vperm.xlu0 %614, %v33
  %v616 = vpop.permute.xlu0 %615
  %618 = vset.pattern.permute.xlu0 1
  %619 = vperm.xlu0 %618, %v34
  %v620 = vpop.permute.xlu0 %619
  %622 = vset.pattern.permute.xlu0 1
  %623 = vperm.xlu0 %622, %v35
  %v624 = vpop.permute.xlu0 %623
  %626 = vset.pattern.permute.xlu0 1
  %627 = vperm.xlu0 %626, %v36
  %v628 = vpop.permute.xlu0 %627
  %630 = vset.pattern.permute.xlu0 1
  %631 = vperm.xlu0 %630, %v37
  %v632 = vpop.permute.xlu0 %631
  %634 = vset.pattern.permute.xlu0 1
  %635 = vperm.xlu0 %634, %v38
  %v636 = vpop.permute.xlu0 %635
  %638 = vset.pattern.permute.xlu0 1
  %639 = vperm.xlu0 %638, %v39
  %v640 = vpop.permute.xlu0 %639
  %642 = vset.pattern.permute.xlu0 1
  %643 = vperm.xlu0 %642, %v40
  %v644 = vpop.permute.xlu0 %643
  %646 = vset.pattern.permute.xlu0 1
  %647 = vperm.xlu0 %646, %v41
  %v648 = vpop.permute.xlu0 %647
  %650 = vset.pattern.permute.xlu0 1
  %651 = vperm.xlu0 %650, %v42
  %v652 = vpop.permute.xlu0 %651
  %654 = vset.pattern.permute.xlu0 1
  %655 = vperm.xlu0 %654, %v43
  %v656 = vpop.permute.xlu0 %655
  %658 = vset.pattern.permute.xlu0 1
  %659 = vperm.xlu0 %658, %v44
  %v660 = vpop.permute.xlu0 %659
  %662 = vset.pattern.permute.xlu0 1
  %663 = vperm.xlu0 %662, %v45
  %v664 = vpop.permute.xlu0 %663
  %666 = vset.pattern.permute.xlu0 1
  %667 = vperm.xlu0 %666, %v46
  %v668 = vpop.permute.xlu0 %667
  %670 = vset.pattern.permute.xlu0 1
  %671 = vperm.xlu0 %670, %v47
  %v672 = vpop.permute.xlu0 %671
  %674 = vset.pattern.permute.xlu0 1
  %675 = vperm.xlu0 %674, %v48
  %v676 = vpop.permute.xlu0 %675
  %678 = vset.pattern.permute.xlu0 1
  %679 = vperm.xlu0 %678, %v49
  %v680 = vpop.permute.xlu0 %679
  %682 = vset.pattern.permute.xlu0 1
  %683 = vperm.xlu0 %682, %v50
  %v684 = vpop.permute.xlu0 %683
  %686 = vset.pattern.permute.xlu0 1
  %687 = vperm.xlu0 %686, %v51
  %v688 = vpop.permute.xlu0 %687
  %690 = vset.pattern.permute.xlu0 1
  %691 = vperm.xlu0 %690, %v52
  %v692 = vpop.permute.xlu0 %691
  %694 = vset.pattern.permute.xlu0 1
  %695 = vperm.xlu0 %694, %v53
  %v696 = vpop.permute.xlu0 %695
  %698 = vset.pattern.permute.xlu0 1
  %699 = vperm.xlu0 %698, %v54
  %v700 = vpop.permute.xlu0 %699
  %702 = vset.pattern.permute.xlu0 1
  %703 = vperm.xlu0 %702, %v55
  %v704 = vpop.permute.xlu0 %703
  %706 = vset.pattern.permute.xlu0 1
  %707 = vperm.xlu0 %706, %v56
  %v708 = vpop.permute.xlu0 %707
  %710 = vset.pattern.permute.xlu0 1
  %711 = vperm.xlu0 %710, %v57
  %v712 = vpop.permute.xlu0 %711
  %714 = vset.pattern.permute.xlu0 1
  %715 = vperm.xlu0 %714, %v58
  %v716 = vpop.permute.xlu0 %715
  %718 = vset.pattern.permute.xlu0 1
  %719 = vperm.xlu0 %718, %v59
  %v720 = vpop.permute.xlu0 %719
  %722 = vset.pattern.permute.xlu0 1
  %723 = vperm.xlu0 %722, %v60
  %v724 = vpop.permute.xlu0 %723
  %726 = vset.pattern.permute.xlu0 1
  %727 = vperm.xlu0 %726, %v61
  %v728 = vpop.permute.xlu0 %727
  %730 = vset.pattern.permute.xlu0 1
  %731 = vperm.xlu0 %730, %v62
  %v732 = vpop.permute.xlu0 %731
  %734 = vset.pattern.permute.xlu0 1
  %735 = vperm.xlu0 %734, %v63
  %v736 = vpop.permute.xlu0 %735
  %738 = vset.pattern.permute.xlu0 1
  %739 = vperm.xlu0 %738, %v64
  %v740 = vpop.permute.xlu0 %739
  %742 = vset.pattern.permute.xlu0 1
  %743 = vperm.xlu0 %742, %v65
  %v744 = vpop.permute.xlu0 %743
  %746 = vset.pattern.permute.xlu0 1
  %747 = vperm.xlu0 %746, %v66
  %v748 = vpop.permute.xlu0 %747
  %750 = vset.pattern.permute.xlu0 1
  %751 = vperm.xlu0 %750, %v67
  %v752 = vpop.permute.xlu0 %751
  %754 = vset.pattern.permute.xlu0 1
  %755 = vperm.xlu0 %754, %v68
  %v756 = vpop.permute.xlu0 %755
  %758 = vset.pattern.permute.xlu0 1
  %759 = vperm.xlu0 %758, %v69
  %v760 = vpop.permute.xlu0 %759
  %762 = vset.pattern.permute.xlu0 1
  %763 = vperm.xlu0 %762, %v70
  %v764 = vpop.permute.xlu0 %763
  %766 = vset.pattern.permute.xlu0 1
  %767 = vperm.xlu0 %766, %v71
  %v768 = vpop.permute.xlu0 %767
  %770 = vset.pattern.permute.xlu0 1
  %771 = vperm.xlu0 %770, %v72
  %v772 = vpop.permute.xlu0 %771
  %774 = vset.pattern.permute.xlu0 1
  %775 = vperm.xlu0 %774, %v73
  %v776 = vpop.permute.xlu0 %775
  %778 = vset.pattern.permute.xlu0 1
  %779 = vperm.xlu0 %778, %v74
  %v780 = vpop.permute.xlu0 %779
  %782 = vset.pattern.permute.xlu0 1
  %783 = vperm.xlu0 %782, %v75
  %v784 = vpop.permute.xlu0 %783
  %786 = vset.pattern.permute.xlu0 1
  %787 = vperm.xlu0 %786, %v76
  %v788 = vpop.permute.xlu0 %787
  %790 = vset.pattern.permute.xlu0 1
  %791 = vperm.xlu0 %790, %v77
  %v792 = vpop.permute.xlu0 %791
  %v794 = vlaneseq
  %v795 = vshrl.u32 %v794, 7
  %v796 = vsub.s32 1, %v795
  %v797 = vrot.slane %v78, %v796
  %v798 = vmul.f32 %v540, %v797
  %v799 = vmul.f32 %v544, %v797
  %v800 = vmul.f32 %v548, %v797
  %v801 = vmul.f32 %v552, %v797
  %v802 = vmul.f32 %v556, %v797
  %v803 = vmul.f32 %v560, %v797
  %v804 = vmul.f32 %v564, %v797
  %v805 = vmul.f32 %v568, %v797
  %v806 = vmul.f32 %v572, %v797
  %v807 = vmul.f32 %v576, %v797
  %v808 = vmul.f32 %v580, %v797
  %v809 = vmul.f32 %v584, %v797
  %v810 = vmul.f32 %v588, %v797
  %v811 = vmul.f32 %v592, %v797
  %v812 = vmul.f32 %v596, %v797
  %v813 = vmul.f32 %v600, %v797
  %v814 = vmul.f32 %v604, %v797
  %v815 = vmul.f32 %v608, %v797
  %v816 = vmul.f32 %v612, %v797
  %v817 = vmul.f32 %v616, %v797
  %v818 = vmul.f32 %v620, %v797
  %v819 = vmul.f32 %v624, %v797
  %v820 = vmul.f32 %v628, %v797
  %v821 = vmul.f32 %v632, %v797
  %v822 = vmul.f32 %v636, %v797
  %v823 = vmul.f32 %v640, %v797
  %v824 = vmul.f32 %v644, %v797
  %v825 = vmul.f32 %v648, %v797
  %v826 = vmul.f32 %v652, %v797
  %v827 = vmul.f32 %v656, %v797
  %v828 = vmul.f32 %v660, %v797
  %v829 = vmul.f32 %v664, %v797
  %v830 = vmul.f32 %v668, %v797
  %v831 = vmul.f32 %v672, %v797
  %v832 = vmul.f32 %v676, %v797
  %v833 = vmul.f32 %v680, %v797
  %v834 = vmul.f32 %v684, %v797
  %v835 = vmul.f32 %v688, %v797
  %v836 = vmul.f32 %v692, %v797
  %v837 = vmul.f32 %v696, %v797
  %v838 = vmul.f32 %v700, %v797
  %v839 = vmul.f32 %v704, %v797
  %v840 = vmul.f32 %v708, %v797
  %v841 = vmul.f32 %v712, %v797
  %v842 = vmul.f32 %v716, %v797
  %v843 = vmul.f32 %v720, %v797
  %v844 = vmul.f32 %v724, %v797
  %v845 = vmul.f32 %v728, %v797
  %v846 = vmul.f32 %v732, %v797
  %v847 = vmul.f32 %v736, %v797
  %v848 = vmul.f32 %v740, %v797
  %v849 = vmul.f32 %v744, %v797
  %v850 = vmul.f32 %v748, %v797
  %v851 = vmul.f32 %v752, %v797
  %v852 = vmul.f32 %v756, %v797
  %v853 = vmul.f32 %v760, %v797
  %v854 = vmul.f32 %v764, %v797
  %v855 = vmul.f32 %v768, %v797
  %v856 = vmul.f32 %v772, %v797
  %v857 = vmul.f32 %v776, %v797
  %v858 = vmul.f32 %v780, %v797
  %v859 = vmul.f32 %v784, %v797
  %v860 = vmul.f32 %v788, %v797
  %v861 = vmul.f32 %v792, %v797
  %v862 = vadd.f32 %v474, %v798
  %v863 = vadd.f32 %v475, %v799
  %v864 = vadd.f32 %v476, %v800
  %v865 = vadd.f32 %v477, %v801
  %v866 = vadd.f32 %v478, %v802
  %v867 = vadd.f32 %v479, %v803
  %v868 = vadd.f32 %v480, %v804
  %v869 = vadd.f32 %v481, %v805
  %v870 = vadd.f32 %v482, %v806
  %v871 = vadd.f32 %v483, %v807
  %v872 = vadd.f32 %v484, %v808
  %v873 = vadd.f32 %v485, %v809
  %v874 = vadd.f32 %v486, %v810
  %v875 = vadd.f32 %v487, %v811
  %v876 = vadd.f32 %v488, %v812
  %v877 = vadd.f32 %v489, %v813
  %v878 = vadd.f32 %v490, %v814
  %v879 = vadd.f32 %v491, %v815
  %v880 = vadd.f32 %v492, %v816
  %v881 = vadd.f32 %v493, %v817
  %v882 = vadd.f32 %v494, %v818
  %v883 = vadd.f32 %v495, %v819
  %v884 = vadd.f32 %v496, %v820
  %v885 = vadd.f32 %v497, %v821
  %v886 = vadd.f32 %v498, %v822
  %v887 = vadd.f32 %v499, %v823
  %v888 = vadd.f32 %v500, %v824
  %v889 = vadd.f32 %v501, %v825
  %v890 = vadd.f32 %v502, %v826
  %v891 = vadd.f32 %v503, %v827
  %v892 = vadd.f32 %v504, %v828
  %v893 = vadd.f32 %v505, %v829
  %v894 = vadd.f32 %v506, %v830
  %v895 = vadd.f32 %v507, %v831
  %v896 = vadd.f32 %v508, %v832
  %v897 = vadd.f32 %v509, %v833
  %v898 = vadd.f32 %v510, %v834
  %v899 = vadd.f32 %v511, %v835
  %v900 = vadd.f32 %v512, %v836
  %v901 = vadd.f32 %v513, %v837
  %v902 = vadd.f32 %v514, %v838
  %v903 = vadd.f32 %v515, %v839
  %v904 = vadd.f32 %v516, %v840
  %v905 = vadd.f32 %v517, %v841
  %v906 = vadd.f32 %v518, %v842
  %v907 = vadd.f32 %v519, %v843
  %v908 = vadd.f32 %v520, %v844
  %v909 = vadd.f32 %v521, %v845
  %v910 = vadd.f32 %v522, %v846
  %v911 = vadd.f32 %v523, %v847
  %v912 = vadd.f32 %v524, %v848
  %v913 = vadd.f32 %v525, %v849
  %v914 = vadd.f32 %v526, %v850
  %v915 = vadd.f32 %v527, %v851
  %v916 = vadd.f32 %v528, %v852
  %v917 = vadd.f32 %v529, %v853
  %v918 = vadd.f32 %v530, %v854
  %v919 = vadd.f32 %v531, %v855
  %v920 = vadd.f32 %v532, %v856
  %v921 = vadd.f32 %v533, %v857
  %v922 = vadd.f32 %v534, %v858
  %v923 = vadd.f32 %v535, %v859
  %v924 = vadd.f32 %v536, %v860
  %v925 = vadd.f32 %v537, %v861
  %926 = vset.pattern.permute.xlu0 2
  %927 = vperm.xlu0 %926, %v14
  %v928 = vpop.permute.xlu0 %927
  %930 = vset.pattern.permute.xlu0 2
  %931 = vperm.xlu0 %930, %v15
  %v932 = vpop.permute.xlu0 %931
  %934 = vset.pattern.permute.xlu0 2
  %935 = vperm.xlu0 %934, %v16
  %v936 = vpop.permute.xlu0 %935
  %938 = vset.pattern.permute.xlu0 2
  %939 = vperm.xlu0 %938, %v17
  %v940 = vpop.permute.xlu0 %939
  %942 = vset.pattern.permute.xlu0 2
  %943 = vperm.xlu0 %942, %v18
  %v944 = vpop.permute.xlu0 %943
  %946 = vset.pattern.permute.xlu0 2
  %947 = vperm.xlu0 %946, %v19
  %v948 = vpop.permute.xlu0 %947
  %950 = vset.pattern.permute.xlu0 2
  %951 = vperm.xlu0 %950, %v20
  %v952 = vpop.permute.xlu0 %951
  %954 = vset.pattern.permute.xlu0 2
  %955 = vperm.xlu0 %954, %v21
  %v956 = vpop.permute.xlu0 %955
  %958 = vset.pattern.permute.xlu0 2
  %959 = vperm.xlu0 %958, %v22
  %v960 = vpop.permute.xlu0 %959
  %962 = vset.pattern.permute.xlu0 2
  %963 = vperm.xlu0 %962, %v23
  %v964 = vpop.permute.xlu0 %963
  %966 = vset.pattern.permute.xlu0 2
  %967 = vperm.xlu0 %966, %v24
  %v968 = vpop.permute.xlu0 %967
  %970 = vset.pattern.permute.xlu0 2
  %971 = vperm.xlu0 %970, %v25
  %v972 = vpop.permute.xlu0 %971
  %974 = vset.pattern.permute.xlu0 2
  %975 = vperm.xlu0 %974, %v26
  %v976 = vpop.permute.xlu0 %975
  %978 = vset.pattern.permute.xlu0 2
  %979 = vperm.xlu0 %978, %v27
  %v980 = vpop.permute.xlu0 %979
  %982 = vset.pattern.permute.xlu0 2
  %983 = vperm.xlu0 %982, %v28
  %v984 = vpop.permute.xlu0 %983
  %986 = vset.pattern.permute.xlu0 2
  %987 = vperm.xlu0 %986, %v29
  %v988 = vpop.permute.xlu0 %987
  %990 = vset.pattern.permute.xlu0 2
  %991 = vperm.xlu0 %990, %v30
  %v992 = vpop.permute.xlu0 %991
  %994 = vset.pattern.permute.xlu0 2
  %995 = vperm.xlu0 %994, %v31
  %v996 = vpop.permute.xlu0 %995
  %998 = vset.pattern.permute.xlu0 2
  %999 = vperm.xlu0 %998, %v32
  %v1000 = vpop.permute.xlu0 %999
  %1002 = vset.pattern.permute.xlu0 2
  %1003 = vperm.xlu0 %1002, %v33
  %v1004 = vpop.permute.xlu0 %1003
  %1006 = vset.pattern.permute.xlu0 2
  %1007 = vperm.xlu0 %1006, %v34
  %v1008 = vpop.permute.xlu0 %1007
  %1010 = vset.pattern.permute.xlu0 2
  %1011 = vperm.xlu0 %1010, %v35
  %v1012 = vpop.permute.xlu0 %1011
  %1014 = vset.pattern.permute.xlu0 2
  %1015 = vperm.xlu0 %1014, %v36
  %v1016 = vpop.permute.xlu0 %1015
  %1018 = vset.pattern.permute.xlu0 2
  %1019 = vperm.xlu0 %1018, %v37
  %v1020 = vpop.permute.xlu0 %1019
  %1022 = vset.pattern.permute.xlu0 2
  %1023 = vperm.xlu0 %1022, %v38
  %v1024 = vpop.permute.xlu0 %1023
  %1026 = vset.pattern.permute.xlu0 2
  %1027 = vperm.xlu0 %1026, %v39
  %v1028 = vpop.permute.xlu0 %1027
  %1030 = vset.pattern.permute.xlu0 2
  %1031 = vperm.xlu0 %1030, %v40
  %v1032 = vpop.permute.xlu0 %1031
  %1034 = vset.pattern.permute.xlu0 2
  %1035 = vperm.xlu0 %1034, %v41
  %v1036 = vpop.permute.xlu0 %1035
  %1038 = vset.pattern.permute.xlu0 2
  %1039 = vperm.xlu0 %1038, %v42
  %v1040 = vpop.permute.xlu0 %1039
  %1042 = vset.pattern.permute.xlu0 2
  %1043 = vperm.xlu0 %1042, %v43
  %v1044 = vpop.permute.xlu0 %1043
  %1046 = vset.pattern.permute.xlu0 2
  %1047 = vperm.xlu0 %1046, %v44
  %v1048 = vpop.permute.xlu0 %1047
  %1050 = vset.pattern.permute.xlu0 2
  %1051 = vperm.xlu0 %1050, %v45
  %v1052 = vpop.permute.xlu0 %1051
  %1054 = vset.pattern.permute.xlu0 2
  %1055 = vperm.xlu0 %1054, %v46
  %v1056 = vpop.permute.xlu0 %1055
  %1058 = vset.pattern.permute.xlu0 2
  %1059 = vperm.xlu0 %1058, %v47
  %v1060 = vpop.permute.xlu0 %1059
  %1062 = vset.pattern.permute.xlu0 2
  %1063 = vperm.xlu0 %1062, %v48
  %v1064 = vpop.permute.xlu0 %1063
  %1066 = vset.pattern.permute.xlu0 2
  %1067 = vperm.xlu0 %1066, %v49
  %v1068 = vpop.permute.xlu0 %1067
  %1070 = vset.pattern.permute.xlu0 2
  %1071 = vperm.xlu0 %1070, %v50
  %v1072 = vpop.permute.xlu0 %1071
  %1074 = vset.pattern.permute.xlu0 2
  %1075 = vperm.xlu0 %1074, %v51
  %v1076 = vpop.permute.xlu0 %1075
  %1078 = vset.pattern.permute.xlu0 2
  %1079 = vperm.xlu0 %1078, %v52
  %v1080 = vpop.permute.xlu0 %1079
  %1082 = vset.pattern.permute.xlu0 2
  %1083 = vperm.xlu0 %1082, %v53
  %v1084 = vpop.permute.xlu0 %1083
  %1086 = vset.pattern.permute.xlu0 2
  %1087 = vperm.xlu0 %1086, %v54
  %v1088 = vpop.permute.xlu0 %1087
  %1090 = vset.pattern.permute.xlu0 2
  %1091 = vperm.xlu0 %1090, %v55
  %v1092 = vpop.permute.xlu0 %1091
  %1094 = vset.pattern.permute.xlu0 2
  %1095 = vperm.xlu0 %1094, %v56
  %v1096 = vpop.permute.xlu0 %1095
  %1098 = vset.pattern.permute.xlu0 2
  %1099 = vperm.xlu0 %1098, %v57
  %v1100 = vpop.permute.xlu0 %1099
  %1102 = vset.pattern.permute.xlu0 2
  %1103 = vperm.xlu0 %1102, %v58
  %v1104 = vpop.permute.xlu0 %1103
  %1106 = vset.pattern.permute.xlu0 2
  %1107 = vperm.xlu0 %1106, %v59
  %v1108 = vpop.permute.xlu0 %1107
  %1110 = vset.pattern.permute.xlu0 2
  %1111 = vperm.xlu0 %1110, %v60
  %v1112 = vpop.permute.xlu0 %1111
  %1114 = vset.pattern.permute.xlu0 2
  %1115 = vperm.xlu0 %1114, %v61
  %v1116 = vpop.permute.xlu0 %1115
  %1118 = vset.pattern.permute.xlu0 2
  %1119 = vperm.xlu0 %1118, %v62
  %v1120 = vpop.permute.xlu0 %1119
  %1122 = vset.pattern.permute.xlu0 2
  %1123 = vperm.xlu0 %1122, %v63
  %v1124 = vpop.permute.xlu0 %1123
  %1126 = vset.pattern.permute.xlu0 2
  %1127 = vperm.xlu0 %1126, %v64
  %v1128 = vpop.permute.xlu0 %1127
  %1130 = vset.pattern.permute.xlu0 2
  %1131 = vperm.xlu0 %1130, %v65
  %v1132 = vpop.permute.xlu0 %1131
  %1134 = vset.pattern.permute.xlu0 2
  %1135 = vperm.xlu0 %1134, %v66
  %v1136 = vpop.permute.xlu0 %1135
  %1138 = vset.pattern.permute.xlu0 2
  %1139 = vperm.xlu0 %1138, %v67
  %v1140 = vpop.permute.xlu0 %1139
  %1142 = vset.pattern.permute.xlu0 2
  %1143 = vperm.xlu0 %1142, %v68
  %v1144 = vpop.permute.xlu0 %1143
  %1146 = vset.pattern.permute.xlu0 2
  %1147 = vperm.xlu0 %1146, %v69
  %v1148 = vpop.permute.xlu0 %1147
  %1150 = vset.pattern.permute.xlu0 2
  %1151 = vperm.xlu0 %1150, %v70
  %v1152 = vpop.permute.xlu0 %1151
  %1154 = vset.pattern.permute.xlu0 2
  %1155 = vperm.xlu0 %1154, %v71
  %v1156 = vpop.permute.xlu0 %1155
  %1158 = vset.pattern.permute.xlu0 2
  %1159 = vperm.xlu0 %1158, %v72
  %v1160 = vpop.permute.xlu0 %1159
  %1162 = vset.pattern.permute.xlu0 2
  %1163 = vperm.xlu0 %1162, %v73
  %v1164 = vpop.permute.xlu0 %1163
  %1166 = vset.pattern.permute.xlu0 2
  %1167 = vperm.xlu0 %1166, %v74
  %v1168 = vpop.permute.xlu0 %1167
  %1170 = vset.pattern.permute.xlu0 2
  %1171 = vperm.xlu0 %1170, %v75
  %v1172 = vpop.permute.xlu0 %1171
  %1174 = vset.pattern.permute.xlu0 2
  %1175 = vperm.xlu0 %1174, %v76
  %v1176 = vpop.permute.xlu0 %1175
  %1178 = vset.pattern.permute.xlu0 2
  %1179 = vperm.xlu0 %1178, %v77
  %v1180 = vpop.permute.xlu0 %1179
  %v1182 = vlaneseq
  %v1183 = vshrl.u32 %v1182, 7
  %v1184 = vsub.s32 2, %v1183
  %v1185 = vrot.slane %v78, %v1184
  %v1186 = vmul.f32 %v928, %v1185
  %v1187 = vmul.f32 %v932, %v1185
  %v1188 = vmul.f32 %v936, %v1185
  %v1189 = vmul.f32 %v940, %v1185
  %v1190 = vmul.f32 %v944, %v1185
  %v1191 = vmul.f32 %v948, %v1185
  %v1192 = vmul.f32 %v952, %v1185
  %v1193 = vmul.f32 %v956, %v1185
  %v1194 = vmul.f32 %v960, %v1185
  %v1195 = vmul.f32 %v964, %v1185
  %v1196 = vmul.f32 %v968, %v1185
  %v1197 = vmul.f32 %v972, %v1185
  %v1198 = vmul.f32 %v976, %v1185
  %v1199 = vmul.f32 %v980, %v1185
  %v1200 = vmul.f32 %v984, %v1185
  %v1201 = vmul.f32 %v988, %v1185
  %v1202 = vmul.f32 %v992, %v1185
  %v1203 = vmul.f32 %v996, %v1185
  %v1204 = vmul.f32 %v1000, %v1185
  %v1205 = vmul.f32 %v1004, %v1185
  %v1206 = vmul.f32 %v1008, %v1185
  %v1207 = vmul.f32 %v1012, %v1185
  %v1208 = vmul.f32 %v1016, %v1185
  %v1209 = vmul.f32 %v1020, %v1185
  %v1210 = vmul.f32 %v1024, %v1185
  %v1211 = vmul.f32 %v1028, %v1185
  %v1212 = vmul.f32 %v1032, %v1185
  %v1213 = vmul.f32 %v1036, %v1185
  %v1214 = vmul.f32 %v1040, %v1185
  %v1215 = vmul.f32 %v1044, %v1185
  %v1216 = vmul.f32 %v1048, %v1185
  %v1217 = vmul.f32 %v1052, %v1185
  %v1218 = vmul.f32 %v1056, %v1185
  %v1219 = vmul.f32 %v1060, %v1185
  %v1220 = vmul.f32 %v1064, %v1185
  %v1221 = vmul.f32 %v1068, %v1185
  %v1222 = vmul.f32 %v1072, %v1185
  %v1223 = vmul.f32 %v1076, %v1185
  %v1224 = vmul.f32 %v1080, %v1185
  %v1225 = vmul.f32 %v1084, %v1185
  %v1226 = vmul.f32 %v1088, %v1185
  %v1227 = vmul.f32 %v1092, %v1185
  %v1228 = vmul.f32 %v1096, %v1185
  %v1229 = vmul.f32 %v1100, %v1185
  %v1230 = vmul.f32 %v1104, %v1185
  %v1231 = vmul.f32 %v1108, %v1185
  %v1232 = vmul.f32 %v1112, %v1185
  %v1233 = vmul.f32 %v1116, %v1185
  %v1234 = vmul.f32 %v1120, %v1185
  %v1235 = vmul.f32 %v1124, %v1185
  %v1236 = vmul.f32 %v1128, %v1185
  %v1237 = vmul.f32 %v1132, %v1185
  %v1238 = vmul.f32 %v1136, %v1185
  %v1239 = vmul.f32 %v1140, %v1185
  %v1240 = vmul.f32 %v1144, %v1185
  %v1241 = vmul.f32 %v1148, %v1185
  %v1242 = vmul.f32 %v1152, %v1185
  %v1243 = vmul.f32 %v1156, %v1185
  %v1244 = vmul.f32 %v1160, %v1185
  %v1245 = vmul.f32 %v1164, %v1185
  %v1246 = vmul.f32 %v1168, %v1185
  %v1247 = vmul.f32 %v1172, %v1185
  %v1248 = vmul.f32 %v1176, %v1185
  %v1249 = vmul.f32 %v1180, %v1185
  %v1250 = vadd.f32 %v862, %v1186
  %v1251 = vadd.f32 %v863, %v1187
  %v1252 = vadd.f32 %v864, %v1188
  %v1253 = vadd.f32 %v865, %v1189
  %v1254 = vadd.f32 %v866, %v1190
  %v1255 = vadd.f32 %v867, %v1191
  %v1256 = vadd.f32 %v868, %v1192
  %v1257 = vadd.f32 %v869, %v1193
  %v1258 = vadd.f32 %v870, %v1194
  %v1259 = vadd.f32 %v871, %v1195
  %v1260 = vadd.f32 %v872, %v1196
  %v1261 = vadd.f32 %v873, %v1197
  %v1262 = vadd.f32 %v874, %v1198
  %v1263 = vadd.f32 %v875, %v1199
  %v1264 = vadd.f32 %v876, %v1200
  %v1265 = vadd.f32 %v877, %v1201
  %v1266 = vadd.f32 %v878, %v1202
  %v1267 = vadd.f32 %v879, %v1203
  %v1268 = vadd.f32 %v880, %v1204
  %v1269 = vadd.f32 %v881, %v1205
  %v1270 = vadd.f32 %v882, %v1206
  %v1271 = vadd.f32 %v883, %v1207
  %v1272 = vadd.f32 %v884, %v1208
  %v1273 = vadd.f32 %v885, %v1209
  %v1274 = vadd.f32 %v886, %v1210
  %v1275 = vadd.f32 %v887, %v1211
  %v1276 = vadd.f32 %v888, %v1212
  %v1277 = vadd.f32 %v889, %v1213
  %v1278 = vadd.f32 %v890, %v1214
  %v1279 = vadd.f32 %v891, %v1215
  %v1280 = vadd.f32 %v892, %v1216
  %v1281 = vadd.f32 %v893, %v1217
  %v1282 = vadd.f32 %v894, %v1218
  %v1283 = vadd.f32 %v895, %v1219
  %v1284 = vadd.f32 %v896, %v1220
  %v1285 = vadd.f32 %v897, %v1221
  %v1286 = vadd.f32 %v898, %v1222
  %v1287 = vadd.f32 %v899, %v1223
  %v1288 = vadd.f32 %v900, %v1224
  %v1289 = vadd.f32 %v901, %v1225
  %v1290 = vadd.f32 %v902, %v1226
  %v1291 = vadd.f32 %v903, %v1227
  %v1292 = vadd.f32 %v904, %v1228
  %v1293 = vadd.f32 %v905, %v1229
  %v1294 = vadd.f32 %v906, %v1230
  %v1295 = vadd.f32 %v907, %v1231
  %v1296 = vadd.f32 %v908, %v1232
  %v1297 = vadd.f32 %v909, %v1233
  %v1298 = vadd.f32 %v910, %v1234
  %v1299 = vadd.f32 %v911, %v1235
  %v1300 = vadd.f32 %v912, %v1236
  %v1301 = vadd.f32 %v913, %v1237
  %v1302 = vadd.f32 %v914, %v1238
  %v1303 = vadd.f32 %v915, %v1239
  %v1304 = vadd.f32 %v916, %v1240
  %v1305 = vadd.f32 %v917, %v1241
  %v1306 = vadd.f32 %v918, %v1242
  %v1307 = vadd.f32 %v919, %v1243
  %v1308 = vadd.f32 %v920, %v1244
  %v1309 = vadd.f32 %v921, %v1245
  %v1310 = vadd.f32 %v922, %v1246
  %v1311 = vadd.f32 %v923, %v1247
  %v1312 = vadd.f32 %v924, %v1248
  %v1313 = vadd.f32 %v925, %v1249
  %1314 = vset.pattern.permute.xlu0 3
  %1315 = vperm.xlu0 %1314, %v14
  %v1316 = vpop.permute.xlu0 %1315
  %1318 = vset.pattern.permute.xlu0 3
  %1319 = vperm.xlu0 %1318, %v15
  %v1320 = vpop.permute.xlu0 %1319
  %1322 = vset.pattern.permute.xlu0 3
  %1323 = vperm.xlu0 %1322, %v16
  %v1324 = vpop.permute.xlu0 %1323
  %1326 = vset.pattern.permute.xlu0 3
  %1327 = vperm.xlu0 %1326, %v17
  %v1328 = vpop.permute.xlu0 %1327
  %1330 = vset.pattern.permute.xlu0 3
  %1331 = vperm.xlu0 %1330, %v18
  %v1332 = vpop.permute.xlu0 %1331
  %1334 = vset.pattern.permute.xlu0 3
  %1335 = vperm.xlu0 %1334, %v19
  %v1336 = vpop.permute.xlu0 %1335
  %1338 = vset.pattern.permute.xlu0 3
  %1339 = vperm.xlu0 %1338, %v20
  %v1340 = vpop.permute.xlu0 %1339
  %1342 = vset.pattern.permute.xlu0 3
  %1343 = vperm.xlu0 %1342, %v21
  %v1344 = vpop.permute.xlu0 %1343
  %1346 = vset.pattern.permute.xlu0 3
  %1347 = vperm.xlu0 %1346, %v22
  %v1348 = vpop.permute.xlu0 %1347
  %1350 = vset.pattern.permute.xlu0 3
  %1351 = vperm.xlu0 %1350, %v23
  %v1352 = vpop.permute.xlu0 %1351
  %1354 = vset.pattern.permute.xlu0 3
  %1355 = vperm.xlu0 %1354, %v24
  %v1356 = vpop.permute.xlu0 %1355
  %1358 = vset.pattern.permute.xlu0 3
  %1359 = vperm.xlu0 %1358, %v25
  %v1360 = vpop.permute.xlu0 %1359
  %1362 = vset.pattern.permute.xlu0 3
  %1363 = vperm.xlu0 %1362, %v26
  %v1364 = vpop.permute.xlu0 %1363
  %1366 = vset.pattern.permute.xlu0 3
  %1367 = vperm.xlu0 %1366, %v27
  %v1368 = vpop.permute.xlu0 %1367
  %1370 = vset.pattern.permute.xlu0 3
  %1371 = vperm.xlu0 %1370, %v28
  %v1372 = vpop.permute.xlu0 %1371
  %1374 = vset.pattern.permute.xlu0 3
  %1375 = vperm.xlu0 %1374, %v29
  %v1376 = vpop.permute.xlu0 %1375
  %1378 = vset.pattern.permute.xlu0 3
  %1379 = vperm.xlu0 %1378, %v30
  %v1380 = vpop.permute.xlu0 %1379
  %1382 = vset.pattern.permute.xlu0 3
  %1383 = vperm.xlu0 %1382, %v31
  %v1384 = vpop.permute.xlu0 %1383
  %1386 = vset.pattern.permute.xlu0 3
  %1387 = vperm.xlu0 %1386, %v32
  %v1388 = vpop.permute.xlu0 %1387
  %1390 = vset.pattern.permute.xlu0 3
  %1391 = vperm.xlu0 %1390, %v33
  %v1392 = vpop.permute.xlu0 %1391
  %1394 = vset.pattern.permute.xlu0 3
  %1395 = vperm.xlu0 %1394, %v34
  %v1396 = vpop.permute.xlu0 %1395
  %1398 = vset.pattern.permute.xlu0 3
  %1399 = vperm.xlu0 %1398, %v35
  %v1400 = vpop.permute.xlu0 %1399
  %1402 = vset.pattern.permute.xlu0 3
  %1403 = vperm.xlu0 %1402, %v36
  %v1404 = vpop.permute.xlu0 %1403
  %1406 = vset.pattern.permute.xlu0 3
  %1407 = vperm.xlu0 %1406, %v37
  %v1408 = vpop.permute.xlu0 %1407
  %1410 = vset.pattern.permute.xlu0 3
  %1411 = vperm.xlu0 %1410, %v38
  %v1412 = vpop.permute.xlu0 %1411
  %1414 = vset.pattern.permute.xlu0 3
  %1415 = vperm.xlu0 %1414, %v39
  %v1416 = vpop.permute.xlu0 %1415
  %1418 = vset.pattern.permute.xlu0 3
  %1419 = vperm.xlu0 %1418, %v40
  %v1420 = vpop.permute.xlu0 %1419
  %1422 = vset.pattern.permute.xlu0 3
  %1423 = vperm.xlu0 %1422, %v41
  %v1424 = vpop.permute.xlu0 %1423
  %1426 = vset.pattern.permute.xlu0 3
  %1427 = vperm.xlu0 %1426, %v42
  %v1428 = vpop.permute.xlu0 %1427
  %1430 = vset.pattern.permute.xlu0 3
  %1431 = vperm.xlu0 %1430, %v43
  %v1432 = vpop.permute.xlu0 %1431
  %1434 = vset.pattern.permute.xlu0 3
  %1435 = vperm.xlu0 %1434, %v44
  %v1436 = vpop.permute.xlu0 %1435
  %1438 = vset.pattern.permute.xlu0 3
  %1439 = vperm.xlu0 %1438, %v45
  %v1440 = vpop.permute.xlu0 %1439
  %1442 = vset.pattern.permute.xlu0 3
  %1443 = vperm.xlu0 %1442, %v46
  %v1444 = vpop.permute.xlu0 %1443
  %1446 = vset.pattern.permute.xlu0 3
  %1447 = vperm.xlu0 %1446, %v47
  %v1448 = vpop.permute.xlu0 %1447
  %1450 = vset.pattern.permute.xlu0 3
  %1451 = vperm.xlu0 %1450, %v48
  %v1452 = vpop.permute.xlu0 %1451
  %1454 = vset.pattern.permute.xlu0 3
  %1455 = vperm.xlu0 %1454, %v49
  %v1456 = vpop.permute.xlu0 %1455
  %1458 = vset.pattern.permute.xlu0 3
  %1459 = vperm.xlu0 %1458, %v50
  %v1460 = vpop.permute.xlu0 %1459
  %1462 = vset.pattern.permute.xlu0 3
  %1463 = vperm.xlu0 %1462, %v51
  %v1464 = vpop.permute.xlu0 %1463
  %1466 = vset.pattern.permute.xlu0 3
  %1467 = vperm.xlu0 %1466, %v52
  %v1468 = vpop.permute.xlu0 %1467
  %1470 = vset.pattern.permute.xlu0 3
  %1471 = vperm.xlu0 %1470, %v53
  %v1472 = vpop.permute.xlu0 %1471
  %1474 = vset.pattern.permute.xlu0 3
  %1475 = vperm.xlu0 %1474, %v54
  %v1476 = vpop.permute.xlu0 %1475
  %1478 = vset.pattern.permute.xlu0 3
  %1479 = vperm.xlu0 %1478, %v55
  %v1480 = vpop.permute.xlu0 %1479
  %1482 = vset.pattern.permute.xlu0 3
  %1483 = vperm.xlu0 %1482, %v56
  %v1484 = vpop.permute.xlu0 %1483
  %1486 = vset.pattern.permute.xlu0 3
  %1487 = vperm.xlu0 %1486, %v57
  %v1488 = vpop.permute.xlu0 %1487
  %1490 = vset.pattern.permute.xlu0 3
  %1491 = vperm.xlu0 %1490, %v58
  %v1492 = vpop.permute.xlu0 %1491
  %1494 = vset.pattern.permute.xlu0 3
  %1495 = vperm.xlu0 %1494, %v59
  %v1496 = vpop.permute.xlu0 %1495
  %1498 = vset.pattern.permute.xlu0 3
  %1499 = vperm.xlu0 %1498, %v60
  %v1500 = vpop.permute.xlu0 %1499
  %1502 = vset.pattern.permute.xlu0 3
  %1503 = vperm.xlu0 %1502, %v61
  %v1504 = vpop.permute.xlu0 %1503
  %1506 = vset.pattern.permute.xlu0 3
  %1507 = vperm.xlu0 %1506, %v62
  %v1508 = vpop.permute.xlu0 %1507
  %1510 = vset.pattern.permute.xlu0 3
  %1511 = vperm.xlu0 %1510, %v63
  %v1512 = vpop.permute.xlu0 %1511
  %1514 = vset.pattern.permute.xlu0 3
  %1515 = vperm.xlu0 %1514, %v64
  %v1516 = vpop.permute.xlu0 %1515
  %1518 = vset.pattern.permute.xlu0 3
  %1519 = vperm.xlu0 %1518, %v65
  %v1520 = vpop.permute.xlu0 %1519
  %1522 = vset.pattern.permute.xlu0 3
  %1523 = vperm.xlu0 %1522, %v66
  %v1524 = vpop.permute.xlu0 %1523
  %1526 = vset.pattern.permute.xlu0 3
  %1527 = vperm.xlu0 %1526, %v67
  %v1528 = vpop.permute.xlu0 %1527
  %1530 = vset.pattern.permute.xlu0 3
  %1531 = vperm.xlu0 %1530, %v68
  %v1532 = vpop.permute.xlu0 %1531
  %1534 = vset.pattern.permute.xlu0 3
  %1535 = vperm.xlu0 %1534, %v69
  %v1536 = vpop.permute.xlu0 %1535
  %1538 = vset.pattern.permute.xlu0 3
  %1539 = vperm.xlu0 %1538, %v70
  %v1540 = vpop.permute.xlu0 %1539
  %1542 = vset.pattern.permute.xlu0 3
  %1543 = vperm.xlu0 %1542, %v71
  %v1544 = vpop.permute.xlu0 %1543
  %1546 = vset.pattern.permute.xlu0 3
  %1547 = vperm.xlu0 %1546, %v72
  %v1548 = vpop.permute.xlu0 %1547
  %1550 = vset.pattern.permute.xlu0 3
  %1551 = vperm.xlu0 %1550, %v73
  %v1552 = vpop.permute.xlu0 %1551
  %1554 = vset.pattern.permute.xlu0 3
  %1555 = vperm.xlu0 %1554, %v74
  %v1556 = vpop.permute.xlu0 %1555
  %1558 = vset.pattern.permute.xlu0 3
  %1559 = vperm.xlu0 %1558, %v75
  %v1560 = vpop.permute.xlu0 %1559
  %1562 = vset.pattern.permute.xlu0 3
  %1563 = vperm.xlu0 %1562, %v76
  %v1564 = vpop.permute.xlu0 %1563
  %1566 = vset.pattern.permute.xlu0 3
  %1567 = vperm.xlu0 %1566, %v77
  %v1568 = vpop.permute.xlu0 %1567
  %v1570 = vmul.f32 %v1316, %v403
  %v1571 = vmul.f32 %v1320, %v403
  %v1572 = vmul.f32 %v1324, %v403
  %v1573 = vmul.f32 %v1328, %v403
  %v1574 = vmul.f32 %v1332, %v403
  %v1575 = vmul.f32 %v1336, %v403
  %v1576 = vmul.f32 %v1340, %v403
  %v1577 = vmul.f32 %v1344, %v403
  %v1578 = vmul.f32 %v1348, %v403
  %v1579 = vmul.f32 %v1352, %v403
  %v1580 = vmul.f32 %v1356, %v403
  %v1581 = vmul.f32 %v1360, %v403
  %v1582 = vmul.f32 %v1364, %v403
  %v1583 = vmul.f32 %v1368, %v403
  %v1584 = vmul.f32 %v1372, %v403
  %v1585 = vmul.f32 %v1376, %v403
  %v1586 = vmul.f32 %v1380, %v403
  %v1587 = vmul.f32 %v1384, %v403
  %v1588 = vmul.f32 %v1388, %v403
  %v1589 = vmul.f32 %v1392, %v403
  %v1590 = vmul.f32 %v1396, %v403
  %v1591 = vmul.f32 %v1400, %v403
  %v1592 = vmul.f32 %v1404, %v403
  %v1593 = vmul.f32 %v1408, %v403
  %v1594 = vmul.f32 %v1412, %v403
  %v1595 = vmul.f32 %v1416, %v403
  %v1596 = vmul.f32 %v1420, %v403
  %v1597 = vmul.f32 %v1424, %v403
  %v1598 = vmul.f32 %v1428, %v403
  %v1599 = vmul.f32 %v1432, %v403
  %v1600 = vmul.f32 %v1436, %v403
  %v1601 = vmul.f32 %v1440, %v403
  %v1602 = vmul.f32 %v1444, %v403
  %v1603 = vmul.f32 %v1448, %v403
  %v1604 = vmul.f32 %v1452, %v403
  %v1605 = vmul.f32 %v1456, %v403
  %v1606 = vmul.f32 %v1460, %v403
  %v1607 = vmul.f32 %v1464, %v403
  %v1608 = vmul.f32 %v1468, %v403
  %v1609 = vmul.f32 %v1472, %v403
  %v1610 = vmul.f32 %v1476, %v403
  %v1611 = vmul.f32 %v1480, %v403
  %v1612 = vmul.f32 %v1484, %v403
  %v1613 = vmul.f32 %v1488, %v403
  %v1614 = vmul.f32 %v1492, %v403
  %v1615 = vmul.f32 %v1496, %v403
  %v1616 = vmul.f32 %v1500, %v403
  %v1617 = vmul.f32 %v1504, %v403
  %v1618 = vmul.f32 %v1508, %v403
  %v1619 = vmul.f32 %v1512, %v403
  %v1620 = vmul.f32 %v1516, %v403
  %v1621 = vmul.f32 %v1520, %v403
  %v1622 = vmul.f32 %v1524, %v403
  %v1623 = vmul.f32 %v1528, %v403
  %v1624 = vmul.f32 %v1532, %v403
  %v1625 = vmul.f32 %v1536, %v403
  %v1626 = vmul.f32 %v1540, %v403
  %v1627 = vmul.f32 %v1544, %v403
  %v1628 = vmul.f32 %v1548, %v403
  %v1629 = vmul.f32 %v1552, %v403
  %v1630 = vmul.f32 %v1556, %v403
  %v1631 = vmul.f32 %v1560, %v403
  %v1632 = vmul.f32 %v1564, %v403
  %v1633 = vmul.f32 %v1568, %v403
  %v1634 = vadd.f32 %v472, %v1570
  %v1635 = vadd.f32 %v472, %v1571
  %v1636 = vadd.f32 %v472, %v1572
  %v1637 = vadd.f32 %v472, %v1573
  %v1638 = vadd.f32 %v472, %v1574
  %v1639 = vadd.f32 %v472, %v1575
  %v1640 = vadd.f32 %v472, %v1576
  %v1641 = vadd.f32 %v472, %v1577
  %v1642 = vadd.f32 %v472, %v1578
  %v1643 = vadd.f32 %v472, %v1579
  %v1644 = vadd.f32 %v472, %v1580
  %v1645 = vadd.f32 %v472, %v1581
  %v1646 = vadd.f32 %v472, %v1582
  %v1647 = vadd.f32 %v472, %v1583
  %v1648 = vadd.f32 %v472, %v1584
  %v1649 = vadd.f32 %v472, %v1585
  %v1650 = vadd.f32 %v472, %v1586
  %v1651 = vadd.f32 %v472, %v1587
  %v1652 = vadd.f32 %v472, %v1588
  %v1653 = vadd.f32 %v472, %v1589
  %v1654 = vadd.f32 %v472, %v1590
  %v1655 = vadd.f32 %v472, %v1591
  %v1656 = vadd.f32 %v472, %v1592
  %v1657 = vadd.f32 %v472, %v1593
  %v1658 = vadd.f32 %v472, %v1594
  %v1659 = vadd.f32 %v472, %v1595
  %v1660 = vadd.f32 %v472, %v1596
  %v1661 = vadd.f32 %v472, %v1597
  %v1662 = vadd.f32 %v472, %v1598
  %v1663 = vadd.f32 %v472, %v1599
  %v1664 = vadd.f32 %v472, %v1600
  %v1665 = vadd.f32 %v472, %v1601
  %v1666 = vadd.f32 %v472, %v1602
  %v1667 = vadd.f32 %v472, %v1603
  %v1668 = vadd.f32 %v472, %v1604
  %v1669 = vadd.f32 %v472, %v1605
  %v1670 = vadd.f32 %v472, %v1606
  %v1671 = vadd.f32 %v472, %v1607
  %v1672 = vadd.f32 %v472, %v1608
  %v1673 = vadd.f32 %v472, %v1609
  %v1674 = vadd.f32 %v472, %v1610
  %v1675 = vadd.f32 %v472, %v1611
  %v1676 = vadd.f32 %v472, %v1612
  %v1677 = vadd.f32 %v472, %v1613
  %v1678 = vadd.f32 %v472, %v1614
  %v1679 = vadd.f32 %v472, %v1615
  %v1680 = vadd.f32 %v472, %v1616
  %v1681 = vadd.f32 %v472, %v1617
  %v1682 = vadd.f32 %v472, %v1618
  %v1683 = vadd.f32 %v472, %v1619
  %v1684 = vadd.f32 %v472, %v1620
  %v1685 = vadd.f32 %v472, %v1621
  %v1686 = vadd.f32 %v472, %v1622
  %v1687 = vadd.f32 %v472, %v1623
  %v1688 = vadd.f32 %v472, %v1624
  %v1689 = vadd.f32 %v472, %v1625
  %v1690 = vadd.f32 %v472, %v1626
  %v1691 = vadd.f32 %v472, %v1627
  %v1692 = vadd.f32 %v472, %v1628
  %v1693 = vadd.f32 %v472, %v1629
  %v1694 = vadd.f32 %v472, %v1630
  %v1695 = vadd.f32 %v472, %v1631
  %v1696 = vadd.f32 %v472, %v1632
  %v1697 = vadd.f32 %v472, %v1633
  %1698 = vset.pattern.permute.xlu0 4
  %1699 = vperm.xlu0 %1698, %v14
  %v1700 = vpop.permute.xlu0 %1699
  %1702 = vset.pattern.permute.xlu0 4
  %1703 = vperm.xlu0 %1702, %v15
  %v1704 = vpop.permute.xlu0 %1703
  %1706 = vset.pattern.permute.xlu0 4
  %1707 = vperm.xlu0 %1706, %v16
  %v1708 = vpop.permute.xlu0 %1707
  %1710 = vset.pattern.permute.xlu0 4
  %1711 = vperm.xlu0 %1710, %v17
  %v1712 = vpop.permute.xlu0 %1711
  %1714 = vset.pattern.permute.xlu0 4
  %1715 = vperm.xlu0 %1714, %v18
  %v1716 = vpop.permute.xlu0 %1715
  %1718 = vset.pattern.permute.xlu0 4
  %1719 = vperm.xlu0 %1718, %v19
  %v1720 = vpop.permute.xlu0 %1719
  %1722 = vset.pattern.permute.xlu0 4
  %1723 = vperm.xlu0 %1722, %v20
  %v1724 = vpop.permute.xlu0 %1723
  %1726 = vset.pattern.permute.xlu0 4
  %1727 = vperm.xlu0 %1726, %v21
  %v1728 = vpop.permute.xlu0 %1727
  %1730 = vset.pattern.permute.xlu0 4
  %1731 = vperm.xlu0 %1730, %v22
  %v1732 = vpop.permute.xlu0 %1731
  %1734 = vset.pattern.permute.xlu0 4
  %1735 = vperm.xlu0 %1734, %v23
  %v1736 = vpop.permute.xlu0 %1735
  %1738 = vset.pattern.permute.xlu0 4
  %1739 = vperm.xlu0 %1738, %v24
  %v1740 = vpop.permute.xlu0 %1739
  %1742 = vset.pattern.permute.xlu0 4
  %1743 = vperm.xlu0 %1742, %v25
  %v1744 = vpop.permute.xlu0 %1743
  %1746 = vset.pattern.permute.xlu0 4
  %1747 = vperm.xlu0 %1746, %v26
  %v1748 = vpop.permute.xlu0 %1747
  %1750 = vset.pattern.permute.xlu0 4
  %1751 = vperm.xlu0 %1750, %v27
  %v1752 = vpop.permute.xlu0 %1751
  %1754 = vset.pattern.permute.xlu0 4
  %1755 = vperm.xlu0 %1754, %v28
  %v1756 = vpop.permute.xlu0 %1755
  %1758 = vset.pattern.permute.xlu0 4
  %1759 = vperm.xlu0 %1758, %v29
  %v1760 = vpop.permute.xlu0 %1759
  %1762 = vset.pattern.permute.xlu0 4
  %1763 = vperm.xlu0 %1762, %v30
  %v1764 = vpop.permute.xlu0 %1763
  %1766 = vset.pattern.permute.xlu0 4
  %1767 = vperm.xlu0 %1766, %v31
  %v1768 = vpop.permute.xlu0 %1767
  %1770 = vset.pattern.permute.xlu0 4
  %1771 = vperm.xlu0 %1770, %v32
  %v1772 = vpop.permute.xlu0 %1771
  %1774 = vset.pattern.permute.xlu0 4
  %1775 = vperm.xlu0 %1774, %v33
  %v1776 = vpop.permute.xlu0 %1775
  %1778 = vset.pattern.permute.xlu0 4
  %1779 = vperm.xlu0 %1778, %v34
  %v1780 = vpop.permute.xlu0 %1779
  %1782 = vset.pattern.permute.xlu0 4
  %1783 = vperm.xlu0 %1782, %v35
  %v1784 = vpop.permute.xlu0 %1783
  %1786 = vset.pattern.permute.xlu0 4
  %1787 = vperm.xlu0 %1786, %v36
  %v1788 = vpop.permute.xlu0 %1787
  %1790 = vset.pattern.permute.xlu0 4
  %1791 = vperm.xlu0 %1790, %v37
  %v1792 = vpop.permute.xlu0 %1791
  %1794 = vset.pattern.permute.xlu0 4
  %1795 = vperm.xlu0 %1794, %v38
  %v1796 = vpop.permute.xlu0 %1795
  %1798 = vset.pattern.permute.xlu0 4
  %1799 = vperm.xlu0 %1798, %v39
  %v1800 = vpop.permute.xlu0 %1799
  %1802 = vset.pattern.permute.xlu0 4
  %1803 = vperm.xlu0 %1802, %v40
  %v1804 = vpop.permute.xlu0 %1803
  %1806 = vset.pattern.permute.xlu0 4
  %1807 = vperm.xlu0 %1806, %v41
  %v1808 = vpop.permute.xlu0 %1807
  %1810 = vset.pattern.permute.xlu0 4
  %1811 = vperm.xlu0 %1810, %v42
  %v1812 = vpop.permute.xlu0 %1811
  %1814 = vset.pattern.permute.xlu0 4
  %1815 = vperm.xlu0 %1814, %v43
  %v1816 = vpop.permute.xlu0 %1815
  %1818 = vset.pattern.permute.xlu0 4
  %1819 = vperm.xlu0 %1818, %v44
  %v1820 = vpop.permute.xlu0 %1819
  %1822 = vset.pattern.permute.xlu0 4
  %1823 = vperm.xlu0 %1822, %v45
  %v1824 = vpop.permute.xlu0 %1823
  %1826 = vset.pattern.permute.xlu0 4
  %1827 = vperm.xlu0 %1826, %v46
  %v1828 = vpop.permute.xlu0 %1827
  %1830 = vset.pattern.permute.xlu0 4
  %1831 = vperm.xlu0 %1830, %v47
  %v1832 = vpop.permute.xlu0 %1831
  %1834 = vset.pattern.permute.xlu0 4
  %1835 = vperm.xlu0 %1834, %v48
  %v1836 = vpop.permute.xlu0 %1835
  %1838 = vset.pattern.permute.xlu0 4
  %1839 = vperm.xlu0 %1838, %v49
  %v1840 = vpop.permute.xlu0 %1839
  %1842 = vset.pattern.permute.xlu0 4
  %1843 = vperm.xlu0 %1842, %v50
  %v1844 = vpop.permute.xlu0 %1843
  %1846 = vset.pattern.permute.xlu0 4
  %1847 = vperm.xlu0 %1846, %v51
  %v1848 = vpop.permute.xlu0 %1847
  %1850 = vset.pattern.permute.xlu0 4
  %1851 = vperm.xlu0 %1850, %v52
  %v1852 = vpop.permute.xlu0 %1851
  %1854 = vset.pattern.permute.xlu0 4
  %1855 = vperm.xlu0 %1854, %v53
  %v1856 = vpop.permute.xlu0 %1855
  %1858 = vset.pattern.permute.xlu0 4
  %1859 = vperm.xlu0 %1858, %v54
  %v1860 = vpop.permute.xlu0 %1859
  %1862 = vset.pattern.permute.xlu0 4
  %1863 = vperm.xlu0 %1862, %v55
  %v1864 = vpop.permute.xlu0 %1863
  %1866 = vset.pattern.permute.xlu0 4
  %1867 = vperm.xlu0 %1866, %v56
  %v1868 = vpop.permute.xlu0 %1867
  %1870 = vset.pattern.permute.xlu0 4
  %1871 = vperm.xlu0 %1870, %v57
  %v1872 = vpop.permute.xlu0 %1871
  %1874 = vset.pattern.permute.xlu0 4
  %1875 = vperm.xlu0 %1874, %v58
  %v1876 = vpop.permute.xlu0 %1875
  %1878 = vset.pattern.permute.xlu0 4
  %1879 = vperm.xlu0 %1878, %v59
  %v1880 = vpop.permute.xlu0 %1879
  %1882 = vset.pattern.permute.xlu0 4
  %1883 = vperm.xlu0 %1882, %v60
  %v1884 = vpop.permute.xlu0 %1883
  %1886 = vset.pattern.permute.xlu0 4
  %1887 = vperm.xlu0 %1886, %v61
  %v1888 = vpop.permute.xlu0 %1887
  %1890 = vset.pattern.permute.xlu0 4
  %1891 = vperm.xlu0 %1890, %v62
  %v1892 = vpop.permute.xlu0 %1891
  %1894 = vset.pattern.permute.xlu0 4
  %1895 = vperm.xlu0 %1894, %v63
  %v1896 = vpop.permute.xlu0 %1895
  %1898 = vset.pattern.permute.xlu0 4
  %1899 = vperm.xlu0 %1898, %v64
  %v1900 = vpop.permute.xlu0 %1899
  %1902 = vset.pattern.permute.xlu0 4
  %1903 = vperm.xlu0 %1902, %v65
  %v1904 = vpop.permute.xlu0 %1903
  %1906 = vset.pattern.permute.xlu0 4
  %1907 = vperm.xlu0 %1906, %v66
  %v1908 = vpop.permute.xlu0 %1907
  %1910 = vset.pattern.permute.xlu0 4
  %1911 = vperm.xlu0 %1910, %v67
  %v1912 = vpop.permute.xlu0 %1911
  %1914 = vset.pattern.permute.xlu0 4
  %1915 = vperm.xlu0 %1914, %v68
  %v1916 = vpop.permute.xlu0 %1915
  %1918 = vset.pattern.permute.xlu0 4
  %1919 = vperm.xlu0 %1918, %v69
  %v1920 = vpop.permute.xlu0 %1919
  %1922 = vset.pattern.permute.xlu0 4
  %1923 = vperm.xlu0 %1922, %v70
  %v1924 = vpop.permute.xlu0 %1923
  %1926 = vset.pattern.permute.xlu0 4
  %1927 = vperm.xlu0 %1926, %v71
  %v1928 = vpop.permute.xlu0 %1927
  %1930 = vset.pattern.permute.xlu0 4
  %1931 = vperm.xlu0 %1930, %v72
  %v1932 = vpop.permute.xlu0 %1931
  %1934 = vset.pattern.permute.xlu0 4
  %1935 = vperm.xlu0 %1934, %v73
  %v1936 = vpop.permute.xlu0 %1935
  %1938 = vset.pattern.permute.xlu0 4
  %1939 = vperm.xlu0 %1938, %v74
  %v1940 = vpop.permute.xlu0 %1939
  %1942 = vset.pattern.permute.xlu0 4
  %1943 = vperm.xlu0 %1942, %v75
  %v1944 = vpop.permute.xlu0 %1943
  %1946 = vset.pattern.permute.xlu0 4
  %1947 = vperm.xlu0 %1946, %v76
  %v1948 = vpop.permute.xlu0 %1947
  %1950 = vset.pattern.permute.xlu0 4
  %1951 = vperm.xlu0 %1950, %v77
  %v1952 = vpop.permute.xlu0 %1951
  %v1954 = vmul.f32 %v1700, %v797
  %v1955 = vmul.f32 %v1704, %v797
  %v1956 = vmul.f32 %v1708, %v797
  %v1957 = vmul.f32 %v1712, %v797
  %v1958 = vmul.f32 %v1716, %v797
  %v1959 = vmul.f32 %v1720, %v797
  %v1960 = vmul.f32 %v1724, %v797
  %v1961 = vmul.f32 %v1728, %v797
  %v1962 = vmul.f32 %v1732, %v797
  %v1963 = vmul.f32 %v1736, %v797
  %v1964 = vmul.f32 %v1740, %v797
  %v1965 = vmul.f32 %v1744, %v797
  %v1966 = vmul.f32 %v1748, %v797
  %v1967 = vmul.f32 %v1752, %v797
  %v1968 = vmul.f32 %v1756, %v797
  %v1969 = vmul.f32 %v1760, %v797
  %v1970 = vmul.f32 %v1764, %v797
  %v1971 = vmul.f32 %v1768, %v797
  %v1972 = vmul.f32 %v1772, %v797
  %v1973 = vmul.f32 %v1776, %v797
  %v1974 = vmul.f32 %v1780, %v797
  %v1975 = vmul.f32 %v1784, %v797
  %v1976 = vmul.f32 %v1788, %v797
  %v1977 = vmul.f32 %v1792, %v797
  %v1978 = vmul.f32 %v1796, %v797
  %v1979 = vmul.f32 %v1800, %v797
  %v1980 = vmul.f32 %v1804, %v797
  %v1981 = vmul.f32 %v1808, %v797
  %v1982 = vmul.f32 %v1812, %v797
  %v1983 = vmul.f32 %v1816, %v797
  %v1984 = vmul.f32 %v1820, %v797
  %v1985 = vmul.f32 %v1824, %v797
  %v1986 = vmul.f32 %v1828, %v797
  %v1987 = vmul.f32 %v1832, %v797
  %v1988 = vmul.f32 %v1836, %v797
  %v1989 = vmul.f32 %v1840, %v797
  %v1990 = vmul.f32 %v1844, %v797
  %v1991 = vmul.f32 %v1848, %v797
  %v1992 = vmul.f32 %v1852, %v797
  %v1993 = vmul.f32 %v1856, %v797
  %v1994 = vmul.f32 %v1860, %v797
  %v1995 = vmul.f32 %v1864, %v797
  %v1996 = vmul.f32 %v1868, %v797
  %v1997 = vmul.f32 %v1872, %v797
  %v1998 = vmul.f32 %v1876, %v797
  %v1999 = vmul.f32 %v1880, %v797
  %v2000 = vmul.f32 %v1884, %v797
  %v2001 = vmul.f32 %v1888, %v797
  %v2002 = vmul.f32 %v1892, %v797
  %v2003 = vmul.f32 %v1896, %v797
  %v2004 = vmul.f32 %v1900, %v797
  %v2005 = vmul.f32 %v1904, %v797
  %v2006 = vmul.f32 %v1908, %v797
  %v2007 = vmul.f32 %v1912, %v797
  %v2008 = vmul.f32 %v1916, %v797
  %v2009 = vmul.f32 %v1920, %v797
  %v2010 = vmul.f32 %v1924, %v797
  %v2011 = vmul.f32 %v1928, %v797
  %v2012 = vmul.f32 %v1932, %v797
  %v2013 = vmul.f32 %v1936, %v797
  %v2014 = vmul.f32 %v1940, %v797
  %v2015 = vmul.f32 %v1944, %v797
  %v2016 = vmul.f32 %v1948, %v797
  %v2017 = vmul.f32 %v1952, %v797
  %v2018 = vadd.f32 %v1634, %v1954
  %v2019 = vadd.f32 %v1635, %v1955
  %v2020 = vadd.f32 %v1636, %v1956
  %v2021 = vadd.f32 %v1637, %v1957
  %v2022 = vadd.f32 %v1638, %v1958
  %v2023 = vadd.f32 %v1639, %v1959
  %v2024 = vadd.f32 %v1640, %v1960
  %v2025 = vadd.f32 %v1641, %v1961
  %v2026 = vadd.f32 %v1642, %v1962
  %v2027 = vadd.f32 %v1643, %v1963
  %v2028 = vadd.f32 %v1644, %v1964
  %v2029 = vadd.f32 %v1645, %v1965
  %v2030 = vadd.f32 %v1646, %v1966
  %v2031 = vadd.f32 %v1647, %v1967
  %v2032 = vadd.f32 %v1648, %v1968
  %v2033 = vadd.f32 %v1649, %v1969
  %v2034 = vadd.f32 %v1650, %v1970
  %v2035 = vadd.f32 %v1651, %v1971
  %v2036 = vadd.f32 %v1652, %v1972
  %v2037 = vadd.f32 %v1653, %v1973
  %v2038 = vadd.f32 %v1654, %v1974
  %v2039 = vadd.f32 %v1655, %v1975
  %v2040 = vadd.f32 %v1656, %v1976
  %v2041 = vadd.f32 %v1657, %v1977
  %v2042 = vadd.f32 %v1658, %v1978
  %v2043 = vadd.f32 %v1659, %v1979
  %v2044 = vadd.f32 %v1660, %v1980
  %v2045 = vadd.f32 %v1661, %v1981
  %v2046 = vadd.f32 %v1662, %v1982
  %v2047 = vadd.f32 %v1663, %v1983
  %v2048 = vadd.f32 %v1664, %v1984
  %v2049 = vadd.f32 %v1665, %v1985
  %v2050 = vadd.f32 %v1666, %v1986
  %v2051 = vadd.f32 %v1667, %v1987
  %v2052 = vadd.f32 %v1668, %v1988
  %v2053 = vadd.f32 %v1669, %v1989
  %v2054 = vadd.f32 %v1670, %v1990
  %v2055 = vadd.f32 %v1671, %v1991
  %v2056 = vadd.f32 %v1672, %v1992
  %v2057 = vadd.f32 %v1673, %v1993
  %v2058 = vadd.f32 %v1674, %v1994
  %v2059 = vadd.f32 %v1675, %v1995
  %v2060 = vadd.f32 %v1676, %v1996
  %v2061 = vadd.f32 %v1677, %v1997
  %v2062 = vadd.f32 %v1678, %v1998
  %v2063 = vadd.f32 %v1679, %v1999
  %v2064 = vadd.f32 %v1680, %v2000
  %v2065 = vadd.f32 %v1681, %v2001
  %v2066 = vadd.f32 %v1682, %v2002
  %v2067 = vadd.f32 %v1683, %v2003
  %v2068 = vadd.f32 %v1684, %v2004
  %v2069 = vadd.f32 %v1685, %v2005
  %v2070 = vadd.f32 %v1686, %v2006
  %v2071 = vadd.f32 %v1687, %v2007
  %v2072 = vadd.f32 %v1688, %v2008
  %v2073 = vadd.f32 %v1689, %v2009
  %v2074 = vadd.f32 %v1690, %v2010
  %v2075 = vadd.f32 %v1691, %v2011
  %v2076 = vadd.f32 %v1692, %v2012
  %v2077 = vadd.f32 %v1693, %v2013
  %v2078 = vadd.f32 %v1694, %v2014
  %v2079 = vadd.f32 %v1695, %v2015
  %v2080 = vadd.f32 %v1696, %v2016
  %v2081 = vadd.f32 %v1697, %v2017
  %2082 = vset.pattern.permute.xlu0 5
  %2083 = vperm.xlu0 %2082, %v14
  %v2084 = vpop.permute.xlu0 %2083
  %2086 = vset.pattern.permute.xlu0 5
  %2087 = vperm.xlu0 %2086, %v15
  %v2088 = vpop.permute.xlu0 %2087
  %2090 = vset.pattern.permute.xlu0 5
  %2091 = vperm.xlu0 %2090, %v16
  %v2092 = vpop.permute.xlu0 %2091
  %2094 = vset.pattern.permute.xlu0 5
  %2095 = vperm.xlu0 %2094, %v17
  %v2096 = vpop.permute.xlu0 %2095
  %2098 = vset.pattern.permute.xlu0 5
  %2099 = vperm.xlu0 %2098, %v18
  %v2100 = vpop.permute.xlu0 %2099
  %2102 = vset.pattern.permute.xlu0 5
  %2103 = vperm.xlu0 %2102, %v19
  %v2104 = vpop.permute.xlu0 %2103
  %2106 = vset.pattern.permute.xlu0 5
  %2107 = vperm.xlu0 %2106, %v20
  %v2108 = vpop.permute.xlu0 %2107
  %2110 = vset.pattern.permute.xlu0 5
  %2111 = vperm.xlu0 %2110, %v21
  %v2112 = vpop.permute.xlu0 %2111
  %2114 = vset.pattern.permute.xlu0 5
  %2115 = vperm.xlu0 %2114, %v22
  %v2116 = vpop.permute.xlu0 %2115
  %2118 = vset.pattern.permute.xlu0 5
  %2119 = vperm.xlu0 %2118, %v23
  %v2120 = vpop.permute.xlu0 %2119
  %2122 = vset.pattern.permute.xlu0 5
  %2123 = vperm.xlu0 %2122, %v24
  %v2124 = vpop.permute.xlu0 %2123
  %2126 = vset.pattern.permute.xlu0 5
  %2127 = vperm.xlu0 %2126, %v25
  %v2128 = vpop.permute.xlu0 %2127
  %2130 = vset.pattern.permute.xlu0 5
  %2131 = vperm.xlu0 %2130, %v26
  %v2132 = vpop.permute.xlu0 %2131
  %2134 = vset.pattern.permute.xlu0 5
  %2135 = vperm.xlu0 %2134, %v27
  %v2136 = vpop.permute.xlu0 %2135
  %2138 = vset.pattern.permute.xlu0 5
  %2139 = vperm.xlu0 %2138, %v28
  %v2140 = vpop.permute.xlu0 %2139
  %2142 = vset.pattern.permute.xlu0 5
  %2143 = vperm.xlu0 %2142, %v29
  %v2144 = vpop.permute.xlu0 %2143
  %2146 = vset.pattern.permute.xlu0 5
  %2147 = vperm.xlu0 %2146, %v30
  %v2148 = vpop.permute.xlu0 %2147
  %2150 = vset.pattern.permute.xlu0 5
  %2151 = vperm.xlu0 %2150, %v31
  %v2152 = vpop.permute.xlu0 %2151
  %2154 = vset.pattern.permute.xlu0 5
  %2155 = vperm.xlu0 %2154, %v32
  %v2156 = vpop.permute.xlu0 %2155
  %2158 = vset.pattern.permute.xlu0 5
  %2159 = vperm.xlu0 %2158, %v33
  %v2160 = vpop.permute.xlu0 %2159
  %2162 = vset.pattern.permute.xlu0 5
  %2163 = vperm.xlu0 %2162, %v34
  %v2164 = vpop.permute.xlu0 %2163
  %2166 = vset.pattern.permute.xlu0 5
  %2167 = vperm.xlu0 %2166, %v35
  %v2168 = vpop.permute.xlu0 %2167
  %2170 = vset.pattern.permute.xlu0 5
  %2171 = vperm.xlu0 %2170, %v36
  %v2172 = vpop.permute.xlu0 %2171
  %2174 = vset.pattern.permute.xlu0 5
  %2175 = vperm.xlu0 %2174, %v37
  %v2176 = vpop.permute.xlu0 %2175
  %2178 = vset.pattern.permute.xlu0 5
  %2179 = vperm.xlu0 %2178, %v38
  %v2180 = vpop.permute.xlu0 %2179
  %2182 = vset.pattern.permute.xlu0 5
  %2183 = vperm.xlu0 %2182, %v39
  %v2184 = vpop.permute.xlu0 %2183
  %2186 = vset.pattern.permute.xlu0 5
  %2187 = vperm.xlu0 %2186, %v40
  %v2188 = vpop.permute.xlu0 %2187
  %2190 = vset.pattern.permute.xlu0 5
  %2191 = vperm.xlu0 %2190, %v41
  %v2192 = vpop.permute.xlu0 %2191
  %2194 = vset.pattern.permute.xlu0 5
  %2195 = vperm.xlu0 %2194, %v42
  %v2196 = vpop.permute.xlu0 %2195
  %2198 = vset.pattern.permute.xlu0 5
  %2199 = vperm.xlu0 %2198, %v43
  %v2200 = vpop.permute.xlu0 %2199
  %2202 = vset.pattern.permute.xlu0 5
  %2203 = vperm.xlu0 %2202, %v44
  %v2204 = vpop.permute.xlu0 %2203
  %2206 = vset.pattern.permute.xlu0 5
  %2207 = vperm.xlu0 %2206, %v45
  %v2208 = vpop.permute.xlu0 %2207
  %2210 = vset.pattern.permute.xlu0 5
  %2211 = vperm.xlu0 %2210, %v46
  %v2212 = vpop.permute.xlu0 %2211
  %2214 = vset.pattern.permute.xlu0 5
  %2215 = vperm.xlu0 %2214, %v47
  %v2216 = vpop.permute.xlu0 %2215
  %2218 = vset.pattern.permute.xlu0 5
  %2219 = vperm.xlu0 %2218, %v48
  %v2220 = vpop.permute.xlu0 %2219
  %2222 = vset.pattern.permute.xlu0 5
  %2223 = vperm.xlu0 %2222, %v49
  %v2224 = vpop.permute.xlu0 %2223
  %2226 = vset.pattern.permute.xlu0 5
  %2227 = vperm.xlu0 %2226, %v50
  %v2228 = vpop.permute.xlu0 %2227
  %2230 = vset.pattern.permute.xlu0 5
  %2231 = vperm.xlu0 %2230, %v51
  %v2232 = vpop.permute.xlu0 %2231
  %2234 = vset.pattern.permute.xlu0 5
  %2235 = vperm.xlu0 %2234, %v52
  %v2236 = vpop.permute.xlu0 %2235
  %2238 = vset.pattern.permute.xlu0 5
  %2239 = vperm.xlu0 %2238, %v53
  %v2240 = vpop.permute.xlu0 %2239
  %2242 = vset.pattern.permute.xlu0 5
  %2243 = vperm.xlu0 %2242, %v54
  %v2244 = vpop.permute.xlu0 %2243
  %2246 = vset.pattern.permute.xlu0 5
  %2247 = vperm.xlu0 %2246, %v55
  %v2248 = vpop.permute.xlu0 %2247
  %2250 = vset.pattern.permute.xlu0 5
  %2251 = vperm.xlu0 %2250, %v56
  %v2252 = vpop.permute.xlu0 %2251
  %2254 = vset.pattern.permute.xlu0 5
  %2255 = vperm.xlu0 %2254, %v57
  %v2256 = vpop.permute.xlu0 %2255
  %2258 = vset.pattern.permute.xlu0 5
  %2259 = vperm.xlu0 %2258, %v58
  %v2260 = vpop.permute.xlu0 %2259
  %2262 = vset.pattern.permute.xlu0 5
  %2263 = vperm.xlu0 %2262, %v59
  %v2264 = vpop.permute.xlu0 %2263
  %2266 = vset.pattern.permute.xlu0 5
  %2267 = vperm.xlu0 %2266, %v60
  %v2268 = vpop.permute.xlu0 %2267
  %2270 = vset.pattern.permute.xlu0 5
  %2271 = vperm.xlu0 %2270, %v61
  %v2272 = vpop.permute.xlu0 %2271
  %2274 = vset.pattern.permute.xlu0 5
  %2275 = vperm.xlu0 %2274, %v62
  %v2276 = vpop.permute.xlu0 %2275
  %2278 = vset.pattern.permute.xlu0 5
  %2279 = vperm.xlu0 %2278, %v63
  %v2280 = vpop.permute.xlu0 %2279
  %2282 = vset.pattern.permute.xlu0 5
  %2283 = vperm.xlu0 %2282, %v64
  %v2284 = vpop.permute.xlu0 %2283
  %2286 = vset.pattern.permute.xlu0 5
  %2287 = vperm.xlu0 %2286, %v65
  %v2288 = vpop.permute.xlu0 %2287
  %2290 = vset.pattern.permute.xlu0 5
  %2291 = vperm.xlu0 %2290, %v66
  %v2292 = vpop.permute.xlu0 %2291
  %2294 = vset.pattern.permute.xlu0 5
  %2295 = vperm.xlu0 %2294, %v67
  %v2296 = vpop.permute.xlu0 %2295
  %2298 = vset.pattern.permute.xlu0 5
  %2299 = vperm.xlu0 %2298, %v68
  %v2300 = vpop.permute.xlu0 %2299
  %2302 = vset.pattern.permute.xlu0 5
  %2303 = vperm.xlu0 %2302, %v69
  %v2304 = vpop.permute.xlu0 %2303
  %2306 = vset.pattern.permute.xlu0 5
  %2307 = vperm.xlu0 %2306, %v70
  %v2308 = vpop.permute.xlu0 %2307
  %2310 = vset.pattern.permute.xlu0 5
  %2311 = vperm.xlu0 %2310, %v71
  %v2312 = vpop.permute.xlu0 %2311
  %2314 = vset.pattern.permute.xlu0 5
  %2315 = vperm.xlu0 %2314, %v72
  %v2316 = vpop.permute.xlu0 %2315
  %2318 = vset.pattern.permute.xlu0 5
  %2319 = vperm.xlu0 %2318, %v73
  %v2320 = vpop.permute.xlu0 %2319
  %2322 = vset.pattern.permute.xlu0 5
  %2323 = vperm.xlu0 %2322, %v74
  %v2324 = vpop.permute.xlu0 %2323
  %2326 = vset.pattern.permute.xlu0 5
  %2327 = vperm.xlu0 %2326, %v75
  %v2328 = vpop.permute.xlu0 %2327
  %2330 = vset.pattern.permute.xlu0 5
  %2331 = vperm.xlu0 %2330, %v76
  %v2332 = vpop.permute.xlu0 %2331
  %2334 = vset.pattern.permute.xlu0 5
  %2335 = vperm.xlu0 %2334, %v77
  %v2336 = vpop.permute.xlu0 %2335
  %v2338 = vmul.f32 %v2084, %v1185
  %v2339 = vmul.f32 %v2088, %v1185
  %v2340 = vmul.f32 %v2092, %v1185
  %v2341 = vmul.f32 %v2096, %v1185
  %v2342 = vmul.f32 %v2100, %v1185
  %v2343 = vmul.f32 %v2104, %v1185
  %v2344 = vmul.f32 %v2108, %v1185
  %v2345 = vmul.f32 %v2112, %v1185
  %v2346 = vmul.f32 %v2116, %v1185
  %v2347 = vmul.f32 %v2120, %v1185
  %v2348 = vmul.f32 %v2124, %v1185
  %v2349 = vmul.f32 %v2128, %v1185
  %v2350 = vmul.f32 %v2132, %v1185
  %v2351 = vmul.f32 %v2136, %v1185
  %v2352 = vmul.f32 %v2140, %v1185
  %v2353 = vmul.f32 %v2144, %v1185
  %v2354 = vmul.f32 %v2148, %v1185
  %v2355 = vmul.f32 %v2152, %v1185
  %v2356 = vmul.f32 %v2156, %v1185
  %v2357 = vmul.f32 %v2160, %v1185
  %v2358 = vmul.f32 %v2164, %v1185
  %v2359 = vmul.f32 %v2168, %v1185
  %v2360 = vmul.f32 %v2172, %v1185
  %v2361 = vmul.f32 %v2176, %v1185
  %v2362 = vmul.f32 %v2180, %v1185
  %v2363 = vmul.f32 %v2184, %v1185
  %v2364 = vmul.f32 %v2188, %v1185
  %v2365 = vmul.f32 %v2192, %v1185
  %v2366 = vmul.f32 %v2196, %v1185
  %v2367 = vmul.f32 %v2200, %v1185
  %v2368 = vmul.f32 %v2204, %v1185
  %v2369 = vmul.f32 %v2208, %v1185
  %v2370 = vmul.f32 %v2212, %v1185
  %v2371 = vmul.f32 %v2216, %v1185
  %v2372 = vmul.f32 %v2220, %v1185
  %v2373 = vmul.f32 %v2224, %v1185
  %v2374 = vmul.f32 %v2228, %v1185
  %v2375 = vmul.f32 %v2232, %v1185
  %v2376 = vmul.f32 %v2236, %v1185
  %v2377 = vmul.f32 %v2240, %v1185
  %v2378 = vmul.f32 %v2244, %v1185
  %v2379 = vmul.f32 %v2248, %v1185
  %v2380 = vmul.f32 %v2252, %v1185
  %v2381 = vmul.f32 %v2256, %v1185
  %v2382 = vmul.f32 %v2260, %v1185
  %v2383 = vmul.f32 %v2264, %v1185
  %v2384 = vmul.f32 %v2268, %v1185
  %v2385 = vmul.f32 %v2272, %v1185
  %v2386 = vmul.f32 %v2276, %v1185
  %v2387 = vmul.f32 %v2280, %v1185
  %v2388 = vmul.f32 %v2284, %v1185
  %v2389 = vmul.f32 %v2288, %v1185
  %v2390 = vmul.f32 %v2292, %v1185
  %v2391 = vmul.f32 %v2296, %v1185
  %v2392 = vmul.f32 %v2300, %v1185
  %v2393 = vmul.f32 %v2304, %v1185
  %v2394 = vmul.f32 %v2308, %v1185
  %v2395 = vmul.f32 %v2312, %v1185
  %v2396 = vmul.f32 %v2316, %v1185
  %v2397 = vmul.f32 %v2320, %v1185
  %v2398 = vmul.f32 %v2324, %v1185
  %v2399 = vmul.f32 %v2328, %v1185
  %v2400 = vmul.f32 %v2332, %v1185
  %v2401 = vmul.f32 %v2336, %v1185
  %v2402 = vadd.f32 %v2018, %v2338
  %v2403 = vadd.f32 %v2019, %v2339
  %v2404 = vadd.f32 %v2020, %v2340
  %v2405 = vadd.f32 %v2021, %v2341
  %v2406 = vadd.f32 %v2022, %v2342
  %v2407 = vadd.f32 %v2023, %v2343
  %v2408 = vadd.f32 %v2024, %v2344
  %v2409 = vadd.f32 %v2025, %v2345
  %v2410 = vadd.f32 %v2026, %v2346
  %v2411 = vadd.f32 %v2027, %v2347
  %v2412 = vadd.f32 %v2028, %v2348
  %v2413 = vadd.f32 %v2029, %v2349
  %v2414 = vadd.f32 %v2030, %v2350
  %v2415 = vadd.f32 %v2031, %v2351
  %v2416 = vadd.f32 %v2032, %v2352
  %v2417 = vadd.f32 %v2033, %v2353
  %v2418 = vadd.f32 %v2034, %v2354
  %v2419 = vadd.f32 %v2035, %v2355
  %v2420 = vadd.f32 %v2036, %v2356
  %v2421 = vadd.f32 %v2037, %v2357
  %v2422 = vadd.f32 %v2038, %v2358
  %v2423 = vadd.f32 %v2039, %v2359
  %v2424 = vadd.f32 %v2040, %v2360
  %v2425 = vadd.f32 %v2041, %v2361
  %v2426 = vadd.f32 %v2042, %v2362
  %v2427 = vadd.f32 %v2043, %v2363
  %v2428 = vadd.f32 %v2044, %v2364
  %v2429 = vadd.f32 %v2045, %v2365
  %v2430 = vadd.f32 %v2046, %v2366
  %v2431 = vadd.f32 %v2047, %v2367
  %v2432 = vadd.f32 %v2048, %v2368
  %v2433 = vadd.f32 %v2049, %v2369
  %v2434 = vadd.f32 %v2050, %v2370
  %v2435 = vadd.f32 %v2051, %v2371
  %v2436 = vadd.f32 %v2052, %v2372
  %v2437 = vadd.f32 %v2053, %v2373
  %v2438 = vadd.f32 %v2054, %v2374
  %v2439 = vadd.f32 %v2055, %v2375
  %v2440 = vadd.f32 %v2056, %v2376
  %v2441 = vadd.f32 %v2057, %v2377
  %v2442 = vadd.f32 %v2058, %v2378
  %v2443 = vadd.f32 %v2059, %v2379
  %v2444 = vadd.f32 %v2060, %v2380
  %v2445 = vadd.f32 %v2061, %v2381
  %v2446 = vadd.f32 %v2062, %v2382
  %v2447 = vadd.f32 %v2063, %v2383
  %v2448 = vadd.f32 %v2064, %v2384
  %v2449 = vadd.f32 %v2065, %v2385
  %v2450 = vadd.f32 %v2066, %v2386
  %v2451 = vadd.f32 %v2067, %v2387
  %v2452 = vadd.f32 %v2068, %v2388
  %v2453 = vadd.f32 %v2069, %v2389
  %v2454 = vadd.f32 %v2070, %v2390
  %v2455 = vadd.f32 %v2071, %v2391
  %v2456 = vadd.f32 %v2072, %v2392
  %v2457 = vadd.f32 %v2073, %v2393
  %v2458 = vadd.f32 %v2074, %v2394
  %v2459 = vadd.f32 %v2075, %v2395
  %v2460 = vadd.f32 %v2076, %v2396
  %v2461 = vadd.f32 %v2077, %v2397
  %v2462 = vadd.f32 %v2078, %v2398
  %v2463 = vadd.f32 %v2079, %v2399
  %v2464 = vadd.f32 %v2080, %v2400
  %v2465 = vadd.f32 %v2081, %v2401
  %2530 = vrot.lane.b32.xlu0 %v2402, 64
  %v2531 = vpop.permute.xlu0 %2530
  %2532 = vrot.lane.b32.xlu0 %v2403, 64
  %v2533 = vpop.permute.xlu0 %2532
  %2534 = vrot.lane.b32.xlu0 %v2404, 64
  %v2535 = vpop.permute.xlu0 %2534
  %2536 = vrot.lane.b32.xlu0 %v2405, 64
  %v2537 = vpop.permute.xlu0 %2536
  %2538 = vrot.lane.b32.xlu0 %v2406, 64
  %v2539 = vpop.permute.xlu0 %2538
  %2540 = vrot.lane.b32.xlu0 %v2407, 64
  %v2541 = vpop.permute.xlu0 %2540
  %2542 = vrot.lane.b32.xlu0 %v2408, 64
  %v2543 = vpop.permute.xlu0 %2542
  %2544 = vrot.lane.b32.xlu0 %v2409, 64
  %v2545 = vpop.permute.xlu0 %2544
  %2546 = vrot.lane.b32.xlu0 %v2410, 64
  %v2547 = vpop.permute.xlu0 %2546
  %2548 = vrot.lane.b32.xlu0 %v2411, 64
  %v2549 = vpop.permute.xlu0 %2548
  %2550 = vrot.lane.b32.xlu0 %v2412, 64
  %v2551 = vpop.permute.xlu0 %2550
  %2552 = vrot.lane.b32.xlu0 %v2413, 64
  %v2553 = vpop.permute.xlu0 %2552
  %2554 = vrot.lane.b32.xlu0 %v2414, 64
  %v2555 = vpop.permute.xlu0 %2554
  %2556 = vrot.lane.b32.xlu0 %v2415, 64
  %v2557 = vpop.permute.xlu0 %2556
  %2558 = vrot.lane.b32.xlu0 %v2416, 64
  %v2559 = vpop.permute.xlu0 %2558
  %2560 = vrot.lane.b32.xlu0 %v2417, 64
  %v2561 = vpop.permute.xlu0 %2560
  %2562 = vrot.lane.b32.xlu0 %v2418, 64
  %v2563 = vpop.permute.xlu0 %2562
  %2564 = vrot.lane.b32.xlu0 %v2419, 64
  %v2565 = vpop.permute.xlu0 %2564
  %2566 = vrot.lane.b32.xlu0 %v2420, 64
  %v2567 = vpop.permute.xlu0 %2566
  %2568 = vrot.lane.b32.xlu0 %v2421, 64
  %v2569 = vpop.permute.xlu0 %2568
  %2570 = vrot.lane.b32.xlu0 %v2422, 64
  %v2571 = vpop.permute.xlu0 %2570
  %2572 = vrot.lane.b32.xlu0 %v2423, 64
  %v2573 = vpop.permute.xlu0 %2572
  %2574 = vrot.lane.b32.xlu0 %v2424, 64
  %v2575 = vpop.permute.xlu0 %2574
  %2576 = vrot.lane.b32.xlu0 %v2425, 64
  %v2577 = vpop.permute.xlu0 %2576
  %2578 = vrot.lane.b32.xlu0 %v2426, 64
  %v2579 = vpop.permute.xlu0 %2578
  %2580 = vrot.lane.b32.xlu0 %v2427, 64
  %v2581 = vpop.permute.xlu0 %2580
  %2582 = vrot.lane.b32.xlu0 %v2428, 64
  %v2583 = vpop.permute.xlu0 %2582
  %2584 = vrot.lane.b32.xlu0 %v2429, 64
  %v2585 = vpop.permute.xlu0 %2584
  %2586 = vrot.lane.b32.xlu0 %v2430, 64
  %v2587 = vpop.permute.xlu0 %2586
  %2588 = vrot.lane.b32.xlu0 %v2431, 64
  %v2589 = vpop.permute.xlu0 %2588
  %2590 = vrot.lane.b32.xlu0 %v2432, 64
  %v2591 = vpop.permute.xlu0 %2590
  %2592 = vrot.lane.b32.xlu0 %v2433, 64
  %v2593 = vpop.permute.xlu0 %2592
  %2594 = vrot.lane.b32.xlu0 %v2434, 64
  %v2595 = vpop.permute.xlu0 %2594
  %2596 = vrot.lane.b32.xlu0 %v2435, 64
  %v2597 = vpop.permute.xlu0 %2596
  %2598 = vrot.lane.b32.xlu0 %v2436, 64
  %v2599 = vpop.permute.xlu0 %2598
  %2600 = vrot.lane.b32.xlu0 %v2437, 64
  %v2601 = vpop.permute.xlu0 %2600
  %2602 = vrot.lane.b32.xlu0 %v2438, 64
  %v2603 = vpop.permute.xlu0 %2602
  %2604 = vrot.lane.b32.xlu0 %v2439, 64
  %v2605 = vpop.permute.xlu0 %2604
  %2606 = vrot.lane.b32.xlu0 %v2440, 64
  %v2607 = vpop.permute.xlu0 %2606
  %2608 = vrot.lane.b32.xlu0 %v2441, 64
  %v2609 = vpop.permute.xlu0 %2608
  %2610 = vrot.lane.b32.xlu0 %v2442, 64
  %v2611 = vpop.permute.xlu0 %2610
  %2612 = vrot.lane.b32.xlu0 %v2443, 64
  %v2613 = vpop.permute.xlu0 %2612
  %2614 = vrot.lane.b32.xlu0 %v2444, 64
  %v2615 = vpop.permute.xlu0 %2614
  %2616 = vrot.lane.b32.xlu0 %v2445, 64
  %v2617 = vpop.permute.xlu0 %2616
  %2618 = vrot.lane.b32.xlu0 %v2446, 64
  %v2619 = vpop.permute.xlu0 %2618
  %2620 = vrot.lane.b32.xlu0 %v2447, 64
  %v2621 = vpop.permute.xlu0 %2620
  %2622 = vrot.lane.b32.xlu0 %v2448, 64
  %v2623 = vpop.permute.xlu0 %2622
  %2624 = vrot.lane.b32.xlu0 %v2449, 64
  %v2625 = vpop.permute.xlu0 %2624
  %2626 = vrot.lane.b32.xlu0 %v2450, 64
  %v2627 = vpop.permute.xlu0 %2626
  %2628 = vrot.lane.b32.xlu0 %v2451, 64
  %v2629 = vpop.permute.xlu0 %2628
  %2630 = vrot.lane.b32.xlu0 %v2452, 64
  %v2631 = vpop.permute.xlu0 %2630
  %2632 = vrot.lane.b32.xlu0 %v2453, 64
  %v2633 = vpop.permute.xlu0 %2632
  %2634 = vrot.lane.b32.xlu0 %v2454, 64
  %v2635 = vpop.permute.xlu0 %2634
  %2636 = vrot.lane.b32.xlu0 %v2455, 64
  %v2637 = vpop.permute.xlu0 %2636
  %2638 = vrot.lane.b32.xlu0 %v2456, 64
  %v2639 = vpop.permute.xlu0 %2638
  %2640 = vrot.lane.b32.xlu0 %v2457, 64
  %v2641 = vpop.permute.xlu0 %2640
  %2642 = vrot.lane.b32.xlu0 %v2458, 64
  %v2643 = vpop.permute.xlu0 %2642
  %2644 = vrot.lane.b32.xlu0 %v2459, 64
  %v2645 = vpop.permute.xlu0 %2644
  %2646 = vrot.lane.b32.xlu0 %v2460, 64
  %v2647 = vpop.permute.xlu0 %2646
  %2648 = vrot.lane.b32.xlu0 %v2461, 64
  %v2649 = vpop.permute.xlu0 %2648
  %2650 = vrot.lane.b32.xlu0 %v2462, 64
  %v2651 = vpop.permute.xlu0 %2650
  %2652 = vrot.lane.b32.xlu0 %v2463, 64
  %v2653 = vpop.permute.xlu0 %2652
  %2654 = vrot.lane.b32.xlu0 %v2464, 64
  %v2655 = vpop.permute.xlu0 %2654
  %2656 = vrot.lane.b32.xlu0 %v2465, 64
  %v2657 = vpop.permute.xlu0 %2656
  %vm2722 = vcmask 523264
  %v2723 = vsel %vm2722, %v1250, %v2531
  %v2724 = vsel %vm2722, %v1251, %v2533
  %v2725 = vsel %vm2722, %v1252, %v2535
  %v2726 = vsel %vm2722, %v1253, %v2537
  %v2727 = vsel %vm2722, %v1254, %v2539
  %v2728 = vsel %vm2722, %v1255, %v2541
  %v2729 = vsel %vm2722, %v1256, %v2543
  %v2730 = vsel %vm2722, %v1257, %v2545
  %v2731 = vsel %vm2722, %v1258, %v2547
  %v2732 = vsel %vm2722, %v1259, %v2549
  %v2733 = vsel %vm2722, %v1260, %v2551
  %v2734 = vsel %vm2722, %v1261, %v2553
  %v2735 = vsel %vm2722, %v1262, %v2555
  %v2736 = vsel %vm2722, %v1263, %v2557
  %v2737 = vsel %vm2722, %v1264, %v2559
  %v2738 = vsel %vm2722, %v1265, %v2561
  %v2739 = vsel %vm2722, %v1266, %v2563
  %v2740 = vsel %vm2722, %v1267, %v2565
  %v2741 = vsel %vm2722, %v1268, %v2567
  %v2742 = vsel %vm2722, %v1269, %v2569
  %v2743 = vsel %vm2722, %v1270, %v2571
  %v2744 = vsel %vm2722, %v1271, %v2573
  %v2745 = vsel %vm2722, %v1272, %v2575
  %v2746 = vsel %vm2722, %v1273, %v2577
  %v2747 = vsel %vm2722, %v1274, %v2579
  %v2748 = vsel %vm2722, %v1275, %v2581
  %v2749 = vsel %vm2722, %v1276, %v2583
  %v2750 = vsel %vm2722, %v1277, %v2585
  %v2751 = vsel %vm2722, %v1278, %v2587
  %v2752 = vsel %vm2722, %v1279, %v2589
  %v2753 = vsel %vm2722, %v1280, %v2591
  %v2754 = vsel %vm2722, %v1281, %v2593
  %v2755 = vsel %vm2722, %v1282, %v2595
  %v2756 = vsel %vm2722, %v1283, %v2597
  %v2757 = vsel %vm2722, %v1284, %v2599
  %v2758 = vsel %vm2722, %v1285, %v2601
  %v2759 = vsel %vm2722, %v1286, %v2603
  %v2760 = vsel %vm2722, %v1287, %v2605
  %v2761 = vsel %vm2722, %v1288, %v2607
  %v2762 = vsel %vm2722, %v1289, %v2609
  %v2763 = vsel %vm2722, %v1290, %v2611
  %v2764 = vsel %vm2722, %v1291, %v2613
  %v2765 = vsel %vm2722, %v1292, %v2615
  %v2766 = vsel %vm2722, %v1293, %v2617
  %v2767 = vsel %vm2722, %v1294, %v2619
  %v2768 = vsel %vm2722, %v1295, %v2621
  %v2769 = vsel %vm2722, %v1296, %v2623
  %v2770 = vsel %vm2722, %v1297, %v2625
  %v2771 = vsel %vm2722, %v1298, %v2627
  %v2772 = vsel %vm2722, %v1299, %v2629
  %v2773 = vsel %vm2722, %v1300, %v2631
  %v2774 = vsel %vm2722, %v1301, %v2633
  %v2775 = vsel %vm2722, %v1302, %v2635
  %v2776 = vsel %vm2722, %v1303, %v2637
  %v2777 = vsel %vm2722, %v1304, %v2639
  %v2778 = vsel %vm2722, %v1305, %v2641
  %v2779 = vsel %vm2722, %v1306, %v2643
  %v2780 = vsel %vm2722, %v1307, %v2645
  %v2781 = vsel %vm2722, %v1308, %v2647
  %v2782 = vsel %vm2722, %v1309, %v2649
  %v2783 = vsel %vm2722, %v1310, %v2651
  %v2784 = vsel %vm2722, %v1311, %v2653
  %v2785 = vsel %vm2722, %v1312, %v2655
  %v2786 = vsel %vm2722, %v1313, %v2657
  %v2787 = vand.u32 2147483647, %v2723
  %vm2788 = vcmp.le.f32.partialorder %v2787, 0.7853982
  %vm2789 = vcmp.lt.s32.totalorder %v2723, 0
  %v2790 = vand.u32 %v2723, 2139095040
  %v2791 = vshrl.u32 %v2790, 23
  %v2792 = vsub.s32 %v2791, 127
  %v2793 = vand.u32 2147483647, %v2723
  %v2794 = vand.u32 %v2793, 8388607
  %v2795 = vor.u32 %v2794, 8388608
  %v2796 = vsub.s32 0, %v2795
  %v2797 = vadd.s32 %v2792, 1
  %vm2798 = vcmp.gt.s32.totalorder %v2797, 0
  %v2799 = vsel %vm2798, %v2797, 0
  %v2800 = vshrl.u32 %v2799, 5
  %v2801 = vand.u32 %v2799, 31
  %v2802 = vsub.s32 32, %v2801
  %v2803 = vshrl.u32 683565275, %v2802
  %v2804 = vshll.u32 683565275, %v2801
  %v2805 = vshrl.u32 2475754826, %v2802
  %v2806 = vor.u32 %v2804, %v2805
  %v2807 = vshll.u32 2475754826, %v2801
  %v2808 = vshrl.u32 2131351028, %v2802
  %v2809 = vor.u32 %v2807, %v2808
  %v2810 = vshll.u32 2131351028, %v2801
  %v2811 = vshrl.u32 2102212464, %v2802
  %v2812 = vor.u32 %v2810, %v2811
  %v2813 = vshll.u32 2102212464, %v2801
  %v2814 = vshrl.u32 920167782, %v2802
  %v2815 = vor.u32 %v2813, %v2814
  %v2816 = vshll.u32 920167782, %v2801
  %v2817 = vshrl.u32 1326507024, %v2802
  %v2818 = vor.u32 %v2816, %v2817
  %vm2819 = vcmp.lt.s32.totalorder %v2800, 1
  %vm2820 = vcmp.lt.s32.totalorder %v2800, 2
  %vm2821 = vcmp.lt.s32.totalorder %v2800, 3
  %vm2822 = vcmp.lt.s32.totalorder %v2800, 4
  %v2823 = vsel %vm2819, %v2803, %v2806
  %v2824 = vsel %vm2822, %v2812, 2102212464
  %v2825 = vsel %vm2821, %v2809, %v2824
  %v2826 = vsel %vm2820, %v2823, %v2825
  %v2827 = vsel %vm2819, %v2806, %v2809
  %v2828 = vsel %vm2822, %v2815, 920167782
  %v2829 = vsel %vm2821, %v2812, %v2828
  %v2830 = vsel %vm2820, %v2827, %v2829
  %v2831 = vsel %vm2819, %v2809, %v2812
  %v2832 = vsel %vm2822, %v2818, 1326507024
  %v2833 = vsel %vm2821, %v2815, %v2832
  %v2834 = vsel %vm2820, %v2831, %v2833
  %v2835 = vshll.u32 %v2795, 8
  %v2836 = vmul.u32.u64.compose %v2835, %v2834
  %v2837 = vextract.low.u32 %v2836
  %v2838 = vextract.high.u32 %v2836
  %v2839 = vmul.u32.u64.compose %v2835, %v2830
  %v2840 = vextract.low.u32 %v2839
  %v2841 = vextract.high.u32 %v2839
  %v2842 = vmul.u32 %v2835, %v2826
  %v2843 = vadd.s32 %v2838, %v2840
  %vm2844 = vc.u32 %v2838, %v2840
  %v2845 = vadd.s32 %v2841, 1
  %v2846 = vsel %vm2844, %v2845, %v2841
  %v2847 = vadd.s32 %v2842, %v2846
  %v2848 = vadd.s32 %v2847, 536870912
  %v2849 = vshrl.u32 %v2848, 30
  %v2850 = vshll.u32 %v2849, 30
  %v2851 = vsub.s32 %v2847, %v2850
  %vm2852 = vcmp.lt.s32.totalorder %v2851, 0
  %v2853 = vsub.s32 0, %v2851
  %v2854 = vsel %vm2852, %v2853, %v2851
  %v2855 = vclz %v2854
  %v2856 = vsub.s32 %v2855, 2
  %vm2857 = vcmp.gt.s32.totalorder 0, %v2856
  %v2858 = vsel %vm2857, 0, %v2856
  %v2859 = vsub.s32 32, %v2858
  %v2860 = vshll.u32 %v2851, %v2858
  %v2861 = vshrl.u32 %v2843, %v2859
  %v2862 = vor.u32 %v2860, %v2861
  %v2863 = vsub.s32 4294967266, %v2858
  %v2864 = vadd.s32 %v2863, 127
  %v2865 = vshll.u32 %v2864, 23
  %v2866 = vor.u32 4788187, %v2865
  %v2867 = vand.u32 2147483647, %v2866
  %v2869 = vcvt.s32.f32 %v2862
  %v2870 = vmul.f32 %v2869, %v2867
  %v2871 = vxor.u32 %v2870, 2147483648
  %v2872 = vsel %vm2789, %v2871, %v2870
  %v2873 = vsub.s32 4, %v2849
  %v2874 = vsel %vm2789, %v2873, %v2849
  %v2875 = vsel %vm2788, %v2723, %v2872
  %v2876 = vsel %vm2788, 0, %v2874
  %v2877 = vcosq.f32.pop %v2875
  %v2878 = vsinq.f32.pop %v2875
  %vm2879 = vweird.f32 %v2723
  %v2880 = vadd.s32 %v2876, 3
  %v2881 = vand.u32 %v2880, 3
  %vm2882 = vcmp.lt.s32.totalorder %v2881, 2
  %vm2883 = vcmp.eq.s32.totalorder %v2881, 0
  %v2884 = vxor.u32 %v2878, 2147483648
  %v2885 = vsel %vm2883, %v2877, %v2884
  %vm2886 = vcmp.eq.s32.totalorder %v2881, 2
  %v2887 = vxor.u32 %v2877, 2147483648
  %v2888 = vsel %vm2886, %v2887, %v2878
  %v2889 = vsel %vm2882, %v2885, %v2888
  %v2890 = vsel %vm2879, nan, %v2889
  %v2891 = vand.u32 2147483647, %v2724
  %vm2892 = vcmp.le.f32.partialorder %v2891, 0.7853982
  %vm2893 = vcmp.lt.s32.totalorder %v2724, 0
  %v2894 = vand.u32 %v2724, 2139095040
  %v2895 = vshrl.u32 %v2894, 23
  %v2896 = vsub.s32 %v2895, 127
  %v2897 = vand.u32 2147483647, %v2724
  %v2898 = vand.u32 %v2897, 8388607
  %v2899 = vor.u32 %v2898, 8388608
  %v2900 = vsub.s32 0, %v2899
  %v2901 = vadd.s32 %v2896, 1
  %vm2902 = vcmp.gt.s32.totalorder %v2901, 0
  %v2903 = vsel %vm2902, %v2901, 0
  %v2904 = vshrl.u32 %v2903, 5
  %v2905 = vand.u32 %v2903, 31
  %v2906 = vsub.s32 32, %v2905
  %v2907 = vshrl.u32 683565275, %v2906
  %v2908 = vshll.u32 683565275, %v2905
  %v2909 = vshrl.u32 2475754826, %v2906
  %v2910 = vor.u32 %v2908, %v2909
  %v2911 = vshll.u32 2475754826, %v2905
  %v2912 = vshrl.u32 2131351028, %v2906
  %v2913 = vor.u32 %v2911, %v2912
  %v2914 = vshll.u32 2131351028, %v2905
  %v2915 = vshrl.u32 2102212464, %v2906
  %v2916 = vor.u32 %v2914, %v2915
  %v2917 = vshll.u32 2102212464, %v2905
  %v2918 = vshrl.u32 920167782, %v2906
  %v2919 = vor.u32 %v2917, %v2918
  %v2920 = vshll.u32 920167782, %v2905
  %v2921 = vshrl.u32 1326507024, %v2906
  %v2922 = vor.u32 %v2920, %v2921
  %vm2923 = vcmp.lt.s32.totalorder %v2904, 1
  %vm2924 = vcmp.lt.s32.totalorder %v2904, 2
  %vm2925 = vcmp.lt.s32.totalorder %v2904, 3
  %vm2926 = vcmp.lt.s32.totalorder %v2904, 4
  %v2927 = vsel %vm2923, %v2907, %v2910
  %v2928 = vsel %vm2926, %v2916, 2102212464
  %v2929 = vsel %vm2925, %v2913, %v2928
  %v2930 = vsel %vm2924, %v2927, %v2929
  %v2931 = vsel %vm2923, %v2910, %v2913
  %v2932 = vsel %vm2926, %v2919, 920167782
  %v2933 = vsel %vm2925, %v2916, %v2932
  %v2934 = vsel %vm2924, %v2931, %v2933
  %v2935 = vsel %vm2923, %v2913, %v2916
  %v2936 = vsel %vm2926, %v2922, 1326507024
  %v2937 = vsel %vm2925, %v2919, %v2936
  %v2938 = vsel %vm2924, %v2935, %v2937
  %v2939 = vshll.u32 %v2899, 8
  %v2940 = vmul.u32.u64.compose %v2939, %v2938
  %v2941 = vextract.low.u32 %v2940
  %v2942 = vextract.high.u32 %v2940
  %v2943 = vmul.u32.u64.compose %v2939, %v2934
  %v2944 = vextract.low.u32 %v2943
  %v2945 = vextract.high.u32 %v2943
  %v2946 = vmul.u32 %v2939, %v2930
  %v2947 = vadd.s32 %v2942, %v2944
  %vm2948 = vc.u32 %v2942, %v2944
  %v2949 = vadd.s32 %v2945, 1
  %v2950 = vsel %vm2948, %v2949, %v2945
  %v2951 = vadd.s32 %v2946, %v2950
  %v2952 = vadd.s32 %v2951, 536870912
  %v2953 = vshrl.u32 %v2952, 30
  %v2954 = vshll.u32 %v2953, 30
  %v2955 = vsub.s32 %v2951, %v2954
  %vm2956 = vcmp.lt.s32.totalorder %v2955, 0
  %v2957 = vsub.s32 0, %v2955
  %v2958 = vsel %vm2956, %v2957, %v2955
  %v2959 = vclz %v2958
  %v2960 = vsub.s32 %v2959, 2
  %vm2961 = vcmp.gt.s32.totalorder 0, %v2960
  %v2962 = vsel %vm2961, 0, %v2960
  %v2963 = vsub.s32 32, %v2962
  %v2964 = vshll.u32 %v2955, %v2962
  %v2965 = vshrl.u32 %v2947, %v2963
  %v2966 = vor.u32 %v2964, %v2965
  %v2967 = vsub.s32 4294967266, %v2962
  %v2968 = vadd.s32 %v2967, 127
  %v2969 = vshll.u32 %v2968, 23
  %v2970 = vor.u32 4788187, %v2969
  %v2971 = vand.u32 2147483647, %v2970
  %v2973 = vcvt.s32.f32 %v2966
  %v2974 = vmul.f32 %v2973, %v2971
  %v2975 = vxor.u32 %v2974, 2147483648
  %v2976 = vsel %vm2893, %v2975, %v2974
  %v2977 = vsub.s32 4, %v2953
  %v2978 = vsel %vm2893, %v2977, %v2953
  %v2979 = vsel %vm2892, %v2724, %v2976
  %v2980 = vsel %vm2892, 0, %v2978
  %v2981 = vcosq.f32.pop %v2979
  %v2982 = vsinq.f32.pop %v2979
  %vm2983 = vweird.f32 %v2724
  %v2984 = vadd.s32 %v2980, 3
  %v2985 = vand.u32 %v2984, 3
  %vm2986 = vcmp.lt.s32.totalorder %v2985, 2
  %vm2987 = vcmp.eq.s32.totalorder %v2985, 0
  %v2988 = vxor.u32 %v2982, 2147483648
  %v2989 = vsel %vm2987, %v2981, %v2988
  %vm2990 = vcmp.eq.s32.totalorder %v2985, 2
  %v2991 = vxor.u32 %v2981, 2147483648
  %v2992 = vsel %vm2990, %v2991, %v2982
  %v2993 = vsel %vm2986, %v2989, %v2992
  %v2994 = vsel %vm2983, nan, %v2993
  %v2995 = vand.u32 2147483647, %v2725
  %vm2996 = vcmp.le.f32.partialorder %v2995, 0.7853982
  %vm2997 = vcmp.lt.s32.totalorder %v2725, 0
  %v2998 = vand.u32 %v2725, 2139095040
  %v2999 = vshrl.u32 %v2998, 23
  %v3000 = vsub.s32 %v2999, 127
  %v3001 = vand.u32 2147483647, %v2725
  %v3002 = vand.u32 %v3001, 8388607
  %v3003 = vor.u32 %v3002, 8388608
  %v3004 = vsub.s32 0, %v3003
  %v3005 = vadd.s32 %v3000, 1
  %vm3006 = vcmp.gt.s32.totalorder %v3005, 0
  %v3007 = vsel %vm3006, %v3005, 0
  %v3008 = vshrl.u32 %v3007, 5
  %v3009 = vand.u32 %v3007, 31
  %v3010 = vsub.s32 32, %v3009
  %v3011 = vshrl.u32 683565275, %v3010
  %v3012 = vshll.u32 683565275, %v3009
  %v3013 = vshrl.u32 2475754826, %v3010
  %v3014 = vor.u32 %v3012, %v3013
  %v3015 = vshll.u32 2475754826, %v3009
  %v3016 = vshrl.u32 2131351028, %v3010
  %v3017 = vor.u32 %v3015, %v3016
  %v3018 = vshll.u32 2131351028, %v3009
  %v3019 = vshrl.u32 2102212464, %v3010
  %v3020 = vor.u32 %v3018, %v3019
  %v3021 = vshll.u32 2102212464, %v3009
  %v3022 = vshrl.u32 920167782, %v3010
  %v3023 = vor.u32 %v3021, %v3022
  %v3024 = vshll.u32 920167782, %v3009
  %v3025 = vshrl.u32 1326507024, %v3010
  %v3026 = vor.u32 %v3024, %v3025
  %vm3027 = vcmp.lt.s32.totalorder %v3008, 1
  %vm3028 = vcmp.lt.s32.totalorder %v3008, 2
  %vm3029 = vcmp.lt.s32.totalorder %v3008, 3
  %vm3030 = vcmp.lt.s32.totalorder %v3008, 4
  %v3031 = vsel %vm3027, %v3011, %v3014
  %v3032 = vsel %vm3030, %v3020, 2102212464
  %v3033 = vsel %vm3029, %v3017, %v3032
  %v3034 = vsel %vm3028, %v3031, %v3033
  %v3035 = vsel %vm3027, %v3014, %v3017
  %v3036 = vsel %vm3030, %v3023, 920167782
  %v3037 = vsel %vm3029, %v3020, %v3036
  %v3038 = vsel %vm3028, %v3035, %v3037
  %v3039 = vsel %vm3027, %v3017, %v3020
  %v3040 = vsel %vm3030, %v3026, 1326507024
  %v3041 = vsel %vm3029, %v3023, %v3040
  %v3042 = vsel %vm3028, %v3039, %v3041
  %v3043 = vshll.u32 %v3003, 8
  %v3044 = vmul.u32.u64.compose %v3043, %v3042
  %v3045 = vextract.low.u32 %v3044
  %v3046 = vextract.high.u32 %v3044
  %v3047 = vmul.u32.u64.compose %v3043, %v3038
  %v3048 = vextract.low.u32 %v3047
  %v3049 = vextract.high.u32 %v3047
  %v3050 = vmul.u32 %v3043, %v3034
  %v3051 = vadd.s32 %v3046, %v3048
  %vm3052 = vc.u32 %v3046, %v3048
  %v3053 = vadd.s32 %v3049, 1
  %v3054 = vsel %vm3052, %v3053, %v3049
  %v3055 = vadd.s32 %v3050, %v3054
  %v3056 = vadd.s32 %v3055, 536870912
  %v3057 = vshrl.u32 %v3056, 30
  %v3058 = vshll.u32 %v3057, 30
  %v3059 = vsub.s32 %v3055, %v3058
  %vm3060 = vcmp.lt.s32.totalorder %v3059, 0
  %v3061 = vsub.s32 0, %v3059
  %v3062 = vsel %vm3060, %v3061, %v3059
  %v3063 = vclz %v3062
  %v3064 = vsub.s32 %v3063, 2
  %vm3065 = vcmp.gt.s32.totalorder 0, %v3064
  %v3066 = vsel %vm3065, 0, %v3064
  %v3067 = vsub.s32 32, %v3066
  %v3068 = vshll.u32 %v3059, %v3066
  %v3069 = vshrl.u32 %v3051, %v3067
  %v3070 = vor.u32 %v3068, %v3069
  %v3071 = vsub.s32 4294967266, %v3066
  %v3072 = vadd.s32 %v3071, 127
  %v3073 = vshll.u32 %v3072, 23
  %v3074 = vor.u32 4788187, %v3073
  %v3075 = vand.u32 2147483647, %v3074
  %v3077 = vcvt.s32.f32 %v3070
  %v3078 = vmul.f32 %v3077, %v3075
  %v3079 = vxor.u32 %v3078, 2147483648
  %v3080 = vsel %vm2997, %v3079, %v3078
  %v3081 = vsub.s32 4, %v3057
  %v3082 = vsel %vm2997, %v3081, %v3057
  %v3083 = vsel %vm2996, %v2725, %v3080
  %v3084 = vsel %vm2996, 0, %v3082
  %v3085 = vcosq.f32.pop %v3083
  %v3086 = vsinq.f32.pop %v3083
  %vm3087 = vweird.f32 %v2725
  %v3088 = vadd.s32 %v3084, 3
  %v3089 = vand.u32 %v3088, 3
  %vm3090 = vcmp.lt.s32.totalorder %v3089, 2
  %vm3091 = vcmp.eq.s32.totalorder %v3089, 0
  %v3092 = vxor.u32 %v3086, 2147483648
  %v3093 = vsel %vm3091, %v3085, %v3092
  %vm3094 = vcmp.eq.s32.totalorder %v3089, 2
  %v3095 = vxor.u32 %v3085, 2147483648
  %v3096 = vsel %vm3094, %v3095, %v3086
  %v3097 = vsel %vm3090, %v3093, %v3096
  %v3098 = vsel %vm3087, nan, %v3097
  %v3099 = vand.u32 2147483647, %v2726
  %vm3100 = vcmp.le.f32.partialorder %v3099, 0.7853982
  %vm3101 = vcmp.lt.s32.totalorder %v2726, 0
  %v3102 = vand.u32 %v2726, 2139095040
  %v3103 = vshrl.u32 %v3102, 23
  %v3104 = vsub.s32 %v3103, 127
  %v3105 = vand.u32 2147483647, %v2726
  %v3106 = vand.u32 %v3105, 8388607
  %v3107 = vor.u32 %v3106, 8388608
  %v3108 = vsub.s32 0, %v3107
  %v3109 = vadd.s32 %v3104, 1
  %vm3110 = vcmp.gt.s32.totalorder %v3109, 0
  %v3111 = vsel %vm3110, %v3109, 0
  %v3112 = vshrl.u32 %v3111, 5
  %v3113 = vand.u32 %v3111, 31
  %v3114 = vsub.s32 32, %v3113
  %v3115 = vshrl.u32 683565275, %v3114
  %v3116 = vshll.u32 683565275, %v3113
  %v3117 = vshrl.u32 2475754826, %v3114
  %v3118 = vor.u32 %v3116, %v3117
  %v3119 = vshll.u32 2475754826, %v3113
  %v3120 = vshrl.u32 2131351028, %v3114
  %v3121 = vor.u32 %v3119, %v3120
  %v3122 = vshll.u32 2131351028, %v3113
  %v3123 = vshrl.u32 2102212464, %v3114
  %v3124 = vor.u32 %v3122, %v3123
  %v3125 = vshll.u32 2102212464, %v3113
  %v3126 = vshrl.u32 920167782, %v3114
  %v3127 = vor.u32 %v3125, %v3126
  %v3128 = vshll.u32 920167782, %v3113
  %v3129 = vshrl.u32 1326507024, %v3114
  %v3130 = vor.u32 %v3128, %v3129
  %vm3131 = vcmp.lt.s32.totalorder %v3112, 1
  %vm3132 = vcmp.lt.s32.totalorder %v3112, 2
  %vm3133 = vcmp.lt.s32.totalorder %v3112, 3
  %vm3134 = vcmp.lt.s32.totalorder %v3112, 4
  %v3135 = vsel %vm3131, %v3115, %v3118
  %v3136 = vsel %vm3134, %v3124, 2102212464
  %v3137 = vsel %vm3133, %v3121, %v3136
  %v3138 = vsel %vm3132, %v3135, %v3137
  %v3139 = vsel %vm3131, %v3118, %v3121
  %v3140 = vsel %vm3134, %v3127, 920167782
  %v3141 = vsel %vm3133, %v3124, %v3140
  %v3142 = vsel %vm3132, %v3139, %v3141
  %v3143 = vsel %vm3131, %v3121, %v3124
  %v3144 = vsel %vm3134, %v3130, 1326507024
  %v3145 = vsel %vm3133, %v3127, %v3144
  %v3146 = vsel %vm3132, %v3143, %v3145
  %v3147 = vshll.u32 %v3107, 8
  %v3148 = vmul.u32.u64.compose %v3147, %v3146
  %v3149 = vextract.low.u32 %v3148
  %v3150 = vextract.high.u32 %v3148
  %v3151 = vmul.u32.u64.compose %v3147, %v3142
  %v3152 = vextract.low.u32 %v3151
  %v3153 = vextract.high.u32 %v3151
  %v3154 = vmul.u32 %v3147, %v3138
  %v3155 = vadd.s32 %v3150, %v3152
  %vm3156 = vc.u32 %v3150, %v3152
  %v3157 = vadd.s32 %v3153, 1
  %v3158 = vsel %vm3156, %v3157, %v3153
  %v3159 = vadd.s32 %v3154, %v3158
  %v3160 = vadd.s32 %v3159, 536870912
  %v3161 = vshrl.u32 %v3160, 30
  %v3162 = vshll.u32 %v3161, 30
  %v3163 = vsub.s32 %v3159, %v3162
  %vm3164 = vcmp.lt.s32.totalorder %v3163, 0
  %v3165 = vsub.s32 0, %v3163
  %v3166 = vsel %vm3164, %v3165, %v3163
  %v3167 = vclz %v3166
  %v3168 = vsub.s32 %v3167, 2
  %vm3169 = vcmp.gt.s32.totalorder 0, %v3168
  %v3170 = vsel %vm3169, 0, %v3168
  %v3171 = vsub.s32 32, %v3170
  %v3172 = vshll.u32 %v3163, %v3170
  %v3173 = vshrl.u32 %v3155, %v3171
  %v3174 = vor.u32 %v3172, %v3173
  %v3175 = vsub.s32 4294967266, %v3170
  %v3176 = vadd.s32 %v3175, 127
  %v3177 = vshll.u32 %v3176, 23
  %v3178 = vor.u32 4788187, %v3177
  %v3179 = vand.u32 2147483647, %v3178
  %v3181 = vcvt.s32.f32 %v3174
  %v3182 = vmul.f32 %v3181, %v3179
  %v3183 = vxor.u32 %v3182, 2147483648
  %v3184 = vsel %vm3101, %v3183, %v3182
  %v3185 = vsub.s32 4, %v3161
  %v3186 = vsel %vm3101, %v3185, %v3161
  %v3187 = vsel %vm3100, %v2726, %v3184
  %v3188 = vsel %vm3100, 0, %v3186
  %v3189 = vcosq.f32.pop %v3187
  %v3190 = vsinq.f32.pop %v3187
  %vm3191 = vweird.f32 %v2726
  %v3192 = vadd.s32 %v3188, 3
  %v3193 = vand.u32 %v3192, 3
  %vm3194 = vcmp.lt.s32.totalorder %v3193, 2
  %vm3195 = vcmp.eq.s32.totalorder %v3193, 0
  %v3196 = vxor.u32 %v3190, 2147483648
  %v3197 = vsel %vm3195, %v3189, %v3196
  %vm3198 = vcmp.eq.s32.totalorder %v3193, 2
  %v3199 = vxor.u32 %v3189, 2147483648
  %v3200 = vsel %vm3198, %v3199, %v3190
  %v3201 = vsel %vm3194, %v3197, %v3200
  %v3202 = vsel %vm3191, nan, %v3201
  %v3203 = vand.u32 2147483647, %v2727
  %vm3204 = vcmp.le.f32.partialorder %v3203, 0.7853982
  %vm3205 = vcmp.lt.s32.totalorder %v2727, 0
  %v3206 = vand.u32 %v2727, 2139095040
  %v3207 = vshrl.u32 %v3206, 23
  %v3208 = vsub.s32 %v3207, 127
  %v3209 = vand.u32 2147483647, %v2727
  %v3210 = vand.u32 %v3209, 8388607
  %v3211 = vor.u32 %v3210, 8388608
  %v3212 = vsub.s32 0, %v3211
  %v3213 = vadd.s32 %v3208, 1
  %vm3214 = vcmp.gt.s32.totalorder %v3213, 0
  %v3215 = vsel %vm3214, %v3213, 0
  %v3216 = vshrl.u32 %v3215, 5
  %v3217 = vand.u32 %v3215, 31
  %v3218 = vsub.s32 32, %v3217
  %v3219 = vshrl.u32 683565275, %v3218
  %v3220 = vshll.u32 683565275, %v3217
  %v3221 = vshrl.u32 2475754826, %v3218
  %v3222 = vor.u32 %v3220, %v3221
  %v3223 = vshll.u32 2475754826, %v3217
  %v3224 = vshrl.u32 2131351028, %v3218
  %v3225 = vor.u32 %v3223, %v3224
  %v3226 = vshll.u32 2131351028, %v3217
  %v3227 = vshrl.u32 2102212464, %v3218
  %v3228 = vor.u32 %v3226, %v3227
  %v3229 = vshll.u32 2102212464, %v3217
  %v3230 = vshrl.u32 920167782, %v3218
  %v3231 = vor.u32 %v3229, %v3230
  %v3232 = vshll.u32 920167782, %v3217
  %v3233 = vshrl.u32 1326507024, %v3218
  %v3234 = vor.u32 %v3232, %v3233
  %vm3235 = vcmp.lt.s32.totalorder %v3216, 1
  %vm3236 = vcmp.lt.s32.totalorder %v3216, 2
  %vm3237 = vcmp.lt.s32.totalorder %v3216, 3
  %vm3238 = vcmp.lt.s32.totalorder %v3216, 4
  %v3239 = vsel %vm3235, %v3219, %v3222
  %v3240 = vsel %vm3238, %v3228, 2102212464
  %v3241 = vsel %vm3237, %v3225, %v3240
  %v3242 = vsel %vm3236, %v3239, %v3241
  %v3243 = vsel %vm3235, %v3222, %v3225
  %v3244 = vsel %vm3238, %v3231, 920167782
  %v3245 = vsel %vm3237, %v3228, %v3244
  %v3246 = vsel %vm3236, %v3243, %v3245
  %v3247 = vsel %vm3235, %v3225, %v3228
  %v3248 = vsel %vm3238, %v3234, 1326507024
  %v3249 = vsel %vm3237, %v3231, %v3248
  %v3250 = vsel %vm3236, %v3247, %v3249
  %v3251 = vshll.u32 %v3211, 8
  %v3252 = vmul.u32.u64.compose %v3251, %v3250
  %v3253 = vextract.low.u32 %v3252
  %v3254 = vextract.high.u32 %v3252
  %v3255 = vmul.u32.u64.compose %v3251, %v3246
  %v3256 = vextract.low.u32 %v3255
  %v3257 = vextract.high.u32 %v3255
  %v3258 = vmul.u32 %v3251, %v3242
  %v3259 = vadd.s32 %v3254, %v3256
  %vm3260 = vc.u32 %v3254, %v3256
  %v3261 = vadd.s32 %v3257, 1
  %v3262 = vsel %vm3260, %v3261, %v3257
  %v3263 = vadd.s32 %v3258, %v3262
  %v3264 = vadd.s32 %v3263, 536870912
  %v3265 = vshrl.u32 %v3264, 30
  %v3266 = vshll.u32 %v3265, 30
  %v3267 = vsub.s32 %v3263, %v3266
  %vm3268 = vcmp.lt.s32.totalorder %v3267, 0
  %v3269 = vsub.s32 0, %v3267
  %v3270 = vsel %vm3268, %v3269, %v3267
  %v3271 = vclz %v3270
  %v3272 = vsub.s32 %v3271, 2
  %vm3273 = vcmp.gt.s32.totalorder 0, %v3272
  %v3274 = vsel %vm3273, 0, %v3272
  %v3275 = vsub.s32 32, %v3274
  %v3276 = vshll.u32 %v3267, %v3274
  %v3277 = vshrl.u32 %v3259, %v3275
  %v3278 = vor.u32 %v3276, %v3277
  %v3279 = vsub.s32 4294967266, %v3274
  %v3280 = vadd.s32 %v3279, 127
  %v3281 = vshll.u32 %v3280, 23
  %v3282 = vor.u32 4788187, %v3281
  %v3283 = vand.u32 2147483647, %v3282
  %v3285 = vcvt.s32.f32 %v3278
  %v3286 = vmul.f32 %v3285, %v3283
  %v3287 = vxor.u32 %v3286, 2147483648
  %v3288 = vsel %vm3205, %v3287, %v3286
  %v3289 = vsub.s32 4, %v3265
  %v3290 = vsel %vm3205, %v3289, %v3265
  %v3291 = vsel %vm3204, %v2727, %v3288
  %v3292 = vsel %vm3204, 0, %v3290
  %v3293 = vcosq.f32.pop %v3291
  %v3294 = vsinq.f32.pop %v3291
  %vm3295 = vweird.f32 %v2727
  %v3296 = vadd.s32 %v3292, 3
  %v3297 = vand.u32 %v3296, 3
  %vm3298 = vcmp.lt.s32.totalorder %v3297, 2
  %vm3299 = vcmp.eq.s32.totalorder %v3297, 0
  %v3300 = vxor.u32 %v3294, 2147483648
  %v3301 = vsel %vm3299, %v3293, %v3300
  %vm3302 = vcmp.eq.s32.totalorder %v3297, 2
  %v3303 = vxor.u32 %v3293, 2147483648
  %v3304 = vsel %vm3302, %v3303, %v3294
  %v3305 = vsel %vm3298, %v3301, %v3304
  %v3306 = vsel %vm3295, nan, %v3305
  %v3307 = vand.u32 2147483647, %v2728
  %vm3308 = vcmp.le.f32.partialorder %v3307, 0.7853982
  %vm3309 = vcmp.lt.s32.totalorder %v2728, 0
  %v3310 = vand.u32 %v2728, 2139095040
  %v3311 = vshrl.u32 %v3310, 23
  %v3312 = vsub.s32 %v3311, 127
  %v3313 = vand.u32 2147483647, %v2728
  %v3314 = vand.u32 %v3313, 8388607
  %v3315 = vor.u32 %v3314, 8388608
  %v3316 = vsub.s32 0, %v3315
  %v3317 = vadd.s32 %v3312, 1
  %vm3318 = vcmp.gt.s32.totalorder %v3317, 0
  %v3319 = vsel %vm3318, %v3317, 0
  %v3320 = vshrl.u32 %v3319, 5
  %v3321 = vand.u32 %v3319, 31
  %v3322 = vsub.s32 32, %v3321
  %v3323 = vshrl.u32 683565275, %v3322
  %v3324 = vshll.u32 683565275, %v3321
  %v3325 = vshrl.u32 2475754826, %v3322
  %v3326 = vor.u32 %v3324, %v3325
  %v3327 = vshll.u32 2475754826, %v3321
  %v3328 = vshrl.u32 2131351028, %v3322
  %v3329 = vor.u32 %v3327, %v3328
  %v3330 = vshll.u32 2131351028, %v3321
  %v3331 = vshrl.u32 2102212464, %v3322
  %v3332 = vor.u32 %v3330, %v3331
  %v3333 = vshll.u32 2102212464, %v3321
  %v3334 = vshrl.u32 920167782, %v3322
  %v3335 = vor.u32 %v3333, %v3334
  %v3336 = vshll.u32 920167782, %v3321
  %v3337 = vshrl.u32 1326507024, %v3322
  %v3338 = vor.u32 %v3336, %v3337
  %vm3339 = vcmp.lt.s32.totalorder %v3320, 1
  %vm3340 = vcmp.lt.s32.totalorder %v3320, 2
  %vm3341 = vcmp.lt.s32.totalorder %v3320, 3
  %vm3342 = vcmp.lt.s32.totalorder %v3320, 4
  %v3343 = vsel %vm3339, %v3323, %v3326
  %v3344 = vsel %vm3342, %v3332, 2102212464
  %v3345 = vsel %vm3341, %v3329, %v3344
  %v3346 = vsel %vm3340, %v3343, %v3345
  %v3347 = vsel %vm3339, %v3326, %v3329
  %v3348 = vsel %vm3342, %v3335, 920167782
  %v3349 = vsel %vm3341, %v3332, %v3348
  %v3350 = vsel %vm3340, %v3347, %v3349
  %v3351 = vsel %vm3339, %v3329, %v3332
  %v3352 = vsel %vm3342, %v3338, 1326507024
  %v3353 = vsel %vm3341, %v3335, %v3352
  %v3354 = vsel %vm3340, %v3351, %v3353
  %v3355 = vshll.u32 %v3315, 8
  %v3356 = vmul.u32.u64.compose %v3355, %v3354
  %v3357 = vextract.low.u32 %v3356
  %v3358 = vextract.high.u32 %v3356
  %v3359 = vmul.u32.u64.compose %v3355, %v3350
  %v3360 = vextract.low.u32 %v3359
  %v3361 = vextract.high.u32 %v3359
  %v3362 = vmul.u32 %v3355, %v3346
  %v3363 = vadd.s32 %v3358, %v3360
  %vm3364 = vc.u32 %v3358, %v3360
  %v3365 = vadd.s32 %v3361, 1
  %v3366 = vsel %vm3364, %v3365, %v3361
  %v3367 = vadd.s32 %v3362, %v3366
  %v3368 = vadd.s32 %v3367, 536870912
  %v3369 = vshrl.u32 %v3368, 30
  %v3370 = vshll.u32 %v3369, 30
  %v3371 = vsub.s32 %v3367, %v3370
  %vm3372 = vcmp.lt.s32.totalorder %v3371, 0
  %v3373 = vsub.s32 0, %v3371
  %v3374 = vsel %vm3372, %v3373, %v3371
  %v3375 = vclz %v3374
  %v3376 = vsub.s32 %v3375, 2
  %vm3377 = vcmp.gt.s32.totalorder 0, %v3376
  %v3378 = vsel %vm3377, 0, %v3376
  %v3379 = vsub.s32 32, %v3378
  %v3380 = vshll.u32 %v3371, %v3378
  %v3381 = vshrl.u32 %v3363, %v3379
  %v3382 = vor.u32 %v3380, %v3381
  %v3383 = vsub.s32 4294967266, %v3378
  %v3384 = vadd.s32 %v3383, 127
  %v3385 = vshll.u32 %v3384, 23
  %v3386 = vor.u32 4788187, %v3385
  %v3387 = vand.u32 2147483647, %v3386
  %v3389 = vcvt.s32.f32 %v3382
  %v3390 = vmul.f32 %v3389, %v3387
  %v3391 = vxor.u32 %v3390, 2147483648
  %v3392 = vsel %vm3309, %v3391, %v3390
  %v3393 = vsub.s32 4, %v3369
  %v3394 = vsel %vm3309, %v3393, %v3369
  %v3395 = vsel %vm3308, %v2728, %v3392
  %v3396 = vsel %vm3308, 0, %v3394
  %v3397 = vcosq.f32.pop %v3395
  %v3398 = vsinq.f32.pop %v3395
  %vm3399 = vweird.f32 %v2728
  %v3400 = vadd.s32 %v3396, 3
  %v3401 = vand.u32 %v3400, 3
  %vm3402 = vcmp.lt.s32.totalorder %v3401, 2
  %vm3403 = vcmp.eq.s32.totalorder %v3401, 0
  %v3404 = vxor.u32 %v3398, 2147483648
  %v3405 = vsel %vm3403, %v3397, %v3404
  %vm3406 = vcmp.eq.s32.totalorder %v3401, 2
  %v3407 = vxor.u32 %v3397, 2147483648
  %v3408 = vsel %vm3406, %v3407, %v3398
  %v3409 = vsel %vm3402, %v3405, %v3408
  %v3410 = vsel %vm3399, nan, %v3409
  %v3411 = vand.u32 2147483647, %v2729
  %vm3412 = vcmp.le.f32.partialorder %v3411, 0.7853982
  %vm3413 = vcmp.lt.s32.totalorder %v2729, 0
  %v3414 = vand.u32 %v2729, 2139095040
  %v3415 = vshrl.u32 %v3414, 23
  %v3416 = vsub.s32 %v3415, 127
  %v3417 = vand.u32 2147483647, %v2729
  %v3418 = vand.u32 %v3417, 8388607
  %v3419 = vor.u32 %v3418, 8388608
  %v3420 = vsub.s32 0, %v3419
  %v3421 = vadd.s32 %v3416, 1
  %vm3422 = vcmp.gt.s32.totalorder %v3421, 0
  %v3423 = vsel %vm3422, %v3421, 0
  %v3424 = vshrl.u32 %v3423, 5
  %v3425 = vand.u32 %v3423, 31
  %v3426 = vsub.s32 32, %v3425
  %v3427 = vshrl.u32 683565275, %v3426
  %v3428 = vshll.u32 683565275, %v3425
  %v3429 = vshrl.u32 2475754826, %v3426
  %v3430 = vor.u32 %v3428, %v3429
  %v3431 = vshll.u32 2475754826, %v3425
  %v3432 = vshrl.u32 2131351028, %v3426
  %v3433 = vor.u32 %v3431, %v3432
  %v3434 = vshll.u32 2131351028, %v3425
  %v3435 = vshrl.u32 2102212464, %v3426
  %v3436 = vor.u32 %v3434, %v3435
  %v3437 = vshll.u32 2102212464, %v3425
  %v3438 = vshrl.u32 920167782, %v3426
  %v3439 = vor.u32 %v3437, %v3438
  %v3440 = vshll.u32 920167782, %v3425
  %v3441 = vshrl.u32 1326507024, %v3426
  %v3442 = vor.u32 %v3440, %v3441
  %vm3443 = vcmp.lt.s32.totalorder %v3424, 1
  %vm3444 = vcmp.lt.s32.totalorder %v3424, 2
  %vm3445 = vcmp.lt.s32.totalorder %v3424, 3
  %vm3446 = vcmp.lt.s32.totalorder %v3424, 4
  %v3447 = vsel %vm3443, %v3427, %v3430
  %v3448 = vsel %vm3446, %v3436, 2102212464
  %v3449 = vsel %vm3445, %v3433, %v3448
  %v3450 = vsel %vm3444, %v3447, %v3449
  %v3451 = vsel %vm3443, %v3430, %v3433
  %v3452 = vsel %vm3446, %v3439, 920167782
  %v3453 = vsel %vm3445, %v3436, %v3452
  %v3454 = vsel %vm3444, %v3451, %v3453
  %v3455 = vsel %vm3443, %v3433, %v3436
  %v3456 = vsel %vm3446, %v3442, 1326507024
  %v3457 = vsel %vm3445, %v3439, %v3456
  %v3458 = vsel %vm3444, %v3455, %v3457
  %v3459 = vshll.u32 %v3419, 8
  %v3460 = vmul.u32.u64.compose %v3459, %v3458
  %v3461 = vextract.low.u32 %v3460
  %v3462 = vextract.high.u32 %v3460
  %v3463 = vmul.u32.u64.compose %v3459, %v3454
  %v3464 = vextract.low.u32 %v3463
  %v3465 = vextract.high.u32 %v3463
  %v3466 = vmul.u32 %v3459, %v3450
  %v3467 = vadd.s32 %v3462, %v3464
  %vm3468 = vc.u32 %v3462, %v3464
  %v3469 = vadd.s32 %v3465, 1
  %v3470 = vsel %vm3468, %v3469, %v3465
  %v3471 = vadd.s32 %v3466, %v3470
  %v3472 = vadd.s32 %v3471, 536870912
  %v3473 = vshrl.u32 %v3472, 30
  %v3474 = vshll.u32 %v3473, 30
  %v3475 = vsub.s32 %v3471, %v3474
  %vm3476 = vcmp.lt.s32.totalorder %v3475, 0
  %v3477 = vsub.s32 0, %v3475
  %v3478 = vsel %vm3476, %v3477, %v3475
  %v3479 = vclz %v3478
  %v3480 = vsub.s32 %v3479, 2
  %vm3481 = vcmp.gt.s32.totalorder 0, %v3480
  %v3482 = vsel %vm3481, 0, %v3480
  %v3483 = vsub.s32 32, %v3482
  %v3484 = vshll.u32 %v3475, %v3482
  %v3485 = vshrl.u32 %v3467, %v3483
  %v3486 = vor.u32 %v3484, %v3485
  %v3487 = vsub.s32 4294967266, %v3482
  %v3488 = vadd.s32 %v3487, 127
  %v3489 = vshll.u32 %v3488, 23
  %v3490 = vor.u32 4788187, %v3489
  %v3491 = vand.u32 2147483647, %v3490
  %v3493 = vcvt.s32.f32 %v3486
  %v3494 = vmul.f32 %v3493, %v3491
  %v3495 = vxor.u32 %v3494, 2147483648
  %v3496 = vsel %vm3413, %v3495, %v3494
  %v3497 = vsub.s32 4, %v3473
  %v3498 = vsel %vm3413, %v3497, %v3473
  %v3499 = vsel %vm3412, %v2729, %v3496
  %v3500 = vsel %vm3412, 0, %v3498
  %v3501 = vcosq.f32.pop %v3499
  %v3502 = vsinq.f32.pop %v3499
  %vm3503 = vweird.f32 %v2729
  %v3504 = vadd.s32 %v3500, 3
  %v3505 = vand.u32 %v3504, 3
  %vm3506 = vcmp.lt.s32.totalorder %v3505, 2
  %vm3507 = vcmp.eq.s32.totalorder %v3505, 0
  %v3508 = vxor.u32 %v3502, 2147483648
  %v3509 = vsel %vm3507, %v3501, %v3508
  %vm3510 = vcmp.eq.s32.totalorder %v3505, 2
  %v3511 = vxor.u32 %v3501, 2147483648
  %v3512 = vsel %vm3510, %v3511, %v3502
  %v3513 = vsel %vm3506, %v3509, %v3512
  %v3514 = vsel %vm3503, nan, %v3513
  %v3515 = vand.u32 2147483647, %v2730
  %vm3516 = vcmp.le.f32.partialorder %v3515, 0.7853982
  %vm3517 = vcmp.lt.s32.totalorder %v2730, 0
  %v3518 = vand.u32 %v2730, 2139095040
  %v3519 = vshrl.u32 %v3518, 23
  %v3520 = vsub.s32 %v3519, 127
  %v3521 = vand.u32 2147483647, %v2730
  %v3522 = vand.u32 %v3521, 8388607
  %v3523 = vor.u32 %v3522, 8388608
  %v3524 = vsub.s32 0, %v3523
  %v3525 = vadd.s32 %v3520, 1
  %vm3526 = vcmp.gt.s32.totalorder %v3525, 0
  %v3527 = vsel %vm3526, %v3525, 0
  %v3528 = vshrl.u32 %v3527, 5
  %v3529 = vand.u32 %v3527, 31
  %v3530 = vsub.s32 32, %v3529
  %v3531 = vshrl.u32 683565275, %v3530
  %v3532 = vshll.u32 683565275, %v3529
  %v3533 = vshrl.u32 2475754826, %v3530
  %v3534 = vor.u32 %v3532, %v3533
  %v3535 = vshll.u32 2475754826, %v3529
  %v3536 = vshrl.u32 2131351028, %v3530
  %v3537 = vor.u32 %v3535, %v3536
  %v3538 = vshll.u32 2131351028, %v3529
  %v3539 = vshrl.u32 2102212464, %v3530
  %v3540 = vor.u32 %v3538, %v3539
  %v3541 = vshll.u32 2102212464, %v3529
  %v3542 = vshrl.u32 920167782, %v3530
  %v3543 = vor.u32 %v3541, %v3542
  %v3544 = vshll.u32 920167782, %v3529
  %v3545 = vshrl.u32 1326507024, %v3530
  %v3546 = vor.u32 %v3544, %v3545
  %vm3547 = vcmp.lt.s32.totalorder %v3528, 1
  %vm3548 = vcmp.lt.s32.totalorder %v3528, 2
  %vm3549 = vcmp.lt.s32.totalorder %v3528, 3
  %vm3550 = vcmp.lt.s32.totalorder %v3528, 4
  %v3551 = vsel %vm3547, %v3531, %v3534
  %v3552 = vsel %vm3550, %v3540, 2102212464
  %v3553 = vsel %vm3549, %v3537, %v3552
  %v3554 = vsel %vm3548, %v3551, %v3553
  %v3555 = vsel %vm3547, %v3534, %v3537
  %v3556 = vsel %vm3550, %v3543, 920167782
  %v3557 = vsel %vm3549, %v3540, %v3556
  %v3558 = vsel %vm3548, %v3555, %v3557
  %v3559 = vsel %vm3547, %v3537, %v3540
  %v3560 = vsel %vm3550, %v3546, 1326507024
  %v3561 = vsel %vm3549, %v3543, %v3560
  %v3562 = vsel %vm3548, %v3559, %v3561
  %v3563 = vshll.u32 %v3523, 8
  %v3564 = vmul.u32.u64.compose %v3563, %v3562
  %v3565 = vextract.low.u32 %v3564
  %v3566 = vextract.high.u32 %v3564
  %v3567 = vmul.u32.u64.compose %v3563, %v3558
  %v3568 = vextract.low.u32 %v3567
  %v3569 = vextract.high.u32 %v3567
  %v3570 = vmul.u32 %v3563, %v3554
  %v3571 = vadd.s32 %v3566, %v3568
  %vm3572 = vc.u32 %v3566, %v3568
  %v3573 = vadd.s32 %v3569, 1
  %v3574 = vsel %vm3572, %v3573, %v3569
  %v3575 = vadd.s32 %v3570, %v3574
  %v3576 = vadd.s32 %v3575, 536870912
  %v3577 = vshrl.u32 %v3576, 30
  %v3578 = vshll.u32 %v3577, 30
  %v3579 = vsub.s32 %v3575, %v3578
  %vm3580 = vcmp.lt.s32.totalorder %v3579, 0
  %v3581 = vsub.s32 0, %v3579
  %v3582 = vsel %vm3580, %v3581, %v3579
  %v3583 = vclz %v3582
  %v3584 = vsub.s32 %v3583, 2
  %vm3585 = vcmp.gt.s32.totalorder 0, %v3584
  %v3586 = vsel %vm3585, 0, %v3584
  %v3587 = vsub.s32 32, %v3586
  %v3588 = vshll.u32 %v3579, %v3586
  %v3589 = vshrl.u32 %v3571, %v3587
  %v3590 = vor.u32 %v3588, %v3589
  %v3591 = vsub.s32 4294967266, %v3586
  %v3592 = vadd.s32 %v3591, 127
  %v3593 = vshll.u32 %v3592, 23
  %v3594 = vor.u32 4788187, %v3593
  %v3595 = vand.u32 2147483647, %v3594
  %v3597 = vcvt.s32.f32 %v3590
  %v3598 = vmul.f32 %v3597, %v3595
  %v3599 = vxor.u32 %v3598, 2147483648
  %v3600 = vsel %vm3517, %v3599, %v3598
  %v3601 = vsub.s32 4, %v3577
  %v3602 = vsel %vm3517, %v3601, %v3577
  %v3603 = vsel %vm3516, %v2730, %v3600
  %v3604 = vsel %vm3516, 0, %v3602
  %v3605 = vcosq.f32.pop %v3603
  %v3606 = vsinq.f32.pop %v3603
  %vm3607 = vweird.f32 %v2730
  %v3608 = vadd.s32 %v3604, 3
  %v3609 = vand.u32 %v3608, 3
  %vm3610 = vcmp.lt.s32.totalorder %v3609, 2
  %vm3611 = vcmp.eq.s32.totalorder %v3609, 0
  %v3612 = vxor.u32 %v3606, 2147483648
  %v3613 = vsel %vm3611, %v3605, %v3612
  %vm3614 = vcmp.eq.s32.totalorder %v3609, 2
  %v3615 = vxor.u32 %v3605, 2147483648
  %v3616 = vsel %vm3614, %v3615, %v3606
  %v3617 = vsel %vm3610, %v3613, %v3616
  %v3618 = vsel %vm3607, nan, %v3617
  %v3619 = vand.u32 2147483647, %v2731
  %vm3620 = vcmp.le.f32.partialorder %v3619, 0.7853982
  %vm3621 = vcmp.lt.s32.totalorder %v2731, 0
  %v3622 = vand.u32 %v2731, 2139095040
  %v3623 = vshrl.u32 %v3622, 23
  %v3624 = vsub.s32 %v3623, 127
  %v3625 = vand.u32 2147483647, %v2731
  %v3626 = vand.u32 %v3625, 8388607
  %v3627 = vor.u32 %v3626, 8388608
  %v3628 = vsub.s32 0, %v3627
  %v3629 = vadd.s32 %v3624, 1
  %vm3630 = vcmp.gt.s32.totalorder %v3629, 0
  %v3631 = vsel %vm3630, %v3629, 0
  %v3632 = vshrl.u32 %v3631, 5
  %v3633 = vand.u32 %v3631, 31
  %v3634 = vsub.s32 32, %v3633
  %v3635 = vshrl.u32 683565275, %v3634
  %v3636 = vshll.u32 683565275, %v3633
  %v3637 = vshrl.u32 2475754826, %v3634
  %v3638 = vor.u32 %v3636, %v3637
  %v3639 = vshll.u32 2475754826, %v3633
  %v3640 = vshrl.u32 2131351028, %v3634
  %v3641 = vor.u32 %v3639, %v3640
  %v3642 = vshll.u32 2131351028, %v3633
  %v3643 = vshrl.u32 2102212464, %v3634
  %v3644 = vor.u32 %v3642, %v3643
  %v3645 = vshll.u32 2102212464, %v3633
  %v3646 = vshrl.u32 920167782, %v3634
  %v3647 = vor.u32 %v3645, %v3646
  %v3648 = vshll.u32 920167782, %v3633
  %v3649 = vshrl.u32 1326507024, %v3634
  %v3650 = vor.u32 %v3648, %v3649
  %vm3651 = vcmp.lt.s32.totalorder %v3632, 1
  %vm3652 = vcmp.lt.s32.totalorder %v3632, 2
  %vm3653 = vcmp.lt.s32.totalorder %v3632, 3
  %vm3654 = vcmp.lt.s32.totalorder %v3632, 4
  %v3655 = vsel %vm3651, %v3635, %v3638
  %v3656 = vsel %vm3654, %v3644, 2102212464
  %v3657 = vsel %vm3653, %v3641, %v3656
  %v3658 = vsel %vm3652, %v3655, %v3657
  %v3659 = vsel %vm3651, %v3638, %v3641
  %v3660 = vsel %vm3654, %v3647, 920167782
  %v3661 = vsel %vm3653, %v3644, %v3660
  %v3662 = vsel %vm3652, %v3659, %v3661
  %v3663 = vsel %vm3651, %v3641, %v3644
  %v3664 = vsel %vm3654, %v3650, 1326507024
  %v3665 = vsel %vm3653, %v3647, %v3664
  %v3666 = vsel %vm3652, %v3663, %v3665
  %v3667 = vshll.u32 %v3627, 8
  %v3668 = vmul.u32.u64.compose %v3667, %v3666
  %v3669 = vextract.low.u32 %v3668
  %v3670 = vextract.high.u32 %v3668
  %v3671 = vmul.u32.u64.compose %v3667, %v3662
  %v3672 = vextract.low.u32 %v3671
  %v3673 = vextract.high.u32 %v3671
  %v3674 = vmul.u32 %v3667, %v3658
  %v3675 = vadd.s32 %v3670, %v3672
  %vm3676 = vc.u32 %v3670, %v3672
  %v3677 = vadd.s32 %v3673, 1
  %v3678 = vsel %vm3676, %v3677, %v3673
  %v3679 = vadd.s32 %v3674, %v3678
  %v3680 = vadd.s32 %v3679, 536870912
  %v3681 = vshrl.u32 %v3680, 30
  %v3682 = vshll.u32 %v3681, 30
  %v3683 = vsub.s32 %v3679, %v3682
  %vm3684 = vcmp.lt.s32.totalorder %v3683, 0
  %v3685 = vsub.s32 0, %v3683
  %v3686 = vsel %vm3684, %v3685, %v3683
  %v3687 = vclz %v3686
  %v3688 = vsub.s32 %v3687, 2
  %vm3689 = vcmp.gt.s32.totalorder 0, %v3688
  %v3690 = vsel %vm3689, 0, %v3688
  %v3691 = vsub.s32 32, %v3690
  %v3692 = vshll.u32 %v3683, %v3690
  %v3693 = vshrl.u32 %v3675, %v3691
  %v3694 = vor.u32 %v3692, %v3693
  %v3695 = vsub.s32 4294967266, %v3690
  %v3696 = vadd.s32 %v3695, 127
  %v3697 = vshll.u32 %v3696, 23
  %v3698 = vor.u32 4788187, %v3697
  %v3699 = vand.u32 2147483647, %v3698
  %v3701 = vcvt.s32.f32 %v3694
  %v3702 = vmul.f32 %v3701, %v3699
  %v3703 = vxor.u32 %v3702, 2147483648
  %v3704 = vsel %vm3621, %v3703, %v3702
  %v3705 = vsub.s32 4, %v3681
  %v3706 = vsel %vm3621, %v3705, %v3681
  %v3707 = vsel %vm3620, %v2731, %v3704
  %v3708 = vsel %vm3620, 0, %v3706
  %v3709 = vcosq.f32.pop %v3707
  %v3710 = vsinq.f32.pop %v3707
  %vm3711 = vweird.f32 %v2731
  %v3712 = vadd.s32 %v3708, 3
  %v3713 = vand.u32 %v3712, 3
  %vm3714 = vcmp.lt.s32.totalorder %v3713, 2
  %vm3715 = vcmp.eq.s32.totalorder %v3713, 0
  %v3716 = vxor.u32 %v3710, 2147483648
  %v3717 = vsel %vm3715, %v3709, %v3716
  %vm3718 = vcmp.eq.s32.totalorder %v3713, 2
  %v3719 = vxor.u32 %v3709, 2147483648
  %v3720 = vsel %vm3718, %v3719, %v3710
  %v3721 = vsel %vm3714, %v3717, %v3720
  %v3722 = vsel %vm3711, nan, %v3721
  %v3723 = vand.u32 2147483647, %v2732
  %vm3724 = vcmp.le.f32.partialorder %v3723, 0.7853982
  %vm3725 = vcmp.lt.s32.totalorder %v2732, 0
  %v3726 = vand.u32 %v2732, 2139095040
  %v3727 = vshrl.u32 %v3726, 23
  %v3728 = vsub.s32 %v3727, 127
  %v3729 = vand.u32 2147483647, %v2732
  %v3730 = vand.u32 %v3729, 8388607
  %v3731 = vor.u32 %v3730, 8388608
  %v3732 = vsub.s32 0, %v3731
  %v3733 = vadd.s32 %v3728, 1
  %vm3734 = vcmp.gt.s32.totalorder %v3733, 0
  %v3735 = vsel %vm3734, %v3733, 0
  %v3736 = vshrl.u32 %v3735, 5
  %v3737 = vand.u32 %v3735, 31
  %v3738 = vsub.s32 32, %v3737
  %v3739 = vshrl.u32 683565275, %v3738
  %v3740 = vshll.u32 683565275, %v3737
  %v3741 = vshrl.u32 2475754826, %v3738
  %v3742 = vor.u32 %v3740, %v3741
  %v3743 = vshll.u32 2475754826, %v3737
  %v3744 = vshrl.u32 2131351028, %v3738
  %v3745 = vor.u32 %v3743, %v3744
  %v3746 = vshll.u32 2131351028, %v3737
  %v3747 = vshrl.u32 2102212464, %v3738
  %v3748 = vor.u32 %v3746, %v3747
  %v3749 = vshll.u32 2102212464, %v3737
  %v3750 = vshrl.u32 920167782, %v3738
  %v3751 = vor.u32 %v3749, %v3750
  %v3752 = vshll.u32 920167782, %v3737
  %v3753 = vshrl.u32 1326507024, %v3738
  %v3754 = vor.u32 %v3752, %v3753
  %vm3755 = vcmp.lt.s32.totalorder %v3736, 1
  %vm3756 = vcmp.lt.s32.totalorder %v3736, 2
  %vm3757 = vcmp.lt.s32.totalorder %v3736, 3
  %vm3758 = vcmp.lt.s32.totalorder %v3736, 4
  %v3759 = vsel %vm3755, %v3739, %v3742
  %v3760 = vsel %vm3758, %v3748, 2102212464
  %v3761 = vsel %vm3757, %v3745, %v3760
  %v3762 = vsel %vm3756, %v3759, %v3761
  %v3763 = vsel %vm3755, %v3742, %v3745
  %v3764 = vsel %vm3758, %v3751, 920167782
  %v3765 = vsel %vm3757, %v3748, %v3764
  %v3766 = vsel %vm3756, %v3763, %v3765
  %v3767 = vsel %vm3755, %v3745, %v3748
  %v3768 = vsel %vm3758, %v3754, 1326507024
  %v3769 = vsel %vm3757, %v3751, %v3768
  %v3770 = vsel %vm3756, %v3767, %v3769
  %v3771 = vshll.u32 %v3731, 8
  %v3772 = vmul.u32.u64.compose %v3771, %v3770
  %v3773 = vextract.low.u32 %v3772
  %v3774 = vextract.high.u32 %v3772
  %v3775 = vmul.u32.u64.compose %v3771, %v3766
  %v3776 = vextract.low.u32 %v3775
  %v3777 = vextract.high.u32 %v3775
  %v3778 = vmul.u32 %v3771, %v3762
  %v3779 = vadd.s32 %v3774, %v3776
  %vm3780 = vc.u32 %v3774, %v3776
  %v3781 = vadd.s32 %v3777, 1
  %v3782 = vsel %vm3780, %v3781, %v3777
  %v3783 = vadd.s32 %v3778, %v3782
  %v3784 = vadd.s32 %v3783, 536870912
  %v3785 = vshrl.u32 %v3784, 30
  %v3786 = vshll.u32 %v3785, 30
  %v3787 = vsub.s32 %v3783, %v3786
  %vm3788 = vcmp.lt.s32.totalorder %v3787, 0
  %v3789 = vsub.s32 0, %v3787
  %v3790 = vsel %vm3788, %v3789, %v3787
  %v3791 = vclz %v3790
  %v3792 = vsub.s32 %v3791, 2
  %vm3793 = vcmp.gt.s32.totalorder 0, %v3792
  %v3794 = vsel %vm3793, 0, %v3792
  %v3795 = vsub.s32 32, %v3794
  %v3796 = vshll.u32 %v3787, %v3794
  %v3797 = vshrl.u32 %v3779, %v3795
  %v3798 = vor.u32 %v3796, %v3797
  %v3799 = vsub.s32 4294967266, %v3794
  %v3800 = vadd.s32 %v3799, 127
  %v3801 = vshll.u32 %v3800, 23
  %v3802 = vor.u32 4788187, %v3801
  %v3803 = vand.u32 2147483647, %v3802
  %v3805 = vcvt.s32.f32 %v3798
  %v3806 = vmul.f32 %v3805, %v3803
  %v3807 = vxor.u32 %v3806, 2147483648
  %v3808 = vsel %vm3725, %v3807, %v3806
  %v3809 = vsub.s32 4, %v3785
  %v3810 = vsel %vm3725, %v3809, %v3785
  %v3811 = vsel %vm3724, %v2732, %v3808
  %v3812 = vsel %vm3724, 0, %v3810
  %v3813 = vcosq.f32.pop %v3811
  %v3814 = vsinq.f32.pop %v3811
  %vm3815 = vweird.f32 %v2732
  %v3816 = vadd.s32 %v3812, 3
  %v3817 = vand.u32 %v3816, 3
  %vm3818 = vcmp.lt.s32.totalorder %v3817, 2
  %vm3819 = vcmp.eq.s32.totalorder %v3817, 0
  %v3820 = vxor.u32 %v3814, 2147483648
  %v3821 = vsel %vm3819, %v3813, %v3820
  %vm3822 = vcmp.eq.s32.totalorder %v3817, 2
  %v3823 = vxor.u32 %v3813, 2147483648
  %v3824 = vsel %vm3822, %v3823, %v3814
  %v3825 = vsel %vm3818, %v3821, %v3824
  %v3826 = vsel %vm3815, nan, %v3825
  %v3827 = vand.u32 2147483647, %v2733
  %vm3828 = vcmp.le.f32.partialorder %v3827, 0.7853982
  %vm3829 = vcmp.lt.s32.totalorder %v2733, 0
  %v3830 = vand.u32 %v2733, 2139095040
  %v3831 = vshrl.u32 %v3830, 23
  %v3832 = vsub.s32 %v3831, 127
  %v3833 = vand.u32 2147483647, %v2733
  %v3834 = vand.u32 %v3833, 8388607
  %v3835 = vor.u32 %v3834, 8388608
  %v3836 = vsub.s32 0, %v3835
  %v3837 = vadd.s32 %v3832, 1
  %vm3838 = vcmp.gt.s32.totalorder %v3837, 0
  %v3839 = vsel %vm3838, %v3837, 0
  %v3840 = vshrl.u32 %v3839, 5
  %v3841 = vand.u32 %v3839, 31
  %v3842 = vsub.s32 32, %v3841
  %v3843 = vshrl.u32 683565275, %v3842
  %v3844 = vshll.u32 683565275, %v3841
  %v3845 = vshrl.u32 2475754826, %v3842
  %v3846 = vor.u32 %v3844, %v3845
  %v3847 = vshll.u32 2475754826, %v3841
  %v3848 = vshrl.u32 2131351028, %v3842
  %v3849 = vor.u32 %v3847, %v3848
  %v3850 = vshll.u32 2131351028, %v3841
  %v3851 = vshrl.u32 2102212464, %v3842
  %v3852 = vor.u32 %v3850, %v3851
  %v3853 = vshll.u32 2102212464, %v3841
  %v3854 = vshrl.u32 920167782, %v3842
  %v3855 = vor.u32 %v3853, %v3854
  %v3856 = vshll.u32 920167782, %v3841
  %v3857 = vshrl.u32 1326507024, %v3842
  %v3858 = vor.u32 %v3856, %v3857
  %vm3859 = vcmp.lt.s32.totalorder %v3840, 1
  %vm3860 = vcmp.lt.s32.totalorder %v3840, 2
  %vm3861 = vcmp.lt.s32.totalorder %v3840, 3
  %vm3862 = vcmp.lt.s32.totalorder %v3840, 4
  %v3863 = vsel %vm3859, %v3843, %v3846
  %v3864 = vsel %vm3862, %v3852, 2102212464
  %v3865 = vsel %vm3861, %v3849, %v3864
  %v3866 = vsel %vm3860, %v3863, %v3865
  %v3867 = vsel %vm3859, %v3846, %v3849
  %v3868 = vsel %vm3862, %v3855, 920167782
  %v3869 = vsel %vm3861, %v3852, %v3868
  %v3870 = vsel %vm3860, %v3867, %v3869
  %v3871 = vsel %vm3859, %v3849, %v3852
  %v3872 = vsel %vm3862, %v3858, 1326507024
  %v3873 = vsel %vm3861, %v3855, %v3872
  %v3874 = vsel %vm3860, %v3871, %v3873
  %v3875 = vshll.u32 %v3835, 8
  %v3876 = vmul.u32.u64.compose %v3875, %v3874
  %v3877 = vextract.low.u32 %v3876
  %v3878 = vextract.high.u32 %v3876
  %v3879 = vmul.u32.u64.compose %v3875, %v3870
  %v3880 = vextract.low.u32 %v3879
  %v3881 = vextract.high.u32 %v3879
  %v3882 = vmul.u32 %v3875, %v3866
  %v3883 = vadd.s32 %v3878, %v3880
  %vm3884 = vc.u32 %v3878, %v3880
  %v3885 = vadd.s32 %v3881, 1
  %v3886 = vsel %vm3884, %v3885, %v3881
  %v3887 = vadd.s32 %v3882, %v3886
  %v3888 = vadd.s32 %v3887, 536870912
  %v3889 = vshrl.u32 %v3888, 30
  %v3890 = vshll.u32 %v3889, 30
  %v3891 = vsub.s32 %v3887, %v3890
  %vm3892 = vcmp.lt.s32.totalorder %v3891, 0
  %v3893 = vsub.s32 0, %v3891
  %v3894 = vsel %vm3892, %v3893, %v3891
  %v3895 = vclz %v3894
  %v3896 = vsub.s32 %v3895, 2
  %vm3897 = vcmp.gt.s32.totalorder 0, %v3896
  %v3898 = vsel %vm3897, 0, %v3896
  %v3899 = vsub.s32 32, %v3898
  %v3900 = vshll.u32 %v3891, %v3898
  %v3901 = vshrl.u32 %v3883, %v3899
  %v3902 = vor.u32 %v3900, %v3901
  %v3903 = vsub.s32 4294967266, %v3898
  %v3904 = vadd.s32 %v3903, 127
  %v3905 = vshll.u32 %v3904, 23
  %v3906 = vor.u32 4788187, %v3905
  %v3907 = vand.u32 2147483647, %v3906
  %v3909 = vcvt.s32.f32 %v3902
  %v3910 = vmul.f32 %v3909, %v3907
  %v3911 = vxor.u32 %v3910, 2147483648
  %v3912 = vsel %vm3829, %v3911, %v3910
  %v3913 = vsub.s32 4, %v3889
  %v3914 = vsel %vm3829, %v3913, %v3889
  %v3915 = vsel %vm3828, %v2733, %v3912
  %v3916 = vsel %vm3828, 0, %v3914
  %v3917 = vcosq.f32.pop %v3915
  %v3918 = vsinq.f32.pop %v3915
  %vm3919 = vweird.f32 %v2733
  %v3920 = vadd.s32 %v3916, 3
  %v3921 = vand.u32 %v3920, 3
  %vm3922 = vcmp.lt.s32.totalorder %v3921, 2
  %vm3923 = vcmp.eq.s32.totalorder %v3921, 0
  %v3924 = vxor.u32 %v3918, 2147483648
  %v3925 = vsel %vm3923, %v3917, %v3924
  %vm3926 = vcmp.eq.s32.totalorder %v3921, 2
  %v3927 = vxor.u32 %v3917, 2147483648
  %v3928 = vsel %vm3926, %v3927, %v3918
  %v3929 = vsel %vm3922, %v3925, %v3928
  %v3930 = vsel %vm3919, nan, %v3929
  %v3931 = vand.u32 2147483647, %v2734
  %vm3932 = vcmp.le.f32.partialorder %v3931, 0.7853982
  %vm3933 = vcmp.lt.s32.totalorder %v2734, 0
  %v3934 = vand.u32 %v2734, 2139095040
  %v3935 = vshrl.u32 %v3934, 23
  %v3936 = vsub.s32 %v3935, 127
  %v3937 = vand.u32 2147483647, %v2734
  %v3938 = vand.u32 %v3937, 8388607
  %v3939 = vor.u32 %v3938, 8388608
  %v3940 = vsub.s32 0, %v3939
  %v3941 = vadd.s32 %v3936, 1
  %vm3942 = vcmp.gt.s32.totalorder %v3941, 0
  %v3943 = vsel %vm3942, %v3941, 0
  %v3944 = vshrl.u32 %v3943, 5
  %v3945 = vand.u32 %v3943, 31
  %v3946 = vsub.s32 32, %v3945
  %v3947 = vshrl.u32 683565275, %v3946
  %v3948 = vshll.u32 683565275, %v3945
  %v3949 = vshrl.u32 2475754826, %v3946
  %v3950 = vor.u32 %v3948, %v3949
  %v3951 = vshll.u32 2475754826, %v3945
  %v3952 = vshrl.u32 2131351028, %v3946
  %v3953 = vor.u32 %v3951, %v3952
  %v3954 = vshll.u32 2131351028, %v3945
  %v3955 = vshrl.u32 2102212464, %v3946
  %v3956 = vor.u32 %v3954, %v3955
  %v3957 = vshll.u32 2102212464, %v3945
  %v3958 = vshrl.u32 920167782, %v3946
  %v3959 = vor.u32 %v3957, %v3958
  %v3960 = vshll.u32 920167782, %v3945
  %v3961 = vshrl.u32 1326507024, %v3946
  %v3962 = vor.u32 %v3960, %v3961
  %vm3963 = vcmp.lt.s32.totalorder %v3944, 1
  %vm3964 = vcmp.lt.s32.totalorder %v3944, 2
  %vm3965 = vcmp.lt.s32.totalorder %v3944, 3
  %vm3966 = vcmp.lt.s32.totalorder %v3944, 4
  %v3967 = vsel %vm3963, %v3947, %v3950
  %v3968 = vsel %vm3966, %v3956, 2102212464
  %v3969 = vsel %vm3965, %v3953, %v3968
  %v3970 = vsel %vm3964, %v3967, %v3969
  %v3971 = vsel %vm3963, %v3950, %v3953
  %v3972 = vsel %vm3966, %v3959, 920167782
  %v3973 = vsel %vm3965, %v3956, %v3972
  %v3974 = vsel %vm3964, %v3971, %v3973
  %v3975 = vsel %vm3963, %v3953, %v3956
  %v3976 = vsel %vm3966, %v3962, 1326507024
  %v3977 = vsel %vm3965, %v3959, %v3976
  %v3978 = vsel %vm3964, %v3975, %v3977
  %v3979 = vshll.u32 %v3939, 8
  %v3980 = vmul.u32.u64.compose %v3979, %v3978
  %v3981 = vextract.low.u32 %v3980
  %v3982 = vextract.high.u32 %v3980
  %v3983 = vmul.u32.u64.compose %v3979, %v3974
  %v3984 = vextract.low.u32 %v3983
  %v3985 = vextract.high.u32 %v3983
  %v3986 = vmul.u32 %v3979, %v3970
  %v3987 = vadd.s32 %v3982, %v3984
  %vm3988 = vc.u32 %v3982, %v3984
  %v3989 = vadd.s32 %v3985, 1
  %v3990 = vsel %vm3988, %v3989, %v3985
  %v3991 = vadd.s32 %v3986, %v3990
  %v3992 = vadd.s32 %v3991, 536870912
  %v3993 = vshrl.u32 %v3992, 30
  %v3994 = vshll.u32 %v3993, 30
  %v3995 = vsub.s32 %v3991, %v3994
  %vm3996 = vcmp.lt.s32.totalorder %v3995, 0
  %v3997 = vsub.s32 0, %v3995
  %v3998 = vsel %vm3996, %v3997, %v3995
  %v3999 = vclz %v3998
  %v4000 = vsub.s32 %v3999, 2
  %vm4001 = vcmp.gt.s32.totalorder 0, %v4000
  %v4002 = vsel %vm4001, 0, %v4000
  %v4003 = vsub.s32 32, %v4002
  %v4004 = vshll.u32 %v3995, %v4002
  %v4005 = vshrl.u32 %v3987, %v4003
  %v4006 = vor.u32 %v4004, %v4005
  %v4007 = vsub.s32 4294967266, %v4002
  %v4008 = vadd.s32 %v4007, 127
  %v4009 = vshll.u32 %v4008, 23
  %v4010 = vor.u32 4788187, %v4009
  %v4011 = vand.u32 2147483647, %v4010
  %v4013 = vcvt.s32.f32 %v4006
  %v4014 = vmul.f32 %v4013, %v4011
  %v4015 = vxor.u32 %v4014, 2147483648
  %v4016 = vsel %vm3933, %v4015, %v4014
  %v4017 = vsub.s32 4, %v3993
  %v4018 = vsel %vm3933, %v4017, %v3993
  %v4019 = vsel %vm3932, %v2734, %v4016
  %v4020 = vsel %vm3932, 0, %v4018
  %v4021 = vcosq.f32.pop %v4019
  %v4022 = vsinq.f32.pop %v4019
  %vm4023 = vweird.f32 %v2734
  %v4024 = vadd.s32 %v4020, 3
  %v4025 = vand.u32 %v4024, 3
  %vm4026 = vcmp.lt.s32.totalorder %v4025, 2
  %vm4027 = vcmp.eq.s32.totalorder %v4025, 0
  %v4028 = vxor.u32 %v4022, 2147483648
  %v4029 = vsel %vm4027, %v4021, %v4028
  %vm4030 = vcmp.eq.s32.totalorder %v4025, 2
  %v4031 = vxor.u32 %v4021, 2147483648
  %v4032 = vsel %vm4030, %v4031, %v4022
  %v4033 = vsel %vm4026, %v4029, %v4032
  %v4034 = vsel %vm4023, nan, %v4033
  %v4035 = vand.u32 2147483647, %v2735
  %vm4036 = vcmp.le.f32.partialorder %v4035, 0.7853982
  %vm4037 = vcmp.lt.s32.totalorder %v2735, 0
  %v4038 = vand.u32 %v2735, 2139095040
  %v4039 = vshrl.u32 %v4038, 23
  %v4040 = vsub.s32 %v4039, 127
  %v4041 = vand.u32 2147483647, %v2735
  %v4042 = vand.u32 %v4041, 8388607
  %v4043 = vor.u32 %v4042, 8388608
  %v4044 = vsub.s32 0, %v4043
  %v4045 = vadd.s32 %v4040, 1
  %vm4046 = vcmp.gt.s32.totalorder %v4045, 0
  %v4047 = vsel %vm4046, %v4045, 0
  %v4048 = vshrl.u32 %v4047, 5
  %v4049 = vand.u32 %v4047, 31
  %v4050 = vsub.s32 32, %v4049
  %v4051 = vshrl.u32 683565275, %v4050
  %v4052 = vshll.u32 683565275, %v4049
  %v4053 = vshrl.u32 2475754826, %v4050
  %v4054 = vor.u32 %v4052, %v4053
  %v4055 = vshll.u32 2475754826, %v4049
  %v4056 = vshrl.u32 2131351028, %v4050
  %v4057 = vor.u32 %v4055, %v4056
  %v4058 = vshll.u32 2131351028, %v4049
  %v4059 = vshrl.u32 2102212464, %v4050
  %v4060 = vor.u32 %v4058, %v4059
  %v4061 = vshll.u32 2102212464, %v4049
  %v4062 = vshrl.u32 920167782, %v4050
  %v4063 = vor.u32 %v4061, %v4062
  %v4064 = vshll.u32 920167782, %v4049
  %v4065 = vshrl.u32 1326507024, %v4050
  %v4066 = vor.u32 %v4064, %v4065
  %vm4067 = vcmp.lt.s32.totalorder %v4048, 1
  %vm4068 = vcmp.lt.s32.totalorder %v4048, 2
  %vm4069 = vcmp.lt.s32.totalorder %v4048, 3
  %vm4070 = vcmp.lt.s32.totalorder %v4048, 4
  %v4071 = vsel %vm4067, %v4051, %v4054
  %v4072 = vsel %vm4070, %v4060, 2102212464
  %v4073 = vsel %vm4069, %v4057, %v4072
  %v4074 = vsel %vm4068, %v4071, %v4073
  %v4075 = vsel %vm4067, %v4054, %v4057
  %v4076 = vsel %vm4070, %v4063, 920167782
  %v4077 = vsel %vm4069, %v4060, %v4076
  %v4078 = vsel %vm4068, %v4075, %v4077
  %v4079 = vsel %vm4067, %v4057, %v4060
  %v4080 = vsel %vm4070, %v4066, 1326507024
  %v4081 = vsel %vm4069, %v4063, %v4080
  %v4082 = vsel %vm4068, %v4079, %v4081
  %v4083 = vshll.u32 %v4043, 8
  %v4084 = vmul.u32.u64.compose %v4083, %v4082
  %v4085 = vextract.low.u32 %v4084
  %v4086 = vextract.high.u32 %v4084
  %v4087 = vmul.u32.u64.compose %v4083, %v4078
  %v4088 = vextract.low.u32 %v4087
  %v4089 = vextract.high.u32 %v4087
  %v4090 = vmul.u32 %v4083, %v4074
  %v4091 = vadd.s32 %v4086, %v4088
  %vm4092 = vc.u32 %v4086, %v4088
  %v4093 = vadd.s32 %v4089, 1
  %v4094 = vsel %vm4092, %v4093, %v4089
  %v4095 = vadd.s32 %v4090, %v4094
  %v4096 = vadd.s32 %v4095, 536870912
  %v4097 = vshrl.u32 %v4096, 30
  %v4098 = vshll.u32 %v4097, 30
  %v4099 = vsub.s32 %v4095, %v4098
  %vm4100 = vcmp.lt.s32.totalorder %v4099, 0
  %v4101 = vsub.s32 0, %v4099
  %v4102 = vsel %vm4100, %v4101, %v4099
  %v4103 = vclz %v4102
  %v4104 = vsub.s32 %v4103, 2
  %vm4105 = vcmp.gt.s32.totalorder 0, %v4104
  %v4106 = vsel %vm4105, 0, %v4104
  %v4107 = vsub.s32 32, %v4106
  %v4108 = vshll.u32 %v4099, %v4106
  %v4109 = vshrl.u32 %v4091, %v4107
  %v4110 = vor.u32 %v4108, %v4109
  %v4111 = vsub.s32 4294967266, %v4106
  %v4112 = vadd.s32 %v4111, 127
  %v4113 = vshll.u32 %v4112, 23
  %v4114 = vor.u32 4788187, %v4113
  %v4115 = vand.u32 2147483647, %v4114
  %v4117 = vcvt.s32.f32 %v4110
  %v4118 = vmul.f32 %v4117, %v4115
  %v4119 = vxor.u32 %v4118, 2147483648
  %v4120 = vsel %vm4037, %v4119, %v4118
  %v4121 = vsub.s32 4, %v4097
  %v4122 = vsel %vm4037, %v4121, %v4097
  %v4123 = vsel %vm4036, %v2735, %v4120
  %v4124 = vsel %vm4036, 0, %v4122
  %v4125 = vcosq.f32.pop %v4123
  %v4126 = vsinq.f32.pop %v4123
  %vm4127 = vweird.f32 %v2735
  %v4128 = vadd.s32 %v4124, 3
  %v4129 = vand.u32 %v4128, 3
  %vm4130 = vcmp.lt.s32.totalorder %v4129, 2
  %vm4131 = vcmp.eq.s32.totalorder %v4129, 0
  %v4132 = vxor.u32 %v4126, 2147483648
  %v4133 = vsel %vm4131, %v4125, %v4132
  %vm4134 = vcmp.eq.s32.totalorder %v4129, 2
  %v4135 = vxor.u32 %v4125, 2147483648
  %v4136 = vsel %vm4134, %v4135, %v4126
  %v4137 = vsel %vm4130, %v4133, %v4136
  %v4138 = vsel %vm4127, nan, %v4137
  %v4139 = vand.u32 2147483647, %v2736
  %vm4140 = vcmp.le.f32.partialorder %v4139, 0.7853982
  %vm4141 = vcmp.lt.s32.totalorder %v2736, 0
  %v4142 = vand.u32 %v2736, 2139095040
  %v4143 = vshrl.u32 %v4142, 23
  %v4144 = vsub.s32 %v4143, 127
  %v4145 = vand.u32 2147483647, %v2736
  %v4146 = vand.u32 %v4145, 8388607
  %v4147 = vor.u32 %v4146, 8388608
  %v4148 = vsub.s32 0, %v4147
  %v4149 = vadd.s32 %v4144, 1
  %vm4150 = vcmp.gt.s32.totalorder %v4149, 0
  %v4151 = vsel %vm4150, %v4149, 0
  %v4152 = vshrl.u32 %v4151, 5
  %v4153 = vand.u32 %v4151, 31
  %v4154 = vsub.s32 32, %v4153
  %v4155 = vshrl.u32 683565275, %v4154
  %v4156 = vshll.u32 683565275, %v4153
  %v4157 = vshrl.u32 2475754826, %v4154
  %v4158 = vor.u32 %v4156, %v4157
  %v4159 = vshll.u32 2475754826, %v4153
  %v4160 = vshrl.u32 2131351028, %v4154
  %v4161 = vor.u32 %v4159, %v4160
  %v4162 = vshll.u32 2131351028, %v4153
  %v4163 = vshrl.u32 2102212464, %v4154
  %v4164 = vor.u32 %v4162, %v4163
  %v4165 = vshll.u32 2102212464, %v4153
  %v4166 = vshrl.u32 920167782, %v4154
  %v4167 = vor.u32 %v4165, %v4166
  %v4168 = vshll.u32 920167782, %v4153
  %v4169 = vshrl.u32 1326507024, %v4154
  %v4170 = vor.u32 %v4168, %v4169
  %vm4171 = vcmp.lt.s32.totalorder %v4152, 1
  %vm4172 = vcmp.lt.s32.totalorder %v4152, 2
  %vm4173 = vcmp.lt.s32.totalorder %v4152, 3
  %vm4174 = vcmp.lt.s32.totalorder %v4152, 4
  %v4175 = vsel %vm4171, %v4155, %v4158
  %v4176 = vsel %vm4174, %v4164, 2102212464
  %v4177 = vsel %vm4173, %v4161, %v4176
  %v4178 = vsel %vm4172, %v4175, %v4177
  %v4179 = vsel %vm4171, %v4158, %v4161
  %v4180 = vsel %vm4174, %v4167, 920167782
  %v4181 = vsel %vm4173, %v4164, %v4180
  %v4182 = vsel %vm4172, %v4179, %v4181
  %v4183 = vsel %vm4171, %v4161, %v4164
  %v4184 = vsel %vm4174, %v4170, 1326507024
  %v4185 = vsel %vm4173, %v4167, %v4184
  %v4186 = vsel %vm4172, %v4183, %v4185
  %v4187 = vshll.u32 %v4147, 8
  %v4188 = vmul.u32.u64.compose %v4187, %v4186
  %v4189 = vextract.low.u32 %v4188
  %v4190 = vextract.high.u32 %v4188
  %v4191 = vmul.u32.u64.compose %v4187, %v4182
  %v4192 = vextract.low.u32 %v4191
  %v4193 = vextract.high.u32 %v4191
  %v4194 = vmul.u32 %v4187, %v4178
  %v4195 = vadd.s32 %v4190, %v4192
  %vm4196 = vc.u32 %v4190, %v4192
  %v4197 = vadd.s32 %v4193, 1
  %v4198 = vsel %vm4196, %v4197, %v4193
  %v4199 = vadd.s32 %v4194, %v4198
  %v4200 = vadd.s32 %v4199, 536870912
  %v4201 = vshrl.u32 %v4200, 30
  %v4202 = vshll.u32 %v4201, 30
  %v4203 = vsub.s32 %v4199, %v4202
  %vm4204 = vcmp.lt.s32.totalorder %v4203, 0
  %v4205 = vsub.s32 0, %v4203
  %v4206 = vsel %vm4204, %v4205, %v4203
  %v4207 = vclz %v4206
  %v4208 = vsub.s32 %v4207, 2
  %vm4209 = vcmp.gt.s32.totalorder 0, %v4208
  %v4210 = vsel %vm4209, 0, %v4208
  %v4211 = vsub.s32 32, %v4210
  %v4212 = vshll.u32 %v4203, %v4210
  %v4213 = vshrl.u32 %v4195, %v4211
  %v4214 = vor.u32 %v4212, %v4213
  %v4215 = vsub.s32 4294967266, %v4210
  %v4216 = vadd.s32 %v4215, 127
  %v4217 = vshll.u32 %v4216, 23
  %v4218 = vor.u32 4788187, %v4217
  %v4219 = vand.u32 2147483647, %v4218
  %v4221 = vcvt.s32.f32 %v4214
  %v4222 = vmul.f32 %v4221, %v4219
  %v4223 = vxor.u32 %v4222, 2147483648
  %v4224 = vsel %vm4141, %v4223, %v4222
  %v4225 = vsub.s32 4, %v4201
  %v4226 = vsel %vm4141, %v4225, %v4201
  %v4227 = vsel %vm4140, %v2736, %v4224
  %v4228 = vsel %vm4140, 0, %v4226
  %v4229 = vcosq.f32.pop %v4227
  %v4230 = vsinq.f32.pop %v4227
  %vm4231 = vweird.f32 %v2736
  %v4232 = vadd.s32 %v4228, 3
  %v4233 = vand.u32 %v4232, 3
  %vm4234 = vcmp.lt.s32.totalorder %v4233, 2
  %vm4235 = vcmp.eq.s32.totalorder %v4233, 0
  %v4236 = vxor.u32 %v4230, 2147483648
  %v4237 = vsel %vm4235, %v4229, %v4236
  %vm4238 = vcmp.eq.s32.totalorder %v4233, 2
  %v4239 = vxor.u32 %v4229, 2147483648
  %v4240 = vsel %vm4238, %v4239, %v4230
  %v4241 = vsel %vm4234, %v4237, %v4240
  %v4242 = vsel %vm4231, nan, %v4241
  %v4243 = vand.u32 2147483647, %v2737
  %vm4244 = vcmp.le.f32.partialorder %v4243, 0.7853982
  %vm4245 = vcmp.lt.s32.totalorder %v2737, 0
  %v4246 = vand.u32 %v2737, 2139095040
  %v4247 = vshrl.u32 %v4246, 23
  %v4248 = vsub.s32 %v4247, 127
  %v4249 = vand.u32 2147483647, %v2737
  %v4250 = vand.u32 %v4249, 8388607
  %v4251 = vor.u32 %v4250, 8388608
  %v4252 = vsub.s32 0, %v4251
  %v4253 = vadd.s32 %v4248, 1
  %vm4254 = vcmp.gt.s32.totalorder %v4253, 0
  %v4255 = vsel %vm4254, %v4253, 0
  %v4256 = vshrl.u32 %v4255, 5
  %v4257 = vand.u32 %v4255, 31
  %v4258 = vsub.s32 32, %v4257
  %v4259 = vshrl.u32 683565275, %v4258
  %v4260 = vshll.u32 683565275, %v4257
  %v4261 = vshrl.u32 2475754826, %v4258
  %v4262 = vor.u32 %v4260, %v4261
  %v4263 = vshll.u32 2475754826, %v4257
  %v4264 = vshrl.u32 2131351028, %v4258
  %v4265 = vor.u32 %v4263, %v4264
  %v4266 = vshll.u32 2131351028, %v4257
  %v4267 = vshrl.u32 2102212464, %v4258
  %v4268 = vor.u32 %v4266, %v4267
  %v4269 = vshll.u32 2102212464, %v4257
  %v4270 = vshrl.u32 920167782, %v4258
  %v4271 = vor.u32 %v4269, %v4270
  %v4272 = vshll.u32 920167782, %v4257
  %v4273 = vshrl.u32 1326507024, %v4258
  %v4274 = vor.u32 %v4272, %v4273
  %vm4275 = vcmp.lt.s32.totalorder %v4256, 1
  %vm4276 = vcmp.lt.s32.totalorder %v4256, 2
  %vm4277 = vcmp.lt.s32.totalorder %v4256, 3
  %vm4278 = vcmp.lt.s32.totalorder %v4256, 4
  %v4279 = vsel %vm4275, %v4259, %v4262
  %v4280 = vsel %vm4278, %v4268, 2102212464
  %v4281 = vsel %vm4277, %v4265, %v4280
  %v4282 = vsel %vm4276, %v4279, %v4281
  %v4283 = vsel %vm4275, %v4262, %v4265
  %v4284 = vsel %vm4278, %v4271, 920167782
  %v4285 = vsel %vm4277, %v4268, %v4284
  %v4286 = vsel %vm4276, %v4283, %v4285
  %v4287 = vsel %vm4275, %v4265, %v4268
  %v4288 = vsel %vm4278, %v4274, 1326507024
  %v4289 = vsel %vm4277, %v4271, %v4288
  %v4290 = vsel %vm4276, %v4287, %v4289
  %v4291 = vshll.u32 %v4251, 8
  %v4292 = vmul.u32.u64.compose %v4291, %v4290
  %v4293 = vextract.low.u32 %v4292
  %v4294 = vextract.high.u32 %v4292
  %v4295 = vmul.u32.u64.compose %v4291, %v4286
  %v4296 = vextract.low.u32 %v4295
  %v4297 = vextract.high.u32 %v4295
  %v4298 = vmul.u32 %v4291, %v4282
  %v4299 = vadd.s32 %v4294, %v4296
  %vm4300 = vc.u32 %v4294, %v4296
  %v4301 = vadd.s32 %v4297, 1
  %v4302 = vsel %vm4300, %v4301, %v4297
  %v4303 = vadd.s32 %v4298, %v4302
  %v4304 = vadd.s32 %v4303, 536870912
  %v4305 = vshrl.u32 %v4304, 30
  %v4306 = vshll.u32 %v4305, 30
  %v4307 = vsub.s32 %v4303, %v4306
  %vm4308 = vcmp.lt.s32.totalorder %v4307, 0
  %v4309 = vsub.s32 0, %v4307
  %v4310 = vsel %vm4308, %v4309, %v4307
  %v4311 = vclz %v4310
  %v4312 = vsub.s32 %v4311, 2
  %vm4313 = vcmp.gt.s32.totalorder 0, %v4312
  %v4314 = vsel %vm4313, 0, %v4312
  %v4315 = vsub.s32 32, %v4314
  %v4316 = vshll.u32 %v4307, %v4314
  %v4317 = vshrl.u32 %v4299, %v4315
  %v4318 = vor.u32 %v4316, %v4317
  %v4319 = vsub.s32 4294967266, %v4314
  %v4320 = vadd.s32 %v4319, 127
  %v4321 = vshll.u32 %v4320, 23
  %v4322 = vor.u32 4788187, %v4321
  %v4323 = vand.u32 2147483647, %v4322
  %v4325 = vcvt.s32.f32 %v4318
  %v4326 = vmul.f32 %v4325, %v4323
  %v4327 = vxor.u32 %v4326, 2147483648
  %v4328 = vsel %vm4245, %v4327, %v4326
  %v4329 = vsub.s32 4, %v4305
  %v4330 = vsel %vm4245, %v4329, %v4305
  %v4331 = vsel %vm4244, %v2737, %v4328
  %v4332 = vsel %vm4244, 0, %v4330
  %v4333 = vcosq.f32.pop %v4331
  %v4334 = vsinq.f32.pop %v4331
  %vm4335 = vweird.f32 %v2737
  %v4336 = vadd.s32 %v4332, 3
  %v4337 = vand.u32 %v4336, 3
  %vm4338 = vcmp.lt.s32.totalorder %v4337, 2
  %vm4339 = vcmp.eq.s32.totalorder %v4337, 0
  %v4340 = vxor.u32 %v4334, 2147483648
  %v4341 = vsel %vm4339, %v4333, %v4340
  %vm4342 = vcmp.eq.s32.totalorder %v4337, 2
  %v4343 = vxor.u32 %v4333, 2147483648
  %v4344 = vsel %vm4342, %v4343, %v4334
  %v4345 = vsel %vm4338, %v4341, %v4344
  %v4346 = vsel %vm4335, nan, %v4345
  %v4347 = vand.u32 2147483647, %v2738
  %vm4348 = vcmp.le.f32.partialorder %v4347, 0.7853982
  %vm4349 = vcmp.lt.s32.totalorder %v2738, 0
  %v4350 = vand.u32 %v2738, 2139095040
  %v4351 = vshrl.u32 %v4350, 23
  %v4352 = vsub.s32 %v4351, 127
  %v4353 = vand.u32 2147483647, %v2738
  %v4354 = vand.u32 %v4353, 8388607
  %v4355 = vor.u32 %v4354, 8388608
  %v4356 = vsub.s32 0, %v4355
  %v4357 = vadd.s32 %v4352, 1
  %vm4358 = vcmp.gt.s32.totalorder %v4357, 0
  %v4359 = vsel %vm4358, %v4357, 0
  %v4360 = vshrl.u32 %v4359, 5
  %v4361 = vand.u32 %v4359, 31
  %v4362 = vsub.s32 32, %v4361
  %v4363 = vshrl.u32 683565275, %v4362
  %v4364 = vshll.u32 683565275, %v4361
  %v4365 = vshrl.u32 2475754826, %v4362
  %v4366 = vor.u32 %v4364, %v4365
  %v4367 = vshll.u32 2475754826, %v4361
  %v4368 = vshrl.u32 2131351028, %v4362
  %v4369 = vor.u32 %v4367, %v4368
  %v4370 = vshll.u32 2131351028, %v4361
  %v4371 = vshrl.u32 2102212464, %v4362
  %v4372 = vor.u32 %v4370, %v4371
  %v4373 = vshll.u32 2102212464, %v4361
  %v4374 = vshrl.u32 920167782, %v4362
  %v4375 = vor.u32 %v4373, %v4374
  %v4376 = vshll.u32 920167782, %v4361
  %v4377 = vshrl.u32 1326507024, %v4362
  %v4378 = vor.u32 %v4376, %v4377
  %vm4379 = vcmp.lt.s32.totalorder %v4360, 1
  %vm4380 = vcmp.lt.s32.totalorder %v4360, 2
  %vm4381 = vcmp.lt.s32.totalorder %v4360, 3
  %vm4382 = vcmp.lt.s32.totalorder %v4360, 4
  %v4383 = vsel %vm4379, %v4363, %v4366
  %v4384 = vsel %vm4382, %v4372, 2102212464
  %v4385 = vsel %vm4381, %v4369, %v4384
  %v4386 = vsel %vm4380, %v4383, %v4385
  %v4387 = vsel %vm4379, %v4366, %v4369
  %v4388 = vsel %vm4382, %v4375, 920167782
  %v4389 = vsel %vm4381, %v4372, %v4388
  %v4390 = vsel %vm4380, %v4387, %v4389
  %v4391 = vsel %vm4379, %v4369, %v4372
  %v4392 = vsel %vm4382, %v4378, 1326507024
  %v4393 = vsel %vm4381, %v4375, %v4392
  %v4394 = vsel %vm4380, %v4391, %v4393
  %v4395 = vshll.u32 %v4355, 8
  %v4396 = vmul.u32.u64.compose %v4395, %v4394
  %v4397 = vextract.low.u32 %v4396
  %v4398 = vextract.high.u32 %v4396
  %v4399 = vmul.u32.u64.compose %v4395, %v4390
  %v4400 = vextract.low.u32 %v4399
  %v4401 = vextract.high.u32 %v4399
  %v4402 = vmul.u32 %v4395, %v4386
  %v4403 = vadd.s32 %v4398, %v4400
  %vm4404 = vc.u32 %v4398, %v4400
  %v4405 = vadd.s32 %v4401, 1
  %v4406 = vsel %vm4404, %v4405, %v4401
  %v4407 = vadd.s32 %v4402, %v4406
  %v4408 = vadd.s32 %v4407, 536870912
  %v4409 = vshrl.u32 %v4408, 30
  %v4410 = vshll.u32 %v4409, 30
  %v4411 = vsub.s32 %v4407, %v4410
  %vm4412 = vcmp.lt.s32.totalorder %v4411, 0
  %v4413 = vsub.s32 0, %v4411
  %v4414 = vsel %vm4412, %v4413, %v4411
  %v4415 = vclz %v4414
  %v4416 = vsub.s32 %v4415, 2
  %vm4417 = vcmp.gt.s32.totalorder 0, %v4416
  %v4418 = vsel %vm4417, 0, %v4416
  %v4419 = vsub.s32 32, %v4418
  %v4420 = vshll.u32 %v4411, %v4418
  %v4421 = vshrl.u32 %v4403, %v4419
  %v4422 = vor.u32 %v4420, %v4421
  %v4423 = vsub.s32 4294967266, %v4418
  %v4424 = vadd.s32 %v4423, 127
  %v4425 = vshll.u32 %v4424, 23
  %v4426 = vor.u32 4788187, %v4425
  %v4427 = vand.u32 2147483647, %v4426
  %v4429 = vcvt.s32.f32 %v4422
  %v4430 = vmul.f32 %v4429, %v4427
  %v4431 = vxor.u32 %v4430, 2147483648
  %v4432 = vsel %vm4349, %v4431, %v4430
  %v4433 = vsub.s32 4, %v4409
  %v4434 = vsel %vm4349, %v4433, %v4409
  %v4435 = vsel %vm4348, %v2738, %v4432
  %v4436 = vsel %vm4348, 0, %v4434
  %v4437 = vcosq.f32.pop %v4435
  %v4438 = vsinq.f32.pop %v4435
  %vm4439 = vweird.f32 %v2738
  %v4440 = vadd.s32 %v4436, 3
  %v4441 = vand.u32 %v4440, 3
  %vm4442 = vcmp.lt.s32.totalorder %v4441, 2
  %vm4443 = vcmp.eq.s32.totalorder %v4441, 0
  %v4444 = vxor.u32 %v4438, 2147483648
  %v4445 = vsel %vm4443, %v4437, %v4444
  %vm4446 = vcmp.eq.s32.totalorder %v4441, 2
  %v4447 = vxor.u32 %v4437, 2147483648
  %v4448 = vsel %vm4446, %v4447, %v4438
  %v4449 = vsel %vm4442, %v4445, %v4448
  %v4450 = vsel %vm4439, nan, %v4449
  %v4451 = vand.u32 2147483647, %v2739
  %vm4452 = vcmp.le.f32.partialorder %v4451, 0.7853982
  %vm4453 = vcmp.lt.s32.totalorder %v2739, 0
  %v4454 = vand.u32 %v2739, 2139095040
  %v4455 = vshrl.u32 %v4454, 23
  %v4456 = vsub.s32 %v4455, 127
  %v4457 = vand.u32 2147483647, %v2739
  %v4458 = vand.u32 %v4457, 8388607
  %v4459 = vor.u32 %v4458, 8388608
  %v4460 = vsub.s32 0, %v4459
  %v4461 = vadd.s32 %v4456, 1
  %vm4462 = vcmp.gt.s32.totalorder %v4461, 0
  %v4463 = vsel %vm4462, %v4461, 0
  %v4464 = vshrl.u32 %v4463, 5
  %v4465 = vand.u32 %v4463, 31
  %v4466 = vsub.s32 32, %v4465
  %v4467 = vshrl.u32 683565275, %v4466
  %v4468 = vshll.u32 683565275, %v4465
  %v4469 = vshrl.u32 2475754826, %v4466
  %v4470 = vor.u32 %v4468, %v4469
  %v4471 = vshll.u32 2475754826, %v4465
  %v4472 = vshrl.u32 2131351028, %v4466
  %v4473 = vor.u32 %v4471, %v4472
  %v4474 = vshll.u32 2131351028, %v4465
  %v4475 = vshrl.u32 2102212464, %v4466
  %v4476 = vor.u32 %v4474, %v4475
  %v4477 = vshll.u32 2102212464, %v4465
  %v4478 = vshrl.u32 920167782, %v4466
  %v4479 = vor.u32 %v4477, %v4478
  %v4480 = vshll.u32 920167782, %v4465
  %v4481 = vshrl.u32 1326507024, %v4466
  %v4482 = vor.u32 %v4480, %v4481
  %vm4483 = vcmp.lt.s32.totalorder %v4464, 1
  %vm4484 = vcmp.lt.s32.totalorder %v4464, 2
  %vm4485 = vcmp.lt.s32.totalorder %v4464, 3
  %vm4486 = vcmp.lt.s32.totalorder %v4464, 4
  %v4487 = vsel %vm4483, %v4467, %v4470
  %v4488 = vsel %vm4486, %v4476, 2102212464
  %v4489 = vsel %vm4485, %v4473, %v4488
  %v4490 = vsel %vm4484, %v4487, %v4489
  %v4491 = vsel %vm4483, %v4470, %v4473
  %v4492 = vsel %vm4486, %v4479, 920167782
  %v4493 = vsel %vm4485, %v4476, %v4492
  %v4494 = vsel %vm4484, %v4491, %v4493
  %v4495 = vsel %vm4483, %v4473, %v4476
  %v4496 = vsel %vm4486, %v4482, 1326507024
  %v4497 = vsel %vm4485, %v4479, %v4496
  %v4498 = vsel %vm4484, %v4495, %v4497
  %v4499 = vshll.u32 %v4459, 8
  %v4500 = vmul.u32.u64.compose %v4499, %v4498
  %v4501 = vextract.low.u32 %v4500
  %v4502 = vextract.high.u32 %v4500
  %v4503 = vmul.u32.u64.compose %v4499, %v4494
  %v4504 = vextract.low.u32 %v4503
  %v4505 = vextract.high.u32 %v4503
  %v4506 = vmul.u32 %v4499, %v4490
  %v4507 = vadd.s32 %v4502, %v4504
  %vm4508 = vc.u32 %v4502, %v4504
  %v4509 = vadd.s32 %v4505, 1
  %v4510 = vsel %vm4508, %v4509, %v4505
  %v4511 = vadd.s32 %v4506, %v4510
  %v4512 = vadd.s32 %v4511, 536870912
  %v4513 = vshrl.u32 %v4512, 30
  %v4514 = vshll.u32 %v4513, 30
  %v4515 = vsub.s32 %v4511, %v4514
  %vm4516 = vcmp.lt.s32.totalorder %v4515, 0
  %v4517 = vsub.s32 0, %v4515
  %v4518 = vsel %vm4516, %v4517, %v4515
  %v4519 = vclz %v4518
  %v4520 = vsub.s32 %v4519, 2
  %vm4521 = vcmp.gt.s32.totalorder 0, %v4520
  %v4522 = vsel %vm4521, 0, %v4520
  %v4523 = vsub.s32 32, %v4522
  %v4524 = vshll.u32 %v4515, %v4522
  %v4525 = vshrl.u32 %v4507, %v4523
  %v4526 = vor.u32 %v4524, %v4525
  %v4527 = vsub.s32 4294967266, %v4522
  %v4528 = vadd.s32 %v4527, 127
  %v4529 = vshll.u32 %v4528, 23
  %v4530 = vor.u32 4788187, %v4529
  %v4531 = vand.u32 2147483647, %v4530
  %v4533 = vcvt.s32.f32 %v4526
  %v4534 = vmul.f32 %v4533, %v4531
  %v4535 = vxor.u32 %v4534, 2147483648
  %v4536 = vsel %vm4453, %v4535, %v4534
  %v4537 = vsub.s32 4, %v4513
  %v4538 = vsel %vm4453, %v4537, %v4513
  %v4539 = vsel %vm4452, %v2739, %v4536
  %v4540 = vsel %vm4452, 0, %v4538
  %v4541 = vcosq.f32.pop %v4539
  %v4542 = vsinq.f32.pop %v4539
  %vm4543 = vweird.f32 %v2739
  %v4544 = vadd.s32 %v4540, 3
  %v4545 = vand.u32 %v4544, 3
  %vm4546 = vcmp.lt.s32.totalorder %v4545, 2
  %vm4547 = vcmp.eq.s32.totalorder %v4545, 0
  %v4548 = vxor.u32 %v4542, 2147483648
  %v4549 = vsel %vm4547, %v4541, %v4548
  %vm4550 = vcmp.eq.s32.totalorder %v4545, 2
  %v4551 = vxor.u32 %v4541, 2147483648
  %v4552 = vsel %vm4550, %v4551, %v4542
  %v4553 = vsel %vm4546, %v4549, %v4552
  %v4554 = vsel %vm4543, nan, %v4553
  %v4555 = vand.u32 2147483647, %v2740
  %vm4556 = vcmp.le.f32.partialorder %v4555, 0.7853982
  %vm4557 = vcmp.lt.s32.totalorder %v2740, 0
  %v4558 = vand.u32 %v2740, 2139095040
  %v4559 = vshrl.u32 %v4558, 23
  %v4560 = vsub.s32 %v4559, 127
  %v4561 = vand.u32 2147483647, %v2740
  %v4562 = vand.u32 %v4561, 8388607
  %v4563 = vor.u32 %v4562, 8388608
  %v4564 = vsub.s32 0, %v4563
  %v4565 = vadd.s32 %v4560, 1
  %vm4566 = vcmp.gt.s32.totalorder %v4565, 0
  %v4567 = vsel %vm4566, %v4565, 0
  %v4568 = vshrl.u32 %v4567, 5
  %v4569 = vand.u32 %v4567, 31
  %v4570 = vsub.s32 32, %v4569
  %v4571 = vshrl.u32 683565275, %v4570
  %v4572 = vshll.u32 683565275, %v4569
  %v4573 = vshrl.u32 2475754826, %v4570
  %v4574 = vor.u32 %v4572, %v4573
  %v4575 = vshll.u32 2475754826, %v4569
  %v4576 = vshrl.u32 2131351028, %v4570
  %v4577 = vor.u32 %v4575, %v4576
  %v4578 = vshll.u32 2131351028, %v4569
  %v4579 = vshrl.u32 2102212464, %v4570
  %v4580 = vor.u32 %v4578, %v4579
  %v4581 = vshll.u32 2102212464, %v4569
  %v4582 = vshrl.u32 920167782, %v4570
  %v4583 = vor.u32 %v4581, %v4582
  %v4584 = vshll.u32 920167782, %v4569
  %v4585 = vshrl.u32 1326507024, %v4570
  %v4586 = vor.u32 %v4584, %v4585
  %vm4587 = vcmp.lt.s32.totalorder %v4568, 1
  %vm4588 = vcmp.lt.s32.totalorder %v4568, 2
  %vm4589 = vcmp.lt.s32.totalorder %v4568, 3
  %vm4590 = vcmp.lt.s32.totalorder %v4568, 4
  %v4591 = vsel %vm4587, %v4571, %v4574
  %v4592 = vsel %vm4590, %v4580, 2102212464
  %v4593 = vsel %vm4589, %v4577, %v4592
  %v4594 = vsel %vm4588, %v4591, %v4593
  %v4595 = vsel %vm4587, %v4574, %v4577
  %v4596 = vsel %vm4590, %v4583, 920167782
  %v4597 = vsel %vm4589, %v4580, %v4596
  %v4598 = vsel %vm4588, %v4595, %v4597
  %v4599 = vsel %vm4587, %v4577, %v4580
  %v4600 = vsel %vm4590, %v4586, 1326507024
  %v4601 = vsel %vm4589, %v4583, %v4600
  %v4602 = vsel %vm4588, %v4599, %v4601
  %v4603 = vshll.u32 %v4563, 8
  %v4604 = vmul.u32.u64.compose %v4603, %v4602
  %v4605 = vextract.low.u32 %v4604
  %v4606 = vextract.high.u32 %v4604
  %v4607 = vmul.u32.u64.compose %v4603, %v4598
  %v4608 = vextract.low.u32 %v4607
  %v4609 = vextract.high.u32 %v4607
  %v4610 = vmul.u32 %v4603, %v4594
  %v4611 = vadd.s32 %v4606, %v4608
  %vm4612 = vc.u32 %v4606, %v4608
  %v4613 = vadd.s32 %v4609, 1
  %v4614 = vsel %vm4612, %v4613, %v4609
  %v4615 = vadd.s32 %v4610, %v4614
  %v4616 = vadd.s32 %v4615, 536870912
  %v4617 = vshrl.u32 %v4616, 30
  %v4618 = vshll.u32 %v4617, 30
  %v4619 = vsub.s32 %v4615, %v4618
  %vm4620 = vcmp.lt.s32.totalorder %v4619, 0
  %v4621 = vsub.s32 0, %v4619
  %v4622 = vsel %vm4620, %v4621, %v4619
  %v4623 = vclz %v4622
  %v4624 = vsub.s32 %v4623, 2
  %vm4625 = vcmp.gt.s32.totalorder 0, %v4624
  %v4626 = vsel %vm4625, 0, %v4624
  %v4627 = vsub.s32 32, %v4626
  %v4628 = vshll.u32 %v4619, %v4626
  %v4629 = vshrl.u32 %v4611, %v4627
  %v4630 = vor.u32 %v4628, %v4629
  %v4631 = vsub.s32 4294967266, %v4626
  %v4632 = vadd.s32 %v4631, 127
  %v4633 = vshll.u32 %v4632, 23
  %v4634 = vor.u32 4788187, %v4633
  %v4635 = vand.u32 2147483647, %v4634
  %v4637 = vcvt.s32.f32 %v4630
  %v4638 = vmul.f32 %v4637, %v4635
  %v4639 = vxor.u32 %v4638, 2147483648
  %v4640 = vsel %vm4557, %v4639, %v4638
  %v4641 = vsub.s32 4, %v4617
  %v4642 = vsel %vm4557, %v4641, %v4617
  %v4643 = vsel %vm4556, %v2740, %v4640
  %v4644 = vsel %vm4556, 0, %v4642
  %v4645 = vcosq.f32.pop %v4643
  %v4646 = vsinq.f32.pop %v4643
  %vm4647 = vweird.f32 %v2740
  %v4648 = vadd.s32 %v4644, 3
  %v4649 = vand.u32 %v4648, 3
  %vm4650 = vcmp.lt.s32.totalorder %v4649, 2
  %vm4651 = vcmp.eq.s32.totalorder %v4649, 0
  %v4652 = vxor.u32 %v4646, 2147483648
  %v4653 = vsel %vm4651, %v4645, %v4652
  %vm4654 = vcmp.eq.s32.totalorder %v4649, 2
  %v4655 = vxor.u32 %v4645, 2147483648
  %v4656 = vsel %vm4654, %v4655, %v4646
  %v4657 = vsel %vm4650, %v4653, %v4656
  %v4658 = vsel %vm4647, nan, %v4657
  %v4659 = vand.u32 2147483647, %v2741
  %vm4660 = vcmp.le.f32.partialorder %v4659, 0.7853982
  %vm4661 = vcmp.lt.s32.totalorder %v2741, 0
  %v4662 = vand.u32 %v2741, 2139095040
  %v4663 = vshrl.u32 %v4662, 23
  %v4664 = vsub.s32 %v4663, 127
  %v4665 = vand.u32 2147483647, %v2741
  %v4666 = vand.u32 %v4665, 8388607
  %v4667 = vor.u32 %v4666, 8388608
  %v4668 = vsub.s32 0, %v4667
  %v4669 = vadd.s32 %v4664, 1
  %vm4670 = vcmp.gt.s32.totalorder %v4669, 0
  %v4671 = vsel %vm4670, %v4669, 0
  %v4672 = vshrl.u32 %v4671, 5
  %v4673 = vand.u32 %v4671, 31
  %v4674 = vsub.s32 32, %v4673
  %v4675 = vshrl.u32 683565275, %v4674
  %v4676 = vshll.u32 683565275, %v4673
  %v4677 = vshrl.u32 2475754826, %v4674
  %v4678 = vor.u32 %v4676, %v4677
  %v4679 = vshll.u32 2475754826, %v4673
  %v4680 = vshrl.u32 2131351028, %v4674
  %v4681 = vor.u32 %v4679, %v4680
  %v4682 = vshll.u32 2131351028, %v4673
  %v4683 = vshrl.u32 2102212464, %v4674
  %v4684 = vor.u32 %v4682, %v4683
  %v4685 = vshll.u32 2102212464, %v4673
  %v4686 = vshrl.u32 920167782, %v4674
  %v4687 = vor.u32 %v4685, %v4686
  %v4688 = vshll.u32 920167782, %v4673
  %v4689 = vshrl.u32 1326507024, %v4674
  %v4690 = vor.u32 %v4688, %v4689
  %vm4691 = vcmp.lt.s32.totalorder %v4672, 1
  %vm4692 = vcmp.lt.s32.totalorder %v4672, 2
  %vm4693 = vcmp.lt.s32.totalorder %v4672, 3
  %vm4694 = vcmp.lt.s32.totalorder %v4672, 4
  %v4695 = vsel %vm4691, %v4675, %v4678
  %v4696 = vsel %vm4694, %v4684, 2102212464
  %v4697 = vsel %vm4693, %v4681, %v4696
  %v4698 = vsel %vm4692, %v4695, %v4697
  %v4699 = vsel %vm4691, %v4678, %v4681
  %v4700 = vsel %vm4694, %v4687, 920167782
  %v4701 = vsel %vm4693, %v4684, %v4700
  %v4702 = vsel %vm4692, %v4699, %v4701
  %v4703 = vsel %vm4691, %v4681, %v4684
  %v4704 = vsel %vm4694, %v4690, 1326507024
  %v4705 = vsel %vm4693, %v4687, %v4704
  %v4706 = vsel %vm4692, %v4703, %v4705
  %v4707 = vshll.u32 %v4667, 8
  %v4708 = vmul.u32.u64.compose %v4707, %v4706
  %v4709 = vextract.low.u32 %v4708
  %v4710 = vextract.high.u32 %v4708
  %v4711 = vmul.u32.u64.compose %v4707, %v4702
  %v4712 = vextract.low.u32 %v4711
  %v4713 = vextract.high.u32 %v4711
  %v4714 = vmul.u32 %v4707, %v4698
  %v4715 = vadd.s32 %v4710, %v4712
  %vm4716 = vc.u32 %v4710, %v4712
  %v4717 = vadd.s32 %v4713, 1
  %v4718 = vsel %vm4716, %v4717, %v4713
  %v4719 = vadd.s32 %v4714, %v4718
  %v4720 = vadd.s32 %v4719, 536870912
  %v4721 = vshrl.u32 %v4720, 30
  %v4722 = vshll.u32 %v4721, 30
  %v4723 = vsub.s32 %v4719, %v4722
  %vm4724 = vcmp.lt.s32.totalorder %v4723, 0
  %v4725 = vsub.s32 0, %v4723
  %v4726 = vsel %vm4724, %v4725, %v4723
  %v4727 = vclz %v4726
  %v4728 = vsub.s32 %v4727, 2
  %vm4729 = vcmp.gt.s32.totalorder 0, %v4728
  %v4730 = vsel %vm4729, 0, %v4728
  %v4731 = vsub.s32 32, %v4730
  %v4732 = vshll.u32 %v4723, %v4730
  %v4733 = vshrl.u32 %v4715, %v4731
  %v4734 = vor.u32 %v4732, %v4733
  %v4735 = vsub.s32 4294967266, %v4730
  %v4736 = vadd.s32 %v4735, 127
  %v4737 = vshll.u32 %v4736, 23
  %v4738 = vor.u32 4788187, %v4737
  %v4739 = vand.u32 2147483647, %v4738
  %v4741 = vcvt.s32.f32 %v4734
  %v4742 = vmul.f32 %v4741, %v4739
  %v4743 = vxor.u32 %v4742, 2147483648
  %v4744 = vsel %vm4661, %v4743, %v4742
  %v4745 = vsub.s32 4, %v4721
  %v4746 = vsel %vm4661, %v4745, %v4721
  %v4747 = vsel %vm4660, %v2741, %v4744
  %v4748 = vsel %vm4660, 0, %v4746
  %v4749 = vcosq.f32.pop %v4747
  %v4750 = vsinq.f32.pop %v4747
  %vm4751 = vweird.f32 %v2741
  %v4752 = vadd.s32 %v4748, 3
  %v4753 = vand.u32 %v4752, 3
  %vm4754 = vcmp.lt.s32.totalorder %v4753, 2
  %vm4755 = vcmp.eq.s32.totalorder %v4753, 0
  %v4756 = vxor.u32 %v4750, 2147483648
  %v4757 = vsel %vm4755, %v4749, %v4756
  %vm4758 = vcmp.eq.s32.totalorder %v4753, 2
  %v4759 = vxor.u32 %v4749, 2147483648
  %v4760 = vsel %vm4758, %v4759, %v4750
  %v4761 = vsel %vm4754, %v4757, %v4760
  %v4762 = vsel %vm4751, nan, %v4761
  %v4763 = vand.u32 2147483647, %v2742
  %vm4764 = vcmp.le.f32.partialorder %v4763, 0.7853982
  %vm4765 = vcmp.lt.s32.totalorder %v2742, 0
  %v4766 = vand.u32 %v2742, 2139095040
  %v4767 = vshrl.u32 %v4766, 23
  %v4768 = vsub.s32 %v4767, 127
  %v4769 = vand.u32 2147483647, %v2742
  %v4770 = vand.u32 %v4769, 8388607
  %v4771 = vor.u32 %v4770, 8388608
  %v4772 = vsub.s32 0, %v4771
  %v4773 = vadd.s32 %v4768, 1
  %vm4774 = vcmp.gt.s32.totalorder %v4773, 0
  %v4775 = vsel %vm4774, %v4773, 0
  %v4776 = vshrl.u32 %v4775, 5
  %v4777 = vand.u32 %v4775, 31
  %v4778 = vsub.s32 32, %v4777
  %v4779 = vshrl.u32 683565275, %v4778
  %v4780 = vshll.u32 683565275, %v4777
  %v4781 = vshrl.u32 2475754826, %v4778
  %v4782 = vor.u32 %v4780, %v4781
  %v4783 = vshll.u32 2475754826, %v4777
  %v4784 = vshrl.u32 2131351028, %v4778
  %v4785 = vor.u32 %v4783, %v4784
  %v4786 = vshll.u32 2131351028, %v4777
  %v4787 = vshrl.u32 2102212464, %v4778
  %v4788 = vor.u32 %v4786, %v4787
  %v4789 = vshll.u32 2102212464, %v4777
  %v4790 = vshrl.u32 920167782, %v4778
  %v4791 = vor.u32 %v4789, %v4790
  %v4792 = vshll.u32 920167782, %v4777
  %v4793 = vshrl.u32 1326507024, %v4778
  %v4794 = vor.u32 %v4792, %v4793
  %vm4795 = vcmp.lt.s32.totalorder %v4776, 1
  %vm4796 = vcmp.lt.s32.totalorder %v4776, 2
  %vm4797 = vcmp.lt.s32.totalorder %v4776, 3
  %vm4798 = vcmp.lt.s32.totalorder %v4776, 4
  %v4799 = vsel %vm4795, %v4779, %v4782
  %v4800 = vsel %vm4798, %v4788, 2102212464
  %v4801 = vsel %vm4797, %v4785, %v4800
  %v4802 = vsel %vm4796, %v4799, %v4801
  %v4803 = vsel %vm4795, %v4782, %v4785
  %v4804 = vsel %vm4798, %v4791, 920167782
  %v4805 = vsel %vm4797, %v4788, %v4804
  %v4806 = vsel %vm4796, %v4803, %v4805
  %v4807 = vsel %vm4795, %v4785, %v4788
  %v4808 = vsel %vm4798, %v4794, 1326507024
  %v4809 = vsel %vm4797, %v4791, %v4808
  %v4810 = vsel %vm4796, %v4807, %v4809
  %v4811 = vshll.u32 %v4771, 8
  %v4812 = vmul.u32.u64.compose %v4811, %v4810
  %v4813 = vextract.low.u32 %v4812
  %v4814 = vextract.high.u32 %v4812
  %v4815 = vmul.u32.u64.compose %v4811, %v4806
  %v4816 = vextract.low.u32 %v4815
  %v4817 = vextract.high.u32 %v4815
  %v4818 = vmul.u32 %v4811, %v4802
  %v4819 = vadd.s32 %v4814, %v4816
  %vm4820 = vc.u32 %v4814, %v4816
  %v4821 = vadd.s32 %v4817, 1
  %v4822 = vsel %vm4820, %v4821, %v4817
  %v4823 = vadd.s32 %v4818, %v4822
  %v4824 = vadd.s32 %v4823, 536870912
  %v4825 = vshrl.u32 %v4824, 30
  %v4826 = vshll.u32 %v4825, 30
  %v4827 = vsub.s32 %v4823, %v4826
  %vm4828 = vcmp.lt.s32.totalorder %v4827, 0
  %v4829 = vsub.s32 0, %v4827
  %v4830 = vsel %vm4828, %v4829, %v4827
  %v4831 = vclz %v4830
  %v4832 = vsub.s32 %v4831, 2
  %vm4833 = vcmp.gt.s32.totalorder 0, %v4832
  %v4834 = vsel %vm4833, 0, %v4832
  %v4835 = vsub.s32 32, %v4834
  %v4836 = vshll.u32 %v4827, %v4834
  %v4837 = vshrl.u32 %v4819, %v4835
  %v4838 = vor.u32 %v4836, %v4837
  %v4839 = vsub.s32 4294967266, %v4834
  %v4840 = vadd.s32 %v4839, 127
  %v4841 = vshll.u32 %v4840, 23
  %v4842 = vor.u32 4788187, %v4841
  %v4843 = vand.u32 2147483647, %v4842
  %v4845 = vcvt.s32.f32 %v4838
  %v4846 = vmul.f32 %v4845, %v4843
  %v4847 = vxor.u32 %v4846, 2147483648
  %v4848 = vsel %vm4765, %v4847, %v4846
  %v4849 = vsub.s32 4, %v4825
  %v4850 = vsel %vm4765, %v4849, %v4825
  %v4851 = vsel %vm4764, %v2742, %v4848
  %v4852 = vsel %vm4764, 0, %v4850
  %v4853 = vcosq.f32.pop %v4851
  %v4854 = vsinq.f32.pop %v4851
  %vm4855 = vweird.f32 %v2742
  %v4856 = vadd.s32 %v4852, 3
  %v4857 = vand.u32 %v4856, 3
  %vm4858 = vcmp.lt.s32.totalorder %v4857, 2
  %vm4859 = vcmp.eq.s32.totalorder %v4857, 0
  %v4860 = vxor.u32 %v4854, 2147483648
  %v4861 = vsel %vm4859, %v4853, %v4860
  %vm4862 = vcmp.eq.s32.totalorder %v4857, 2
  %v4863 = vxor.u32 %v4853, 2147483648
  %v4864 = vsel %vm4862, %v4863, %v4854
  %v4865 = vsel %vm4858, %v4861, %v4864
  %v4866 = vsel %vm4855, nan, %v4865
  %v4867 = vand.u32 2147483647, %v2743
  %vm4868 = vcmp.le.f32.partialorder %v4867, 0.7853982
  %vm4869 = vcmp.lt.s32.totalorder %v2743, 0
  %v4870 = vand.u32 %v2743, 2139095040
  %v4871 = vshrl.u32 %v4870, 23
  %v4872 = vsub.s32 %v4871, 127
  %v4873 = vand.u32 2147483647, %v2743
  %v4874 = vand.u32 %v4873, 8388607
  %v4875 = vor.u32 %v4874, 8388608
  %v4876 = vsub.s32 0, %v4875
  %v4877 = vadd.s32 %v4872, 1
  %vm4878 = vcmp.gt.s32.totalorder %v4877, 0
  %v4879 = vsel %vm4878, %v4877, 0
  %v4880 = vshrl.u32 %v4879, 5
  %v4881 = vand.u32 %v4879, 31
  %v4882 = vsub.s32 32, %v4881
  %v4883 = vshrl.u32 683565275, %v4882
  %v4884 = vshll.u32 683565275, %v4881
  %v4885 = vshrl.u32 2475754826, %v4882
  %v4886 = vor.u32 %v4884, %v4885
  %v4887 = vshll.u32 2475754826, %v4881
  %v4888 = vshrl.u32 2131351028, %v4882
  %v4889 = vor.u32 %v4887, %v4888
  %v4890 = vshll.u32 2131351028, %v4881
  %v4891 = vshrl.u32 2102212464, %v4882
  %v4892 = vor.u32 %v4890, %v4891
  %v4893 = vshll.u32 2102212464, %v4881
  %v4894 = vshrl.u32 920167782, %v4882
  %v4895 = vor.u32 %v4893, %v4894
  %v4896 = vshll.u32 920167782, %v4881
  %v4897 = vshrl.u32 1326507024, %v4882
  %v4898 = vor.u32 %v4896, %v4897
  %vm4899 = vcmp.lt.s32.totalorder %v4880, 1
  %vm4900 = vcmp.lt.s32.totalorder %v4880, 2
  %vm4901 = vcmp.lt.s32.totalorder %v4880, 3
  %vm4902 = vcmp.lt.s32.totalorder %v4880, 4
  %v4903 = vsel %vm4899, %v4883, %v4886
  %v4904 = vsel %vm4902, %v4892, 2102212464
  %v4905 = vsel %vm4901, %v4889, %v4904
  %v4906 = vsel %vm4900, %v4903, %v4905
  %v4907 = vsel %vm4899, %v4886, %v4889
  %v4908 = vsel %vm4902, %v4895, 920167782
  %v4909 = vsel %vm4901, %v4892, %v4908
  %v4910 = vsel %vm4900, %v4907, %v4909
  %v4911 = vsel %vm4899, %v4889, %v4892
  %v4912 = vsel %vm4902, %v4898, 1326507024
  %v4913 = vsel %vm4901, %v4895, %v4912
  %v4914 = vsel %vm4900, %v4911, %v4913
  %v4915 = vshll.u32 %v4875, 8
  %v4916 = vmul.u32.u64.compose %v4915, %v4914
  %v4917 = vextract.low.u32 %v4916
  %v4918 = vextract.high.u32 %v4916
  %v4919 = vmul.u32.u64.compose %v4915, %v4910
  %v4920 = vextract.low.u32 %v4919
  %v4921 = vextract.high.u32 %v4919
  %v4922 = vmul.u32 %v4915, %v4906
  %v4923 = vadd.s32 %v4918, %v4920
  %vm4924 = vc.u32 %v4918, %v4920
  %v4925 = vadd.s32 %v4921, 1
  %v4926 = vsel %vm4924, %v4925, %v4921
  %v4927 = vadd.s32 %v4922, %v4926
  %v4928 = vadd.s32 %v4927, 536870912
  %v4929 = vshrl.u32 %v4928, 30
  %v4930 = vshll.u32 %v4929, 30
  %v4931 = vsub.s32 %v4927, %v4930
  %vm4932 = vcmp.lt.s32.totalorder %v4931, 0
  %v4933 = vsub.s32 0, %v4931
  %v4934 = vsel %vm4932, %v4933, %v4931
  %v4935 = vclz %v4934
  %v4936 = vsub.s32 %v4935, 2
  %vm4937 = vcmp.gt.s32.totalorder 0, %v4936
  %v4938 = vsel %vm4937, 0, %v4936
  %v4939 = vsub.s32 32, %v4938
  %v4940 = vshll.u32 %v4931, %v4938
  %v4941 = vshrl.u32 %v4923, %v4939
  %v4942 = vor.u32 %v4940, %v4941
  %v4943 = vsub.s32 4294967266, %v4938
  %v4944 = vadd.s32 %v4943, 127
  %v4945 = vshll.u32 %v4944, 23
  %v4946 = vor.u32 4788187, %v4945
  %v4947 = vand.u32 2147483647, %v4946
  %v4949 = vcvt.s32.f32 %v4942
  %v4950 = vmul.f32 %v4949, %v4947
  %v4951 = vxor.u32 %v4950, 2147483648
  %v4952 = vsel %vm4869, %v4951, %v4950
  %v4953 = vsub.s32 4, %v4929
  %v4954 = vsel %vm4869, %v4953, %v4929
  %v4955 = vsel %vm4868, %v2743, %v4952
  %v4956 = vsel %vm4868, 0, %v4954
  %v4957 = vcosq.f32.pop %v4955
  %v4958 = vsinq.f32.pop %v4955
  %vm4959 = vweird.f32 %v2743
  %v4960 = vadd.s32 %v4956, 3
  %v4961 = vand.u32 %v4960, 3
  %vm4962 = vcmp.lt.s32.totalorder %v4961, 2
  %vm4963 = vcmp.eq.s32.totalorder %v4961, 0
  %v4964 = vxor.u32 %v4958, 2147483648
  %v4965 = vsel %vm4963, %v4957, %v4964
  %vm4966 = vcmp.eq.s32.totalorder %v4961, 2
  %v4967 = vxor.u32 %v4957, 2147483648
  %v4968 = vsel %vm4966, %v4967, %v4958
  %v4969 = vsel %vm4962, %v4965, %v4968
  %v4970 = vsel %vm4959, nan, %v4969
  %v4971 = vand.u32 2147483647, %v2744
  %vm4972 = vcmp.le.f32.partialorder %v4971, 0.7853982
  %vm4973 = vcmp.lt.s32.totalorder %v2744, 0
  %v4974 = vand.u32 %v2744, 2139095040
  %v4975 = vshrl.u32 %v4974, 23
  %v4976 = vsub.s32 %v4975, 127
  %v4977 = vand.u32 2147483647, %v2744
  %v4978 = vand.u32 %v4977, 8388607
  %v4979 = vor.u32 %v4978, 8388608
  %v4980 = vsub.s32 0, %v4979
  %v4981 = vadd.s32 %v4976, 1
  %vm4982 = vcmp.gt.s32.totalorder %v4981, 0
  %v4983 = vsel %vm4982, %v4981, 0
  %v4984 = vshrl.u32 %v4983, 5
  %v4985 = vand.u32 %v4983, 31
  %v4986 = vsub.s32 32, %v4985
  %v4987 = vshrl.u32 683565275, %v4986
  %v4988 = vshll.u32 683565275, %v4985
  %v4989 = vshrl.u32 2475754826, %v4986
  %v4990 = vor.u32 %v4988, %v4989
  %v4991 = vshll.u32 2475754826, %v4985
  %v4992 = vshrl.u32 2131351028, %v4986
  %v4993 = vor.u32 %v4991, %v4992
  %v4994 = vshll.u32 2131351028, %v4985
  %v4995 = vshrl.u32 2102212464, %v4986
  %v4996 = vor.u32 %v4994, %v4995
  %v4997 = vshll.u32 2102212464, %v4985
  %v4998 = vshrl.u32 920167782, %v4986
  %v4999 = vor.u32 %v4997, %v4998
  %v5000 = vshll.u32 920167782, %v4985
  %v5001 = vshrl.u32 1326507024, %v4986
  %v5002 = vor.u32 %v5000, %v5001
  %vm5003 = vcmp.lt.s32.totalorder %v4984, 1
  %vm5004 = vcmp.lt.s32.totalorder %v4984, 2
  %vm5005 = vcmp.lt.s32.totalorder %v4984, 3
  %vm5006 = vcmp.lt.s32.totalorder %v4984, 4
  %v5007 = vsel %vm5003, %v4987, %v4990
  %v5008 = vsel %vm5006, %v4996, 2102212464
  %v5009 = vsel %vm5005, %v4993, %v5008
  %v5010 = vsel %vm5004, %v5007, %v5009
  %v5011 = vsel %vm5003, %v4990, %v4993
  %v5012 = vsel %vm5006, %v4999, 920167782
  %v5013 = vsel %vm5005, %v4996, %v5012
  %v5014 = vsel %vm5004, %v5011, %v5013
  %v5015 = vsel %vm5003, %v4993, %v4996
  %v5016 = vsel %vm5006, %v5002, 1326507024
  %v5017 = vsel %vm5005, %v4999, %v5016
  %v5018 = vsel %vm5004, %v5015, %v5017
  %v5019 = vshll.u32 %v4979, 8
  %v5020 = vmul.u32.u64.compose %v5019, %v5018
  %v5021 = vextract.low.u32 %v5020
  %v5022 = vextract.high.u32 %v5020
  %v5023 = vmul.u32.u64.compose %v5019, %v5014
  %v5024 = vextract.low.u32 %v5023
  %v5025 = vextract.high.u32 %v5023
  %v5026 = vmul.u32 %v5019, %v5010
  %v5027 = vadd.s32 %v5022, %v5024
  %vm5028 = vc.u32 %v5022, %v5024
  %v5029 = vadd.s32 %v5025, 1
  %v5030 = vsel %vm5028, %v5029, %v5025
  %v5031 = vadd.s32 %v5026, %v5030
  %v5032 = vadd.s32 %v5031, 536870912
  %v5033 = vshrl.u32 %v5032, 30
  %v5034 = vshll.u32 %v5033, 30
  %v5035 = vsub.s32 %v5031, %v5034
  %vm5036 = vcmp.lt.s32.totalorder %v5035, 0
  %v5037 = vsub.s32 0, %v5035
  %v5038 = vsel %vm5036, %v5037, %v5035
  %v5039 = vclz %v5038
  %v5040 = vsub.s32 %v5039, 2
  %vm5041 = vcmp.gt.s32.totalorder 0, %v5040
  %v5042 = vsel %vm5041, 0, %v5040
  %v5043 = vsub.s32 32, %v5042
  %v5044 = vshll.u32 %v5035, %v5042
  %v5045 = vshrl.u32 %v5027, %v5043
  %v5046 = vor.u32 %v5044, %v5045
  %v5047 = vsub.s32 4294967266, %v5042
  %v5048 = vadd.s32 %v5047, 127
  %v5049 = vshll.u32 %v5048, 23
  %v5050 = vor.u32 4788187, %v5049
  %v5051 = vand.u32 2147483647, %v5050
  %v5053 = vcvt.s32.f32 %v5046
  %v5054 = vmul.f32 %v5053, %v5051
  %v5055 = vxor.u32 %v5054, 2147483648
  %v5056 = vsel %vm4973, %v5055, %v5054
  %v5057 = vsub.s32 4, %v5033
  %v5058 = vsel %vm4973, %v5057, %v5033
  %v5059 = vsel %vm4972, %v2744, %v5056
  %v5060 = vsel %vm4972, 0, %v5058
  %v5061 = vcosq.f32.pop %v5059
  %v5062 = vsinq.f32.pop %v5059
  %vm5063 = vweird.f32 %v2744
  %v5064 = vadd.s32 %v5060, 3
  %v5065 = vand.u32 %v5064, 3
  %vm5066 = vcmp.lt.s32.totalorder %v5065, 2
  %vm5067 = vcmp.eq.s32.totalorder %v5065, 0
  %v5068 = vxor.u32 %v5062, 2147483648
  %v5069 = vsel %vm5067, %v5061, %v5068
  %vm5070 = vcmp.eq.s32.totalorder %v5065, 2
  %v5071 = vxor.u32 %v5061, 2147483648
  %v5072 = vsel %vm5070, %v5071, %v5062
  %v5073 = vsel %vm5066, %v5069, %v5072
  %v5074 = vsel %vm5063, nan, %v5073
  %v5075 = vand.u32 2147483647, %v2745
  %vm5076 = vcmp.le.f32.partialorder %v5075, 0.7853982
  %vm5077 = vcmp.lt.s32.totalorder %v2745, 0
  %v5078 = vand.u32 %v2745, 2139095040
  %v5079 = vshrl.u32 %v5078, 23
  %v5080 = vsub.s32 %v5079, 127
  %v5081 = vand.u32 2147483647, %v2745
  %v5082 = vand.u32 %v5081, 8388607
  %v5083 = vor.u32 %v5082, 8388608
  %v5084 = vsub.s32 0, %v5083
  %v5085 = vadd.s32 %v5080, 1
  %vm5086 = vcmp.gt.s32.totalorder %v5085, 0
  %v5087 = vsel %vm5086, %v5085, 0
  %v5088 = vshrl.u32 %v5087, 5
  %v5089 = vand.u32 %v5087, 31
  %v5090 = vsub.s32 32, %v5089
  %v5091 = vshrl.u32 683565275, %v5090
  %v5092 = vshll.u32 683565275, %v5089
  %v5093 = vshrl.u32 2475754826, %v5090
  %v5094 = vor.u32 %v5092, %v5093
  %v5095 = vshll.u32 2475754826, %v5089
  %v5096 = vshrl.u32 2131351028, %v5090
  %v5097 = vor.u32 %v5095, %v5096
  %v5098 = vshll.u32 2131351028, %v5089
  %v5099 = vshrl.u32 2102212464, %v5090
  %v5100 = vor.u32 %v5098, %v5099
  %v5101 = vshll.u32 2102212464, %v5089
  %v5102 = vshrl.u32 920167782, %v5090
  %v5103 = vor.u32 %v5101, %v5102
  %v5104 = vshll.u32 920167782, %v5089
  %v5105 = vshrl.u32 1326507024, %v5090
  %v5106 = vor.u32 %v5104, %v5105
  %vm5107 = vcmp.lt.s32.totalorder %v5088, 1
  %vm5108 = vcmp.lt.s32.totalorder %v5088, 2
  %vm5109 = vcmp.lt.s32.totalorder %v5088, 3
  %vm5110 = vcmp.lt.s32.totalorder %v5088, 4
  %v5111 = vsel %vm5107, %v5091, %v5094
  %v5112 = vsel %vm5110, %v5100, 2102212464
  %v5113 = vsel %vm5109, %v5097, %v5112
  %v5114 = vsel %vm5108, %v5111, %v5113
  %v5115 = vsel %vm5107, %v5094, %v5097
  %v5116 = vsel %vm5110, %v5103, 920167782
  %v5117 = vsel %vm5109, %v5100, %v5116
  %v5118 = vsel %vm5108, %v5115, %v5117
  %v5119 = vsel %vm5107, %v5097, %v5100
  %v5120 = vsel %vm5110, %v5106, 1326507024
  %v5121 = vsel %vm5109, %v5103, %v5120
  %v5122 = vsel %vm5108, %v5119, %v5121
  %v5123 = vshll.u32 %v5083, 8
  %v5124 = vmul.u32.u64.compose %v5123, %v5122
  %v5125 = vextract.low.u32 %v5124
  %v5126 = vextract.high.u32 %v5124
  %v5127 = vmul.u32.u64.compose %v5123, %v5118
  %v5128 = vextract.low.u32 %v5127
  %v5129 = vextract.high.u32 %v5127
  %v5130 = vmul.u32 %v5123, %v5114
  %v5131 = vadd.s32 %v5126, %v5128
  %vm5132 = vc.u32 %v5126, %v5128
  %v5133 = vadd.s32 %v5129, 1
  %v5134 = vsel %vm5132, %v5133, %v5129
  %v5135 = vadd.s32 %v5130, %v5134
  %v5136 = vadd.s32 %v5135, 536870912
  %v5137 = vshrl.u32 %v5136, 30
  %v5138 = vshll.u32 %v5137, 30
  %v5139 = vsub.s32 %v5135, %v5138
  %vm5140 = vcmp.lt.s32.totalorder %v5139, 0
  %v5141 = vsub.s32 0, %v5139
  %v5142 = vsel %vm5140, %v5141, %v5139
  %v5143 = vclz %v5142
  %v5144 = vsub.s32 %v5143, 2
  %vm5145 = vcmp.gt.s32.totalorder 0, %v5144
  %v5146 = vsel %vm5145, 0, %v5144
  %v5147 = vsub.s32 32, %v5146
  %v5148 = vshll.u32 %v5139, %v5146
  %v5149 = vshrl.u32 %v5131, %v5147
  %v5150 = vor.u32 %v5148, %v5149
  %v5151 = vsub.s32 4294967266, %v5146
  %v5152 = vadd.s32 %v5151, 127
  %v5153 = vshll.u32 %v5152, 23
  %v5154 = vor.u32 4788187, %v5153
  %v5155 = vand.u32 2147483647, %v5154
  %v5157 = vcvt.s32.f32 %v5150
  %v5158 = vmul.f32 %v5157, %v5155
  %v5159 = vxor.u32 %v5158, 2147483648
  %v5160 = vsel %vm5077, %v5159, %v5158
  %v5161 = vsub.s32 4, %v5137
  %v5162 = vsel %vm5077, %v5161, %v5137
  %v5163 = vsel %vm5076, %v2745, %v5160
  %v5164 = vsel %vm5076, 0, %v5162
  %v5165 = vcosq.f32.pop %v5163
  %v5166 = vsinq.f32.pop %v5163
  %vm5167 = vweird.f32 %v2745
  %v5168 = vadd.s32 %v5164, 3
  %v5169 = vand.u32 %v5168, 3
  %vm5170 = vcmp.lt.s32.totalorder %v5169, 2
  %vm5171 = vcmp.eq.s32.totalorder %v5169, 0
  %v5172 = vxor.u32 %v5166, 2147483648
  %v5173 = vsel %vm5171, %v5165, %v5172
  %vm5174 = vcmp.eq.s32.totalorder %v5169, 2
  %v5175 = vxor.u32 %v5165, 2147483648
  %v5176 = vsel %vm5174, %v5175, %v5166
  %v5177 = vsel %vm5170, %v5173, %v5176
  %v5178 = vsel %vm5167, nan, %v5177
  %v5179 = vand.u32 2147483647, %v2746
  %vm5180 = vcmp.le.f32.partialorder %v5179, 0.7853982
  %vm5181 = vcmp.lt.s32.totalorder %v2746, 0
  %v5182 = vand.u32 %v2746, 2139095040
  %v5183 = vshrl.u32 %v5182, 23
  %v5184 = vsub.s32 %v5183, 127
  %v5185 = vand.u32 2147483647, %v2746
  %v5186 = vand.u32 %v5185, 8388607
  %v5187 = vor.u32 %v5186, 8388608
  %v5188 = vsub.s32 0, %v5187
  %v5189 = vadd.s32 %v5184, 1
  %vm5190 = vcmp.gt.s32.totalorder %v5189, 0
  %v5191 = vsel %vm5190, %v5189, 0
  %v5192 = vshrl.u32 %v5191, 5
  %v5193 = vand.u32 %v5191, 31
  %v5194 = vsub.s32 32, %v5193
  %v5195 = vshrl.u32 683565275, %v5194
  %v5196 = vshll.u32 683565275, %v5193
  %v5197 = vshrl.u32 2475754826, %v5194
  %v5198 = vor.u32 %v5196, %v5197
  %v5199 = vshll.u32 2475754826, %v5193
  %v5200 = vshrl.u32 2131351028, %v5194
  %v5201 = vor.u32 %v5199, %v5200
  %v5202 = vshll.u32 2131351028, %v5193
  %v5203 = vshrl.u32 2102212464, %v5194
  %v5204 = vor.u32 %v5202, %v5203
  %v5205 = vshll.u32 2102212464, %v5193
  %v5206 = vshrl.u32 920167782, %v5194
  %v5207 = vor.u32 %v5205, %v5206
  %v5208 = vshll.u32 920167782, %v5193
  %v5209 = vshrl.u32 1326507024, %v5194
  %v5210 = vor.u32 %v5208, %v5209
  %vm5211 = vcmp.lt.s32.totalorder %v5192, 1
  %vm5212 = vcmp.lt.s32.totalorder %v5192, 2
  %vm5213 = vcmp.lt.s32.totalorder %v5192, 3
  %vm5214 = vcmp.lt.s32.totalorder %v5192, 4
  %v5215 = vsel %vm5211, %v5195, %v5198
  %v5216 = vsel %vm5214, %v5204, 2102212464
  %v5217 = vsel %vm5213, %v5201, %v5216
  %v5218 = vsel %vm5212, %v5215, %v5217
  %v5219 = vsel %vm5211, %v5198, %v5201
  %v5220 = vsel %vm5214, %v5207, 920167782
  %v5221 = vsel %vm5213, %v5204, %v5220
  %v5222 = vsel %vm5212, %v5219, %v5221
  %v5223 = vsel %vm5211, %v5201, %v5204
  %v5224 = vsel %vm5214, %v5210, 1326507024
  %v5225 = vsel %vm5213, %v5207, %v5224
  %v5226 = vsel %vm5212, %v5223, %v5225
  %v5227 = vshll.u32 %v5187, 8
  %v5228 = vmul.u32.u64.compose %v5227, %v5226
  %v5229 = vextract.low.u32 %v5228
  %v5230 = vextract.high.u32 %v5228
  %v5231 = vmul.u32.u64.compose %v5227, %v5222
  %v5232 = vextract.low.u32 %v5231
  %v5233 = vextract.high.u32 %v5231
  %v5234 = vmul.u32 %v5227, %v5218
  %v5235 = vadd.s32 %v5230, %v5232
  %vm5236 = vc.u32 %v5230, %v5232
  %v5237 = vadd.s32 %v5233, 1
  %v5238 = vsel %vm5236, %v5237, %v5233
  %v5239 = vadd.s32 %v5234, %v5238
  %v5240 = vadd.s32 %v5239, 536870912
  %v5241 = vshrl.u32 %v5240, 30
  %v5242 = vshll.u32 %v5241, 30
  %v5243 = vsub.s32 %v5239, %v5242
  %vm5244 = vcmp.lt.s32.totalorder %v5243, 0
  %v5245 = vsub.s32 0, %v5243
  %v5246 = vsel %vm5244, %v5245, %v5243
  %v5247 = vclz %v5246
  %v5248 = vsub.s32 %v5247, 2
  %vm5249 = vcmp.gt.s32.totalorder 0, %v5248
  %v5250 = vsel %vm5249, 0, %v5248
  %v5251 = vsub.s32 32, %v5250
  %v5252 = vshll.u32 %v5243, %v5250
  %v5253 = vshrl.u32 %v5235, %v5251
  %v5254 = vor.u32 %v5252, %v5253
  %v5255 = vsub.s32 4294967266, %v5250
  %v5256 = vadd.s32 %v5255, 127
  %v5257 = vshll.u32 %v5256, 23
  %v5258 = vor.u32 4788187, %v5257
  %v5259 = vand.u32 2147483647, %v5258
  %v5261 = vcvt.s32.f32 %v5254
  %v5262 = vmul.f32 %v5261, %v5259
  %v5263 = vxor.u32 %v5262, 2147483648
  %v5264 = vsel %vm5181, %v5263, %v5262
  %v5265 = vsub.s32 4, %v5241
  %v5266 = vsel %vm5181, %v5265, %v5241
  %v5267 = vsel %vm5180, %v2746, %v5264
  %v5268 = vsel %vm5180, 0, %v5266
  %v5269 = vcosq.f32.pop %v5267
  %v5270 = vsinq.f32.pop %v5267
  %vm5271 = vweird.f32 %v2746
  %v5272 = vadd.s32 %v5268, 3
  %v5273 = vand.u32 %v5272, 3
  %vm5274 = vcmp.lt.s32.totalorder %v5273, 2
  %vm5275 = vcmp.eq.s32.totalorder %v5273, 0
  %v5276 = vxor.u32 %v5270, 2147483648
  %v5277 = vsel %vm5275, %v5269, %v5276
  %vm5278 = vcmp.eq.s32.totalorder %v5273, 2
  %v5279 = vxor.u32 %v5269, 2147483648
  %v5280 = vsel %vm5278, %v5279, %v5270
  %v5281 = vsel %vm5274, %v5277, %v5280
  %v5282 = vsel %vm5271, nan, %v5281
  %v5283 = vand.u32 2147483647, %v2747
  %vm5284 = vcmp.le.f32.partialorder %v5283, 0.7853982
  %vm5285 = vcmp.lt.s32.totalorder %v2747, 0
  %v5286 = vand.u32 %v2747, 2139095040
  %v5287 = vshrl.u32 %v5286, 23
  %v5288 = vsub.s32 %v5287, 127
  %v5289 = vand.u32 2147483647, %v2747
  %v5290 = vand.u32 %v5289, 8388607
  %v5291 = vor.u32 %v5290, 8388608
  %v5292 = vsub.s32 0, %v5291
  %v5293 = vadd.s32 %v5288, 1
  %vm5294 = vcmp.gt.s32.totalorder %v5293, 0
  %v5295 = vsel %vm5294, %v5293, 0
  %v5296 = vshrl.u32 %v5295, 5
  %v5297 = vand.u32 %v5295, 31
  %v5298 = vsub.s32 32, %v5297
  %v5299 = vshrl.u32 683565275, %v5298
  %v5300 = vshll.u32 683565275, %v5297
  %v5301 = vshrl.u32 2475754826, %v5298
  %v5302 = vor.u32 %v5300, %v5301
  %v5303 = vshll.u32 2475754826, %v5297
  %v5304 = vshrl.u32 2131351028, %v5298
  %v5305 = vor.u32 %v5303, %v5304
  %v5306 = vshll.u32 2131351028, %v5297
  %v5307 = vshrl.u32 2102212464, %v5298
  %v5308 = vor.u32 %v5306, %v5307
  %v5309 = vshll.u32 2102212464, %v5297
  %v5310 = vshrl.u32 920167782, %v5298
  %v5311 = vor.u32 %v5309, %v5310
  %v5312 = vshll.u32 920167782, %v5297
  %v5313 = vshrl.u32 1326507024, %v5298
  %v5314 = vor.u32 %v5312, %v5313
  %vm5315 = vcmp.lt.s32.totalorder %v5296, 1
  %vm5316 = vcmp.lt.s32.totalorder %v5296, 2
  %vm5317 = vcmp.lt.s32.totalorder %v5296, 3
  %vm5318 = vcmp.lt.s32.totalorder %v5296, 4
  %v5319 = vsel %vm5315, %v5299, %v5302
  %v5320 = vsel %vm5318, %v5308, 2102212464
  %v5321 = vsel %vm5317, %v5305, %v5320
  %v5322 = vsel %vm5316, %v5319, %v5321
  %v5323 = vsel %vm5315, %v5302, %v5305
  %v5324 = vsel %vm5318, %v5311, 920167782
  %v5325 = vsel %vm5317, %v5308, %v5324
  %v5326 = vsel %vm5316, %v5323, %v5325
  %v5327 = vsel %vm5315, %v5305, %v5308
  %v5328 = vsel %vm5318, %v5314, 1326507024
  %v5329 = vsel %vm5317, %v5311, %v5328
  %v5330 = vsel %vm5316, %v5327, %v5329
  %v5331 = vshll.u32 %v5291, 8
  %v5332 = vmul.u32.u64.compose %v5331, %v5330
  %v5333 = vextract.low.u32 %v5332
  %v5334 = vextract.high.u32 %v5332
  %v5335 = vmul.u32.u64.compose %v5331, %v5326
  %v5336 = vextract.low.u32 %v5335
  %v5337 = vextract.high.u32 %v5335
  %v5338 = vmul.u32 %v5331, %v5322
  %v5339 = vadd.s32 %v5334, %v5336
  %vm5340 = vc.u32 %v5334, %v5336
  %v5341 = vadd.s32 %v5337, 1
  %v5342 = vsel %vm5340, %v5341, %v5337
  %v5343 = vadd.s32 %v5338, %v5342
  %v5344 = vadd.s32 %v5343, 536870912
  %v5345 = vshrl.u32 %v5344, 30
  %v5346 = vshll.u32 %v5345, 30
  %v5347 = vsub.s32 %v5343, %v5346
  %vm5348 = vcmp.lt.s32.totalorder %v5347, 0
  %v5349 = vsub.s32 0, %v5347
  %v5350 = vsel %vm5348, %v5349, %v5347
  %v5351 = vclz %v5350
  %v5352 = vsub.s32 %v5351, 2
  %vm5353 = vcmp.gt.s32.totalorder 0, %v5352
  %v5354 = vsel %vm5353, 0, %v5352
  %v5355 = vsub.s32 32, %v5354
  %v5356 = vshll.u32 %v5347, %v5354
  %v5357 = vshrl.u32 %v5339, %v5355
  %v5358 = vor.u32 %v5356, %v5357
  %v5359 = vsub.s32 4294967266, %v5354
  %v5360 = vadd.s32 %v5359, 127
  %v5361 = vshll.u32 %v5360, 23
  %v5362 = vor.u32 4788187, %v5361
  %v5363 = vand.u32 2147483647, %v5362
  %v5365 = vcvt.s32.f32 %v5358
  %v5366 = vmul.f32 %v5365, %v5363
  %v5367 = vxor.u32 %v5366, 2147483648
  %v5368 = vsel %vm5285, %v5367, %v5366
  %v5369 = vsub.s32 4, %v5345
  %v5370 = vsel %vm5285, %v5369, %v5345
  %v5371 = vsel %vm5284, %v2747, %v5368
  %v5372 = vsel %vm5284, 0, %v5370
  %v5373 = vcosq.f32.pop %v5371
  %v5374 = vsinq.f32.pop %v5371
  %vm5375 = vweird.f32 %v2747
  %v5376 = vadd.s32 %v5372, 3
  %v5377 = vand.u32 %v5376, 3
  %vm5378 = vcmp.lt.s32.totalorder %v5377, 2
  %vm5379 = vcmp.eq.s32.totalorder %v5377, 0
  %v5380 = vxor.u32 %v5374, 2147483648
  %v5381 = vsel %vm5379, %v5373, %v5380
  %vm5382 = vcmp.eq.s32.totalorder %v5377, 2
  %v5383 = vxor.u32 %v5373, 2147483648
  %v5384 = vsel %vm5382, %v5383, %v5374
  %v5385 = vsel %vm5378, %v5381, %v5384
  %v5386 = vsel %vm5375, nan, %v5385
  %v5387 = vand.u32 2147483647, %v2748
  %vm5388 = vcmp.le.f32.partialorder %v5387, 0.7853982
  %vm5389 = vcmp.lt.s32.totalorder %v2748, 0
  %v5390 = vand.u32 %v2748, 2139095040
  %v5391 = vshrl.u32 %v5390, 23
  %v5392 = vsub.s32 %v5391, 127
  %v5393 = vand.u32 2147483647, %v2748
  %v5394 = vand.u32 %v5393, 8388607
  %v5395 = vor.u32 %v5394, 8388608
  %v5396 = vsub.s32 0, %v5395
  %v5397 = vadd.s32 %v5392, 1
  %vm5398 = vcmp.gt.s32.totalorder %v5397, 0
  %v5399 = vsel %vm5398, %v5397, 0
  %v5400 = vshrl.u32 %v5399, 5
  %v5401 = vand.u32 %v5399, 31
  %v5402 = vsub.s32 32, %v5401
  %v5403 = vshrl.u32 683565275, %v5402
  %v5404 = vshll.u32 683565275, %v5401
  %v5405 = vshrl.u32 2475754826, %v5402
  %v5406 = vor.u32 %v5404, %v5405
  %v5407 = vshll.u32 2475754826, %v5401
  %v5408 = vshrl.u32 2131351028, %v5402
  %v5409 = vor.u32 %v5407, %v5408
  %v5410 = vshll.u32 2131351028, %v5401
  %v5411 = vshrl.u32 2102212464, %v5402
  %v5412 = vor.u32 %v5410, %v5411
  %v5413 = vshll.u32 2102212464, %v5401
  %v5414 = vshrl.u32 920167782, %v5402
  %v5415 = vor.u32 %v5413, %v5414
  %v5416 = vshll.u32 920167782, %v5401
  %v5417 = vshrl.u32 1326507024, %v5402
  %v5418 = vor.u32 %v5416, %v5417
  %vm5419 = vcmp.lt.s32.totalorder %v5400, 1
  %vm5420 = vcmp.lt.s32.totalorder %v5400, 2
  %vm5421 = vcmp.lt.s32.totalorder %v5400, 3
  %vm5422 = vcmp.lt.s32.totalorder %v5400, 4
  %v5423 = vsel %vm5419, %v5403, %v5406
  %v5424 = vsel %vm5422, %v5412, 2102212464
  %v5425 = vsel %vm5421, %v5409, %v5424
  %v5426 = vsel %vm5420, %v5423, %v5425
  %v5427 = vsel %vm5419, %v5406, %v5409
  %v5428 = vsel %vm5422, %v5415, 920167782
  %v5429 = vsel %vm5421, %v5412, %v5428
  %v5430 = vsel %vm5420, %v5427, %v5429
  %v5431 = vsel %vm5419, %v5409, %v5412
  %v5432 = vsel %vm5422, %v5418, 1326507024
  %v5433 = vsel %vm5421, %v5415, %v5432
  %v5434 = vsel %vm5420, %v5431, %v5433
  %v5435 = vshll.u32 %v5395, 8
  %v5436 = vmul.u32.u64.compose %v5435, %v5434
  %v5437 = vextract.low.u32 %v5436
  %v5438 = vextract.high.u32 %v5436
  %v5439 = vmul.u32.u64.compose %v5435, %v5430
  %v5440 = vextract.low.u32 %v5439
  %v5441 = vextract.high.u32 %v5439
  %v5442 = vmul.u32 %v5435, %v5426
  %v5443 = vadd.s32 %v5438, %v5440
  %vm5444 = vc.u32 %v5438, %v5440
  %v5445 = vadd.s32 %v5441, 1
  %v5446 = vsel %vm5444, %v5445, %v5441
  %v5447 = vadd.s32 %v5442, %v5446
  %v5448 = vadd.s32 %v5447, 536870912
  %v5449 = vshrl.u32 %v5448, 30
  %v5450 = vshll.u32 %v5449, 30
  %v5451 = vsub.s32 %v5447, %v5450
  %vm5452 = vcmp.lt.s32.totalorder %v5451, 0
  %v5453 = vsub.s32 0, %v5451
  %v5454 = vsel %vm5452, %v5453, %v5451
  %v5455 = vclz %v5454
  %v5456 = vsub.s32 %v5455, 2
  %vm5457 = vcmp.gt.s32.totalorder 0, %v5456
  %v5458 = vsel %vm5457, 0, %v5456
  %v5459 = vsub.s32 32, %v5458
  %v5460 = vshll.u32 %v5451, %v5458
  %v5461 = vshrl.u32 %v5443, %v5459
  %v5462 = vor.u32 %v5460, %v5461
  %v5463 = vsub.s32 4294967266, %v5458
  %v5464 = vadd.s32 %v5463, 127
  %v5465 = vshll.u32 %v5464, 23
  %v5466 = vor.u32 4788187, %v5465
  %v5467 = vand.u32 2147483647, %v5466
  %v5469 = vcvt.s32.f32 %v5462
  %v5470 = vmul.f32 %v5469, %v5467
  %v5471 = vxor.u32 %v5470, 2147483648
  %v5472 = vsel %vm5389, %v5471, %v5470
  %v5473 = vsub.s32 4, %v5449
  %v5474 = vsel %vm5389, %v5473, %v5449
  %v5475 = vsel %vm5388, %v2748, %v5472
  %v5476 = vsel %vm5388, 0, %v5474
  %v5477 = vcosq.f32.pop %v5475
  %v5478 = vsinq.f32.pop %v5475
  %vm5479 = vweird.f32 %v2748
  %v5480 = vadd.s32 %v5476, 3
  %v5481 = vand.u32 %v5480, 3
  %vm5482 = vcmp.lt.s32.totalorder %v5481, 2
  %vm5483 = vcmp.eq.s32.totalorder %v5481, 0
  %v5484 = vxor.u32 %v5478, 2147483648
  %v5485 = vsel %vm5483, %v5477, %v5484
  %vm5486 = vcmp.eq.s32.totalorder %v5481, 2
  %v5487 = vxor.u32 %v5477, 2147483648
  %v5488 = vsel %vm5486, %v5487, %v5478
  %v5489 = vsel %vm5482, %v5485, %v5488
  %v5490 = vsel %vm5479, nan, %v5489
  %v5491 = vand.u32 2147483647, %v2749
  %vm5492 = vcmp.le.f32.partialorder %v5491, 0.7853982
  %vm5493 = vcmp.lt.s32.totalorder %v2749, 0
  %v5494 = vand.u32 %v2749, 2139095040
  %v5495 = vshrl.u32 %v5494, 23
  %v5496 = vsub.s32 %v5495, 127
  %v5497 = vand.u32 2147483647, %v2749
  %v5498 = vand.u32 %v5497, 8388607
  %v5499 = vor.u32 %v5498, 8388608
  %v5500 = vsub.s32 0, %v5499
  %v5501 = vadd.s32 %v5496, 1
  %vm5502 = vcmp.gt.s32.totalorder %v5501, 0
  %v5503 = vsel %vm5502, %v5501, 0
  %v5504 = vshrl.u32 %v5503, 5
  %v5505 = vand.u32 %v5503, 31
  %v5506 = vsub.s32 32, %v5505
  %v5507 = vshrl.u32 683565275, %v5506
  %v5508 = vshll.u32 683565275, %v5505
  %v5509 = vshrl.u32 2475754826, %v5506
  %v5510 = vor.u32 %v5508, %v5509
  %v5511 = vshll.u32 2475754826, %v5505
  %v5512 = vshrl.u32 2131351028, %v5506
  %v5513 = vor.u32 %v5511, %v5512
  %v5514 = vshll.u32 2131351028, %v5505
  %v5515 = vshrl.u32 2102212464, %v5506
  %v5516 = vor.u32 %v5514, %v5515
  %v5517 = vshll.u32 2102212464, %v5505
  %v5518 = vshrl.u32 920167782, %v5506
  %v5519 = vor.u32 %v5517, %v5518
  %v5520 = vshll.u32 920167782, %v5505
  %v5521 = vshrl.u32 1326507024, %v5506
  %v5522 = vor.u32 %v5520, %v5521
  %vm5523 = vcmp.lt.s32.totalorder %v5504, 1
  %vm5524 = vcmp.lt.s32.totalorder %v5504, 2
  %vm5525 = vcmp.lt.s32.totalorder %v5504, 3
  %vm5526 = vcmp.lt.s32.totalorder %v5504, 4
  %v5527 = vsel %vm5523, %v5507, %v5510
  %v5528 = vsel %vm5526, %v5516, 2102212464
  %v5529 = vsel %vm5525, %v5513, %v5528
  %v5530 = vsel %vm5524, %v5527, %v5529
  %v5531 = vsel %vm5523, %v5510, %v5513
  %v5532 = vsel %vm5526, %v5519, 920167782
  %v5533 = vsel %vm5525, %v5516, %v5532
  %v5534 = vsel %vm5524, %v5531, %v5533
  %v5535 = vsel %vm5523, %v5513, %v5516
  %v5536 = vsel %vm5526, %v5522, 1326507024
  %v5537 = vsel %vm5525, %v5519, %v5536
  %v5538 = vsel %vm5524, %v5535, %v5537
  %v5539 = vshll.u32 %v5499, 8
  %v5540 = vmul.u32.u64.compose %v5539, %v5538
  %v5541 = vextract.low.u32 %v5540
  %v5542 = vextract.high.u32 %v5540
  %v5543 = vmul.u32.u64.compose %v5539, %v5534
  %v5544 = vextract.low.u32 %v5543
  %v5545 = vextract.high.u32 %v5543
  %v5546 = vmul.u32 %v5539, %v5530
  %v5547 = vadd.s32 %v5542, %v5544
  %vm5548 = vc.u32 %v5542, %v5544
  %v5549 = vadd.s32 %v5545, 1
  %v5550 = vsel %vm5548, %v5549, %v5545
  %v5551 = vadd.s32 %v5546, %v5550
  %v5552 = vadd.s32 %v5551, 536870912
  %v5553 = vshrl.u32 %v5552, 30
  %v5554 = vshll.u32 %v5553, 30
  %v5555 = vsub.s32 %v5551, %v5554
  %vm5556 = vcmp.lt.s32.totalorder %v5555, 0
  %v5557 = vsub.s32 0, %v5555
  %v5558 = vsel %vm5556, %v5557, %v5555
  %v5559 = vclz %v5558
  %v5560 = vsub.s32 %v5559, 2
  %vm5561 = vcmp.gt.s32.totalorder 0, %v5560
  %v5562 = vsel %vm5561, 0, %v5560
  %v5563 = vsub.s32 32, %v5562
  %v5564 = vshll.u32 %v5555, %v5562
  %v5565 = vshrl.u32 %v5547, %v5563
  %v5566 = vor.u32 %v5564, %v5565
  %v5567 = vsub.s32 4294967266, %v5562
  %v5568 = vadd.s32 %v5567, 127
  %v5569 = vshll.u32 %v5568, 23
  %v5570 = vor.u32 4788187, %v5569
  %v5571 = vand.u32 2147483647, %v5570
  %v5573 = vcvt.s32.f32 %v5566
  %v5574 = vmul.f32 %v5573, %v5571
  %v5575 = vxor.u32 %v5574, 2147483648
  %v5576 = vsel %vm5493, %v5575, %v5574
  %v5577 = vsub.s32 4, %v5553
  %v5578 = vsel %vm5493, %v5577, %v5553
  %v5579 = vsel %vm5492, %v2749, %v5576
  %v5580 = vsel %vm5492, 0, %v5578
  %v5581 = vcosq.f32.pop %v5579
  %v5582 = vsinq.f32.pop %v5579
  %vm5583 = vweird.f32 %v2749
  %v5584 = vadd.s32 %v5580, 3
  %v5585 = vand.u32 %v5584, 3
  %vm5586 = vcmp.lt.s32.totalorder %v5585, 2
  %vm5587 = vcmp.eq.s32.totalorder %v5585, 0
  %v5588 = vxor.u32 %v5582, 2147483648
  %v5589 = vsel %vm5587, %v5581, %v5588
  %vm5590 = vcmp.eq.s32.totalorder %v5585, 2
  %v5591 = vxor.u32 %v5581, 2147483648
  %v5592 = vsel %vm5590, %v5591, %v5582
  %v5593 = vsel %vm5586, %v5589, %v5592
  %v5594 = vsel %vm5583, nan, %v5593
  %v5595 = vand.u32 2147483647, %v2750
  %vm5596 = vcmp.le.f32.partialorder %v5595, 0.7853982
  %vm5597 = vcmp.lt.s32.totalorder %v2750, 0
  %v5598 = vand.u32 %v2750, 2139095040
  %v5599 = vshrl.u32 %v5598, 23
  %v5600 = vsub.s32 %v5599, 127
  %v5601 = vand.u32 2147483647, %v2750
  %v5602 = vand.u32 %v5601, 8388607
  %v5603 = vor.u32 %v5602, 8388608
  %v5604 = vsub.s32 0, %v5603
  %v5605 = vadd.s32 %v5600, 1
  %vm5606 = vcmp.gt.s32.totalorder %v5605, 0
  %v5607 = vsel %vm5606, %v5605, 0
  %v5608 = vshrl.u32 %v5607, 5
  %v5609 = vand.u32 %v5607, 31
  %v5610 = vsub.s32 32, %v5609
  %v5611 = vshrl.u32 683565275, %v5610
  %v5612 = vshll.u32 683565275, %v5609
  %v5613 = vshrl.u32 2475754826, %v5610
  %v5614 = vor.u32 %v5612, %v5613
  %v5615 = vshll.u32 2475754826, %v5609
  %v5616 = vshrl.u32 2131351028, %v5610
  %v5617 = vor.u32 %v5615, %v5616
  %v5618 = vshll.u32 2131351028, %v5609
  %v5619 = vshrl.u32 2102212464, %v5610
  %v5620 = vor.u32 %v5618, %v5619
  %v5621 = vshll.u32 2102212464, %v5609
  %v5622 = vshrl.u32 920167782, %v5610
  %v5623 = vor.u32 %v5621, %v5622
  %v5624 = vshll.u32 920167782, %v5609
  %v5625 = vshrl.u32 1326507024, %v5610
  %v5626 = vor.u32 %v5624, %v5625
  %vm5627 = vcmp.lt.s32.totalorder %v5608, 1
  %vm5628 = vcmp.lt.s32.totalorder %v5608, 2
  %vm5629 = vcmp.lt.s32.totalorder %v5608, 3
  %vm5630 = vcmp.lt.s32.totalorder %v5608, 4
  %v5631 = vsel %vm5627, %v5611, %v5614
  %v5632 = vsel %vm5630, %v5620, 2102212464
  %v5633 = vsel %vm5629, %v5617, %v5632
  %v5634 = vsel %vm5628, %v5631, %v5633
  %v5635 = vsel %vm5627, %v5614, %v5617
  %v5636 = vsel %vm5630, %v5623, 920167782
  %v5637 = vsel %vm5629, %v5620, %v5636
  %v5638 = vsel %vm5628, %v5635, %v5637
  %v5639 = vsel %vm5627, %v5617, %v5620
  %v5640 = vsel %vm5630, %v5626, 1326507024
  %v5641 = vsel %vm5629, %v5623, %v5640
  %v5642 = vsel %vm5628, %v5639, %v5641
  %v5643 = vshll.u32 %v5603, 8
  %v5644 = vmul.u32.u64.compose %v5643, %v5642
  %v5645 = vextract.low.u32 %v5644
  %v5646 = vextract.high.u32 %v5644
  %v5647 = vmul.u32.u64.compose %v5643, %v5638
  %v5648 = vextract.low.u32 %v5647
  %v5649 = vextract.high.u32 %v5647
  %v5650 = vmul.u32 %v5643, %v5634
  %v5651 = vadd.s32 %v5646, %v5648
  %vm5652 = vc.u32 %v5646, %v5648
  %v5653 = vadd.s32 %v5649, 1
  %v5654 = vsel %vm5652, %v5653, %v5649
  %v5655 = vadd.s32 %v5650, %v5654
  %v5656 = vadd.s32 %v5655, 536870912
  %v5657 = vshrl.u32 %v5656, 30
  %v5658 = vshll.u32 %v5657, 30
  %v5659 = vsub.s32 %v5655, %v5658
  %vm5660 = vcmp.lt.s32.totalorder %v5659, 0
  %v5661 = vsub.s32 0, %v5659
  %v5662 = vsel %vm5660, %v5661, %v5659
  %v5663 = vclz %v5662
  %v5664 = vsub.s32 %v5663, 2
  %vm5665 = vcmp.gt.s32.totalorder 0, %v5664
  %v5666 = vsel %vm5665, 0, %v5664
  %v5667 = vsub.s32 32, %v5666
  %v5668 = vshll.u32 %v5659, %v5666
  %v5669 = vshrl.u32 %v5651, %v5667
  %v5670 = vor.u32 %v5668, %v5669
  %v5671 = vsub.s32 4294967266, %v5666
  %v5672 = vadd.s32 %v5671, 127
  %v5673 = vshll.u32 %v5672, 23
  %v5674 = vor.u32 4788187, %v5673
  %v5675 = vand.u32 2147483647, %v5674
  %v5677 = vcvt.s32.f32 %v5670
  %v5678 = vmul.f32 %v5677, %v5675
  %v5679 = vxor.u32 %v5678, 2147483648
  %v5680 = vsel %vm5597, %v5679, %v5678
  %v5681 = vsub.s32 4, %v5657
  %v5682 = vsel %vm5597, %v5681, %v5657
  %v5683 = vsel %vm5596, %v2750, %v5680
  %v5684 = vsel %vm5596, 0, %v5682
  %v5685 = vcosq.f32.pop %v5683
  %v5686 = vsinq.f32.pop %v5683
  %vm5687 = vweird.f32 %v2750
  %v5688 = vadd.s32 %v5684, 3
  %v5689 = vand.u32 %v5688, 3
  %vm5690 = vcmp.lt.s32.totalorder %v5689, 2
  %vm5691 = vcmp.eq.s32.totalorder %v5689, 0
  %v5692 = vxor.u32 %v5686, 2147483648
  %v5693 = vsel %vm5691, %v5685, %v5692
  %vm5694 = vcmp.eq.s32.totalorder %v5689, 2
  %v5695 = vxor.u32 %v5685, 2147483648
  %v5696 = vsel %vm5694, %v5695, %v5686
  %v5697 = vsel %vm5690, %v5693, %v5696
  %v5698 = vsel %vm5687, nan, %v5697
  %v5699 = vand.u32 2147483647, %v2751
  %vm5700 = vcmp.le.f32.partialorder %v5699, 0.7853982
  %vm5701 = vcmp.lt.s32.totalorder %v2751, 0
  %v5702 = vand.u32 %v2751, 2139095040
  %v5703 = vshrl.u32 %v5702, 23
  %v5704 = vsub.s32 %v5703, 127
  %v5705 = vand.u32 2147483647, %v2751
  %v5706 = vand.u32 %v5705, 8388607
  %v5707 = vor.u32 %v5706, 8388608
  %v5708 = vsub.s32 0, %v5707
  %v5709 = vadd.s32 %v5704, 1
  %vm5710 = vcmp.gt.s32.totalorder %v5709, 0
  %v5711 = vsel %vm5710, %v5709, 0
  %v5712 = vshrl.u32 %v5711, 5
  %v5713 = vand.u32 %v5711, 31
  %v5714 = vsub.s32 32, %v5713
  %v5715 = vshrl.u32 683565275, %v5714
  %v5716 = vshll.u32 683565275, %v5713
  %v5717 = vshrl.u32 2475754826, %v5714
  %v5718 = vor.u32 %v5716, %v5717
  %v5719 = vshll.u32 2475754826, %v5713
  %v5720 = vshrl.u32 2131351028, %v5714
  %v5721 = vor.u32 %v5719, %v5720
  %v5722 = vshll.u32 2131351028, %v5713
  %v5723 = vshrl.u32 2102212464, %v5714
  %v5724 = vor.u32 %v5722, %v5723
  %v5725 = vshll.u32 2102212464, %v5713
  %v5726 = vshrl.u32 920167782, %v5714
  %v5727 = vor.u32 %v5725, %v5726
  %v5728 = vshll.u32 920167782, %v5713
  %v5729 = vshrl.u32 1326507024, %v5714
  %v5730 = vor.u32 %v5728, %v5729
  %vm5731 = vcmp.lt.s32.totalorder %v5712, 1
  %vm5732 = vcmp.lt.s32.totalorder %v5712, 2
  %vm5733 = vcmp.lt.s32.totalorder %v5712, 3
  %vm5734 = vcmp.lt.s32.totalorder %v5712, 4
  %v5735 = vsel %vm5731, %v5715, %v5718
  %v5736 = vsel %vm5734, %v5724, 2102212464
  %v5737 = vsel %vm5733, %v5721, %v5736
  %v5738 = vsel %vm5732, %v5735, %v5737
  %v5739 = vsel %vm5731, %v5718, %v5721
  %v5740 = vsel %vm5734, %v5727, 920167782
  %v5741 = vsel %vm5733, %v5724, %v5740
  %v5742 = vsel %vm5732, %v5739, %v5741
  %v5743 = vsel %vm5731, %v5721, %v5724
  %v5744 = vsel %vm5734, %v5730, 1326507024
  %v5745 = vsel %vm5733, %v5727, %v5744
  %v5746 = vsel %vm5732, %v5743, %v5745
  %v5747 = vshll.u32 %v5707, 8
  %v5748 = vmul.u32.u64.compose %v5747, %v5746
  %v5749 = vextract.low.u32 %v5748
  %v5750 = vextract.high.u32 %v5748
  %v5751 = vmul.u32.u64.compose %v5747, %v5742
  %v5752 = vextract.low.u32 %v5751
  %v5753 = vextract.high.u32 %v5751
  %v5754 = vmul.u32 %v5747, %v5738
  %v5755 = vadd.s32 %v5750, %v5752
  %vm5756 = vc.u32 %v5750, %v5752
  %v5757 = vadd.s32 %v5753, 1
  %v5758 = vsel %vm5756, %v5757, %v5753
  %v5759 = vadd.s32 %v5754, %v5758
  %v5760 = vadd.s32 %v5759, 536870912
  %v5761 = vshrl.u32 %v5760, 30
  %v5762 = vshll.u32 %v5761, 30
  %v5763 = vsub.s32 %v5759, %v5762
  %vm5764 = vcmp.lt.s32.totalorder %v5763, 0
  %v5765 = vsub.s32 0, %v5763
  %v5766 = vsel %vm5764, %v5765, %v5763
  %v5767 = vclz %v5766
  %v5768 = vsub.s32 %v5767, 2
  %vm5769 = vcmp.gt.s32.totalorder 0, %v5768
  %v5770 = vsel %vm5769, 0, %v5768
  %v5771 = vsub.s32 32, %v5770
  %v5772 = vshll.u32 %v5763, %v5770
  %v5773 = vshrl.u32 %v5755, %v5771
  %v5774 = vor.u32 %v5772, %v5773
  %v5775 = vsub.s32 4294967266, %v5770
  %v5776 = vadd.s32 %v5775, 127
  %v5777 = vshll.u32 %v5776, 23
  %v5778 = vor.u32 4788187, %v5777
  %v5779 = vand.u32 2147483647, %v5778
  %v5781 = vcvt.s32.f32 %v5774
  %v5782 = vmul.f32 %v5781, %v5779
  %v5783 = vxor.u32 %v5782, 2147483648
  %v5784 = vsel %vm5701, %v5783, %v5782
  %v5785 = vsub.s32 4, %v5761
  %v5786 = vsel %vm5701, %v5785, %v5761
  %v5787 = vsel %vm5700, %v2751, %v5784
  %v5788 = vsel %vm5700, 0, %v5786
  %v5789 = vcosq.f32.pop %v5787
  %v5790 = vsinq.f32.pop %v5787
  %vm5791 = vweird.f32 %v2751
  %v5792 = vadd.s32 %v5788, 3
  %v5793 = vand.u32 %v5792, 3
  %vm5794 = vcmp.lt.s32.totalorder %v5793, 2
  %vm5795 = vcmp.eq.s32.totalorder %v5793, 0
  %v5796 = vxor.u32 %v5790, 2147483648
  %v5797 = vsel %vm5795, %v5789, %v5796
  %vm5798 = vcmp.eq.s32.totalorder %v5793, 2
  %v5799 = vxor.u32 %v5789, 2147483648
  %v5800 = vsel %vm5798, %v5799, %v5790
  %v5801 = vsel %vm5794, %v5797, %v5800
  %v5802 = vsel %vm5791, nan, %v5801
  %v5803 = vand.u32 2147483647, %v2752
  %vm5804 = vcmp.le.f32.partialorder %v5803, 0.7853982
  %vm5805 = vcmp.lt.s32.totalorder %v2752, 0
  %v5806 = vand.u32 %v2752, 2139095040
  %v5807 = vshrl.u32 %v5806, 23
  %v5808 = vsub.s32 %v5807, 127
  %v5809 = vand.u32 2147483647, %v2752
  %v5810 = vand.u32 %v5809, 8388607
  %v5811 = vor.u32 %v5810, 8388608
  %v5812 = vsub.s32 0, %v5811
  %v5813 = vadd.s32 %v5808, 1
  %vm5814 = vcmp.gt.s32.totalorder %v5813, 0
  %v5815 = vsel %vm5814, %v5813, 0
  %v5816 = vshrl.u32 %v5815, 5
  %v5817 = vand.u32 %v5815, 31
  %v5818 = vsub.s32 32, %v5817
  %v5819 = vshrl.u32 683565275, %v5818
  %v5820 = vshll.u32 683565275, %v5817
  %v5821 = vshrl.u32 2475754826, %v5818
  %v5822 = vor.u32 %v5820, %v5821
  %v5823 = vshll.u32 2475754826, %v5817
  %v5824 = vshrl.u32 2131351028, %v5818
  %v5825 = vor.u32 %v5823, %v5824
  %v5826 = vshll.u32 2131351028, %v5817
  %v5827 = vshrl.u32 2102212464, %v5818
  %v5828 = vor.u32 %v5826, %v5827
  %v5829 = vshll.u32 2102212464, %v5817
  %v5830 = vshrl.u32 920167782, %v5818
  %v5831 = vor.u32 %v5829, %v5830
  %v5832 = vshll.u32 920167782, %v5817
  %v5833 = vshrl.u32 1326507024, %v5818
  %v5834 = vor.u32 %v5832, %v5833
  %vm5835 = vcmp.lt.s32.totalorder %v5816, 1
  %vm5836 = vcmp.lt.s32.totalorder %v5816, 2
  %vm5837 = vcmp.lt.s32.totalorder %v5816, 3
  %vm5838 = vcmp.lt.s32.totalorder %v5816, 4
  %v5839 = vsel %vm5835, %v5819, %v5822
  %v5840 = vsel %vm5838, %v5828, 2102212464
  %v5841 = vsel %vm5837, %v5825, %v5840
  %v5842 = vsel %vm5836, %v5839, %v5841
  %v5843 = vsel %vm5835, %v5822, %v5825
  %v5844 = vsel %vm5838, %v5831, 920167782
  %v5845 = vsel %vm5837, %v5828, %v5844
  %v5846 = vsel %vm5836, %v5843, %v5845
  %v5847 = vsel %vm5835, %v5825, %v5828
  %v5848 = vsel %vm5838, %v5834, 1326507024
  %v5849 = vsel %vm5837, %v5831, %v5848
  %v5850 = vsel %vm5836, %v5847, %v5849
  %v5851 = vshll.u32 %v5811, 8
  %v5852 = vmul.u32.u64.compose %v5851, %v5850
  %v5853 = vextract.low.u32 %v5852
  %v5854 = vextract.high.u32 %v5852
  %v5855 = vmul.u32.u64.compose %v5851, %v5846
  %v5856 = vextract.low.u32 %v5855
  %v5857 = vextract.high.u32 %v5855
  %v5858 = vmul.u32 %v5851, %v5842
  %v5859 = vadd.s32 %v5854, %v5856
  %vm5860 = vc.u32 %v5854, %v5856
  %v5861 = vadd.s32 %v5857, 1
  %v5862 = vsel %vm5860, %v5861, %v5857
  %v5863 = vadd.s32 %v5858, %v5862
  %v5864 = vadd.s32 %v5863, 536870912
  %v5865 = vshrl.u32 %v5864, 30
  %v5866 = vshll.u32 %v5865, 30
  %v5867 = vsub.s32 %v5863, %v5866
  %vm5868 = vcmp.lt.s32.totalorder %v5867, 0
  %v5869 = vsub.s32 0, %v5867
  %v5870 = vsel %vm5868, %v5869, %v5867
  %v5871 = vclz %v5870
  %v5872 = vsub.s32 %v5871, 2
  %vm5873 = vcmp.gt.s32.totalorder 0, %v5872
  %v5874 = vsel %vm5873, 0, %v5872
  %v5875 = vsub.s32 32, %v5874
  %v5876 = vshll.u32 %v5867, %v5874
  %v5877 = vshrl.u32 %v5859, %v5875
  %v5878 = vor.u32 %v5876, %v5877
  %v5879 = vsub.s32 4294967266, %v5874
  %v5880 = vadd.s32 %v5879, 127
  %v5881 = vshll.u32 %v5880, 23
  %v5882 = vor.u32 4788187, %v5881
  %v5883 = vand.u32 2147483647, %v5882
  %v5885 = vcvt.s32.f32 %v5878
  %v5886 = vmul.f32 %v5885, %v5883
  %v5887 = vxor.u32 %v5886, 2147483648
  %v5888 = vsel %vm5805, %v5887, %v5886
  %v5889 = vsub.s32 4, %v5865
  %v5890 = vsel %vm5805, %v5889, %v5865
  %v5891 = vsel %vm5804, %v2752, %v5888
  %v5892 = vsel %vm5804, 0, %v5890
  %v5893 = vcosq.f32.pop %v5891
  %v5894 = vsinq.f32.pop %v5891
  %vm5895 = vweird.f32 %v2752
  %v5896 = vadd.s32 %v5892, 3
  %v5897 = vand.u32 %v5896, 3
  %vm5898 = vcmp.lt.s32.totalorder %v5897, 2
  %vm5899 = vcmp.eq.s32.totalorder %v5897, 0
  %v5900 = vxor.u32 %v5894, 2147483648
  %v5901 = vsel %vm5899, %v5893, %v5900
  %vm5902 = vcmp.eq.s32.totalorder %v5897, 2
  %v5903 = vxor.u32 %v5893, 2147483648
  %v5904 = vsel %vm5902, %v5903, %v5894
  %v5905 = vsel %vm5898, %v5901, %v5904
  %v5906 = vsel %vm5895, nan, %v5905
  %v5907 = vand.u32 2147483647, %v2753
  %vm5908 = vcmp.le.f32.partialorder %v5907, 0.7853982
  %vm5909 = vcmp.lt.s32.totalorder %v2753, 0
  %v5910 = vand.u32 %v2753, 2139095040
  %v5911 = vshrl.u32 %v5910, 23
  %v5912 = vsub.s32 %v5911, 127
  %v5913 = vand.u32 2147483647, %v2753
  %v5914 = vand.u32 %v5913, 8388607
  %v5915 = vor.u32 %v5914, 8388608
  %v5916 = vsub.s32 0, %v5915
  %v5917 = vadd.s32 %v5912, 1
  %vm5918 = vcmp.gt.s32.totalorder %v5917, 0
  %v5919 = vsel %vm5918, %v5917, 0
  %v5920 = vshrl.u32 %v5919, 5
  %v5921 = vand.u32 %v5919, 31
  %v5922 = vsub.s32 32, %v5921
  %v5923 = vshrl.u32 683565275, %v5922
  %v5924 = vshll.u32 683565275, %v5921
  %v5925 = vshrl.u32 2475754826, %v5922
  %v5926 = vor.u32 %v5924, %v5925
  %v5927 = vshll.u32 2475754826, %v5921
  %v5928 = vshrl.u32 2131351028, %v5922
  %v5929 = vor.u32 %v5927, %v5928
  %v5930 = vshll.u32 2131351028, %v5921
  %v5931 = vshrl.u32 2102212464, %v5922
  %v5932 = vor.u32 %v5930, %v5931
  %v5933 = vshll.u32 2102212464, %v5921
  %v5934 = vshrl.u32 920167782, %v5922
  %v5935 = vor.u32 %v5933, %v5934
  %v5936 = vshll.u32 920167782, %v5921
  %v5937 = vshrl.u32 1326507024, %v5922
  %v5938 = vor.u32 %v5936, %v5937
  %vm5939 = vcmp.lt.s32.totalorder %v5920, 1
  %vm5940 = vcmp.lt.s32.totalorder %v5920, 2
  %vm5941 = vcmp.lt.s32.totalorder %v5920, 3
  %vm5942 = vcmp.lt.s32.totalorder %v5920, 4
  %v5943 = vsel %vm5939, %v5923, %v5926
  %v5944 = vsel %vm5942, %v5932, 2102212464
  %v5945 = vsel %vm5941, %v5929, %v5944
  %v5946 = vsel %vm5940, %v5943, %v5945
  %v5947 = vsel %vm5939, %v5926, %v5929
  %v5948 = vsel %vm5942, %v5935, 920167782
  %v5949 = vsel %vm5941, %v5932, %v5948
  %v5950 = vsel %vm5940, %v5947, %v5949
  %v5951 = vsel %vm5939, %v5929, %v5932
  %v5952 = vsel %vm5942, %v5938, 1326507024
  %v5953 = vsel %vm5941, %v5935, %v5952
  %v5954 = vsel %vm5940, %v5951, %v5953
  %v5955 = vshll.u32 %v5915, 8
  %v5956 = vmul.u32.u64.compose %v5955, %v5954
  %v5957 = vextract.low.u32 %v5956
  %v5958 = vextract.high.u32 %v5956
  %v5959 = vmul.u32.u64.compose %v5955, %v5950
  %v5960 = vextract.low.u32 %v5959
  %v5961 = vextract.high.u32 %v5959
  %v5962 = vmul.u32 %v5955, %v5946
  %v5963 = vadd.s32 %v5958, %v5960
  %vm5964 = vc.u32 %v5958, %v5960
  %v5965 = vadd.s32 %v5961, 1
  %v5966 = vsel %vm5964, %v5965, %v5961
  %v5967 = vadd.s32 %v5962, %v5966
  %v5968 = vadd.s32 %v5967, 536870912
  %v5969 = vshrl.u32 %v5968, 30
  %v5970 = vshll.u32 %v5969, 30
  %v5971 = vsub.s32 %v5967, %v5970
  %vm5972 = vcmp.lt.s32.totalorder %v5971, 0
  %v5973 = vsub.s32 0, %v5971
  %v5974 = vsel %vm5972, %v5973, %v5971
  %v5975 = vclz %v5974
  %v5976 = vsub.s32 %v5975, 2
  %vm5977 = vcmp.gt.s32.totalorder 0, %v5976
  %v5978 = vsel %vm5977, 0, %v5976
  %v5979 = vsub.s32 32, %v5978
  %v5980 = vshll.u32 %v5971, %v5978
  %v5981 = vshrl.u32 %v5963, %v5979
  %v5982 = vor.u32 %v5980, %v5981
  %v5983 = vsub.s32 4294967266, %v5978
  %v5984 = vadd.s32 %v5983, 127
  %v5985 = vshll.u32 %v5984, 23
  %v5986 = vor.u32 4788187, %v5985
  %v5987 = vand.u32 2147483647, %v5986
  %v5989 = vcvt.s32.f32 %v5982
  %v5990 = vmul.f32 %v5989, %v5987
  %v5991 = vxor.u32 %v5990, 2147483648
  %v5992 = vsel %vm5909, %v5991, %v5990
  %v5993 = vsub.s32 4, %v5969
  %v5994 = vsel %vm5909, %v5993, %v5969
  %v5995 = vsel %vm5908, %v2753, %v5992
  %v5996 = vsel %vm5908, 0, %v5994
  %v5997 = vcosq.f32.pop %v5995
  %v5998 = vsinq.f32.pop %v5995
  %vm5999 = vweird.f32 %v2753
  %v6000 = vadd.s32 %v5996, 3
  %v6001 = vand.u32 %v6000, 3
  %vm6002 = vcmp.lt.s32.totalorder %v6001, 2
  %vm6003 = vcmp.eq.s32.totalorder %v6001, 0
  %v6004 = vxor.u32 %v5998, 2147483648
  %v6005 = vsel %vm6003, %v5997, %v6004
  %vm6006 = vcmp.eq.s32.totalorder %v6001, 2
  %v6007 = vxor.u32 %v5997, 2147483648
  %v6008 = vsel %vm6006, %v6007, %v5998
  %v6009 = vsel %vm6002, %v6005, %v6008
  %v6010 = vsel %vm5999, nan, %v6009
  %v6011 = vand.u32 2147483647, %v2754
  %vm6012 = vcmp.le.f32.partialorder %v6011, 0.7853982
  %vm6013 = vcmp.lt.s32.totalorder %v2754, 0
  %v6014 = vand.u32 %v2754, 2139095040
  %v6015 = vshrl.u32 %v6014, 23
  %v6016 = vsub.s32 %v6015, 127
  %v6017 = vand.u32 2147483647, %v2754
  %v6018 = vand.u32 %v6017, 8388607
  %v6019 = vor.u32 %v6018, 8388608
  %v6020 = vsub.s32 0, %v6019
  %v6021 = vadd.s32 %v6016, 1
  %vm6022 = vcmp.gt.s32.totalorder %v6021, 0
  %v6023 = vsel %vm6022, %v6021, 0
  %v6024 = vshrl.u32 %v6023, 5
  %v6025 = vand.u32 %v6023, 31
  %v6026 = vsub.s32 32, %v6025
  %v6027 = vshrl.u32 683565275, %v6026
  %v6028 = vshll.u32 683565275, %v6025
  %v6029 = vshrl.u32 2475754826, %v6026
  %v6030 = vor.u32 %v6028, %v6029
  %v6031 = vshll.u32 2475754826, %v6025
  %v6032 = vshrl.u32 2131351028, %v6026
  %v6033 = vor.u32 %v6031, %v6032
  %v6034 = vshll.u32 2131351028, %v6025
  %v6035 = vshrl.u32 2102212464, %v6026
  %v6036 = vor.u32 %v6034, %v6035
  %v6037 = vshll.u32 2102212464, %v6025
  %v6038 = vshrl.u32 920167782, %v6026
  %v6039 = vor.u32 %v6037, %v6038
  %v6040 = vshll.u32 920167782, %v6025
  %v6041 = vshrl.u32 1326507024, %v6026
  %v6042 = vor.u32 %v6040, %v6041
  %vm6043 = vcmp.lt.s32.totalorder %v6024, 1
  %vm6044 = vcmp.lt.s32.totalorder %v6024, 2
  %vm6045 = vcmp.lt.s32.totalorder %v6024, 3
  %vm6046 = vcmp.lt.s32.totalorder %v6024, 4
  %v6047 = vsel %vm6043, %v6027, %v6030
  %v6048 = vsel %vm6046, %v6036, 2102212464
  %v6049 = vsel %vm6045, %v6033, %v6048
  %v6050 = vsel %vm6044, %v6047, %v6049
  %v6051 = vsel %vm6043, %v6030, %v6033
  %v6052 = vsel %vm6046, %v6039, 920167782
  %v6053 = vsel %vm6045, %v6036, %v6052
  %v6054 = vsel %vm6044, %v6051, %v6053
  %v6055 = vsel %vm6043, %v6033, %v6036
  %v6056 = vsel %vm6046, %v6042, 1326507024
  %v6057 = vsel %vm6045, %v6039, %v6056
  %v6058 = vsel %vm6044, %v6055, %v6057
  %v6059 = vshll.u32 %v6019, 8
  %v6060 = vmul.u32.u64.compose %v6059, %v6058
  %v6061 = vextract.low.u32 %v6060
  %v6062 = vextract.high.u32 %v6060
  %v6063 = vmul.u32.u64.compose %v6059, %v6054
  %v6064 = vextract.low.u32 %v6063
  %v6065 = vextract.high.u32 %v6063
  %v6066 = vmul.u32 %v6059, %v6050
  %v6067 = vadd.s32 %v6062, %v6064
  %vm6068 = vc.u32 %v6062, %v6064
  %v6069 = vadd.s32 %v6065, 1
  %v6070 = vsel %vm6068, %v6069, %v6065
  %v6071 = vadd.s32 %v6066, %v6070
  %v6072 = vadd.s32 %v6071, 536870912
  %v6073 = vshrl.u32 %v6072, 30
  %v6074 = vshll.u32 %v6073, 30
  %v6075 = vsub.s32 %v6071, %v6074
  %vm6076 = vcmp.lt.s32.totalorder %v6075, 0
  %v6077 = vsub.s32 0, %v6075
  %v6078 = vsel %vm6076, %v6077, %v6075
  %v6079 = vclz %v6078
  %v6080 = vsub.s32 %v6079, 2
  %vm6081 = vcmp.gt.s32.totalorder 0, %v6080
  %v6082 = vsel %vm6081, 0, %v6080
  %v6083 = vsub.s32 32, %v6082
  %v6084 = vshll.u32 %v6075, %v6082
  %v6085 = vshrl.u32 %v6067, %v6083
  %v6086 = vor.u32 %v6084, %v6085
  %v6087 = vsub.s32 4294967266, %v6082
  %v6088 = vadd.s32 %v6087, 127
  %v6089 = vshll.u32 %v6088, 23
  %v6090 = vor.u32 4788187, %v6089
  %v6091 = vand.u32 2147483647, %v6090
  %v6093 = vcvt.s32.f32 %v6086
  %v6094 = vmul.f32 %v6093, %v6091
  %v6095 = vxor.u32 %v6094, 2147483648
  %v6096 = vsel %vm6013, %v6095, %v6094
  %v6097 = vsub.s32 4, %v6073
  %v6098 = vsel %vm6013, %v6097, %v6073
  %v6099 = vsel %vm6012, %v2754, %v6096
  %v6100 = vsel %vm6012, 0, %v6098
  %v6101 = vcosq.f32.pop %v6099
  %v6102 = vsinq.f32.pop %v6099
  %vm6103 = vweird.f32 %v2754
  %v6104 = vadd.s32 %v6100, 3
  %v6105 = vand.u32 %v6104, 3
  %vm6106 = vcmp.lt.s32.totalorder %v6105, 2
  %vm6107 = vcmp.eq.s32.totalorder %v6105, 0
  %v6108 = vxor.u32 %v6102, 2147483648
  %v6109 = vsel %vm6107, %v6101, %v6108
  %vm6110 = vcmp.eq.s32.totalorder %v6105, 2
  %v6111 = vxor.u32 %v6101, 2147483648
  %v6112 = vsel %vm6110, %v6111, %v6102
  %v6113 = vsel %vm6106, %v6109, %v6112
  %v6114 = vsel %vm6103, nan, %v6113
  %v6115 = vand.u32 2147483647, %v2755
  %vm6116 = vcmp.le.f32.partialorder %v6115, 0.7853982
  %vm6117 = vcmp.lt.s32.totalorder %v2755, 0
  %v6118 = vand.u32 %v2755, 2139095040
  %v6119 = vshrl.u32 %v6118, 23
  %v6120 = vsub.s32 %v6119, 127
  %v6121 = vand.u32 2147483647, %v2755
  %v6122 = vand.u32 %v6121, 8388607
  %v6123 = vor.u32 %v6122, 8388608
  %v6124 = vsub.s32 0, %v6123
  %v6125 = vadd.s32 %v6120, 1
  %vm6126 = vcmp.gt.s32.totalorder %v6125, 0
  %v6127 = vsel %vm6126, %v6125, 0
  %v6128 = vshrl.u32 %v6127, 5
  %v6129 = vand.u32 %v6127, 31
  %v6130 = vsub.s32 32, %v6129
  %v6131 = vshrl.u32 683565275, %v6130
  %v6132 = vshll.u32 683565275, %v6129
  %v6133 = vshrl.u32 2475754826, %v6130
  %v6134 = vor.u32 %v6132, %v6133
  %v6135 = vshll.u32 2475754826, %v6129
  %v6136 = vshrl.u32 2131351028, %v6130
  %v6137 = vor.u32 %v6135, %v6136
  %v6138 = vshll.u32 2131351028, %v6129
  %v6139 = vshrl.u32 2102212464, %v6130
  %v6140 = vor.u32 %v6138, %v6139
  %v6141 = vshll.u32 2102212464, %v6129
  %v6142 = vshrl.u32 920167782, %v6130
  %v6143 = vor.u32 %v6141, %v6142
  %v6144 = vshll.u32 920167782, %v6129
  %v6145 = vshrl.u32 1326507024, %v6130
  %v6146 = vor.u32 %v6144, %v6145
  %vm6147 = vcmp.lt.s32.totalorder %v6128, 1
  %vm6148 = vcmp.lt.s32.totalorder %v6128, 2
  %vm6149 = vcmp.lt.s32.totalorder %v6128, 3
  %vm6150 = vcmp.lt.s32.totalorder %v6128, 4
  %v6151 = vsel %vm6147, %v6131, %v6134
  %v6152 = vsel %vm6150, %v6140, 2102212464
  %v6153 = vsel %vm6149, %v6137, %v6152
  %v6154 = vsel %vm6148, %v6151, %v6153
  %v6155 = vsel %vm6147, %v6134, %v6137
  %v6156 = vsel %vm6150, %v6143, 920167782
  %v6157 = vsel %vm6149, %v6140, %v6156
  %v6158 = vsel %vm6148, %v6155, %v6157
  %v6159 = vsel %vm6147, %v6137, %v6140
  %v6160 = vsel %vm6150, %v6146, 1326507024
  %v6161 = vsel %vm6149, %v6143, %v6160
  %v6162 = vsel %vm6148, %v6159, %v6161
  %v6163 = vshll.u32 %v6123, 8
  %v6164 = vmul.u32.u64.compose %v6163, %v6162
  %v6165 = vextract.low.u32 %v6164
  %v6166 = vextract.high.u32 %v6164
  %v6167 = vmul.u32.u64.compose %v6163, %v6158
  %v6168 = vextract.low.u32 %v6167
  %v6169 = vextract.high.u32 %v6167
  %v6170 = vmul.u32 %v6163, %v6154
  %v6171 = vadd.s32 %v6166, %v6168
  %vm6172 = vc.u32 %v6166, %v6168
  %v6173 = vadd.s32 %v6169, 1
  %v6174 = vsel %vm6172, %v6173, %v6169
  %v6175 = vadd.s32 %v6170, %v6174
  %v6176 = vadd.s32 %v6175, 536870912
  %v6177 = vshrl.u32 %v6176, 30
  %v6178 = vshll.u32 %v6177, 30
  %v6179 = vsub.s32 %v6175, %v6178
  %vm6180 = vcmp.lt.s32.totalorder %v6179, 0
  %v6181 = vsub.s32 0, %v6179
  %v6182 = vsel %vm6180, %v6181, %v6179
  %v6183 = vclz %v6182
  %v6184 = vsub.s32 %v6183, 2
  %vm6185 = vcmp.gt.s32.totalorder 0, %v6184
  %v6186 = vsel %vm6185, 0, %v6184
  %v6187 = vsub.s32 32, %v6186
  %v6188 = vshll.u32 %v6179, %v6186
  %v6189 = vshrl.u32 %v6171, %v6187
  %v6190 = vor.u32 %v6188, %v6189
  %v6191 = vsub.s32 4294967266, %v6186
  %v6192 = vadd.s32 %v6191, 127
  %v6193 = vshll.u32 %v6192, 23
  %v6194 = vor.u32 4788187, %v6193
  %v6195 = vand.u32 2147483647, %v6194
  %v6197 = vcvt.s32.f32 %v6190
  %v6198 = vmul.f32 %v6197, %v6195
  %v6199 = vxor.u32 %v6198, 2147483648
  %v6200 = vsel %vm6117, %v6199, %v6198
  %v6201 = vsub.s32 4, %v6177
  %v6202 = vsel %vm6117, %v6201, %v6177
  %v6203 = vsel %vm6116, %v2755, %v6200
  %v6204 = vsel %vm6116, 0, %v6202
  %v6205 = vcosq.f32.pop %v6203
  %v6206 = vsinq.f32.pop %v6203
  %vm6207 = vweird.f32 %v2755
  %v6208 = vadd.s32 %v6204, 3
  %v6209 = vand.u32 %v6208, 3
  %vm6210 = vcmp.lt.s32.totalorder %v6209, 2
  %vm6211 = vcmp.eq.s32.totalorder %v6209, 0
  %v6212 = vxor.u32 %v6206, 2147483648
  %v6213 = vsel %vm6211, %v6205, %v6212
  %vm6214 = vcmp.eq.s32.totalorder %v6209, 2
  %v6215 = vxor.u32 %v6205, 2147483648
  %v6216 = vsel %vm6214, %v6215, %v6206
  %v6217 = vsel %vm6210, %v6213, %v6216
  %v6218 = vsel %vm6207, nan, %v6217
  %v6219 = vand.u32 2147483647, %v2756
  %vm6220 = vcmp.le.f32.partialorder %v6219, 0.7853982
  %vm6221 = vcmp.lt.s32.totalorder %v2756, 0
  %v6222 = vand.u32 %v2756, 2139095040
  %v6223 = vshrl.u32 %v6222, 23
  %v6224 = vsub.s32 %v6223, 127
  %v6225 = vand.u32 2147483647, %v2756
  %v6226 = vand.u32 %v6225, 8388607
  %v6227 = vor.u32 %v6226, 8388608
  %v6228 = vsub.s32 0, %v6227
  %v6229 = vadd.s32 %v6224, 1
  %vm6230 = vcmp.gt.s32.totalorder %v6229, 0
  %v6231 = vsel %vm6230, %v6229, 0
  %v6232 = vshrl.u32 %v6231, 5
  %v6233 = vand.u32 %v6231, 31
  %v6234 = vsub.s32 32, %v6233
  %v6235 = vshrl.u32 683565275, %v6234
  %v6236 = vshll.u32 683565275, %v6233
  %v6237 = vshrl.u32 2475754826, %v6234
  %v6238 = vor.u32 %v6236, %v6237
  %v6239 = vshll.u32 2475754826, %v6233
  %v6240 = vshrl.u32 2131351028, %v6234
  %v6241 = vor.u32 %v6239, %v6240
  %v6242 = vshll.u32 2131351028, %v6233
  %v6243 = vshrl.u32 2102212464, %v6234
  %v6244 = vor.u32 %v6242, %v6243
  %v6245 = vshll.u32 2102212464, %v6233
  %v6246 = vshrl.u32 920167782, %v6234
  %v6247 = vor.u32 %v6245, %v6246
  %v6248 = vshll.u32 920167782, %v6233
  %v6249 = vshrl.u32 1326507024, %v6234
  %v6250 = vor.u32 %v6248, %v6249
  %vm6251 = vcmp.lt.s32.totalorder %v6232, 1
  %vm6252 = vcmp.lt.s32.totalorder %v6232, 2
  %vm6253 = vcmp.lt.s32.totalorder %v6232, 3
  %vm6254 = vcmp.lt.s32.totalorder %v6232, 4
  %v6255 = vsel %vm6251, %v6235, %v6238
  %v6256 = vsel %vm6254, %v6244, 2102212464
  %v6257 = vsel %vm6253, %v6241, %v6256
  %v6258 = vsel %vm6252, %v6255, %v6257
  %v6259 = vsel %vm6251, %v6238, %v6241
  %v6260 = vsel %vm6254, %v6247, 920167782
  %v6261 = vsel %vm6253, %v6244, %v6260
  %v6262 = vsel %vm6252, %v6259, %v6261
  %v6263 = vsel %vm6251, %v6241, %v6244
  %v6264 = vsel %vm6254, %v6250, 1326507024
  %v6265 = vsel %vm6253, %v6247, %v6264
  %v6266 = vsel %vm6252, %v6263, %v6265
  %v6267 = vshll.u32 %v6227, 8
  %v6268 = vmul.u32.u64.compose %v6267, %v6266
  %v6269 = vextract.low.u32 %v6268
  %v6270 = vextract.high.u32 %v6268
  %v6271 = vmul.u32.u64.compose %v6267, %v6262
  %v6272 = vextract.low.u32 %v6271
  %v6273 = vextract.high.u32 %v6271
  %v6274 = vmul.u32 %v6267, %v6258
  %v6275 = vadd.s32 %v6270, %v6272
  %vm6276 = vc.u32 %v6270, %v6272
  %v6277 = vadd.s32 %v6273, 1
  %v6278 = vsel %vm6276, %v6277, %v6273
  %v6279 = vadd.s32 %v6274, %v6278
  %v6280 = vadd.s32 %v6279, 536870912
  %v6281 = vshrl.u32 %v6280, 30
  %v6282 = vshll.u32 %v6281, 30
  %v6283 = vsub.s32 %v6279, %v6282
  %vm6284 = vcmp.lt.s32.totalorder %v6283, 0
  %v6285 = vsub.s32 0, %v6283
  %v6286 = vsel %vm6284, %v6285, %v6283
  %v6287 = vclz %v6286
  %v6288 = vsub.s32 %v6287, 2
  %vm6289 = vcmp.gt.s32.totalorder 0, %v6288
  %v6290 = vsel %vm6289, 0, %v6288
  %v6291 = vsub.s32 32, %v6290
  %v6292 = vshll.u32 %v6283, %v6290
  %v6293 = vshrl.u32 %v6275, %v6291
  %v6294 = vor.u32 %v6292, %v6293
  %v6295 = vsub.s32 4294967266, %v6290
  %v6296 = vadd.s32 %v6295, 127
  %v6297 = vshll.u32 %v6296, 23
  %v6298 = vor.u32 4788187, %v6297
  %v6299 = vand.u32 2147483647, %v6298
  %v6301 = vcvt.s32.f32 %v6294
  %v6302 = vmul.f32 %v6301, %v6299
  %v6303 = vxor.u32 %v6302, 2147483648
  %v6304 = vsel %vm6221, %v6303, %v6302
  %v6305 = vsub.s32 4, %v6281
  %v6306 = vsel %vm6221, %v6305, %v6281
  %v6307 = vsel %vm6220, %v2756, %v6304
  %v6308 = vsel %vm6220, 0, %v6306
  %v6309 = vcosq.f32.pop %v6307
  %v6310 = vsinq.f32.pop %v6307
  %vm6311 = vweird.f32 %v2756
  %v6312 = vadd.s32 %v6308, 3
  %v6313 = vand.u32 %v6312, 3
  %vm6314 = vcmp.lt.s32.totalorder %v6313, 2
  %vm6315 = vcmp.eq.s32.totalorder %v6313, 0
  %v6316 = vxor.u32 %v6310, 2147483648
  %v6317 = vsel %vm6315, %v6309, %v6316
  %vm6318 = vcmp.eq.s32.totalorder %v6313, 2
  %v6319 = vxor.u32 %v6309, 2147483648
  %v6320 = vsel %vm6318, %v6319, %v6310
  %v6321 = vsel %vm6314, %v6317, %v6320
  %v6322 = vsel %vm6311, nan, %v6321
  %v6323 = vand.u32 2147483647, %v2757
  %vm6324 = vcmp.le.f32.partialorder %v6323, 0.7853982
  %vm6325 = vcmp.lt.s32.totalorder %v2757, 0
  %v6326 = vand.u32 %v2757, 2139095040
  %v6327 = vshrl.u32 %v6326, 23
  %v6328 = vsub.s32 %v6327, 127
  %v6329 = vand.u32 2147483647, %v2757
  %v6330 = vand.u32 %v6329, 8388607
  %v6331 = vor.u32 %v6330, 8388608
  %v6332 = vsub.s32 0, %v6331
  %v6333 = vadd.s32 %v6328, 1
  %vm6334 = vcmp.gt.s32.totalorder %v6333, 0
  %v6335 = vsel %vm6334, %v6333, 0
  %v6336 = vshrl.u32 %v6335, 5
  %v6337 = vand.u32 %v6335, 31
  %v6338 = vsub.s32 32, %v6337
  %v6339 = vshrl.u32 683565275, %v6338
  %v6340 = vshll.u32 683565275, %v6337
  %v6341 = vshrl.u32 2475754826, %v6338
  %v6342 = vor.u32 %v6340, %v6341
  %v6343 = vshll.u32 2475754826, %v6337
  %v6344 = vshrl.u32 2131351028, %v6338
  %v6345 = vor.u32 %v6343, %v6344
  %v6346 = vshll.u32 2131351028, %v6337
  %v6347 = vshrl.u32 2102212464, %v6338
  %v6348 = vor.u32 %v6346, %v6347
  %v6349 = vshll.u32 2102212464, %v6337
  %v6350 = vshrl.u32 920167782, %v6338
  %v6351 = vor.u32 %v6349, %v6350
  %v6352 = vshll.u32 920167782, %v6337
  %v6353 = vshrl.u32 1326507024, %v6338
  %v6354 = vor.u32 %v6352, %v6353
  %vm6355 = vcmp.lt.s32.totalorder %v6336, 1
  %vm6356 = vcmp.lt.s32.totalorder %v6336, 2
  %vm6357 = vcmp.lt.s32.totalorder %v6336, 3
  %vm6358 = vcmp.lt.s32.totalorder %v6336, 4
  %v6359 = vsel %vm6355, %v6339, %v6342
  %v6360 = vsel %vm6358, %v6348, 2102212464
  %v6361 = vsel %vm6357, %v6345, %v6360
  %v6362 = vsel %vm6356, %v6359, %v6361
  %v6363 = vsel %vm6355, %v6342, %v6345
  %v6364 = vsel %vm6358, %v6351, 920167782
  %v6365 = vsel %vm6357, %v6348, %v6364
  %v6366 = vsel %vm6356, %v6363, %v6365
  %v6367 = vsel %vm6355, %v6345, %v6348
  %v6368 = vsel %vm6358, %v6354, 1326507024
  %v6369 = vsel %vm6357, %v6351, %v6368
  %v6370 = vsel %vm6356, %v6367, %v6369
  %v6371 = vshll.u32 %v6331, 8
  %v6372 = vmul.u32.u64.compose %v6371, %v6370
  %v6373 = vextract.low.u32 %v6372
  %v6374 = vextract.high.u32 %v6372
  %v6375 = vmul.u32.u64.compose %v6371, %v6366
  %v6376 = vextract.low.u32 %v6375
  %v6377 = vextract.high.u32 %v6375
  %v6378 = vmul.u32 %v6371, %v6362
  %v6379 = vadd.s32 %v6374, %v6376
  %vm6380 = vc.u32 %v6374, %v6376
  %v6381 = vadd.s32 %v6377, 1
  %v6382 = vsel %vm6380, %v6381, %v6377
  %v6383 = vadd.s32 %v6378, %v6382
  %v6384 = vadd.s32 %v6383, 536870912
  %v6385 = vshrl.u32 %v6384, 30
  %v6386 = vshll.u32 %v6385, 30
  %v6387 = vsub.s32 %v6383, %v6386
  %vm6388 = vcmp.lt.s32.totalorder %v6387, 0
  %v6389 = vsub.s32 0, %v6387
  %v6390 = vsel %vm6388, %v6389, %v6387
  %v6391 = vclz %v6390
  %v6392 = vsub.s32 %v6391, 2
  %vm6393 = vcmp.gt.s32.totalorder 0, %v6392
  %v6394 = vsel %vm6393, 0, %v6392
  %v6395 = vsub.s32 32, %v6394
  %v6396 = vshll.u32 %v6387, %v6394
  %v6397 = vshrl.u32 %v6379, %v6395
  %v6398 = vor.u32 %v6396, %v6397
  %v6399 = vsub.s32 4294967266, %v6394
  %v6400 = vadd.s32 %v6399, 127
  %v6401 = vshll.u32 %v6400, 23
  %v6402 = vor.u32 4788187, %v6401
  %v6403 = vand.u32 2147483647, %v6402
  %v6405 = vcvt.s32.f32 %v6398
  %v6406 = vmul.f32 %v6405, %v6403
  %v6407 = vxor.u32 %v6406, 2147483648
  %v6408 = vsel %vm6325, %v6407, %v6406
  %v6409 = vsub.s32 4, %v6385
  %v6410 = vsel %vm6325, %v6409, %v6385
  %v6411 = vsel %vm6324, %v2757, %v6408
  %v6412 = vsel %vm6324, 0, %v6410
  %v6413 = vcosq.f32.pop %v6411
  %v6414 = vsinq.f32.pop %v6411
  %vm6415 = vweird.f32 %v2757
  %v6416 = vadd.s32 %v6412, 3
  %v6417 = vand.u32 %v6416, 3
  %vm6418 = vcmp.lt.s32.totalorder %v6417, 2
  %vm6419 = vcmp.eq.s32.totalorder %v6417, 0
  %v6420 = vxor.u32 %v6414, 2147483648
  %v6421 = vsel %vm6419, %v6413, %v6420
  %vm6422 = vcmp.eq.s32.totalorder %v6417, 2
  %v6423 = vxor.u32 %v6413, 2147483648
  %v6424 = vsel %vm6422, %v6423, %v6414
  %v6425 = vsel %vm6418, %v6421, %v6424
  %v6426 = vsel %vm6415, nan, %v6425
  %v6427 = vand.u32 2147483647, %v2758
  %vm6428 = vcmp.le.f32.partialorder %v6427, 0.7853982
  %vm6429 = vcmp.lt.s32.totalorder %v2758, 0
  %v6430 = vand.u32 %v2758, 2139095040
  %v6431 = vshrl.u32 %v6430, 23
  %v6432 = vsub.s32 %v6431, 127
  %v6433 = vand.u32 2147483647, %v2758
  %v6434 = vand.u32 %v6433, 8388607
  %v6435 = vor.u32 %v6434, 8388608
  %v6436 = vsub.s32 0, %v6435
  %v6437 = vadd.s32 %v6432, 1
  %vm6438 = vcmp.gt.s32.totalorder %v6437, 0
  %v6439 = vsel %vm6438, %v6437, 0
  %v6440 = vshrl.u32 %v6439, 5
  %v6441 = vand.u32 %v6439, 31
  %v6442 = vsub.s32 32, %v6441
  %v6443 = vshrl.u32 683565275, %v6442
  %v6444 = vshll.u32 683565275, %v6441
  %v6445 = vshrl.u32 2475754826, %v6442
  %v6446 = vor.u32 %v6444, %v6445
  %v6447 = vshll.u32 2475754826, %v6441
  %v6448 = vshrl.u32 2131351028, %v6442
  %v6449 = vor.u32 %v6447, %v6448
  %v6450 = vshll.u32 2131351028, %v6441
  %v6451 = vshrl.u32 2102212464, %v6442
  %v6452 = vor.u32 %v6450, %v6451
  %v6453 = vshll.u32 2102212464, %v6441
  %v6454 = vshrl.u32 920167782, %v6442
  %v6455 = vor.u32 %v6453, %v6454
  %v6456 = vshll.u32 920167782, %v6441
  %v6457 = vshrl.u32 1326507024, %v6442
  %v6458 = vor.u32 %v6456, %v6457
  %vm6459 = vcmp.lt.s32.totalorder %v6440, 1
  %vm6460 = vcmp.lt.s32.totalorder %v6440, 2
  %vm6461 = vcmp.lt.s32.totalorder %v6440, 3
  %vm6462 = vcmp.lt.s32.totalorder %v6440, 4
  %v6463 = vsel %vm6459, %v6443, %v6446
  %v6464 = vsel %vm6462, %v6452, 2102212464
  %v6465 = vsel %vm6461, %v6449, %v6464
  %v6466 = vsel %vm6460, %v6463, %v6465
  %v6467 = vsel %vm6459, %v6446, %v6449
  %v6468 = vsel %vm6462, %v6455, 920167782
  %v6469 = vsel %vm6461, %v6452, %v6468
  %v6470 = vsel %vm6460, %v6467, %v6469
  %v6471 = vsel %vm6459, %v6449, %v6452
  %v6472 = vsel %vm6462, %v6458, 1326507024
  %v6473 = vsel %vm6461, %v6455, %v6472
  %v6474 = vsel %vm6460, %v6471, %v6473
  %v6475 = vshll.u32 %v6435, 8
  %v6476 = vmul.u32.u64.compose %v6475, %v6474
  %v6477 = vextract.low.u32 %v6476
  %v6478 = vextract.high.u32 %v6476
  %v6479 = vmul.u32.u64.compose %v6475, %v6470
  %v6480 = vextract.low.u32 %v6479
  %v6481 = vextract.high.u32 %v6479
  %v6482 = vmul.u32 %v6475, %v6466
  %v6483 = vadd.s32 %v6478, %v6480
  %vm6484 = vc.u32 %v6478, %v6480
  %v6485 = vadd.s32 %v6481, 1
  %v6486 = vsel %vm6484, %v6485, %v6481
  %v6487 = vadd.s32 %v6482, %v6486
  %v6488 = vadd.s32 %v6487, 536870912
  %v6489 = vshrl.u32 %v6488, 30
  %v6490 = vshll.u32 %v6489, 30
  %v6491 = vsub.s32 %v6487, %v6490
  %vm6492 = vcmp.lt.s32.totalorder %v6491, 0
  %v6493 = vsub.s32 0, %v6491
  %v6494 = vsel %vm6492, %v6493, %v6491
  %v6495 = vclz %v6494
  %v6496 = vsub.s32 %v6495, 2
  %vm6497 = vcmp.gt.s32.totalorder 0, %v6496
  %v6498 = vsel %vm6497, 0, %v6496
  %v6499 = vsub.s32 32, %v6498
  %v6500 = vshll.u32 %v6491, %v6498
  %v6501 = vshrl.u32 %v6483, %v6499
  %v6502 = vor.u32 %v6500, %v6501
  %v6503 = vsub.s32 4294967266, %v6498
  %v6504 = vadd.s32 %v6503, 127
  %v6505 = vshll.u32 %v6504, 23
  %v6506 = vor.u32 4788187, %v6505
  %v6507 = vand.u32 2147483647, %v6506
  %v6509 = vcvt.s32.f32 %v6502
  %v6510 = vmul.f32 %v6509, %v6507
  %v6511 = vxor.u32 %v6510, 2147483648
  %v6512 = vsel %vm6429, %v6511, %v6510
  %v6513 = vsub.s32 4, %v6489
  %v6514 = vsel %vm6429, %v6513, %v6489
  %v6515 = vsel %vm6428, %v2758, %v6512
  %v6516 = vsel %vm6428, 0, %v6514
  %v6517 = vcosq.f32.pop %v6515
  %v6518 = vsinq.f32.pop %v6515
  %vm6519 = vweird.f32 %v2758
  %v6520 = vadd.s32 %v6516, 3
  %v6521 = vand.u32 %v6520, 3
  %vm6522 = vcmp.lt.s32.totalorder %v6521, 2
  %vm6523 = vcmp.eq.s32.totalorder %v6521, 0
  %v6524 = vxor.u32 %v6518, 2147483648
  %v6525 = vsel %vm6523, %v6517, %v6524
  %vm6526 = vcmp.eq.s32.totalorder %v6521, 2
  %v6527 = vxor.u32 %v6517, 2147483648
  %v6528 = vsel %vm6526, %v6527, %v6518
  %v6529 = vsel %vm6522, %v6525, %v6528
  %v6530 = vsel %vm6519, nan, %v6529
  %v6531 = vand.u32 2147483647, %v2759
  %vm6532 = vcmp.le.f32.partialorder %v6531, 0.7853982
  %vm6533 = vcmp.lt.s32.totalorder %v2759, 0
  %v6534 = vand.u32 %v2759, 2139095040
  %v6535 = vshrl.u32 %v6534, 23
  %v6536 = vsub.s32 %v6535, 127
  %v6537 = vand.u32 2147483647, %v2759
  %v6538 = vand.u32 %v6537, 8388607
  %v6539 = vor.u32 %v6538, 8388608
  %v6540 = vsub.s32 0, %v6539
  %v6541 = vadd.s32 %v6536, 1
  %vm6542 = vcmp.gt.s32.totalorder %v6541, 0
  %v6543 = vsel %vm6542, %v6541, 0
  %v6544 = vshrl.u32 %v6543, 5
  %v6545 = vand.u32 %v6543, 31
  %v6546 = vsub.s32 32, %v6545
  %v6547 = vshrl.u32 683565275, %v6546
  %v6548 = vshll.u32 683565275, %v6545
  %v6549 = vshrl.u32 2475754826, %v6546
  %v6550 = vor.u32 %v6548, %v6549
  %v6551 = vshll.u32 2475754826, %v6545
  %v6552 = vshrl.u32 2131351028, %v6546
  %v6553 = vor.u32 %v6551, %v6552
  %v6554 = vshll.u32 2131351028, %v6545
  %v6555 = vshrl.u32 2102212464, %v6546
  %v6556 = vor.u32 %v6554, %v6555
  %v6557 = vshll.u32 2102212464, %v6545
  %v6558 = vshrl.u32 920167782, %v6546
  %v6559 = vor.u32 %v6557, %v6558
  %v6560 = vshll.u32 920167782, %v6545
  %v6561 = vshrl.u32 1326507024, %v6546
  %v6562 = vor.u32 %v6560, %v6561
  %vm6563 = vcmp.lt.s32.totalorder %v6544, 1
  %vm6564 = vcmp.lt.s32.totalorder %v6544, 2
  %vm6565 = vcmp.lt.s32.totalorder %v6544, 3
  %vm6566 = vcmp.lt.s32.totalorder %v6544, 4
  %v6567 = vsel %vm6563, %v6547, %v6550
  %v6568 = vsel %vm6566, %v6556, 2102212464
  %v6569 = vsel %vm6565, %v6553, %v6568
  %v6570 = vsel %vm6564, %v6567, %v6569
  %v6571 = vsel %vm6563, %v6550, %v6553
  %v6572 = vsel %vm6566, %v6559, 920167782
  %v6573 = vsel %vm6565, %v6556, %v6572
  %v6574 = vsel %vm6564, %v6571, %v6573
  %v6575 = vsel %vm6563, %v6553, %v6556
  %v6576 = vsel %vm6566, %v6562, 1326507024
  %v6577 = vsel %vm6565, %v6559, %v6576
  %v6578 = vsel %vm6564, %v6575, %v6577
  %v6579 = vshll.u32 %v6539, 8
  %v6580 = vmul.u32.u64.compose %v6579, %v6578
  %v6581 = vextract.low.u32 %v6580
  %v6582 = vextract.high.u32 %v6580
  %v6583 = vmul.u32.u64.compose %v6579, %v6574
  %v6584 = vextract.low.u32 %v6583
  %v6585 = vextract.high.u32 %v6583
  %v6586 = vmul.u32 %v6579, %v6570
  %v6587 = vadd.s32 %v6582, %v6584
  %vm6588 = vc.u32 %v6582, %v6584
  %v6589 = vadd.s32 %v6585, 1
  %v6590 = vsel %vm6588, %v6589, %v6585
  %v6591 = vadd.s32 %v6586, %v6590
  %v6592 = vadd.s32 %v6591, 536870912
  %v6593 = vshrl.u32 %v6592, 30
  %v6594 = vshll.u32 %v6593, 30
  %v6595 = vsub.s32 %v6591, %v6594
  %vm6596 = vcmp.lt.s32.totalorder %v6595, 0
  %v6597 = vsub.s32 0, %v6595
  %v6598 = vsel %vm6596, %v6597, %v6595
  %v6599 = vclz %v6598
  %v6600 = vsub.s32 %v6599, 2
  %vm6601 = vcmp.gt.s32.totalorder 0, %v6600
  %v6602 = vsel %vm6601, 0, %v6600
  %v6603 = vsub.s32 32, %v6602
  %v6604 = vshll.u32 %v6595, %v6602
  %v6605 = vshrl.u32 %v6587, %v6603
  %v6606 = vor.u32 %v6604, %v6605
  %v6607 = vsub.s32 4294967266, %v6602
  %v6608 = vadd.s32 %v6607, 127
  %v6609 = vshll.u32 %v6608, 23
  %v6610 = vor.u32 4788187, %v6609
  %v6611 = vand.u32 2147483647, %v6610
  %v6613 = vcvt.s32.f32 %v6606
  %v6614 = vmul.f32 %v6613, %v6611
  %v6615 = vxor.u32 %v6614, 2147483648
  %v6616 = vsel %vm6533, %v6615, %v6614
  %v6617 = vsub.s32 4, %v6593
  %v6618 = vsel %vm6533, %v6617, %v6593
  %v6619 = vsel %vm6532, %v2759, %v6616
  %v6620 = vsel %vm6532, 0, %v6618
  %v6621 = vcosq.f32.pop %v6619
  %v6622 = vsinq.f32.pop %v6619
  %vm6623 = vweird.f32 %v2759
  %v6624 = vadd.s32 %v6620, 3
  %v6625 = vand.u32 %v6624, 3
  %vm6626 = vcmp.lt.s32.totalorder %v6625, 2
  %vm6627 = vcmp.eq.s32.totalorder %v6625, 0
  %v6628 = vxor.u32 %v6622, 2147483648
  %v6629 = vsel %vm6627, %v6621, %v6628
  %vm6630 = vcmp.eq.s32.totalorder %v6625, 2
  %v6631 = vxor.u32 %v6621, 2147483648
  %v6632 = vsel %vm6630, %v6631, %v6622
  %v6633 = vsel %vm6626, %v6629, %v6632
  %v6634 = vsel %vm6623, nan, %v6633
  %v6635 = vand.u32 2147483647, %v2760
  %vm6636 = vcmp.le.f32.partialorder %v6635, 0.7853982
  %vm6637 = vcmp.lt.s32.totalorder %v2760, 0
  %v6638 = vand.u32 %v2760, 2139095040
  %v6639 = vshrl.u32 %v6638, 23
  %v6640 = vsub.s32 %v6639, 127
  %v6641 = vand.u32 2147483647, %v2760
  %v6642 = vand.u32 %v6641, 8388607
  %v6643 = vor.u32 %v6642, 8388608
  %v6644 = vsub.s32 0, %v6643
  %v6645 = vadd.s32 %v6640, 1
  %vm6646 = vcmp.gt.s32.totalorder %v6645, 0
  %v6647 = vsel %vm6646, %v6645, 0
  %v6648 = vshrl.u32 %v6647, 5
  %v6649 = vand.u32 %v6647, 31
  %v6650 = vsub.s32 32, %v6649
  %v6651 = vshrl.u32 683565275, %v6650
  %v6652 = vshll.u32 683565275, %v6649
  %v6653 = vshrl.u32 2475754826, %v6650
  %v6654 = vor.u32 %v6652, %v6653
  %v6655 = vshll.u32 2475754826, %v6649
  %v6656 = vshrl.u32 2131351028, %v6650
  %v6657 = vor.u32 %v6655, %v6656
  %v6658 = vshll.u32 2131351028, %v6649
  %v6659 = vshrl.u32 2102212464, %v6650
  %v6660 = vor.u32 %v6658, %v6659
  %v6661 = vshll.u32 2102212464, %v6649
  %v6662 = vshrl.u32 920167782, %v6650
  %v6663 = vor.u32 %v6661, %v6662
  %v6664 = vshll.u32 920167782, %v6649
  %v6665 = vshrl.u32 1326507024, %v6650
  %v6666 = vor.u32 %v6664, %v6665
  %vm6667 = vcmp.lt.s32.totalorder %v6648, 1
  %vm6668 = vcmp.lt.s32.totalorder %v6648, 2
  %vm6669 = vcmp.lt.s32.totalorder %v6648, 3
  %vm6670 = vcmp.lt.s32.totalorder %v6648, 4
  %v6671 = vsel %vm6667, %v6651, %v6654
  %v6672 = vsel %vm6670, %v6660, 2102212464
  %v6673 = vsel %vm6669, %v6657, %v6672
  %v6674 = vsel %vm6668, %v6671, %v6673
  %v6675 = vsel %vm6667, %v6654, %v6657
  %v6676 = vsel %vm6670, %v6663, 920167782
  %v6677 = vsel %vm6669, %v6660, %v6676
  %v6678 = vsel %vm6668, %v6675, %v6677
  %v6679 = vsel %vm6667, %v6657, %v6660
  %v6680 = vsel %vm6670, %v6666, 1326507024
  %v6681 = vsel %vm6669, %v6663, %v6680
  %v6682 = vsel %vm6668, %v6679, %v6681
  %v6683 = vshll.u32 %v6643, 8
  %v6684 = vmul.u32.u64.compose %v6683, %v6682
  %v6685 = vextract.low.u32 %v6684
  %v6686 = vextract.high.u32 %v6684
  %v6687 = vmul.u32.u64.compose %v6683, %v6678
  %v6688 = vextract.low.u32 %v6687
  %v6689 = vextract.high.u32 %v6687
  %v6690 = vmul.u32 %v6683, %v6674
  %v6691 = vadd.s32 %v6686, %v6688
  %vm6692 = vc.u32 %v6686, %v6688
  %v6693 = vadd.s32 %v6689, 1
  %v6694 = vsel %vm6692, %v6693, %v6689
  %v6695 = vadd.s32 %v6690, %v6694
  %v6696 = vadd.s32 %v6695, 536870912
  %v6697 = vshrl.u32 %v6696, 30
  %v6698 = vshll.u32 %v6697, 30
  %v6699 = vsub.s32 %v6695, %v6698
  %vm6700 = vcmp.lt.s32.totalorder %v6699, 0
  %v6701 = vsub.s32 0, %v6699
  %v6702 = vsel %vm6700, %v6701, %v6699
  %v6703 = vclz %v6702
  %v6704 = vsub.s32 %v6703, 2
  %vm6705 = vcmp.gt.s32.totalorder 0, %v6704
  %v6706 = vsel %vm6705, 0, %v6704
  %v6707 = vsub.s32 32, %v6706
  %v6708 = vshll.u32 %v6699, %v6706
  %v6709 = vshrl.u32 %v6691, %v6707
  %v6710 = vor.u32 %v6708, %v6709
  %v6711 = vsub.s32 4294967266, %v6706
  %v6712 = vadd.s32 %v6711, 127
  %v6713 = vshll.u32 %v6712, 23
  %v6714 = vor.u32 4788187, %v6713
  %v6715 = vand.u32 2147483647, %v6714
  %v6717 = vcvt.s32.f32 %v6710
  %v6718 = vmul.f32 %v6717, %v6715
  %v6719 = vxor.u32 %v6718, 2147483648
  %v6720 = vsel %vm6637, %v6719, %v6718
  %v6721 = vsub.s32 4, %v6697
  %v6722 = vsel %vm6637, %v6721, %v6697
  %v6723 = vsel %vm6636, %v2760, %v6720
  %v6724 = vsel %vm6636, 0, %v6722
  %v6725 = vcosq.f32.pop %v6723
  %v6726 = vsinq.f32.pop %v6723
  %vm6727 = vweird.f32 %v2760
  %v6728 = vadd.s32 %v6724, 3
  %v6729 = vand.u32 %v6728, 3
  %vm6730 = vcmp.lt.s32.totalorder %v6729, 2
  %vm6731 = vcmp.eq.s32.totalorder %v6729, 0
  %v6732 = vxor.u32 %v6726, 2147483648
  %v6733 = vsel %vm6731, %v6725, %v6732
  %vm6734 = vcmp.eq.s32.totalorder %v6729, 2
  %v6735 = vxor.u32 %v6725, 2147483648
  %v6736 = vsel %vm6734, %v6735, %v6726
  %v6737 = vsel %vm6730, %v6733, %v6736
  %v6738 = vsel %vm6727, nan, %v6737
  %v6739 = vand.u32 2147483647, %v2761
  %vm6740 = vcmp.le.f32.partialorder %v6739, 0.7853982
  %vm6741 = vcmp.lt.s32.totalorder %v2761, 0
  %v6742 = vand.u32 %v2761, 2139095040
  %v6743 = vshrl.u32 %v6742, 23
  %v6744 = vsub.s32 %v6743, 127
  %v6745 = vand.u32 2147483647, %v2761
  %v6746 = vand.u32 %v6745, 8388607
  %v6747 = vor.u32 %v6746, 8388608
  %v6748 = vsub.s32 0, %v6747
  %v6749 = vadd.s32 %v6744, 1
  %vm6750 = vcmp.gt.s32.totalorder %v6749, 0
  %v6751 = vsel %vm6750, %v6749, 0
  %v6752 = vshrl.u32 %v6751, 5
  %v6753 = vand.u32 %v6751, 31
  %v6754 = vsub.s32 32, %v6753
  %v6755 = vshrl.u32 683565275, %v6754
  %v6756 = vshll.u32 683565275, %v6753
  %v6757 = vshrl.u32 2475754826, %v6754
  %v6758 = vor.u32 %v6756, %v6757
  %v6759 = vshll.u32 2475754826, %v6753
  %v6760 = vshrl.u32 2131351028, %v6754
  %v6761 = vor.u32 %v6759, %v6760
  %v6762 = vshll.u32 2131351028, %v6753
  %v6763 = vshrl.u32 2102212464, %v6754
  %v6764 = vor.u32 %v6762, %v6763
  %v6765 = vshll.u32 2102212464, %v6753
  %v6766 = vshrl.u32 920167782, %v6754
  %v6767 = vor.u32 %v6765, %v6766
  %v6768 = vshll.u32 920167782, %v6753
  %v6769 = vshrl.u32 1326507024, %v6754
  %v6770 = vor.u32 %v6768, %v6769
  %vm6771 = vcmp.lt.s32.totalorder %v6752, 1
  %vm6772 = vcmp.lt.s32.totalorder %v6752, 2
  %vm6773 = vcmp.lt.s32.totalorder %v6752, 3
  %vm6774 = vcmp.lt.s32.totalorder %v6752, 4
  %v6775 = vsel %vm6771, %v6755, %v6758
  %v6776 = vsel %vm6774, %v6764, 2102212464
  %v6777 = vsel %vm6773, %v6761, %v6776
  %v6778 = vsel %vm6772, %v6775, %v6777
  %v6779 = vsel %vm6771, %v6758, %v6761
  %v6780 = vsel %vm6774, %v6767, 920167782
  %v6781 = vsel %vm6773, %v6764, %v6780
  %v6782 = vsel %vm6772, %v6779, %v6781
  %v6783 = vsel %vm6771, %v6761, %v6764
  %v6784 = vsel %vm6774, %v6770, 1326507024
  %v6785 = vsel %vm6773, %v6767, %v6784
  %v6786 = vsel %vm6772, %v6783, %v6785
  %v6787 = vshll.u32 %v6747, 8
  %v6788 = vmul.u32.u64.compose %v6787, %v6786
  %v6789 = vextract.low.u32 %v6788
  %v6790 = vextract.high.u32 %v6788
  %v6791 = vmul.u32.u64.compose %v6787, %v6782
  %v6792 = vextract.low.u32 %v6791
  %v6793 = vextract.high.u32 %v6791
  %v6794 = vmul.u32 %v6787, %v6778
  %v6795 = vadd.s32 %v6790, %v6792
  %vm6796 = vc.u32 %v6790, %v6792
  %v6797 = vadd.s32 %v6793, 1
  %v6798 = vsel %vm6796, %v6797, %v6793
  %v6799 = vadd.s32 %v6794, %v6798
  %v6800 = vadd.s32 %v6799, 536870912
  %v6801 = vshrl.u32 %v6800, 30
  %v6802 = vshll.u32 %v6801, 30
  %v6803 = vsub.s32 %v6799, %v6802
  %vm6804 = vcmp.lt.s32.totalorder %v6803, 0
  %v6805 = vsub.s32 0, %v6803
  %v6806 = vsel %vm6804, %v6805, %v6803
  %v6807 = vclz %v6806
  %v6808 = vsub.s32 %v6807, 2
  %vm6809 = vcmp.gt.s32.totalorder 0, %v6808
  %v6810 = vsel %vm6809, 0, %v6808
  %v6811 = vsub.s32 32, %v6810
  %v6812 = vshll.u32 %v6803, %v6810
  %v6813 = vshrl.u32 %v6795, %v6811
  %v6814 = vor.u32 %v6812, %v6813
  %v6815 = vsub.s32 4294967266, %v6810
  %v6816 = vadd.s32 %v6815, 127
  %v6817 = vshll.u32 %v6816, 23
  %v6818 = vor.u32 4788187, %v6817
  %v6819 = vand.u32 2147483647, %v6818
  %v6821 = vcvt.s32.f32 %v6814
  %v6822 = vmul.f32 %v6821, %v6819
  %v6823 = vxor.u32 %v6822, 2147483648
  %v6824 = vsel %vm6741, %v6823, %v6822
  %v6825 = vsub.s32 4, %v6801
  %v6826 = vsel %vm6741, %v6825, %v6801
  %v6827 = vsel %vm6740, %v2761, %v6824
  %v6828 = vsel %vm6740, 0, %v6826
  %v6829 = vcosq.f32.pop %v6827
  %v6830 = vsinq.f32.pop %v6827
  %vm6831 = vweird.f32 %v2761
  %v6832 = vadd.s32 %v6828, 3
  %v6833 = vand.u32 %v6832, 3
  %vm6834 = vcmp.lt.s32.totalorder %v6833, 2
  %vm6835 = vcmp.eq.s32.totalorder %v6833, 0
  %v6836 = vxor.u32 %v6830, 2147483648
  %v6837 = vsel %vm6835, %v6829, %v6836
  %vm6838 = vcmp.eq.s32.totalorder %v6833, 2
  %v6839 = vxor.u32 %v6829, 2147483648
  %v6840 = vsel %vm6838, %v6839, %v6830
  %v6841 = vsel %vm6834, %v6837, %v6840
  %v6842 = vsel %vm6831, nan, %v6841
  %v6843 = vand.u32 2147483647, %v2762
  %vm6844 = vcmp.le.f32.partialorder %v6843, 0.7853982
  %vm6845 = vcmp.lt.s32.totalorder %v2762, 0
  %v6846 = vand.u32 %v2762, 2139095040
  %v6847 = vshrl.u32 %v6846, 23
  %v6848 = vsub.s32 %v6847, 127
  %v6849 = vand.u32 2147483647, %v2762
  %v6850 = vand.u32 %v6849, 8388607
  %v6851 = vor.u32 %v6850, 8388608
  %v6852 = vsub.s32 0, %v6851
  %v6853 = vadd.s32 %v6848, 1
  %vm6854 = vcmp.gt.s32.totalorder %v6853, 0
  %v6855 = vsel %vm6854, %v6853, 0
  %v6856 = vshrl.u32 %v6855, 5
  %v6857 = vand.u32 %v6855, 31
  %v6858 = vsub.s32 32, %v6857
  %v6859 = vshrl.u32 683565275, %v6858
  %v6860 = vshll.u32 683565275, %v6857
  %v6861 = vshrl.u32 2475754826, %v6858
  %v6862 = vor.u32 %v6860, %v6861
  %v6863 = vshll.u32 2475754826, %v6857
  %v6864 = vshrl.u32 2131351028, %v6858
  %v6865 = vor.u32 %v6863, %v6864
  %v6866 = vshll.u32 2131351028, %v6857
  %v6867 = vshrl.u32 2102212464, %v6858
  %v6868 = vor.u32 %v6866, %v6867
  %v6869 = vshll.u32 2102212464, %v6857
  %v6870 = vshrl.u32 920167782, %v6858
  %v6871 = vor.u32 %v6869, %v6870
  %v6872 = vshll.u32 920167782, %v6857
  %v6873 = vshrl.u32 1326507024, %v6858
  %v6874 = vor.u32 %v6872, %v6873
  %vm6875 = vcmp.lt.s32.totalorder %v6856, 1
  %vm6876 = vcmp.lt.s32.totalorder %v6856, 2
  %vm6877 = vcmp.lt.s32.totalorder %v6856, 3
  %vm6878 = vcmp.lt.s32.totalorder %v6856, 4
  %v6879 = vsel %vm6875, %v6859, %v6862
  %v6880 = vsel %vm6878, %v6868, 2102212464
  %v6881 = vsel %vm6877, %v6865, %v6880
  %v6882 = vsel %vm6876, %v6879, %v6881
  %v6883 = vsel %vm6875, %v6862, %v6865
  %v6884 = vsel %vm6878, %v6871, 920167782
  %v6885 = vsel %vm6877, %v6868, %v6884
  %v6886 = vsel %vm6876, %v6883, %v6885
  %v6887 = vsel %vm6875, %v6865, %v6868
  %v6888 = vsel %vm6878, %v6874, 1326507024
  %v6889 = vsel %vm6877, %v6871, %v6888
  %v6890 = vsel %vm6876, %v6887, %v6889
  %v6891 = vshll.u32 %v6851, 8
  %v6892 = vmul.u32.u64.compose %v6891, %v6890
  %v6893 = vextract.low.u32 %v6892
  %v6894 = vextract.high.u32 %v6892
  %v6895 = vmul.u32.u64.compose %v6891, %v6886
  %v6896 = vextract.low.u32 %v6895
  %v6897 = vextract.high.u32 %v6895
  %v6898 = vmul.u32 %v6891, %v6882
  %v6899 = vadd.s32 %v6894, %v6896
  %vm6900 = vc.u32 %v6894, %v6896
  %v6901 = vadd.s32 %v6897, 1
  %v6902 = vsel %vm6900, %v6901, %v6897
  %v6903 = vadd.s32 %v6898, %v6902
  %v6904 = vadd.s32 %v6903, 536870912
  %v6905 = vshrl.u32 %v6904, 30
  %v6906 = vshll.u32 %v6905, 30
  %v6907 = vsub.s32 %v6903, %v6906
  %vm6908 = vcmp.lt.s32.totalorder %v6907, 0
  %v6909 = vsub.s32 0, %v6907
  %v6910 = vsel %vm6908, %v6909, %v6907
  %v6911 = vclz %v6910
  %v6912 = vsub.s32 %v6911, 2
  %vm6913 = vcmp.gt.s32.totalorder 0, %v6912
  %v6914 = vsel %vm6913, 0, %v6912
  %v6915 = vsub.s32 32, %v6914
  %v6916 = vshll.u32 %v6907, %v6914
  %v6917 = vshrl.u32 %v6899, %v6915
  %v6918 = vor.u32 %v6916, %v6917
  %v6919 = vsub.s32 4294967266, %v6914
  %v6920 = vadd.s32 %v6919, 127
  %v6921 = vshll.u32 %v6920, 23
  %v6922 = vor.u32 4788187, %v6921
  %v6923 = vand.u32 2147483647, %v6922
  %v6925 = vcvt.s32.f32 %v6918
  %v6926 = vmul.f32 %v6925, %v6923
  %v6927 = vxor.u32 %v6926, 2147483648
  %v6928 = vsel %vm6845, %v6927, %v6926
  %v6929 = vsub.s32 4, %v6905
  %v6930 = vsel %vm6845, %v6929, %v6905
  %v6931 = vsel %vm6844, %v2762, %v6928
  %v6932 = vsel %vm6844, 0, %v6930
  %v6933 = vcosq.f32.pop %v6931
  %v6934 = vsinq.f32.pop %v6931
  %vm6935 = vweird.f32 %v2762
  %v6936 = vadd.s32 %v6932, 3
  %v6937 = vand.u32 %v6936, 3
  %vm6938 = vcmp.lt.s32.totalorder %v6937, 2
  %vm6939 = vcmp.eq.s32.totalorder %v6937, 0
  %v6940 = vxor.u32 %v6934, 2147483648
  %v6941 = vsel %vm6939, %v6933, %v6940
  %vm6942 = vcmp.eq.s32.totalorder %v6937, 2
  %v6943 = vxor.u32 %v6933, 2147483648
  %v6944 = vsel %vm6942, %v6943, %v6934
  %v6945 = vsel %vm6938, %v6941, %v6944
  %v6946 = vsel %vm6935, nan, %v6945
  %v6947 = vand.u32 2147483647, %v2763
  %vm6948 = vcmp.le.f32.partialorder %v6947, 0.7853982
  %vm6949 = vcmp.lt.s32.totalorder %v2763, 0
  %v6950 = vand.u32 %v2763, 2139095040
  %v6951 = vshrl.u32 %v6950, 23
  %v6952 = vsub.s32 %v6951, 127
  %v6953 = vand.u32 2147483647, %v2763
  %v6954 = vand.u32 %v6953, 8388607
  %v6955 = vor.u32 %v6954, 8388608
  %v6956 = vsub.s32 0, %v6955
  %v6957 = vadd.s32 %v6952, 1
  %vm6958 = vcmp.gt.s32.totalorder %v6957, 0
  %v6959 = vsel %vm6958, %v6957, 0
  %v6960 = vshrl.u32 %v6959, 5
  %v6961 = vand.u32 %v6959, 31
  %v6962 = vsub.s32 32, %v6961
  %v6963 = vshrl.u32 683565275, %v6962
  %v6964 = vshll.u32 683565275, %v6961
  %v6965 = vshrl.u32 2475754826, %v6962
  %v6966 = vor.u32 %v6964, %v6965
  %v6967 = vshll.u32 2475754826, %v6961
  %v6968 = vshrl.u32 2131351028, %v6962
  %v6969 = vor.u32 %v6967, %v6968
  %v6970 = vshll.u32 2131351028, %v6961
  %v6971 = vshrl.u32 2102212464, %v6962
  %v6972 = vor.u32 %v6970, %v6971
  %v6973 = vshll.u32 2102212464, %v6961
  %v6974 = vshrl.u32 920167782, %v6962
  %v6975 = vor.u32 %v6973, %v6974
  %v6976 = vshll.u32 920167782, %v6961
  %v6977 = vshrl.u32 1326507024, %v6962
  %v6978 = vor.u32 %v6976, %v6977
  %vm6979 = vcmp.lt.s32.totalorder %v6960, 1
  %vm6980 = vcmp.lt.s32.totalorder %v6960, 2
  %vm6981 = vcmp.lt.s32.totalorder %v6960, 3
  %vm6982 = vcmp.lt.s32.totalorder %v6960, 4
  %v6983 = vsel %vm6979, %v6963, %v6966
  %v6984 = vsel %vm6982, %v6972, 2102212464
  %v6985 = vsel %vm6981, %v6969, %v6984
  %v6986 = vsel %vm6980, %v6983, %v6985
  %v6987 = vsel %vm6979, %v6966, %v6969
  %v6988 = vsel %vm6982, %v6975, 920167782
  %v6989 = vsel %vm6981, %v6972, %v6988
  %v6990 = vsel %vm6980, %v6987, %v6989
  %v6991 = vsel %vm6979, %v6969, %v6972
  %v6992 = vsel %vm6982, %v6978, 1326507024
  %v6993 = vsel %vm6981, %v6975, %v6992
  %v6994 = vsel %vm6980, %v6991, %v6993
  %v6995 = vshll.u32 %v6955, 8
  %v6996 = vmul.u32.u64.compose %v6995, %v6994
  %v6997 = vextract.low.u32 %v6996
  %v6998 = vextract.high.u32 %v6996
  %v6999 = vmul.u32.u64.compose %v6995, %v6990
  %v7000 = vextract.low.u32 %v6999
  %v7001 = vextract.high.u32 %v6999
  %v7002 = vmul.u32 %v6995, %v6986
  %v7003 = vadd.s32 %v6998, %v7000
  %vm7004 = vc.u32 %v6998, %v7000
  %v7005 = vadd.s32 %v7001, 1
  %v7006 = vsel %vm7004, %v7005, %v7001
  %v7007 = vadd.s32 %v7002, %v7006
  %v7008 = vadd.s32 %v7007, 536870912
  %v7009 = vshrl.u32 %v7008, 30
  %v7010 = vshll.u32 %v7009, 30
  %v7011 = vsub.s32 %v7007, %v7010
  %vm7012 = vcmp.lt.s32.totalorder %v7011, 0
  %v7013 = vsub.s32 0, %v7011
  %v7014 = vsel %vm7012, %v7013, %v7011
  %v7015 = vclz %v7014
  %v7016 = vsub.s32 %v7015, 2
  %vm7017 = vcmp.gt.s32.totalorder 0, %v7016
  %v7018 = vsel %vm7017, 0, %v7016
  %v7019 = vsub.s32 32, %v7018
  %v7020 = vshll.u32 %v7011, %v7018
  %v7021 = vshrl.u32 %v7003, %v7019
  %v7022 = vor.u32 %v7020, %v7021
  %v7023 = vsub.s32 4294967266, %v7018
  %v7024 = vadd.s32 %v7023, 127
  %v7025 = vshll.u32 %v7024, 23
  %v7026 = vor.u32 4788187, %v7025
  %v7027 = vand.u32 2147483647, %v7026
  %v7029 = vcvt.s32.f32 %v7022
  %v7030 = vmul.f32 %v7029, %v7027
  %v7031 = vxor.u32 %v7030, 2147483648
  %v7032 = vsel %vm6949, %v7031, %v7030
  %v7033 = vsub.s32 4, %v7009
  %v7034 = vsel %vm6949, %v7033, %v7009
  %v7035 = vsel %vm6948, %v2763, %v7032
  %v7036 = vsel %vm6948, 0, %v7034
  %v7037 = vcosq.f32.pop %v7035
  %v7038 = vsinq.f32.pop %v7035
  %vm7039 = vweird.f32 %v2763
  %v7040 = vadd.s32 %v7036, 3
  %v7041 = vand.u32 %v7040, 3
  %vm7042 = vcmp.lt.s32.totalorder %v7041, 2
  %vm7043 = vcmp.eq.s32.totalorder %v7041, 0
  %v7044 = vxor.u32 %v7038, 2147483648
  %v7045 = vsel %vm7043, %v7037, %v7044
  %vm7046 = vcmp.eq.s32.totalorder %v7041, 2
  %v7047 = vxor.u32 %v7037, 2147483648
  %v7048 = vsel %vm7046, %v7047, %v7038
  %v7049 = vsel %vm7042, %v7045, %v7048
  %v7050 = vsel %vm7039, nan, %v7049
  %v7051 = vand.u32 2147483647, %v2764
  %vm7052 = vcmp.le.f32.partialorder %v7051, 0.7853982
  %vm7053 = vcmp.lt.s32.totalorder %v2764, 0
  %v7054 = vand.u32 %v2764, 2139095040
  %v7055 = vshrl.u32 %v7054, 23
  %v7056 = vsub.s32 %v7055, 127
  %v7057 = vand.u32 2147483647, %v2764
  %v7058 = vand.u32 %v7057, 8388607
  %v7059 = vor.u32 %v7058, 8388608
  %v7060 = vsub.s32 0, %v7059
  %v7061 = vadd.s32 %v7056, 1
  %vm7062 = vcmp.gt.s32.totalorder %v7061, 0
  %v7063 = vsel %vm7062, %v7061, 0
  %v7064 = vshrl.u32 %v7063, 5
  %v7065 = vand.u32 %v7063, 31
  %v7066 = vsub.s32 32, %v7065
  %v7067 = vshrl.u32 683565275, %v7066
  %v7068 = vshll.u32 683565275, %v7065
  %v7069 = vshrl.u32 2475754826, %v7066
  %v7070 = vor.u32 %v7068, %v7069
  %v7071 = vshll.u32 2475754826, %v7065
  %v7072 = vshrl.u32 2131351028, %v7066
  %v7073 = vor.u32 %v7071, %v7072
  %v7074 = vshll.u32 2131351028, %v7065
  %v7075 = vshrl.u32 2102212464, %v7066
  %v7076 = vor.u32 %v7074, %v7075
  %v7077 = vshll.u32 2102212464, %v7065
  %v7078 = vshrl.u32 920167782, %v7066
  %v7079 = vor.u32 %v7077, %v7078
  %v7080 = vshll.u32 920167782, %v7065
  %v7081 = vshrl.u32 1326507024, %v7066
  %v7082 = vor.u32 %v7080, %v7081
  %vm7083 = vcmp.lt.s32.totalorder %v7064, 1
  %vm7084 = vcmp.lt.s32.totalorder %v7064, 2
  %vm7085 = vcmp.lt.s32.totalorder %v7064, 3
  %vm7086 = vcmp.lt.s32.totalorder %v7064, 4
  %v7087 = vsel %vm7083, %v7067, %v7070
  %v7088 = vsel %vm7086, %v7076, 2102212464
  %v7089 = vsel %vm7085, %v7073, %v7088
  %v7090 = vsel %vm7084, %v7087, %v7089
  %v7091 = vsel %vm7083, %v7070, %v7073
  %v7092 = vsel %vm7086, %v7079, 920167782
  %v7093 = vsel %vm7085, %v7076, %v7092
  %v7094 = vsel %vm7084, %v7091, %v7093
  %v7095 = vsel %vm7083, %v7073, %v7076
  %v7096 = vsel %vm7086, %v7082, 1326507024
  %v7097 = vsel %vm7085, %v7079, %v7096
  %v7098 = vsel %vm7084, %v7095, %v7097
  %v7099 = vshll.u32 %v7059, 8
  %v7100 = vmul.u32.u64.compose %v7099, %v7098
  %v7101 = vextract.low.u32 %v7100
  %v7102 = vextract.high.u32 %v7100
  %v7103 = vmul.u32.u64.compose %v7099, %v7094
  %v7104 = vextract.low.u32 %v7103
  %v7105 = vextract.high.u32 %v7103
  %v7106 = vmul.u32 %v7099, %v7090
  %v7107 = vadd.s32 %v7102, %v7104
  %vm7108 = vc.u32 %v7102, %v7104
  %v7109 = vadd.s32 %v7105, 1
  %v7110 = vsel %vm7108, %v7109, %v7105
  %v7111 = vadd.s32 %v7106, %v7110
  %v7112 = vadd.s32 %v7111, 536870912
  %v7113 = vshrl.u32 %v7112, 30
  %v7114 = vshll.u32 %v7113, 30
  %v7115 = vsub.s32 %v7111, %v7114
  %vm7116 = vcmp.lt.s32.totalorder %v7115, 0
  %v7117 = vsub.s32 0, %v7115
  %v7118 = vsel %vm7116, %v7117, %v7115
  %v7119 = vclz %v7118
  %v7120 = vsub.s32 %v7119, 2
  %vm7121 = vcmp.gt.s32.totalorder 0, %v7120
  %v7122 = vsel %vm7121, 0, %v7120
  %v7123 = vsub.s32 32, %v7122
  %v7124 = vshll.u32 %v7115, %v7122
  %v7125 = vshrl.u32 %v7107, %v7123
  %v7126 = vor.u32 %v7124, %v7125
  %v7127 = vsub.s32 4294967266, %v7122
  %v7128 = vadd.s32 %v7127, 127
  %v7129 = vshll.u32 %v7128, 23
  %v7130 = vor.u32 4788187, %v7129
  %v7131 = vand.u32 2147483647, %v7130
  %v7133 = vcvt.s32.f32 %v7126
  %v7134 = vmul.f32 %v7133, %v7131
  %v7135 = vxor.u32 %v7134, 2147483648
  %v7136 = vsel %vm7053, %v7135, %v7134
  %v7137 = vsub.s32 4, %v7113
  %v7138 = vsel %vm7053, %v7137, %v7113
  %v7139 = vsel %vm7052, %v2764, %v7136
  %v7140 = vsel %vm7052, 0, %v7138
  %v7141 = vcosq.f32.pop %v7139
  %v7142 = vsinq.f32.pop %v7139
  %vm7143 = vweird.f32 %v2764
  %v7144 = vadd.s32 %v7140, 3
  %v7145 = vand.u32 %v7144, 3
  %vm7146 = vcmp.lt.s32.totalorder %v7145, 2
  %vm7147 = vcmp.eq.s32.totalorder %v7145, 0
  %v7148 = vxor.u32 %v7142, 2147483648
  %v7149 = vsel %vm7147, %v7141, %v7148
  %vm7150 = vcmp.eq.s32.totalorder %v7145, 2
  %v7151 = vxor.u32 %v7141, 2147483648
  %v7152 = vsel %vm7150, %v7151, %v7142
  %v7153 = vsel %vm7146, %v7149, %v7152
  %v7154 = vsel %vm7143, nan, %v7153
  %v7155 = vand.u32 2147483647, %v2765
  %vm7156 = vcmp.le.f32.partialorder %v7155, 0.7853982
  %vm7157 = vcmp.lt.s32.totalorder %v2765, 0
  %v7158 = vand.u32 %v2765, 2139095040
  %v7159 = vshrl.u32 %v7158, 23
  %v7160 = vsub.s32 %v7159, 127
  %v7161 = vand.u32 2147483647, %v2765
  %v7162 = vand.u32 %v7161, 8388607
  %v7163 = vor.u32 %v7162, 8388608
  %v7164 = vsub.s32 0, %v7163
  %v7165 = vadd.s32 %v7160, 1
  %vm7166 = vcmp.gt.s32.totalorder %v7165, 0
  %v7167 = vsel %vm7166, %v7165, 0
  %v7168 = vshrl.u32 %v7167, 5
  %v7169 = vand.u32 %v7167, 31
  %v7170 = vsub.s32 32, %v7169
  %v7171 = vshrl.u32 683565275, %v7170
  %v7172 = vshll.u32 683565275, %v7169
  %v7173 = vshrl.u32 2475754826, %v7170
  %v7174 = vor.u32 %v7172, %v7173
  %v7175 = vshll.u32 2475754826, %v7169
  %v7176 = vshrl.u32 2131351028, %v7170
  %v7177 = vor.u32 %v7175, %v7176
  %v7178 = vshll.u32 2131351028, %v7169
  %v7179 = vshrl.u32 2102212464, %v7170
  %v7180 = vor.u32 %v7178, %v7179
  %v7181 = vshll.u32 2102212464, %v7169
  %v7182 = vshrl.u32 920167782, %v7170
  %v7183 = vor.u32 %v7181, %v7182
  %v7184 = vshll.u32 920167782, %v7169
  %v7185 = vshrl.u32 1326507024, %v7170
  %v7186 = vor.u32 %v7184, %v7185
  %vm7187 = vcmp.lt.s32.totalorder %v7168, 1
  %vm7188 = vcmp.lt.s32.totalorder %v7168, 2
  %vm7189 = vcmp.lt.s32.totalorder %v7168, 3
  %vm7190 = vcmp.lt.s32.totalorder %v7168, 4
  %v7191 = vsel %vm7187, %v7171, %v7174
  %v7192 = vsel %vm7190, %v7180, 2102212464
  %v7193 = vsel %vm7189, %v7177, %v7192
  %v7194 = vsel %vm7188, %v7191, %v7193
  %v7195 = vsel %vm7187, %v7174, %v7177
  %v7196 = vsel %vm7190, %v7183, 920167782
  %v7197 = vsel %vm7189, %v7180, %v7196
  %v7198 = vsel %vm7188, %v7195, %v7197
  %v7199 = vsel %vm7187, %v7177, %v7180
  %v7200 = vsel %vm7190, %v7186, 1326507024
  %v7201 = vsel %vm7189, %v7183, %v7200
  %v7202 = vsel %vm7188, %v7199, %v7201
  %v7203 = vshll.u32 %v7163, 8
  %v7204 = vmul.u32.u64.compose %v7203, %v7202
  %v7205 = vextract.low.u32 %v7204
  %v7206 = vextract.high.u32 %v7204
  %v7207 = vmul.u32.u64.compose %v7203, %v7198
  %v7208 = vextract.low.u32 %v7207
  %v7209 = vextract.high.u32 %v7207
  %v7210 = vmul.u32 %v7203, %v7194
  %v7211 = vadd.s32 %v7206, %v7208
  %vm7212 = vc.u32 %v7206, %v7208
  %v7213 = vadd.s32 %v7209, 1
  %v7214 = vsel %vm7212, %v7213, %v7209
  %v7215 = vadd.s32 %v7210, %v7214
  %v7216 = vadd.s32 %v7215, 536870912
  %v7217 = vshrl.u32 %v7216, 30
  %v7218 = vshll.u32 %v7217, 30
  %v7219 = vsub.s32 %v7215, %v7218
  %vm7220 = vcmp.lt.s32.totalorder %v7219, 0
  %v7221 = vsub.s32 0, %v7219
  %v7222 = vsel %vm7220, %v7221, %v7219
  %v7223 = vclz %v7222
  %v7224 = vsub.s32 %v7223, 2
  %vm7225 = vcmp.gt.s32.totalorder 0, %v7224
  %v7226 = vsel %vm7225, 0, %v7224
  %v7227 = vsub.s32 32, %v7226
  %v7228 = vshll.u32 %v7219, %v7226
  %v7229 = vshrl.u32 %v7211, %v7227
  %v7230 = vor.u32 %v7228, %v7229
  %v7231 = vsub.s32 4294967266, %v7226
  %v7232 = vadd.s32 %v7231, 127
  %v7233 = vshll.u32 %v7232, 23
  %v7234 = vor.u32 4788187, %v7233
  %v7235 = vand.u32 2147483647, %v7234
  %v7237 = vcvt.s32.f32 %v7230
  %v7238 = vmul.f32 %v7237, %v7235
  %v7239 = vxor.u32 %v7238, 2147483648
  %v7240 = vsel %vm7157, %v7239, %v7238
  %v7241 = vsub.s32 4, %v7217
  %v7242 = vsel %vm7157, %v7241, %v7217
  %v7243 = vsel %vm7156, %v2765, %v7240
  %v7244 = vsel %vm7156, 0, %v7242
  %v7245 = vcosq.f32.pop %v7243
  %v7246 = vsinq.f32.pop %v7243
  %vm7247 = vweird.f32 %v2765
  %v7248 = vadd.s32 %v7244, 3
  %v7249 = vand.u32 %v7248, 3
  %vm7250 = vcmp.lt.s32.totalorder %v7249, 2
  %vm7251 = vcmp.eq.s32.totalorder %v7249, 0
  %v7252 = vxor.u32 %v7246, 2147483648
  %v7253 = vsel %vm7251, %v7245, %v7252
  %vm7254 = vcmp.eq.s32.totalorder %v7249, 2
  %v7255 = vxor.u32 %v7245, 2147483648
  %v7256 = vsel %vm7254, %v7255, %v7246
  %v7257 = vsel %vm7250, %v7253, %v7256
  %v7258 = vsel %vm7247, nan, %v7257
  %v7259 = vand.u32 2147483647, %v2766
  %vm7260 = vcmp.le.f32.partialorder %v7259, 0.7853982
  %vm7261 = vcmp.lt.s32.totalorder %v2766, 0
  %v7262 = vand.u32 %v2766, 2139095040
  %v7263 = vshrl.u32 %v7262, 23
  %v7264 = vsub.s32 %v7263, 127
  %v7265 = vand.u32 2147483647, %v2766
  %v7266 = vand.u32 %v7265, 8388607
  %v7267 = vor.u32 %v7266, 8388608
  %v7268 = vsub.s32 0, %v7267
  %v7269 = vadd.s32 %v7264, 1
  %vm7270 = vcmp.gt.s32.totalorder %v7269, 0
  %v7271 = vsel %vm7270, %v7269, 0
  %v7272 = vshrl.u32 %v7271, 5
  %v7273 = vand.u32 %v7271, 31
  %v7274 = vsub.s32 32, %v7273
  %v7275 = vshrl.u32 683565275, %v7274
  %v7276 = vshll.u32 683565275, %v7273
  %v7277 = vshrl.u32 2475754826, %v7274
  %v7278 = vor.u32 %v7276, %v7277
  %v7279 = vshll.u32 2475754826, %v7273
  %v7280 = vshrl.u32 2131351028, %v7274
  %v7281 = vor.u32 %v7279, %v7280
  %v7282 = vshll.u32 2131351028, %v7273
  %v7283 = vshrl.u32 2102212464, %v7274
  %v7284 = vor.u32 %v7282, %v7283
  %v7285 = vshll.u32 2102212464, %v7273
  %v7286 = vshrl.u32 920167782, %v7274
  %v7287 = vor.u32 %v7285, %v7286
  %v7288 = vshll.u32 920167782, %v7273
  %v7289 = vshrl.u32 1326507024, %v7274
  %v7290 = vor.u32 %v7288, %v7289
  %vm7291 = vcmp.lt.s32.totalorder %v7272, 1
  %vm7292 = vcmp.lt.s32.totalorder %v7272, 2
  %vm7293 = vcmp.lt.s32.totalorder %v7272, 3
  %vm7294 = vcmp.lt.s32.totalorder %v7272, 4
  %v7295 = vsel %vm7291, %v7275, %v7278
  %v7296 = vsel %vm7294, %v7284, 2102212464
  %v7297 = vsel %vm7293, %v7281, %v7296
  %v7298 = vsel %vm7292, %v7295, %v7297
  %v7299 = vsel %vm7291, %v7278, %v7281
  %v7300 = vsel %vm7294, %v7287, 920167782
  %v7301 = vsel %vm7293, %v7284, %v7300
  %v7302 = vsel %vm7292, %v7299, %v7301
  %v7303 = vsel %vm7291, %v7281, %v7284
  %v7304 = vsel %vm7294, %v7290, 1326507024
  %v7305 = vsel %vm7293, %v7287, %v7304
  %v7306 = vsel %vm7292, %v7303, %v7305
  %v7307 = vshll.u32 %v7267, 8
  %v7308 = vmul.u32.u64.compose %v7307, %v7306
  %v7309 = vextract.low.u32 %v7308
  %v7310 = vextract.high.u32 %v7308
  %v7311 = vmul.u32.u64.compose %v7307, %v7302
  %v7312 = vextract.low.u32 %v7311
  %v7313 = vextract.high.u32 %v7311
  %v7314 = vmul.u32 %v7307, %v7298
  %v7315 = vadd.s32 %v7310, %v7312
  %vm7316 = vc.u32 %v7310, %v7312
  %v7317 = vadd.s32 %v7313, 1
  %v7318 = vsel %vm7316, %v7317, %v7313
  %v7319 = vadd.s32 %v7314, %v7318
  %v7320 = vadd.s32 %v7319, 536870912
  %v7321 = vshrl.u32 %v7320, 30
  %v7322 = vshll.u32 %v7321, 30
  %v7323 = vsub.s32 %v7319, %v7322
  %vm7324 = vcmp.lt.s32.totalorder %v7323, 0
  %v7325 = vsub.s32 0, %v7323
  %v7326 = vsel %vm7324, %v7325, %v7323
  %v7327 = vclz %v7326
  %v7328 = vsub.s32 %v7327, 2
  %vm7329 = vcmp.gt.s32.totalorder 0, %v7328
  %v7330 = vsel %vm7329, 0, %v7328
  %v7331 = vsub.s32 32, %v7330
  %v7332 = vshll.u32 %v7323, %v7330
  %v7333 = vshrl.u32 %v7315, %v7331
  %v7334 = vor.u32 %v7332, %v7333
  %v7335 = vsub.s32 4294967266, %v7330
  %v7336 = vadd.s32 %v7335, 127
  %v7337 = vshll.u32 %v7336, 23
  %v7338 = vor.u32 4788187, %v7337
  %v7339 = vand.u32 2147483647, %v7338
  %v7341 = vcvt.s32.f32 %v7334
  %v7342 = vmul.f32 %v7341, %v7339
  %v7343 = vxor.u32 %v7342, 2147483648
  %v7344 = vsel %vm7261, %v7343, %v7342
  %v7345 = vsub.s32 4, %v7321
  %v7346 = vsel %vm7261, %v7345, %v7321
  %v7347 = vsel %vm7260, %v2766, %v7344
  %v7348 = vsel %vm7260, 0, %v7346
  %v7349 = vcosq.f32.pop %v7347
  %v7350 = vsinq.f32.pop %v7347
  %vm7351 = vweird.f32 %v2766
  %v7352 = vadd.s32 %v7348, 3
  %v7353 = vand.u32 %v7352, 3
  %vm7354 = vcmp.lt.s32.totalorder %v7353, 2
  %vm7355 = vcmp.eq.s32.totalorder %v7353, 0
  %v7356 = vxor.u32 %v7350, 2147483648
  %v7357 = vsel %vm7355, %v7349, %v7356
  %vm7358 = vcmp.eq.s32.totalorder %v7353, 2
  %v7359 = vxor.u32 %v7349, 2147483648
  %v7360 = vsel %vm7358, %v7359, %v7350
  %v7361 = vsel %vm7354, %v7357, %v7360
  %v7362 = vsel %vm7351, nan, %v7361
  %v7363 = vand.u32 2147483647, %v2767
  %vm7364 = vcmp.le.f32.partialorder %v7363, 0.7853982
  %vm7365 = vcmp.lt.s32.totalorder %v2767, 0
  %v7366 = vand.u32 %v2767, 2139095040
  %v7367 = vshrl.u32 %v7366, 23
  %v7368 = vsub.s32 %v7367, 127
  %v7369 = vand.u32 2147483647, %v2767
  %v7370 = vand.u32 %v7369, 8388607
  %v7371 = vor.u32 %v7370, 8388608
  %v7372 = vsub.s32 0, %v7371
  %v7373 = vadd.s32 %v7368, 1
  %vm7374 = vcmp.gt.s32.totalorder %v7373, 0
  %v7375 = vsel %vm7374, %v7373, 0
  %v7376 = vshrl.u32 %v7375, 5
  %v7377 = vand.u32 %v7375, 31
  %v7378 = vsub.s32 32, %v7377
  %v7379 = vshrl.u32 683565275, %v7378
  %v7380 = vshll.u32 683565275, %v7377
  %v7381 = vshrl.u32 2475754826, %v7378
  %v7382 = vor.u32 %v7380, %v7381
  %v7383 = vshll.u32 2475754826, %v7377
  %v7384 = vshrl.u32 2131351028, %v7378
  %v7385 = vor.u32 %v7383, %v7384
  %v7386 = vshll.u32 2131351028, %v7377
  %v7387 = vshrl.u32 2102212464, %v7378
  %v7388 = vor.u32 %v7386, %v7387
  %v7389 = vshll.u32 2102212464, %v7377
  %v7390 = vshrl.u32 920167782, %v7378
  %v7391 = vor.u32 %v7389, %v7390
  %v7392 = vshll.u32 920167782, %v7377
  %v7393 = vshrl.u32 1326507024, %v7378
  %v7394 = vor.u32 %v7392, %v7393
  %vm7395 = vcmp.lt.s32.totalorder %v7376, 1
  %vm7396 = vcmp.lt.s32.totalorder %v7376, 2
  %vm7397 = vcmp.lt.s32.totalorder %v7376, 3
  %vm7398 = vcmp.lt.s32.totalorder %v7376, 4
  %v7399 = vsel %vm7395, %v7379, %v7382
  %v7400 = vsel %vm7398, %v7388, 2102212464
  %v7401 = vsel %vm7397, %v7385, %v7400
  %v7402 = vsel %vm7396, %v7399, %v7401
  %v7403 = vsel %vm7395, %v7382, %v7385
  %v7404 = vsel %vm7398, %v7391, 920167782
  %v7405 = vsel %vm7397, %v7388, %v7404
  %v7406 = vsel %vm7396, %v7403, %v7405
  %v7407 = vsel %vm7395, %v7385, %v7388
  %v7408 = vsel %vm7398, %v7394, 1326507024
  %v7409 = vsel %vm7397, %v7391, %v7408
  %v7410 = vsel %vm7396, %v7407, %v7409
  %v7411 = vshll.u32 %v7371, 8
  %v7412 = vmul.u32.u64.compose %v7411, %v7410
  %v7413 = vextract.low.u32 %v7412
  %v7414 = vextract.high.u32 %v7412
  %v7415 = vmul.u32.u64.compose %v7411, %v7406
  %v7416 = vextract.low.u32 %v7415
  %v7417 = vextract.high.u32 %v7415
  %v7418 = vmul.u32 %v7411, %v7402
  %v7419 = vadd.s32 %v7414, %v7416
  %vm7420 = vc.u32 %v7414, %v7416
  %v7421 = vadd.s32 %v7417, 1
  %v7422 = vsel %vm7420, %v7421, %v7417
  %v7423 = vadd.s32 %v7418, %v7422
  %v7424 = vadd.s32 %v7423, 536870912
  %v7425 = vshrl.u32 %v7424, 30
  %v7426 = vshll.u32 %v7425, 30
  %v7427 = vsub.s32 %v7423, %v7426
  %vm7428 = vcmp.lt.s32.totalorder %v7427, 0
  %v7429 = vsub.s32 0, %v7427
  %v7430 = vsel %vm7428, %v7429, %v7427
  %v7431 = vclz %v7430
  %v7432 = vsub.s32 %v7431, 2
  %vm7433 = vcmp.gt.s32.totalorder 0, %v7432
  %v7434 = vsel %vm7433, 0, %v7432
  %v7435 = vsub.s32 32, %v7434
  %v7436 = vshll.u32 %v7427, %v7434
  %v7437 = vshrl.u32 %v7419, %v7435
  %v7438 = vor.u32 %v7436, %v7437
  %v7439 = vsub.s32 4294967266, %v7434
  %v7440 = vadd.s32 %v7439, 127
  %v7441 = vshll.u32 %v7440, 23
  %v7442 = vor.u32 4788187, %v7441
  %v7443 = vand.u32 2147483647, %v7442
  %v7445 = vcvt.s32.f32 %v7438
  %v7446 = vmul.f32 %v7445, %v7443
  %v7447 = vxor.u32 %v7446, 2147483648
  %v7448 = vsel %vm7365, %v7447, %v7446
  %v7449 = vsub.s32 4, %v7425
  %v7450 = vsel %vm7365, %v7449, %v7425
  %v7451 = vsel %vm7364, %v2767, %v7448
  %v7452 = vsel %vm7364, 0, %v7450
  %v7453 = vcosq.f32.pop %v7451
  %v7454 = vsinq.f32.pop %v7451
  %vm7455 = vweird.f32 %v2767
  %v7456 = vadd.s32 %v7452, 3
  %v7457 = vand.u32 %v7456, 3
  %vm7458 = vcmp.lt.s32.totalorder %v7457, 2
  %vm7459 = vcmp.eq.s32.totalorder %v7457, 0
  %v7460 = vxor.u32 %v7454, 2147483648
  %v7461 = vsel %vm7459, %v7453, %v7460
  %vm7462 = vcmp.eq.s32.totalorder %v7457, 2
  %v7463 = vxor.u32 %v7453, 2147483648
  %v7464 = vsel %vm7462, %v7463, %v7454
  %v7465 = vsel %vm7458, %v7461, %v7464
  %v7466 = vsel %vm7455, nan, %v7465
  %v7467 = vand.u32 2147483647, %v2768
  %vm7468 = vcmp.le.f32.partialorder %v7467, 0.7853982
  %vm7469 = vcmp.lt.s32.totalorder %v2768, 0
  %v7470 = vand.u32 %v2768, 2139095040
  %v7471 = vshrl.u32 %v7470, 23
  %v7472 = vsub.s32 %v7471, 127
  %v7473 = vand.u32 2147483647, %v2768
  %v7474 = vand.u32 %v7473, 8388607
  %v7475 = vor.u32 %v7474, 8388608
  %v7476 = vsub.s32 0, %v7475
  %v7477 = vadd.s32 %v7472, 1
  %vm7478 = vcmp.gt.s32.totalorder %v7477, 0
  %v7479 = vsel %vm7478, %v7477, 0
  %v7480 = vshrl.u32 %v7479, 5
  %v7481 = vand.u32 %v7479, 31
  %v7482 = vsub.s32 32, %v7481
  %v7483 = vshrl.u32 683565275, %v7482
  %v7484 = vshll.u32 683565275, %v7481
  %v7485 = vshrl.u32 2475754826, %v7482
  %v7486 = vor.u32 %v7484, %v7485
  %v7487 = vshll.u32 2475754826, %v7481
  %v7488 = vshrl.u32 2131351028, %v7482
  %v7489 = vor.u32 %v7487, %v7488
  %v7490 = vshll.u32 2131351028, %v7481
  %v7491 = vshrl.u32 2102212464, %v7482
  %v7492 = vor.u32 %v7490, %v7491
  %v7493 = vshll.u32 2102212464, %v7481
  %v7494 = vshrl.u32 920167782, %v7482
  %v7495 = vor.u32 %v7493, %v7494
  %v7496 = vshll.u32 920167782, %v7481
  %v7497 = vshrl.u32 1326507024, %v7482
  %v7498 = vor.u32 %v7496, %v7497
  %vm7499 = vcmp.lt.s32.totalorder %v7480, 1
  %vm7500 = vcmp.lt.s32.totalorder %v7480, 2
  %vm7501 = vcmp.lt.s32.totalorder %v7480, 3
  %vm7502 = vcmp.lt.s32.totalorder %v7480, 4
  %v7503 = vsel %vm7499, %v7483, %v7486
  %v7504 = vsel %vm7502, %v7492, 2102212464
  %v7505 = vsel %vm7501, %v7489, %v7504
  %v7506 = vsel %vm7500, %v7503, %v7505
  %v7507 = vsel %vm7499, %v7486, %v7489
  %v7508 = vsel %vm7502, %v7495, 920167782
  %v7509 = vsel %vm7501, %v7492, %v7508
  %v7510 = vsel %vm7500, %v7507, %v7509
  %v7511 = vsel %vm7499, %v7489, %v7492
  %v7512 = vsel %vm7502, %v7498, 1326507024
  %v7513 = vsel %vm7501, %v7495, %v7512
  %v7514 = vsel %vm7500, %v7511, %v7513
  %v7515 = vshll.u32 %v7475, 8
  %v7516 = vmul.u32.u64.compose %v7515, %v7514
  %v7517 = vextract.low.u32 %v7516
  %v7518 = vextract.high.u32 %v7516
  %v7519 = vmul.u32.u64.compose %v7515, %v7510
  %v7520 = vextract.low.u32 %v7519
  %v7521 = vextract.high.u32 %v7519
  %v7522 = vmul.u32 %v7515, %v7506
  %v7523 = vadd.s32 %v7518, %v7520
  %vm7524 = vc.u32 %v7518, %v7520
  %v7525 = vadd.s32 %v7521, 1
  %v7526 = vsel %vm7524, %v7525, %v7521
  %v7527 = vadd.s32 %v7522, %v7526
  %v7528 = vadd.s32 %v7527, 536870912
  %v7529 = vshrl.u32 %v7528, 30
  %v7530 = vshll.u32 %v7529, 30
  %v7531 = vsub.s32 %v7527, %v7530
  %vm7532 = vcmp.lt.s32.totalorder %v7531, 0
  %v7533 = vsub.s32 0, %v7531
  %v7534 = vsel %vm7532, %v7533, %v7531
  %v7535 = vclz %v7534
  %v7536 = vsub.s32 %v7535, 2
  %vm7537 = vcmp.gt.s32.totalorder 0, %v7536
  %v7538 = vsel %vm7537, 0, %v7536
  %v7539 = vsub.s32 32, %v7538
  %v7540 = vshll.u32 %v7531, %v7538
  %v7541 = vshrl.u32 %v7523, %v7539
  %v7542 = vor.u32 %v7540, %v7541
  %v7543 = vsub.s32 4294967266, %v7538
  %v7544 = vadd.s32 %v7543, 127
  %v7545 = vshll.u32 %v7544, 23
  %v7546 = vor.u32 4788187, %v7545
  %v7547 = vand.u32 2147483647, %v7546
  %v7549 = vcvt.s32.f32 %v7542
  %v7550 = vmul.f32 %v7549, %v7547
  %v7551 = vxor.u32 %v7550, 2147483648
  %v7552 = vsel %vm7469, %v7551, %v7550
  %v7553 = vsub.s32 4, %v7529
  %v7554 = vsel %vm7469, %v7553, %v7529
  %v7555 = vsel %vm7468, %v2768, %v7552
  %v7556 = vsel %vm7468, 0, %v7554
  %v7557 = vcosq.f32.pop %v7555
  %v7558 = vsinq.f32.pop %v7555
  %vm7559 = vweird.f32 %v2768
  %v7560 = vadd.s32 %v7556, 3
  %v7561 = vand.u32 %v7560, 3
  %vm7562 = vcmp.lt.s32.totalorder %v7561, 2
  %vm7563 = vcmp.eq.s32.totalorder %v7561, 0
  %v7564 = vxor.u32 %v7558, 2147483648
  %v7565 = vsel %vm7563, %v7557, %v7564
  %vm7566 = vcmp.eq.s32.totalorder %v7561, 2
  %v7567 = vxor.u32 %v7557, 2147483648
  %v7568 = vsel %vm7566, %v7567, %v7558
  %v7569 = vsel %vm7562, %v7565, %v7568
  %v7570 = vsel %vm7559, nan, %v7569
  %v7571 = vand.u32 2147483647, %v2769
  %vm7572 = vcmp.le.f32.partialorder %v7571, 0.7853982
  %vm7573 = vcmp.lt.s32.totalorder %v2769, 0
  %v7574 = vand.u32 %v2769, 2139095040
  %v7575 = vshrl.u32 %v7574, 23
  %v7576 = vsub.s32 %v7575, 127
  %v7577 = vand.u32 2147483647, %v2769
  %v7578 = vand.u32 %v7577, 8388607
  %v7579 = vor.u32 %v7578, 8388608
  %v7580 = vsub.s32 0, %v7579
  %v7581 = vadd.s32 %v7576, 1
  %vm7582 = vcmp.gt.s32.totalorder %v7581, 0
  %v7583 = vsel %vm7582, %v7581, 0
  %v7584 = vshrl.u32 %v7583, 5
  %v7585 = vand.u32 %v7583, 31
  %v7586 = vsub.s32 32, %v7585
  %v7587 = vshrl.u32 683565275, %v7586
  %v7588 = vshll.u32 683565275, %v7585
  %v7589 = vshrl.u32 2475754826, %v7586
  %v7590 = vor.u32 %v7588, %v7589
  %v7591 = vshll.u32 2475754826, %v7585
  %v7592 = vshrl.u32 2131351028, %v7586
  %v7593 = vor.u32 %v7591, %v7592
  %v7594 = vshll.u32 2131351028, %v7585
  %v7595 = vshrl.u32 2102212464, %v7586
  %v7596 = vor.u32 %v7594, %v7595
  %v7597 = vshll.u32 2102212464, %v7585
  %v7598 = vshrl.u32 920167782, %v7586
  %v7599 = vor.u32 %v7597, %v7598
  %v7600 = vshll.u32 920167782, %v7585
  %v7601 = vshrl.u32 1326507024, %v7586
  %v7602 = vor.u32 %v7600, %v7601
  %vm7603 = vcmp.lt.s32.totalorder %v7584, 1
  %vm7604 = vcmp.lt.s32.totalorder %v7584, 2
  %vm7605 = vcmp.lt.s32.totalorder %v7584, 3
  %vm7606 = vcmp.lt.s32.totalorder %v7584, 4
  %v7607 = vsel %vm7603, %v7587, %v7590
  %v7608 = vsel %vm7606, %v7596, 2102212464
  %v7609 = vsel %vm7605, %v7593, %v7608
  %v7610 = vsel %vm7604, %v7607, %v7609
  %v7611 = vsel %vm7603, %v7590, %v7593
  %v7612 = vsel %vm7606, %v7599, 920167782
  %v7613 = vsel %vm7605, %v7596, %v7612
  %v7614 = vsel %vm7604, %v7611, %v7613
  %v7615 = vsel %vm7603, %v7593, %v7596
  %v7616 = vsel %vm7606, %v7602, 1326507024
  %v7617 = vsel %vm7605, %v7599, %v7616
  %v7618 = vsel %vm7604, %v7615, %v7617
  %v7619 = vshll.u32 %v7579, 8
  %v7620 = vmul.u32.u64.compose %v7619, %v7618
  %v7621 = vextract.low.u32 %v7620
  %v7622 = vextract.high.u32 %v7620
  %v7623 = vmul.u32.u64.compose %v7619, %v7614
  %v7624 = vextract.low.u32 %v7623
  %v7625 = vextract.high.u32 %v7623
  %v7626 = vmul.u32 %v7619, %v7610
  %v7627 = vadd.s32 %v7622, %v7624
  %vm7628 = vc.u32 %v7622, %v7624
  %v7629 = vadd.s32 %v7625, 1
  %v7630 = vsel %vm7628, %v7629, %v7625
  %v7631 = vadd.s32 %v7626, %v7630
  %v7632 = vadd.s32 %v7631, 536870912
  %v7633 = vshrl.u32 %v7632, 30
  %v7634 = vshll.u32 %v7633, 30
  %v7635 = vsub.s32 %v7631, %v7634
  %vm7636 = vcmp.lt.s32.totalorder %v7635, 0
  %v7637 = vsub.s32 0, %v7635
  %v7638 = vsel %vm7636, %v7637, %v7635
  %v7639 = vclz %v7638
  %v7640 = vsub.s32 %v7639, 2
  %vm7641 = vcmp.gt.s32.totalorder 0, %v7640
  %v7642 = vsel %vm7641, 0, %v7640
  %v7643 = vsub.s32 32, %v7642
  %v7644 = vshll.u32 %v7635, %v7642
  %v7645 = vshrl.u32 %v7627, %v7643
  %v7646 = vor.u32 %v7644, %v7645
  %v7647 = vsub.s32 4294967266, %v7642
  %v7648 = vadd.s32 %v7647, 127
  %v7649 = vshll.u32 %v7648, 23
  %v7650 = vor.u32 4788187, %v7649
  %v7651 = vand.u32 2147483647, %v7650
  %v7653 = vcvt.s32.f32 %v7646
  %v7654 = vmul.f32 %v7653, %v7651
  %v7655 = vxor.u32 %v7654, 2147483648
  %v7656 = vsel %vm7573, %v7655, %v7654
  %v7657 = vsub.s32 4, %v7633
  %v7658 = vsel %vm7573, %v7657, %v7633
  %v7659 = vsel %vm7572, %v2769, %v7656
  %v7660 = vsel %vm7572, 0, %v7658
  %v7661 = vcosq.f32.pop %v7659
  %v7662 = vsinq.f32.pop %v7659
  %vm7663 = vweird.f32 %v2769
  %v7664 = vadd.s32 %v7660, 3
  %v7665 = vand.u32 %v7664, 3
  %vm7666 = vcmp.lt.s32.totalorder %v7665, 2
  %vm7667 = vcmp.eq.s32.totalorder %v7665, 0
  %v7668 = vxor.u32 %v7662, 2147483648
  %v7669 = vsel %vm7667, %v7661, %v7668
  %vm7670 = vcmp.eq.s32.totalorder %v7665, 2
  %v7671 = vxor.u32 %v7661, 2147483648
  %v7672 = vsel %vm7670, %v7671, %v7662
  %v7673 = vsel %vm7666, %v7669, %v7672
  %v7674 = vsel %vm7663, nan, %v7673
  %v7675 = vand.u32 2147483647, %v2770
  %vm7676 = vcmp.le.f32.partialorder %v7675, 0.7853982
  %vm7677 = vcmp.lt.s32.totalorder %v2770, 0
  %v7678 = vand.u32 %v2770, 2139095040
  %v7679 = vshrl.u32 %v7678, 23
  %v7680 = vsub.s32 %v7679, 127
  %v7681 = vand.u32 2147483647, %v2770
  %v7682 = vand.u32 %v7681, 8388607
  %v7683 = vor.u32 %v7682, 8388608
  %v7684 = vsub.s32 0, %v7683
  %v7685 = vadd.s32 %v7680, 1
  %vm7686 = vcmp.gt.s32.totalorder %v7685, 0
  %v7687 = vsel %vm7686, %v7685, 0
  %v7688 = vshrl.u32 %v7687, 5
  %v7689 = vand.u32 %v7687, 31
  %v7690 = vsub.s32 32, %v7689
  %v7691 = vshrl.u32 683565275, %v7690
  %v7692 = vshll.u32 683565275, %v7689
  %v7693 = vshrl.u32 2475754826, %v7690
  %v7694 = vor.u32 %v7692, %v7693
  %v7695 = vshll.u32 2475754826, %v7689
  %v7696 = vshrl.u32 2131351028, %v7690
  %v7697 = vor.u32 %v7695, %v7696
  %v7698 = vshll.u32 2131351028, %v7689
  %v7699 = vshrl.u32 2102212464, %v7690
  %v7700 = vor.u32 %v7698, %v7699
  %v7701 = vshll.u32 2102212464, %v7689
  %v7702 = vshrl.u32 920167782, %v7690
  %v7703 = vor.u32 %v7701, %v7702
  %v7704 = vshll.u32 920167782, %v7689
  %v7705 = vshrl.u32 1326507024, %v7690
  %v7706 = vor.u32 %v7704, %v7705
  %vm7707 = vcmp.lt.s32.totalorder %v7688, 1
  %vm7708 = vcmp.lt.s32.totalorder %v7688, 2
  %vm7709 = vcmp.lt.s32.totalorder %v7688, 3
  %vm7710 = vcmp.lt.s32.totalorder %v7688, 4
  %v7711 = vsel %vm7707, %v7691, %v7694
  %v7712 = vsel %vm7710, %v7700, 2102212464
  %v7713 = vsel %vm7709, %v7697, %v7712
  %v7714 = vsel %vm7708, %v7711, %v7713
  %v7715 = vsel %vm7707, %v7694, %v7697
  %v7716 = vsel %vm7710, %v7703, 920167782
  %v7717 = vsel %vm7709, %v7700, %v7716
  %v7718 = vsel %vm7708, %v7715, %v7717
  %v7719 = vsel %vm7707, %v7697, %v7700
  %v7720 = vsel %vm7710, %v7706, 1326507024
  %v7721 = vsel %vm7709, %v7703, %v7720
  %v7722 = vsel %vm7708, %v7719, %v7721
  %v7723 = vshll.u32 %v7683, 8
  %v7724 = vmul.u32.u64.compose %v7723, %v7722
  %v7725 = vextract.low.u32 %v7724
  %v7726 = vextract.high.u32 %v7724
  %v7727 = vmul.u32.u64.compose %v7723, %v7718
  %v7728 = vextract.low.u32 %v7727
  %v7729 = vextract.high.u32 %v7727
  %v7730 = vmul.u32 %v7723, %v7714
  %v7731 = vadd.s32 %v7726, %v7728
  %vm7732 = vc.u32 %v7726, %v7728
  %v7733 = vadd.s32 %v7729, 1
  %v7734 = vsel %vm7732, %v7733, %v7729
  %v7735 = vadd.s32 %v7730, %v7734
  %v7736 = vadd.s32 %v7735, 536870912
  %v7737 = vshrl.u32 %v7736, 30
  %v7738 = vshll.u32 %v7737, 30
  %v7739 = vsub.s32 %v7735, %v7738
  %vm7740 = vcmp.lt.s32.totalorder %v7739, 0
  %v7741 = vsub.s32 0, %v7739
  %v7742 = vsel %vm7740, %v7741, %v7739
  %v7743 = vclz %v7742
  %v7744 = vsub.s32 %v7743, 2
  %vm7745 = vcmp.gt.s32.totalorder 0, %v7744
  %v7746 = vsel %vm7745, 0, %v7744
  %v7747 = vsub.s32 32, %v7746
  %v7748 = vshll.u32 %v7739, %v7746
  %v7749 = vshrl.u32 %v7731, %v7747
  %v7750 = vor.u32 %v7748, %v7749
  %v7751 = vsub.s32 4294967266, %v7746
  %v7752 = vadd.s32 %v7751, 127
  %v7753 = vshll.u32 %v7752, 23
  %v7754 = vor.u32 4788187, %v7753
  %v7755 = vand.u32 2147483647, %v7754
  %v7757 = vcvt.s32.f32 %v7750
  %v7758 = vmul.f32 %v7757, %v7755
  %v7759 = vxor.u32 %v7758, 2147483648
  %v7760 = vsel %vm7677, %v7759, %v7758
  %v7761 = vsub.s32 4, %v7737
  %v7762 = vsel %vm7677, %v7761, %v7737
  %v7763 = vsel %vm7676, %v2770, %v7760
  %v7764 = vsel %vm7676, 0, %v7762
  %v7765 = vcosq.f32.pop %v7763
  %v7766 = vsinq.f32.pop %v7763
  %vm7767 = vweird.f32 %v2770
  %v7768 = vadd.s32 %v7764, 3
  %v7769 = vand.u32 %v7768, 3
  %vm7770 = vcmp.lt.s32.totalorder %v7769, 2
  %vm7771 = vcmp.eq.s32.totalorder %v7769, 0
  %v7772 = vxor.u32 %v7766, 2147483648
  %v7773 = vsel %vm7771, %v7765, %v7772
  %vm7774 = vcmp.eq.s32.totalorder %v7769, 2
  %v7775 = vxor.u32 %v7765, 2147483648
  %v7776 = vsel %vm7774, %v7775, %v7766
  %v7777 = vsel %vm7770, %v7773, %v7776
  %v7778 = vsel %vm7767, nan, %v7777
  %v7779 = vand.u32 2147483647, %v2771
  %vm7780 = vcmp.le.f32.partialorder %v7779, 0.7853982
  %vm7781 = vcmp.lt.s32.totalorder %v2771, 0
  %v7782 = vand.u32 %v2771, 2139095040
  %v7783 = vshrl.u32 %v7782, 23
  %v7784 = vsub.s32 %v7783, 127
  %v7785 = vand.u32 2147483647, %v2771
  %v7786 = vand.u32 %v7785, 8388607
  %v7787 = vor.u32 %v7786, 8388608
  %v7788 = vsub.s32 0, %v7787
  %v7789 = vadd.s32 %v7784, 1
  %vm7790 = vcmp.gt.s32.totalorder %v7789, 0
  %v7791 = vsel %vm7790, %v7789, 0
  %v7792 = vshrl.u32 %v7791, 5
  %v7793 = vand.u32 %v7791, 31
  %v7794 = vsub.s32 32, %v7793
  %v7795 = vshrl.u32 683565275, %v7794
  %v7796 = vshll.u32 683565275, %v7793
  %v7797 = vshrl.u32 2475754826, %v7794
  %v7798 = vor.u32 %v7796, %v7797
  %v7799 = vshll.u32 2475754826, %v7793
  %v7800 = vshrl.u32 2131351028, %v7794
  %v7801 = vor.u32 %v7799, %v7800
  %v7802 = vshll.u32 2131351028, %v7793
  %v7803 = vshrl.u32 2102212464, %v7794
  %v7804 = vor.u32 %v7802, %v7803
  %v7805 = vshll.u32 2102212464, %v7793
  %v7806 = vshrl.u32 920167782, %v7794
  %v7807 = vor.u32 %v7805, %v7806
  %v7808 = vshll.u32 920167782, %v7793
  %v7809 = vshrl.u32 1326507024, %v7794
  %v7810 = vor.u32 %v7808, %v7809
  %vm7811 = vcmp.lt.s32.totalorder %v7792, 1
  %vm7812 = vcmp.lt.s32.totalorder %v7792, 2
  %vm7813 = vcmp.lt.s32.totalorder %v7792, 3
  %vm7814 = vcmp.lt.s32.totalorder %v7792, 4
  %v7815 = vsel %vm7811, %v7795, %v7798
  %v7816 = vsel %vm7814, %v7804, 2102212464
  %v7817 = vsel %vm7813, %v7801, %v7816
  %v7818 = vsel %vm7812, %v7815, %v7817
  %v7819 = vsel %vm7811, %v7798, %v7801
  %v7820 = vsel %vm7814, %v7807, 920167782
  %v7821 = vsel %vm7813, %v7804, %v7820
  %v7822 = vsel %vm7812, %v7819, %v7821
  %v7823 = vsel %vm7811, %v7801, %v7804
  %v7824 = vsel %vm7814, %v7810, 1326507024
  %v7825 = vsel %vm7813, %v7807, %v7824
  %v7826 = vsel %vm7812, %v7823, %v7825
  %v7827 = vshll.u32 %v7787, 8
  %v7828 = vmul.u32.u64.compose %v7827, %v7826
  %v7829 = vextract.low.u32 %v7828
  %v7830 = vextract.high.u32 %v7828
  %v7831 = vmul.u32.u64.compose %v7827, %v7822
  %v7832 = vextract.low.u32 %v7831
  %v7833 = vextract.high.u32 %v7831
  %v7834 = vmul.u32 %v7827, %v7818
  %v7835 = vadd.s32 %v7830, %v7832
  %vm7836 = vc.u32 %v7830, %v7832
  %v7837 = vadd.s32 %v7833, 1
  %v7838 = vsel %vm7836, %v7837, %v7833
  %v7839 = vadd.s32 %v7834, %v7838
  %v7840 = vadd.s32 %v7839, 536870912
  %v7841 = vshrl.u32 %v7840, 30
  %v7842 = vshll.u32 %v7841, 30
  %v7843 = vsub.s32 %v7839, %v7842
  %vm7844 = vcmp.lt.s32.totalorder %v7843, 0
  %v7845 = vsub.s32 0, %v7843
  %v7846 = vsel %vm7844, %v7845, %v7843
  %v7847 = vclz %v7846
  %v7848 = vsub.s32 %v7847, 2
  %vm7849 = vcmp.gt.s32.totalorder 0, %v7848
  %v7850 = vsel %vm7849, 0, %v7848
  %v7851 = vsub.s32 32, %v7850
  %v7852 = vshll.u32 %v7843, %v7850
  %v7853 = vshrl.u32 %v7835, %v7851
  %v7854 = vor.u32 %v7852, %v7853
  %v7855 = vsub.s32 4294967266, %v7850
  %v7856 = vadd.s32 %v7855, 127
  %v7857 = vshll.u32 %v7856, 23
  %v7858 = vor.u32 4788187, %v7857
  %v7859 = vand.u32 2147483647, %v7858
  %v7861 = vcvt.s32.f32 %v7854
  %v7862 = vmul.f32 %v7861, %v7859
  %v7863 = vxor.u32 %v7862, 2147483648
  %v7864 = vsel %vm7781, %v7863, %v7862
  %v7865 = vsub.s32 4, %v7841
  %v7866 = vsel %vm7781, %v7865, %v7841
  %v7867 = vsel %vm7780, %v2771, %v7864
  %v7868 = vsel %vm7780, 0, %v7866
  %v7869 = vcosq.f32.pop %v7867
  %v7870 = vsinq.f32.pop %v7867
  %vm7871 = vweird.f32 %v2771
  %v7872 = vadd.s32 %v7868, 3
  %v7873 = vand.u32 %v7872, 3
  %vm7874 = vcmp.lt.s32.totalorder %v7873, 2
  %vm7875 = vcmp.eq.s32.totalorder %v7873, 0
  %v7876 = vxor.u32 %v7870, 2147483648
  %v7877 = vsel %vm7875, %v7869, %v7876
  %vm7878 = vcmp.eq.s32.totalorder %v7873, 2
  %v7879 = vxor.u32 %v7869, 2147483648
  %v7880 = vsel %vm7878, %v7879, %v7870
  %v7881 = vsel %vm7874, %v7877, %v7880
  %v7882 = vsel %vm7871, nan, %v7881
  %v7883 = vand.u32 2147483647, %v2772
  %vm7884 = vcmp.le.f32.partialorder %v7883, 0.7853982
  %vm7885 = vcmp.lt.s32.totalorder %v2772, 0
  %v7886 = vand.u32 %v2772, 2139095040
  %v7887 = vshrl.u32 %v7886, 23
  %v7888 = vsub.s32 %v7887, 127
  %v7889 = vand.u32 2147483647, %v2772
  %v7890 = vand.u32 %v7889, 8388607
  %v7891 = vor.u32 %v7890, 8388608
  %v7892 = vsub.s32 0, %v7891
  %v7893 = vadd.s32 %v7888, 1
  %vm7894 = vcmp.gt.s32.totalorder %v7893, 0
  %v7895 = vsel %vm7894, %v7893, 0
  %v7896 = vshrl.u32 %v7895, 5
  %v7897 = vand.u32 %v7895, 31
  %v7898 = vsub.s32 32, %v7897
  %v7899 = vshrl.u32 683565275, %v7898
  %v7900 = vshll.u32 683565275, %v7897
  %v7901 = vshrl.u32 2475754826, %v7898
  %v7902 = vor.u32 %v7900, %v7901
  %v7903 = vshll.u32 2475754826, %v7897
  %v7904 = vshrl.u32 2131351028, %v7898
  %v7905 = vor.u32 %v7903, %v7904
  %v7906 = vshll.u32 2131351028, %v7897
  %v7907 = vshrl.u32 2102212464, %v7898
  %v7908 = vor.u32 %v7906, %v7907
  %v7909 = vshll.u32 2102212464, %v7897
  %v7910 = vshrl.u32 920167782, %v7898
  %v7911 = vor.u32 %v7909, %v7910
  %v7912 = vshll.u32 920167782, %v7897
  %v7913 = vshrl.u32 1326507024, %v7898
  %v7914 = vor.u32 %v7912, %v7913
  %vm7915 = vcmp.lt.s32.totalorder %v7896, 1
  %vm7916 = vcmp.lt.s32.totalorder %v7896, 2
  %vm7917 = vcmp.lt.s32.totalorder %v7896, 3
  %vm7918 = vcmp.lt.s32.totalorder %v7896, 4
  %v7919 = vsel %vm7915, %v7899, %v7902
  %v7920 = vsel %vm7918, %v7908, 2102212464
  %v7921 = vsel %vm7917, %v7905, %v7920
  %v7922 = vsel %vm7916, %v7919, %v7921
  %v7923 = vsel %vm7915, %v7902, %v7905
  %v7924 = vsel %vm7918, %v7911, 920167782
  %v7925 = vsel %vm7917, %v7908, %v7924
  %v7926 = vsel %vm7916, %v7923, %v7925
  %v7927 = vsel %vm7915, %v7905, %v7908
  %v7928 = vsel %vm7918, %v7914, 1326507024
  %v7929 = vsel %vm7917, %v7911, %v7928
  %v7930 = vsel %vm7916, %v7927, %v7929
  %v7931 = vshll.u32 %v7891, 8
  %v7932 = vmul.u32.u64.compose %v7931, %v7930
  %v7933 = vextract.low.u32 %v7932
  %v7934 = vextract.high.u32 %v7932
  %v7935 = vmul.u32.u64.compose %v7931, %v7926
  %v7936 = vextract.low.u32 %v7935
  %v7937 = vextract.high.u32 %v7935
  %v7938 = vmul.u32 %v7931, %v7922
  %v7939 = vadd.s32 %v7934, %v7936
  %vm7940 = vc.u32 %v7934, %v7936
  %v7941 = vadd.s32 %v7937, 1
  %v7942 = vsel %vm7940, %v7941, %v7937
  %v7943 = vadd.s32 %v7938, %v7942
  %v7944 = vadd.s32 %v7943, 536870912
  %v7945 = vshrl.u32 %v7944, 30
  %v7946 = vshll.u32 %v7945, 30
  %v7947 = vsub.s32 %v7943, %v7946
  %vm7948 = vcmp.lt.s32.totalorder %v7947, 0
  %v7949 = vsub.s32 0, %v7947
  %v7950 = vsel %vm7948, %v7949, %v7947
  %v7951 = vclz %v7950
  %v7952 = vsub.s32 %v7951, 2
  %vm7953 = vcmp.gt.s32.totalorder 0, %v7952
  %v7954 = vsel %vm7953, 0, %v7952
  %v7955 = vsub.s32 32, %v7954
  %v7956 = vshll.u32 %v7947, %v7954
  %v7957 = vshrl.u32 %v7939, %v7955
  %v7958 = vor.u32 %v7956, %v7957
  %v7959 = vsub.s32 4294967266, %v7954
  %v7960 = vadd.s32 %v7959, 127
  %v7961 = vshll.u32 %v7960, 23
  %v7962 = vor.u32 4788187, %v7961
  %v7963 = vand.u32 2147483647, %v7962
  %v7965 = vcvt.s32.f32 %v7958
  %v7966 = vmul.f32 %v7965, %v7963
  %v7967 = vxor.u32 %v7966, 2147483648
  %v7968 = vsel %vm7885, %v7967, %v7966
  %v7969 = vsub.s32 4, %v7945
  %v7970 = vsel %vm7885, %v7969, %v7945
  %v7971 = vsel %vm7884, %v2772, %v7968
  %v7972 = vsel %vm7884, 0, %v7970
  %v7973 = vcosq.f32.pop %v7971
  %v7974 = vsinq.f32.pop %v7971
  %vm7975 = vweird.f32 %v2772
  %v7976 = vadd.s32 %v7972, 3
  %v7977 = vand.u32 %v7976, 3
  %vm7978 = vcmp.lt.s32.totalorder %v7977, 2
  %vm7979 = vcmp.eq.s32.totalorder %v7977, 0
  %v7980 = vxor.u32 %v7974, 2147483648
  %v7981 = vsel %vm7979, %v7973, %v7980
  %vm7982 = vcmp.eq.s32.totalorder %v7977, 2
  %v7983 = vxor.u32 %v7973, 2147483648
  %v7984 = vsel %vm7982, %v7983, %v7974
  %v7985 = vsel %vm7978, %v7981, %v7984
  %v7986 = vsel %vm7975, nan, %v7985
  %v7987 = vand.u32 2147483647, %v2773
  %vm7988 = vcmp.le.f32.partialorder %v7987, 0.7853982
  %vm7989 = vcmp.lt.s32.totalorder %v2773, 0
  %v7990 = vand.u32 %v2773, 2139095040
  %v7991 = vshrl.u32 %v7990, 23
  %v7992 = vsub.s32 %v7991, 127
  %v7993 = vand.u32 2147483647, %v2773
  %v7994 = vand.u32 %v7993, 8388607
  %v7995 = vor.u32 %v7994, 8388608
  %v7996 = vsub.s32 0, %v7995
  %v7997 = vadd.s32 %v7992, 1
  %vm7998 = vcmp.gt.s32.totalorder %v7997, 0
  %v7999 = vsel %vm7998, %v7997, 0
  %v8000 = vshrl.u32 %v7999, 5
  %v8001 = vand.u32 %v7999, 31
  %v8002 = vsub.s32 32, %v8001
  %v8003 = vshrl.u32 683565275, %v8002
  %v8004 = vshll.u32 683565275, %v8001
  %v8005 = vshrl.u32 2475754826, %v8002
  %v8006 = vor.u32 %v8004, %v8005
  %v8007 = vshll.u32 2475754826, %v8001
  %v8008 = vshrl.u32 2131351028, %v8002
  %v8009 = vor.u32 %v8007, %v8008
  %v8010 = vshll.u32 2131351028, %v8001
  %v8011 = vshrl.u32 2102212464, %v8002
  %v8012 = vor.u32 %v8010, %v8011
  %v8013 = vshll.u32 2102212464, %v8001
  %v8014 = vshrl.u32 920167782, %v8002
  %v8015 = vor.u32 %v8013, %v8014
  %v8016 = vshll.u32 920167782, %v8001
  %v8017 = vshrl.u32 1326507024, %v8002
  %v8018 = vor.u32 %v8016, %v8017
  %vm8019 = vcmp.lt.s32.totalorder %v8000, 1
  %vm8020 = vcmp.lt.s32.totalorder %v8000, 2
  %vm8021 = vcmp.lt.s32.totalorder %v8000, 3
  %vm8022 = vcmp.lt.s32.totalorder %v8000, 4
  %v8023 = vsel %vm8019, %v8003, %v8006
  %v8024 = vsel %vm8022, %v8012, 2102212464
  %v8025 = vsel %vm8021, %v8009, %v8024
  %v8026 = vsel %vm8020, %v8023, %v8025
  %v8027 = vsel %vm8019, %v8006, %v8009
  %v8028 = vsel %vm8022, %v8015, 920167782
  %v8029 = vsel %vm8021, %v8012, %v8028
  %v8030 = vsel %vm8020, %v8027, %v8029
  %v8031 = vsel %vm8019, %v8009, %v8012
  %v8032 = vsel %vm8022, %v8018, 1326507024
  %v8033 = vsel %vm8021, %v8015, %v8032
  %v8034 = vsel %vm8020, %v8031, %v8033
  %v8035 = vshll.u32 %v7995, 8
  %v8036 = vmul.u32.u64.compose %v8035, %v8034
  %v8037 = vextract.low.u32 %v8036
  %v8038 = vextract.high.u32 %v8036
  %v8039 = vmul.u32.u64.compose %v8035, %v8030
  %v8040 = vextract.low.u32 %v8039
  %v8041 = vextract.high.u32 %v8039
  %v8042 = vmul.u32 %v8035, %v8026
  %v8043 = vadd.s32 %v8038, %v8040
  %vm8044 = vc.u32 %v8038, %v8040
  %v8045 = vadd.s32 %v8041, 1
  %v8046 = vsel %vm8044, %v8045, %v8041
  %v8047 = vadd.s32 %v8042, %v8046
  %v8048 = vadd.s32 %v8047, 536870912
  %v8049 = vshrl.u32 %v8048, 30
  %v8050 = vshll.u32 %v8049, 30
  %v8051 = vsub.s32 %v8047, %v8050
  %vm8052 = vcmp.lt.s32.totalorder %v8051, 0
  %v8053 = vsub.s32 0, %v8051
  %v8054 = vsel %vm8052, %v8053, %v8051
  %v8055 = vclz %v8054
  %v8056 = vsub.s32 %v8055, 2
  %vm8057 = vcmp.gt.s32.totalorder 0, %v8056
  %v8058 = vsel %vm8057, 0, %v8056
  %v8059 = vsub.s32 32, %v8058
  %v8060 = vshll.u32 %v8051, %v8058
  %v8061 = vshrl.u32 %v8043, %v8059
  %v8062 = vor.u32 %v8060, %v8061
  %v8063 = vsub.s32 4294967266, %v8058
  %v8064 = vadd.s32 %v8063, 127
  %v8065 = vshll.u32 %v8064, 23
  %v8066 = vor.u32 4788187, %v8065
  %v8067 = vand.u32 2147483647, %v8066
  %v8069 = vcvt.s32.f32 %v8062
  %v8070 = vmul.f32 %v8069, %v8067
  %v8071 = vxor.u32 %v8070, 2147483648
  %v8072 = vsel %vm7989, %v8071, %v8070
  %v8073 = vsub.s32 4, %v8049
  %v8074 = vsel %vm7989, %v8073, %v8049
  %v8075 = vsel %vm7988, %v2773, %v8072
  %v8076 = vsel %vm7988, 0, %v8074
  %v8077 = vcosq.f32.pop %v8075
  %v8078 = vsinq.f32.pop %v8075
  %vm8079 = vweird.f32 %v2773
  %v8080 = vadd.s32 %v8076, 3
  %v8081 = vand.u32 %v8080, 3
  %vm8082 = vcmp.lt.s32.totalorder %v8081, 2
  %vm8083 = vcmp.eq.s32.totalorder %v8081, 0
  %v8084 = vxor.u32 %v8078, 2147483648
  %v8085 = vsel %vm8083, %v8077, %v8084
  %vm8086 = vcmp.eq.s32.totalorder %v8081, 2
  %v8087 = vxor.u32 %v8077, 2147483648
  %v8088 = vsel %vm8086, %v8087, %v8078
  %v8089 = vsel %vm8082, %v8085, %v8088
  %v8090 = vsel %vm8079, nan, %v8089
  %v8091 = vand.u32 2147483647, %v2774
  %vm8092 = vcmp.le.f32.partialorder %v8091, 0.7853982
  %vm8093 = vcmp.lt.s32.totalorder %v2774, 0
  %v8094 = vand.u32 %v2774, 2139095040
  %v8095 = vshrl.u32 %v8094, 23
  %v8096 = vsub.s32 %v8095, 127
  %v8097 = vand.u32 2147483647, %v2774
  %v8098 = vand.u32 %v8097, 8388607
  %v8099 = vor.u32 %v8098, 8388608
  %v8100 = vsub.s32 0, %v8099
  %v8101 = vadd.s32 %v8096, 1
  %vm8102 = vcmp.gt.s32.totalorder %v8101, 0
  %v8103 = vsel %vm8102, %v8101, 0
  %v8104 = vshrl.u32 %v8103, 5
  %v8105 = vand.u32 %v8103, 31
  %v8106 = vsub.s32 32, %v8105
  %v8107 = vshrl.u32 683565275, %v8106
  %v8108 = vshll.u32 683565275, %v8105
  %v8109 = vshrl.u32 2475754826, %v8106
  %v8110 = vor.u32 %v8108, %v8109
  %v8111 = vshll.u32 2475754826, %v8105
  %v8112 = vshrl.u32 2131351028, %v8106
  %v8113 = vor.u32 %v8111, %v8112
  %v8114 = vshll.u32 2131351028, %v8105
  %v8115 = vshrl.u32 2102212464, %v8106
  %v8116 = vor.u32 %v8114, %v8115
  %v8117 = vshll.u32 2102212464, %v8105
  %v8118 = vshrl.u32 920167782, %v8106
  %v8119 = vor.u32 %v8117, %v8118
  %v8120 = vshll.u32 920167782, %v8105
  %v8121 = vshrl.u32 1326507024, %v8106
  %v8122 = vor.u32 %v8120, %v8121
  %vm8123 = vcmp.lt.s32.totalorder %v8104, 1
  %vm8124 = vcmp.lt.s32.totalorder %v8104, 2
  %vm8125 = vcmp.lt.s32.totalorder %v8104, 3
  %vm8126 = vcmp.lt.s32.totalorder %v8104, 4
  %v8127 = vsel %vm8123, %v8107, %v8110
  %v8128 = vsel %vm8126, %v8116, 2102212464
  %v8129 = vsel %vm8125, %v8113, %v8128
  %v8130 = vsel %vm8124, %v8127, %v8129
  %v8131 = vsel %vm8123, %v8110, %v8113
  %v8132 = vsel %vm8126, %v8119, 920167782
  %v8133 = vsel %vm8125, %v8116, %v8132
  %v8134 = vsel %vm8124, %v8131, %v8133
  %v8135 = vsel %vm8123, %v8113, %v8116
  %v8136 = vsel %vm8126, %v8122, 1326507024
  %v8137 = vsel %vm8125, %v8119, %v8136
  %v8138 = vsel %vm8124, %v8135, %v8137
  %v8139 = vshll.u32 %v8099, 8
  %v8140 = vmul.u32.u64.compose %v8139, %v8138
  %v8141 = vextract.low.u32 %v8140
  %v8142 = vextract.high.u32 %v8140
  %v8143 = vmul.u32.u64.compose %v8139, %v8134
  %v8144 = vextract.low.u32 %v8143
  %v8145 = vextract.high.u32 %v8143
  %v8146 = vmul.u32 %v8139, %v8130
  %v8147 = vadd.s32 %v8142, %v8144
  %vm8148 = vc.u32 %v8142, %v8144
  %v8149 = vadd.s32 %v8145, 1
  %v8150 = vsel %vm8148, %v8149, %v8145
  %v8151 = vadd.s32 %v8146, %v8150
  %v8152 = vadd.s32 %v8151, 536870912
  %v8153 = vshrl.u32 %v8152, 30
  %v8154 = vshll.u32 %v8153, 30
  %v8155 = vsub.s32 %v8151, %v8154
  %vm8156 = vcmp.lt.s32.totalorder %v8155, 0
  %v8157 = vsub.s32 0, %v8155
  %v8158 = vsel %vm8156, %v8157, %v8155
  %v8159 = vclz %v8158
  %v8160 = vsub.s32 %v8159, 2
  %vm8161 = vcmp.gt.s32.totalorder 0, %v8160
  %v8162 = vsel %vm8161, 0, %v8160
  %v8163 = vsub.s32 32, %v8162
  %v8164 = vshll.u32 %v8155, %v8162
  %v8165 = vshrl.u32 %v8147, %v8163
  %v8166 = vor.u32 %v8164, %v8165
  %v8167 = vsub.s32 4294967266, %v8162
  %v8168 = vadd.s32 %v8167, 127
  %v8169 = vshll.u32 %v8168, 23
  %v8170 = vor.u32 4788187, %v8169
  %v8171 = vand.u32 2147483647, %v8170
  %v8173 = vcvt.s32.f32 %v8166
  %v8174 = vmul.f32 %v8173, %v8171
  %v8175 = vxor.u32 %v8174, 2147483648
  %v8176 = vsel %vm8093, %v8175, %v8174
  %v8177 = vsub.s32 4, %v8153
  %v8178 = vsel %vm8093, %v8177, %v8153
  %v8179 = vsel %vm8092, %v2774, %v8176
  %v8180 = vsel %vm8092, 0, %v8178
  %v8181 = vcosq.f32.pop %v8179
  %v8182 = vsinq.f32.pop %v8179
  %vm8183 = vweird.f32 %v2774
  %v8184 = vadd.s32 %v8180, 3
  %v8185 = vand.u32 %v8184, 3
  %vm8186 = vcmp.lt.s32.totalorder %v8185, 2
  %vm8187 = vcmp.eq.s32.totalorder %v8185, 0
  %v8188 = vxor.u32 %v8182, 2147483648
  %v8189 = vsel %vm8187, %v8181, %v8188
  %vm8190 = vcmp.eq.s32.totalorder %v8185, 2
  %v8191 = vxor.u32 %v8181, 2147483648
  %v8192 = vsel %vm8190, %v8191, %v8182
  %v8193 = vsel %vm8186, %v8189, %v8192
  %v8194 = vsel %vm8183, nan, %v8193
  %v8195 = vand.u32 2147483647, %v2775
  %vm8196 = vcmp.le.f32.partialorder %v8195, 0.7853982
  %vm8197 = vcmp.lt.s32.totalorder %v2775, 0
  %v8198 = vand.u32 %v2775, 2139095040
  %v8199 = vshrl.u32 %v8198, 23
  %v8200 = vsub.s32 %v8199, 127
  %v8201 = vand.u32 2147483647, %v2775
  %v8202 = vand.u32 %v8201, 8388607
  %v8203 = vor.u32 %v8202, 8388608
  %v8204 = vsub.s32 0, %v8203
  %v8205 = vadd.s32 %v8200, 1
  %vm8206 = vcmp.gt.s32.totalorder %v8205, 0
  %v8207 = vsel %vm8206, %v8205, 0
  %v8208 = vshrl.u32 %v8207, 5
  %v8209 = vand.u32 %v8207, 31
  %v8210 = vsub.s32 32, %v8209
  %v8211 = vshrl.u32 683565275, %v8210
  %v8212 = vshll.u32 683565275, %v8209
  %v8213 = vshrl.u32 2475754826, %v8210
  %v8214 = vor.u32 %v8212, %v8213
  %v8215 = vshll.u32 2475754826, %v8209
  %v8216 = vshrl.u32 2131351028, %v8210
  %v8217 = vor.u32 %v8215, %v8216
  %v8218 = vshll.u32 2131351028, %v8209
  %v8219 = vshrl.u32 2102212464, %v8210
  %v8220 = vor.u32 %v8218, %v8219
  %v8221 = vshll.u32 2102212464, %v8209
  %v8222 = vshrl.u32 920167782, %v8210
  %v8223 = vor.u32 %v8221, %v8222
  %v8224 = vshll.u32 920167782, %v8209
  %v8225 = vshrl.u32 1326507024, %v8210
  %v8226 = vor.u32 %v8224, %v8225
  %vm8227 = vcmp.lt.s32.totalorder %v8208, 1
  %vm8228 = vcmp.lt.s32.totalorder %v8208, 2
  %vm8229 = vcmp.lt.s32.totalorder %v8208, 3
  %vm8230 = vcmp.lt.s32.totalorder %v8208, 4
  %v8231 = vsel %vm8227, %v8211, %v8214
  %v8232 = vsel %vm8230, %v8220, 2102212464
  %v8233 = vsel %vm8229, %v8217, %v8232
  %v8234 = vsel %vm8228, %v8231, %v8233
  %v8235 = vsel %vm8227, %v8214, %v8217
  %v8236 = vsel %vm8230, %v8223, 920167782
  %v8237 = vsel %vm8229, %v8220, %v8236
  %v8238 = vsel %vm8228, %v8235, %v8237
  %v8239 = vsel %vm8227, %v8217, %v8220
  %v8240 = vsel %vm8230, %v8226, 1326507024
  %v8241 = vsel %vm8229, %v8223, %v8240
  %v8242 = vsel %vm8228, %v8239, %v8241
  %v8243 = vshll.u32 %v8203, 8
  %v8244 = vmul.u32.u64.compose %v8243, %v8242
  %v8245 = vextract.low.u32 %v8244
  %v8246 = vextract.high.u32 %v8244
  %v8247 = vmul.u32.u64.compose %v8243, %v8238
  %v8248 = vextract.low.u32 %v8247
  %v8249 = vextract.high.u32 %v8247
  %v8250 = vmul.u32 %v8243, %v8234
  %v8251 = vadd.s32 %v8246, %v8248
  %vm8252 = vc.u32 %v8246, %v8248
  %v8253 = vadd.s32 %v8249, 1
  %v8254 = vsel %vm8252, %v8253, %v8249
  %v8255 = vadd.s32 %v8250, %v8254
  %v8256 = vadd.s32 %v8255, 536870912
  %v8257 = vshrl.u32 %v8256, 30
  %v8258 = vshll.u32 %v8257, 30
  %v8259 = vsub.s32 %v8255, %v8258
  %vm8260 = vcmp.lt.s32.totalorder %v8259, 0
  %v8261 = vsub.s32 0, %v8259
  %v8262 = vsel %vm8260, %v8261, %v8259
  %v8263 = vclz %v8262
  %v8264 = vsub.s32 %v8263, 2
  %vm8265 = vcmp.gt.s32.totalorder 0, %v8264
  %v8266 = vsel %vm8265, 0, %v8264
  %v8267 = vsub.s32 32, %v8266
  %v8268 = vshll.u32 %v8259, %v8266
  %v8269 = vshrl.u32 %v8251, %v8267
  %v8270 = vor.u32 %v8268, %v8269
  %v8271 = vsub.s32 4294967266, %v8266
  %v8272 = vadd.s32 %v8271, 127
  %v8273 = vshll.u32 %v8272, 23
  %v8274 = vor.u32 4788187, %v8273
  %v8275 = vand.u32 2147483647, %v8274
  %v8277 = vcvt.s32.f32 %v8270
  %v8278 = vmul.f32 %v8277, %v8275
  %v8279 = vxor.u32 %v8278, 2147483648
  %v8280 = vsel %vm8197, %v8279, %v8278
  %v8281 = vsub.s32 4, %v8257
  %v8282 = vsel %vm8197, %v8281, %v8257
  %v8283 = vsel %vm8196, %v2775, %v8280
  %v8284 = vsel %vm8196, 0, %v8282
  %v8285 = vcosq.f32.pop %v8283
  %v8286 = vsinq.f32.pop %v8283
  %vm8287 = vweird.f32 %v2775
  %v8288 = vadd.s32 %v8284, 3
  %v8289 = vand.u32 %v8288, 3
  %vm8290 = vcmp.lt.s32.totalorder %v8289, 2
  %vm8291 = vcmp.eq.s32.totalorder %v8289, 0
  %v8292 = vxor.u32 %v8286, 2147483648
  %v8293 = vsel %vm8291, %v8285, %v8292
  %vm8294 = vcmp.eq.s32.totalorder %v8289, 2
  %v8295 = vxor.u32 %v8285, 2147483648
  %v8296 = vsel %vm8294, %v8295, %v8286
  %v8297 = vsel %vm8290, %v8293, %v8296
  %v8298 = vsel %vm8287, nan, %v8297
  %v8299 = vand.u32 2147483647, %v2776
  %vm8300 = vcmp.le.f32.partialorder %v8299, 0.7853982
  %vm8301 = vcmp.lt.s32.totalorder %v2776, 0
  %v8302 = vand.u32 %v2776, 2139095040
  %v8303 = vshrl.u32 %v8302, 23
  %v8304 = vsub.s32 %v8303, 127
  %v8305 = vand.u32 2147483647, %v2776
  %v8306 = vand.u32 %v8305, 8388607
  %v8307 = vor.u32 %v8306, 8388608
  %v8308 = vsub.s32 0, %v8307
  %v8309 = vadd.s32 %v8304, 1
  %vm8310 = vcmp.gt.s32.totalorder %v8309, 0
  %v8311 = vsel %vm8310, %v8309, 0
  %v8312 = vshrl.u32 %v8311, 5
  %v8313 = vand.u32 %v8311, 31
  %v8314 = vsub.s32 32, %v8313
  %v8315 = vshrl.u32 683565275, %v8314
  %v8316 = vshll.u32 683565275, %v8313
  %v8317 = vshrl.u32 2475754826, %v8314
  %v8318 = vor.u32 %v8316, %v8317
  %v8319 = vshll.u32 2475754826, %v8313
  %v8320 = vshrl.u32 2131351028, %v8314
  %v8321 = vor.u32 %v8319, %v8320
  %v8322 = vshll.u32 2131351028, %v8313
  %v8323 = vshrl.u32 2102212464, %v8314
  %v8324 = vor.u32 %v8322, %v8323
  %v8325 = vshll.u32 2102212464, %v8313
  %v8326 = vshrl.u32 920167782, %v8314
  %v8327 = vor.u32 %v8325, %v8326
  %v8328 = vshll.u32 920167782, %v8313
  %v8329 = vshrl.u32 1326507024, %v8314
  %v8330 = vor.u32 %v8328, %v8329
  %vm8331 = vcmp.lt.s32.totalorder %v8312, 1
  %vm8332 = vcmp.lt.s32.totalorder %v8312, 2
  %vm8333 = vcmp.lt.s32.totalorder %v8312, 3
  %vm8334 = vcmp.lt.s32.totalorder %v8312, 4
  %v8335 = vsel %vm8331, %v8315, %v8318
  %v8336 = vsel %vm8334, %v8324, 2102212464
  %v8337 = vsel %vm8333, %v8321, %v8336
  %v8338 = vsel %vm8332, %v8335, %v8337
  %v8339 = vsel %vm8331, %v8318, %v8321
  %v8340 = vsel %vm8334, %v8327, 920167782
  %v8341 = vsel %vm8333, %v8324, %v8340
  %v8342 = vsel %vm8332, %v8339, %v8341
  %v8343 = vsel %vm8331, %v8321, %v8324
  %v8344 = vsel %vm8334, %v8330, 1326507024
  %v8345 = vsel %vm8333, %v8327, %v8344
  %v8346 = vsel %vm8332, %v8343, %v8345
  %v8347 = vshll.u32 %v8307, 8
  %v8348 = vmul.u32.u64.compose %v8347, %v8346
  %v8349 = vextract.low.u32 %v8348
  %v8350 = vextract.high.u32 %v8348
  %v8351 = vmul.u32.u64.compose %v8347, %v8342
  %v8352 = vextract.low.u32 %v8351
  %v8353 = vextract.high.u32 %v8351
  %v8354 = vmul.u32 %v8347, %v8338
  %v8355 = vadd.s32 %v8350, %v8352
  %vm8356 = vc.u32 %v8350, %v8352
  %v8357 = vadd.s32 %v8353, 1
  %v8358 = vsel %vm8356, %v8357, %v8353
  %v8359 = vadd.s32 %v8354, %v8358
  %v8360 = vadd.s32 %v8359, 536870912
  %v8361 = vshrl.u32 %v8360, 30
  %v8362 = vshll.u32 %v8361, 30
  %v8363 = vsub.s32 %v8359, %v8362
  %vm8364 = vcmp.lt.s32.totalorder %v8363, 0
  %v8365 = vsub.s32 0, %v8363
  %v8366 = vsel %vm8364, %v8365, %v8363
  %v8367 = vclz %v8366
  %v8368 = vsub.s32 %v8367, 2
  %vm8369 = vcmp.gt.s32.totalorder 0, %v8368
  %v8370 = vsel %vm8369, 0, %v8368
  %v8371 = vsub.s32 32, %v8370
  %v8372 = vshll.u32 %v8363, %v8370
  %v8373 = vshrl.u32 %v8355, %v8371
  %v8374 = vor.u32 %v8372, %v8373
  %v8375 = vsub.s32 4294967266, %v8370
  %v8376 = vadd.s32 %v8375, 127
  %v8377 = vshll.u32 %v8376, 23
  %v8378 = vor.u32 4788187, %v8377
  %v8379 = vand.u32 2147483647, %v8378
  %v8381 = vcvt.s32.f32 %v8374
  %v8382 = vmul.f32 %v8381, %v8379
  %v8383 = vxor.u32 %v8382, 2147483648
  %v8384 = vsel %vm8301, %v8383, %v8382
  %v8385 = vsub.s32 4, %v8361
  %v8386 = vsel %vm8301, %v8385, %v8361
  %v8387 = vsel %vm8300, %v2776, %v8384
  %v8388 = vsel %vm8300, 0, %v8386
  %v8389 = vcosq.f32.pop %v8387
  %v8390 = vsinq.f32.pop %v8387
  %vm8391 = vweird.f32 %v2776
  %v8392 = vadd.s32 %v8388, 3
  %v8393 = vand.u32 %v8392, 3
  %vm8394 = vcmp.lt.s32.totalorder %v8393, 2
  %vm8395 = vcmp.eq.s32.totalorder %v8393, 0
  %v8396 = vxor.u32 %v8390, 2147483648
  %v8397 = vsel %vm8395, %v8389, %v8396
  %vm8398 = vcmp.eq.s32.totalorder %v8393, 2
  %v8399 = vxor.u32 %v8389, 2147483648
  %v8400 = vsel %vm8398, %v8399, %v8390
  %v8401 = vsel %vm8394, %v8397, %v8400
  %v8402 = vsel %vm8391, nan, %v8401
  %v8403 = vand.u32 2147483647, %v2777
  %vm8404 = vcmp.le.f32.partialorder %v8403, 0.7853982
  %vm8405 = vcmp.lt.s32.totalorder %v2777, 0
  %v8406 = vand.u32 %v2777, 2139095040
  %v8407 = vshrl.u32 %v8406, 23
  %v8408 = vsub.s32 %v8407, 127
  %v8409 = vand.u32 2147483647, %v2777
  %v8410 = vand.u32 %v8409, 8388607
  %v8411 = vor.u32 %v8410, 8388608
  %v8412 = vsub.s32 0, %v8411
  %v8413 = vadd.s32 %v8408, 1
  %vm8414 = vcmp.gt.s32.totalorder %v8413, 0
  %v8415 = vsel %vm8414, %v8413, 0
  %v8416 = vshrl.u32 %v8415, 5
  %v8417 = vand.u32 %v8415, 31
  %v8418 = vsub.s32 32, %v8417
  %v8419 = vshrl.u32 683565275, %v8418
  %v8420 = vshll.u32 683565275, %v8417
  %v8421 = vshrl.u32 2475754826, %v8418
  %v8422 = vor.u32 %v8420, %v8421
  %v8423 = vshll.u32 2475754826, %v8417
  %v8424 = vshrl.u32 2131351028, %v8418
  %v8425 = vor.u32 %v8423, %v8424
  %v8426 = vshll.u32 2131351028, %v8417
  %v8427 = vshrl.u32 2102212464, %v8418
  %v8428 = vor.u32 %v8426, %v8427
  %v8429 = vshll.u32 2102212464, %v8417
  %v8430 = vshrl.u32 920167782, %v8418
  %v8431 = vor.u32 %v8429, %v8430
  %v8432 = vshll.u32 920167782, %v8417
  %v8433 = vshrl.u32 1326507024, %v8418
  %v8434 = vor.u32 %v8432, %v8433
  %vm8435 = vcmp.lt.s32.totalorder %v8416, 1
  %vm8436 = vcmp.lt.s32.totalorder %v8416, 2
  %vm8437 = vcmp.lt.s32.totalorder %v8416, 3
  %vm8438 = vcmp.lt.s32.totalorder %v8416, 4
  %v8439 = vsel %vm8435, %v8419, %v8422
  %v8440 = vsel %vm8438, %v8428, 2102212464
  %v8441 = vsel %vm8437, %v8425, %v8440
  %v8442 = vsel %vm8436, %v8439, %v8441
  %v8443 = vsel %vm8435, %v8422, %v8425
  %v8444 = vsel %vm8438, %v8431, 920167782
  %v8445 = vsel %vm8437, %v8428, %v8444
  %v8446 = vsel %vm8436, %v8443, %v8445
  %v8447 = vsel %vm8435, %v8425, %v8428
  %v8448 = vsel %vm8438, %v8434, 1326507024
  %v8449 = vsel %vm8437, %v8431, %v8448
  %v8450 = vsel %vm8436, %v8447, %v8449
  %v8451 = vshll.u32 %v8411, 8
  %v8452 = vmul.u32.u64.compose %v8451, %v8450
  %v8453 = vextract.low.u32 %v8452
  %v8454 = vextract.high.u32 %v8452
  %v8455 = vmul.u32.u64.compose %v8451, %v8446
  %v8456 = vextract.low.u32 %v8455
  %v8457 = vextract.high.u32 %v8455
  %v8458 = vmul.u32 %v8451, %v8442
  %v8459 = vadd.s32 %v8454, %v8456
  %vm8460 = vc.u32 %v8454, %v8456
  %v8461 = vadd.s32 %v8457, 1
  %v8462 = vsel %vm8460, %v8461, %v8457
  %v8463 = vadd.s32 %v8458, %v8462
  %v8464 = vadd.s32 %v8463, 536870912
  %v8465 = vshrl.u32 %v8464, 30
  %v8466 = vshll.u32 %v8465, 30
  %v8467 = vsub.s32 %v8463, %v8466
  %vm8468 = vcmp.lt.s32.totalorder %v8467, 0
  %v8469 = vsub.s32 0, %v8467
  %v8470 = vsel %vm8468, %v8469, %v8467
  %v8471 = vclz %v8470
  %v8472 = vsub.s32 %v8471, 2
  %vm8473 = vcmp.gt.s32.totalorder 0, %v8472
  %v8474 = vsel %vm8473, 0, %v8472
  %v8475 = vsub.s32 32, %v8474
  %v8476 = vshll.u32 %v8467, %v8474
  %v8477 = vshrl.u32 %v8459, %v8475
  %v8478 = vor.u32 %v8476, %v8477
  %v8479 = vsub.s32 4294967266, %v8474
  %v8480 = vadd.s32 %v8479, 127
  %v8481 = vshll.u32 %v8480, 23
  %v8482 = vor.u32 4788187, %v8481
  %v8483 = vand.u32 2147483647, %v8482
  %v8485 = vcvt.s32.f32 %v8478
  %v8486 = vmul.f32 %v8485, %v8483
  %v8487 = vxor.u32 %v8486, 2147483648
  %v8488 = vsel %vm8405, %v8487, %v8486
  %v8489 = vsub.s32 4, %v8465
  %v8490 = vsel %vm8405, %v8489, %v8465
  %v8491 = vsel %vm8404, %v2777, %v8488
  %v8492 = vsel %vm8404, 0, %v8490
  %v8493 = vcosq.f32.pop %v8491
  %v8494 = vsinq.f32.pop %v8491
  %vm8495 = vweird.f32 %v2777
  %v8496 = vadd.s32 %v8492, 3
  %v8497 = vand.u32 %v8496, 3
  %vm8498 = vcmp.lt.s32.totalorder %v8497, 2
  %vm8499 = vcmp.eq.s32.totalorder %v8497, 0
  %v8500 = vxor.u32 %v8494, 2147483648
  %v8501 = vsel %vm8499, %v8493, %v8500
  %vm8502 = vcmp.eq.s32.totalorder %v8497, 2
  %v8503 = vxor.u32 %v8493, 2147483648
  %v8504 = vsel %vm8502, %v8503, %v8494
  %v8505 = vsel %vm8498, %v8501, %v8504
  %v8506 = vsel %vm8495, nan, %v8505
  %v8507 = vand.u32 2147483647, %v2778
  %vm8508 = vcmp.le.f32.partialorder %v8507, 0.7853982
  %vm8509 = vcmp.lt.s32.totalorder %v2778, 0
  %v8510 = vand.u32 %v2778, 2139095040
  %v8511 = vshrl.u32 %v8510, 23
  %v8512 = vsub.s32 %v8511, 127
  %v8513 = vand.u32 2147483647, %v2778
  %v8514 = vand.u32 %v8513, 8388607
  %v8515 = vor.u32 %v8514, 8388608
  %v8516 = vsub.s32 0, %v8515
  %v8517 = vadd.s32 %v8512, 1
  %vm8518 = vcmp.gt.s32.totalorder %v8517, 0
  %v8519 = vsel %vm8518, %v8517, 0
  %v8520 = vshrl.u32 %v8519, 5
  %v8521 = vand.u32 %v8519, 31
  %v8522 = vsub.s32 32, %v8521
  %v8523 = vshrl.u32 683565275, %v8522
  %v8524 = vshll.u32 683565275, %v8521
  %v8525 = vshrl.u32 2475754826, %v8522
  %v8526 = vor.u32 %v8524, %v8525
  %v8527 = vshll.u32 2475754826, %v8521
  %v8528 = vshrl.u32 2131351028, %v8522
  %v8529 = vor.u32 %v8527, %v8528
  %v8530 = vshll.u32 2131351028, %v8521
  %v8531 = vshrl.u32 2102212464, %v8522
  %v8532 = vor.u32 %v8530, %v8531
  %v8533 = vshll.u32 2102212464, %v8521
  %v8534 = vshrl.u32 920167782, %v8522
  %v8535 = vor.u32 %v8533, %v8534
  %v8536 = vshll.u32 920167782, %v8521
  %v8537 = vshrl.u32 1326507024, %v8522
  %v8538 = vor.u32 %v8536, %v8537
  %vm8539 = vcmp.lt.s32.totalorder %v8520, 1
  %vm8540 = vcmp.lt.s32.totalorder %v8520, 2
  %vm8541 = vcmp.lt.s32.totalorder %v8520, 3
  %vm8542 = vcmp.lt.s32.totalorder %v8520, 4
  %v8543 = vsel %vm8539, %v8523, %v8526
  %v8544 = vsel %vm8542, %v8532, 2102212464
  %v8545 = vsel %vm8541, %v8529, %v8544
  %v8546 = vsel %vm8540, %v8543, %v8545
  %v8547 = vsel %vm8539, %v8526, %v8529
  %v8548 = vsel %vm8542, %v8535, 920167782
  %v8549 = vsel %vm8541, %v8532, %v8548
  %v8550 = vsel %vm8540, %v8547, %v8549
  %v8551 = vsel %vm8539, %v8529, %v8532
  %v8552 = vsel %vm8542, %v8538, 1326507024
  %v8553 = vsel %vm8541, %v8535, %v8552
  %v8554 = vsel %vm8540, %v8551, %v8553
  %v8555 = vshll.u32 %v8515, 8
  %v8556 = vmul.u32.u64.compose %v8555, %v8554
  %v8557 = vextract.low.u32 %v8556
  %v8558 = vextract.high.u32 %v8556
  %v8559 = vmul.u32.u64.compose %v8555, %v8550
  %v8560 = vextract.low.u32 %v8559
  %v8561 = vextract.high.u32 %v8559
  %v8562 = vmul.u32 %v8555, %v8546
  %v8563 = vadd.s32 %v8558, %v8560
  %vm8564 = vc.u32 %v8558, %v8560
  %v8565 = vadd.s32 %v8561, 1
  %v8566 = vsel %vm8564, %v8565, %v8561
  %v8567 = vadd.s32 %v8562, %v8566
  %v8568 = vadd.s32 %v8567, 536870912
  %v8569 = vshrl.u32 %v8568, 30
  %v8570 = vshll.u32 %v8569, 30
  %v8571 = vsub.s32 %v8567, %v8570
  %vm8572 = vcmp.lt.s32.totalorder %v8571, 0
  %v8573 = vsub.s32 0, %v8571
  %v8574 = vsel %vm8572, %v8573, %v8571
  %v8575 = vclz %v8574
  %v8576 = vsub.s32 %v8575, 2
  %vm8577 = vcmp.gt.s32.totalorder 0, %v8576
  %v8578 = vsel %vm8577, 0, %v8576
  %v8579 = vsub.s32 32, %v8578
  %v8580 = vshll.u32 %v8571, %v8578
  %v8581 = vshrl.u32 %v8563, %v8579
  %v8582 = vor.u32 %v8580, %v8581
  %v8583 = vsub.s32 4294967266, %v8578
  %v8584 = vadd.s32 %v8583, 127
  %v8585 = vshll.u32 %v8584, 23
  %v8586 = vor.u32 4788187, %v8585
  %v8587 = vand.u32 2147483647, %v8586
  %v8589 = vcvt.s32.f32 %v8582
  %v8590 = vmul.f32 %v8589, %v8587
  %v8591 = vxor.u32 %v8590, 2147483648
  %v8592 = vsel %vm8509, %v8591, %v8590
  %v8593 = vsub.s32 4, %v8569
  %v8594 = vsel %vm8509, %v8593, %v8569
  %v8595 = vsel %vm8508, %v2778, %v8592
  %v8596 = vsel %vm8508, 0, %v8594
  %v8597 = vcosq.f32.pop %v8595
  %v8598 = vsinq.f32.pop %v8595
  %vm8599 = vweird.f32 %v2778
  %v8600 = vadd.s32 %v8596, 3
  %v8601 = vand.u32 %v8600, 3
  %vm8602 = vcmp.lt.s32.totalorder %v8601, 2
  %vm8603 = vcmp.eq.s32.totalorder %v8601, 0
  %v8604 = vxor.u32 %v8598, 2147483648
  %v8605 = vsel %vm8603, %v8597, %v8604
  %vm8606 = vcmp.eq.s32.totalorder %v8601, 2
  %v8607 = vxor.u32 %v8597, 2147483648
  %v8608 = vsel %vm8606, %v8607, %v8598
  %v8609 = vsel %vm8602, %v8605, %v8608
  %v8610 = vsel %vm8599, nan, %v8609
  %v8611 = vand.u32 2147483647, %v2779
  %vm8612 = vcmp.le.f32.partialorder %v8611, 0.7853982
  %vm8613 = vcmp.lt.s32.totalorder %v2779, 0
  %v8614 = vand.u32 %v2779, 2139095040
  %v8615 = vshrl.u32 %v8614, 23
  %v8616 = vsub.s32 %v8615, 127
  %v8617 = vand.u32 2147483647, %v2779
  %v8618 = vand.u32 %v8617, 8388607
  %v8619 = vor.u32 %v8618, 8388608
  %v8620 = vsub.s32 0, %v8619
  %v8621 = vadd.s32 %v8616, 1
  %vm8622 = vcmp.gt.s32.totalorder %v8621, 0
  %v8623 = vsel %vm8622, %v8621, 0
  %v8624 = vshrl.u32 %v8623, 5
  %v8625 = vand.u32 %v8623, 31
  %v8626 = vsub.s32 32, %v8625
  %v8627 = vshrl.u32 683565275, %v8626
  %v8628 = vshll.u32 683565275, %v8625
  %v8629 = vshrl.u32 2475754826, %v8626
  %v8630 = vor.u32 %v8628, %v8629
  %v8631 = vshll.u32 2475754826, %v8625
  %v8632 = vshrl.u32 2131351028, %v8626
  %v8633 = vor.u32 %v8631, %v8632
  %v8634 = vshll.u32 2131351028, %v8625
  %v8635 = vshrl.u32 2102212464, %v8626
  %v8636 = vor.u32 %v8634, %v8635
  %v8637 = vshll.u32 2102212464, %v8625
  %v8638 = vshrl.u32 920167782, %v8626
  %v8639 = vor.u32 %v8637, %v8638
  %v8640 = vshll.u32 920167782, %v8625
  %v8641 = vshrl.u32 1326507024, %v8626
  %v8642 = vor.u32 %v8640, %v8641
  %vm8643 = vcmp.lt.s32.totalorder %v8624, 1
  %vm8644 = vcmp.lt.s32.totalorder %v8624, 2
  %vm8645 = vcmp.lt.s32.totalorder %v8624, 3
  %vm8646 = vcmp.lt.s32.totalorder %v8624, 4
  %v8647 = vsel %vm8643, %v8627, %v8630
  %v8648 = vsel %vm8646, %v8636, 2102212464
  %v8649 = vsel %vm8645, %v8633, %v8648
  %v8650 = vsel %vm8644, %v8647, %v8649
  %v8651 = vsel %vm8643, %v8630, %v8633
  %v8652 = vsel %vm8646, %v8639, 920167782
  %v8653 = vsel %vm8645, %v8636, %v8652
  %v8654 = vsel %vm8644, %v8651, %v8653
  %v8655 = vsel %vm8643, %v8633, %v8636
  %v8656 = vsel %vm8646, %v8642, 1326507024
  %v8657 = vsel %vm8645, %v8639, %v8656
  %v8658 = vsel %vm8644, %v8655, %v8657
  %v8659 = vshll.u32 %v8619, 8
  %v8660 = vmul.u32.u64.compose %v8659, %v8658
  %v8661 = vextract.low.u32 %v8660
  %v8662 = vextract.high.u32 %v8660
  %v8663 = vmul.u32.u64.compose %v8659, %v8654
  %v8664 = vextract.low.u32 %v8663
  %v8665 = vextract.high.u32 %v8663
  %v8666 = vmul.u32 %v8659, %v8650
  %v8667 = vadd.s32 %v8662, %v8664
  %vm8668 = vc.u32 %v8662, %v8664
  %v8669 = vadd.s32 %v8665, 1
  %v8670 = vsel %vm8668, %v8669, %v8665
  %v8671 = vadd.s32 %v8666, %v8670
  %v8672 = vadd.s32 %v8671, 536870912
  %v8673 = vshrl.u32 %v8672, 30
  %v8674 = vshll.u32 %v8673, 30
  %v8675 = vsub.s32 %v8671, %v8674
  %vm8676 = vcmp.lt.s32.totalorder %v8675, 0
  %v8677 = vsub.s32 0, %v8675
  %v8678 = vsel %vm8676, %v8677, %v8675
  %v8679 = vclz %v8678
  %v8680 = vsub.s32 %v8679, 2
  %vm8681 = vcmp.gt.s32.totalorder 0, %v8680
  %v8682 = vsel %vm8681, 0, %v8680
  %v8683 = vsub.s32 32, %v8682
  %v8684 = vshll.u32 %v8675, %v8682
  %v8685 = vshrl.u32 %v8667, %v8683
  %v8686 = vor.u32 %v8684, %v8685
  %v8687 = vsub.s32 4294967266, %v8682
  %v8688 = vadd.s32 %v8687, 127
  %v8689 = vshll.u32 %v8688, 23
  %v8690 = vor.u32 4788187, %v8689
  %v8691 = vand.u32 2147483647, %v8690
  %v8693 = vcvt.s32.f32 %v8686
  %v8694 = vmul.f32 %v8693, %v8691
  %v8695 = vxor.u32 %v8694, 2147483648
  %v8696 = vsel %vm8613, %v8695, %v8694
  %v8697 = vsub.s32 4, %v8673
  %v8698 = vsel %vm8613, %v8697, %v8673
  %v8699 = vsel %vm8612, %v2779, %v8696
  %v8700 = vsel %vm8612, 0, %v8698
  %v8701 = vcosq.f32.pop %v8699
  %v8702 = vsinq.f32.pop %v8699
  %vm8703 = vweird.f32 %v2779
  %v8704 = vadd.s32 %v8700, 3
  %v8705 = vand.u32 %v8704, 3
  %vm8706 = vcmp.lt.s32.totalorder %v8705, 2
  %vm8707 = vcmp.eq.s32.totalorder %v8705, 0
  %v8708 = vxor.u32 %v8702, 2147483648
  %v8709 = vsel %vm8707, %v8701, %v8708
  %vm8710 = vcmp.eq.s32.totalorder %v8705, 2
  %v8711 = vxor.u32 %v8701, 2147483648
  %v8712 = vsel %vm8710, %v8711, %v8702
  %v8713 = vsel %vm8706, %v8709, %v8712
  %v8714 = vsel %vm8703, nan, %v8713
  %v8715 = vand.u32 2147483647, %v2780
  %vm8716 = vcmp.le.f32.partialorder %v8715, 0.7853982
  %vm8717 = vcmp.lt.s32.totalorder %v2780, 0
  %v8718 = vand.u32 %v2780, 2139095040
  %v8719 = vshrl.u32 %v8718, 23
  %v8720 = vsub.s32 %v8719, 127
  %v8721 = vand.u32 2147483647, %v2780
  %v8722 = vand.u32 %v8721, 8388607
  %v8723 = vor.u32 %v8722, 8388608
  %v8724 = vsub.s32 0, %v8723
  %v8725 = vadd.s32 %v8720, 1
  %vm8726 = vcmp.gt.s32.totalorder %v8725, 0
  %v8727 = vsel %vm8726, %v8725, 0
  %v8728 = vshrl.u32 %v8727, 5
  %v8729 = vand.u32 %v8727, 31
  %v8730 = vsub.s32 32, %v8729
  %v8731 = vshrl.u32 683565275, %v8730
  %v8732 = vshll.u32 683565275, %v8729
  %v8733 = vshrl.u32 2475754826, %v8730
  %v8734 = vor.u32 %v8732, %v8733
  %v8735 = vshll.u32 2475754826, %v8729
  %v8736 = vshrl.u32 2131351028, %v8730
  %v8737 = vor.u32 %v8735, %v8736
  %v8738 = vshll.u32 2131351028, %v8729
  %v8739 = vshrl.u32 2102212464, %v8730
  %v8740 = vor.u32 %v8738, %v8739
  %v8741 = vshll.u32 2102212464, %v8729
  %v8742 = vshrl.u32 920167782, %v8730
  %v8743 = vor.u32 %v8741, %v8742
  %v8744 = vshll.u32 920167782, %v8729
  %v8745 = vshrl.u32 1326507024, %v8730
  %v8746 = vor.u32 %v8744, %v8745
  %vm8747 = vcmp.lt.s32.totalorder %v8728, 1
  %vm8748 = vcmp.lt.s32.totalorder %v8728, 2
  %vm8749 = vcmp.lt.s32.totalorder %v8728, 3
  %vm8750 = vcmp.lt.s32.totalorder %v8728, 4
  %v8751 = vsel %vm8747, %v8731, %v8734
  %v8752 = vsel %vm8750, %v8740, 2102212464
  %v8753 = vsel %vm8749, %v8737, %v8752
  %v8754 = vsel %vm8748, %v8751, %v8753
  %v8755 = vsel %vm8747, %v8734, %v8737
  %v8756 = vsel %vm8750, %v8743, 920167782
  %v8757 = vsel %vm8749, %v8740, %v8756
  %v8758 = vsel %vm8748, %v8755, %v8757
  %v8759 = vsel %vm8747, %v8737, %v8740
  %v8760 = vsel %vm8750, %v8746, 1326507024
  %v8761 = vsel %vm8749, %v8743, %v8760
  %v8762 = vsel %vm8748, %v8759, %v8761
  %v8763 = vshll.u32 %v8723, 8
  %v8764 = vmul.u32.u64.compose %v8763, %v8762
  %v8765 = vextract.low.u32 %v8764
  %v8766 = vextract.high.u32 %v8764
  %v8767 = vmul.u32.u64.compose %v8763, %v8758
  %v8768 = vextract.low.u32 %v8767
  %v8769 = vextract.high.u32 %v8767
  %v8770 = vmul.u32 %v8763, %v8754
  %v8771 = vadd.s32 %v8766, %v8768
  %vm8772 = vc.u32 %v8766, %v8768
  %v8773 = vadd.s32 %v8769, 1
  %v8774 = vsel %vm8772, %v8773, %v8769
  %v8775 = vadd.s32 %v8770, %v8774
  %v8776 = vadd.s32 %v8775, 536870912
  %v8777 = vshrl.u32 %v8776, 30
  %v8778 = vshll.u32 %v8777, 30
  %v8779 = vsub.s32 %v8775, %v8778
  %vm8780 = vcmp.lt.s32.totalorder %v8779, 0
  %v8781 = vsub.s32 0, %v8779
  %v8782 = vsel %vm8780, %v8781, %v8779
  %v8783 = vclz %v8782
  %v8784 = vsub.s32 %v8783, 2
  %vm8785 = vcmp.gt.s32.totalorder 0, %v8784
  %v8786 = vsel %vm8785, 0, %v8784
  %v8787 = vsub.s32 32, %v8786
  %v8788 = vshll.u32 %v8779, %v8786
  %v8789 = vshrl.u32 %v8771, %v8787
  %v8790 = vor.u32 %v8788, %v8789
  %v8791 = vsub.s32 4294967266, %v8786
  %v8792 = vadd.s32 %v8791, 127
  %v8793 = vshll.u32 %v8792, 23
  %v8794 = vor.u32 4788187, %v8793
  %v8795 = vand.u32 2147483647, %v8794
  %v8797 = vcvt.s32.f32 %v8790
  %v8798 = vmul.f32 %v8797, %v8795
  %v8799 = vxor.u32 %v8798, 2147483648
  %v8800 = vsel %vm8717, %v8799, %v8798
  %v8801 = vsub.s32 4, %v8777
  %v8802 = vsel %vm8717, %v8801, %v8777
  %v8803 = vsel %vm8716, %v2780, %v8800
  %v8804 = vsel %vm8716, 0, %v8802
  %v8805 = vcosq.f32.pop %v8803
  %v8806 = vsinq.f32.pop %v8803
  %vm8807 = vweird.f32 %v2780
  %v8808 = vadd.s32 %v8804, 3
  %v8809 = vand.u32 %v8808, 3
  %vm8810 = vcmp.lt.s32.totalorder %v8809, 2
  %vm8811 = vcmp.eq.s32.totalorder %v8809, 0
  %v8812 = vxor.u32 %v8806, 2147483648
  %v8813 = vsel %vm8811, %v8805, %v8812
  %vm8814 = vcmp.eq.s32.totalorder %v8809, 2
  %v8815 = vxor.u32 %v8805, 2147483648
  %v8816 = vsel %vm8814, %v8815, %v8806
  %v8817 = vsel %vm8810, %v8813, %v8816
  %v8818 = vsel %vm8807, nan, %v8817
  %v8819 = vand.u32 2147483647, %v2781
  %vm8820 = vcmp.le.f32.partialorder %v8819, 0.7853982
  %vm8821 = vcmp.lt.s32.totalorder %v2781, 0
  %v8822 = vand.u32 %v2781, 2139095040
  %v8823 = vshrl.u32 %v8822, 23
  %v8824 = vsub.s32 %v8823, 127
  %v8825 = vand.u32 2147483647, %v2781
  %v8826 = vand.u32 %v8825, 8388607
  %v8827 = vor.u32 %v8826, 8388608
  %v8828 = vsub.s32 0, %v8827
  %v8829 = vadd.s32 %v8824, 1
  %vm8830 = vcmp.gt.s32.totalorder %v8829, 0
  %v8831 = vsel %vm8830, %v8829, 0
  %v8832 = vshrl.u32 %v8831, 5
  %v8833 = vand.u32 %v8831, 31
  %v8834 = vsub.s32 32, %v8833
  %v8835 = vshrl.u32 683565275, %v8834
  %v8836 = vshll.u32 683565275, %v8833
  %v8837 = vshrl.u32 2475754826, %v8834
  %v8838 = vor.u32 %v8836, %v8837
  %v8839 = vshll.u32 2475754826, %v8833
  %v8840 = vshrl.u32 2131351028, %v8834
  %v8841 = vor.u32 %v8839, %v8840
  %v8842 = vshll.u32 2131351028, %v8833
  %v8843 = vshrl.u32 2102212464, %v8834
  %v8844 = vor.u32 %v8842, %v8843
  %v8845 = vshll.u32 2102212464, %v8833
  %v8846 = vshrl.u32 920167782, %v8834
  %v8847 = vor.u32 %v8845, %v8846
  %v8848 = vshll.u32 920167782, %v8833
  %v8849 = vshrl.u32 1326507024, %v8834
  %v8850 = vor.u32 %v8848, %v8849
  %vm8851 = vcmp.lt.s32.totalorder %v8832, 1
  %vm8852 = vcmp.lt.s32.totalorder %v8832, 2
  %vm8853 = vcmp.lt.s32.totalorder %v8832, 3
  %vm8854 = vcmp.lt.s32.totalorder %v8832, 4
  %v8855 = vsel %vm8851, %v8835, %v8838
  %v8856 = vsel %vm8854, %v8844, 2102212464
  %v8857 = vsel %vm8853, %v8841, %v8856
  %v8858 = vsel %vm8852, %v8855, %v8857
  %v8859 = vsel %vm8851, %v8838, %v8841
  %v8860 = vsel %vm8854, %v8847, 920167782
  %v8861 = vsel %vm8853, %v8844, %v8860
  %v8862 = vsel %vm8852, %v8859, %v8861
  %v8863 = vsel %vm8851, %v8841, %v8844
  %v8864 = vsel %vm8854, %v8850, 1326507024
  %v8865 = vsel %vm8853, %v8847, %v8864
  %v8866 = vsel %vm8852, %v8863, %v8865
  %v8867 = vshll.u32 %v8827, 8
  %v8868 = vmul.u32.u64.compose %v8867, %v8866
  %v8869 = vextract.low.u32 %v8868
  %v8870 = vextract.high.u32 %v8868
  %v8871 = vmul.u32.u64.compose %v8867, %v8862
  %v8872 = vextract.low.u32 %v8871
  %v8873 = vextract.high.u32 %v8871
  %v8874 = vmul.u32 %v8867, %v8858
  %v8875 = vadd.s32 %v8870, %v8872
  %vm8876 = vc.u32 %v8870, %v8872
  %v8877 = vadd.s32 %v8873, 1
  %v8878 = vsel %vm8876, %v8877, %v8873
  %v8879 = vadd.s32 %v8874, %v8878
  %v8880 = vadd.s32 %v8879, 536870912
  %v8881 = vshrl.u32 %v8880, 30
  %v8882 = vshll.u32 %v8881, 30
  %v8883 = vsub.s32 %v8879, %v8882
  %vm8884 = vcmp.lt.s32.totalorder %v8883, 0
  %v8885 = vsub.s32 0, %v8883
  %v8886 = vsel %vm8884, %v8885, %v8883
  %v8887 = vclz %v8886
  %v8888 = vsub.s32 %v8887, 2
  %vm8889 = vcmp.gt.s32.totalorder 0, %v8888
  %v8890 = vsel %vm8889, 0, %v8888
  %v8891 = vsub.s32 32, %v8890
  %v8892 = vshll.u32 %v8883, %v8890
  %v8893 = vshrl.u32 %v8875, %v8891
  %v8894 = vor.u32 %v8892, %v8893
  %v8895 = vsub.s32 4294967266, %v8890
  %v8896 = vadd.s32 %v8895, 127
  %v8897 = vshll.u32 %v8896, 23
  %v8898 = vor.u32 4788187, %v8897
  %v8899 = vand.u32 2147483647, %v8898
  %v8901 = vcvt.s32.f32 %v8894
  %v8902 = vmul.f32 %v8901, %v8899
  %v8903 = vxor.u32 %v8902, 2147483648
  %v8904 = vsel %vm8821, %v8903, %v8902
  %v8905 = vsub.s32 4, %v8881
  %v8906 = vsel %vm8821, %v8905, %v8881
  %v8907 = vsel %vm8820, %v2781, %v8904
  %v8908 = vsel %vm8820, 0, %v8906
  %v8909 = vcosq.f32.pop %v8907
  %v8910 = vsinq.f32.pop %v8907
  %vm8911 = vweird.f32 %v2781
  %v8912 = vadd.s32 %v8908, 3
  %v8913 = vand.u32 %v8912, 3
  %vm8914 = vcmp.lt.s32.totalorder %v8913, 2
  %vm8915 = vcmp.eq.s32.totalorder %v8913, 0
  %v8916 = vxor.u32 %v8910, 2147483648
  %v8917 = vsel %vm8915, %v8909, %v8916
  %vm8918 = vcmp.eq.s32.totalorder %v8913, 2
  %v8919 = vxor.u32 %v8909, 2147483648
  %v8920 = vsel %vm8918, %v8919, %v8910
  %v8921 = vsel %vm8914, %v8917, %v8920
  %v8922 = vsel %vm8911, nan, %v8921
  %v8923 = vand.u32 2147483647, %v2782
  %vm8924 = vcmp.le.f32.partialorder %v8923, 0.7853982
  %vm8925 = vcmp.lt.s32.totalorder %v2782, 0
  %v8926 = vand.u32 %v2782, 2139095040
  %v8927 = vshrl.u32 %v8926, 23
  %v8928 = vsub.s32 %v8927, 127
  %v8929 = vand.u32 2147483647, %v2782
  %v8930 = vand.u32 %v8929, 8388607
  %v8931 = vor.u32 %v8930, 8388608
  %v8932 = vsub.s32 0, %v8931
  %v8933 = vadd.s32 %v8928, 1
  %vm8934 = vcmp.gt.s32.totalorder %v8933, 0
  %v8935 = vsel %vm8934, %v8933, 0
  %v8936 = vshrl.u32 %v8935, 5
  %v8937 = vand.u32 %v8935, 31
  %v8938 = vsub.s32 32, %v8937
  %v8939 = vshrl.u32 683565275, %v8938
  %v8940 = vshll.u32 683565275, %v8937
  %v8941 = vshrl.u32 2475754826, %v8938
  %v8942 = vor.u32 %v8940, %v8941
  %v8943 = vshll.u32 2475754826, %v8937
  %v8944 = vshrl.u32 2131351028, %v8938
  %v8945 = vor.u32 %v8943, %v8944
  %v8946 = vshll.u32 2131351028, %v8937
  %v8947 = vshrl.u32 2102212464, %v8938
  %v8948 = vor.u32 %v8946, %v8947
  %v8949 = vshll.u32 2102212464, %v8937
  %v8950 = vshrl.u32 920167782, %v8938
  %v8951 = vor.u32 %v8949, %v8950
  %v8952 = vshll.u32 920167782, %v8937
  %v8953 = vshrl.u32 1326507024, %v8938
  %v8954 = vor.u32 %v8952, %v8953
  %vm8955 = vcmp.lt.s32.totalorder %v8936, 1
  %vm8956 = vcmp.lt.s32.totalorder %v8936, 2
  %vm8957 = vcmp.lt.s32.totalorder %v8936, 3
  %vm8958 = vcmp.lt.s32.totalorder %v8936, 4
  %v8959 = vsel %vm8955, %v8939, %v8942
  %v8960 = vsel %vm8958, %v8948, 2102212464
  %v8961 = vsel %vm8957, %v8945, %v8960
  %v8962 = vsel %vm8956, %v8959, %v8961
  %v8963 = vsel %vm8955, %v8942, %v8945
  %v8964 = vsel %vm8958, %v8951, 920167782
  %v8965 = vsel %vm8957, %v8948, %v8964
  %v8966 = vsel %vm8956, %v8963, %v8965
  %v8967 = vsel %vm8955, %v8945, %v8948
  %v8968 = vsel %vm8958, %v8954, 1326507024
  %v8969 = vsel %vm8957, %v8951, %v8968
  %v8970 = vsel %vm8956, %v8967, %v8969
  %v8971 = vshll.u32 %v8931, 8
  %v8972 = vmul.u32.u64.compose %v8971, %v8970
  %v8973 = vextract.low.u32 %v8972
  %v8974 = vextract.high.u32 %v8972
  %v8975 = vmul.u32.u64.compose %v8971, %v8966
  %v8976 = vextract.low.u32 %v8975
  %v8977 = vextract.high.u32 %v8975
  %v8978 = vmul.u32 %v8971, %v8962
  %v8979 = vadd.s32 %v8974, %v8976
  %vm8980 = vc.u32 %v8974, %v8976
  %v8981 = vadd.s32 %v8977, 1
  %v8982 = vsel %vm8980, %v8981, %v8977
  %v8983 = vadd.s32 %v8978, %v8982
  %v8984 = vadd.s32 %v8983, 536870912
  %v8985 = vshrl.u32 %v8984, 30
  %v8986 = vshll.u32 %v8985, 30
  %v8987 = vsub.s32 %v8983, %v8986
  %vm8988 = vcmp.lt.s32.totalorder %v8987, 0
  %v8989 = vsub.s32 0, %v8987
  %v8990 = vsel %vm8988, %v8989, %v8987
  %v8991 = vclz %v8990
  %v8992 = vsub.s32 %v8991, 2
  %vm8993 = vcmp.gt.s32.totalorder 0, %v8992
  %v8994 = vsel %vm8993, 0, %v8992
  %v8995 = vsub.s32 32, %v8994
  %v8996 = vshll.u32 %v8987, %v8994
  %v8997 = vshrl.u32 %v8979, %v8995
  %v8998 = vor.u32 %v8996, %v8997
  %v8999 = vsub.s32 4294967266, %v8994
  %v9000 = vadd.s32 %v8999, 127
  %v9001 = vshll.u32 %v9000, 23
  %v9002 = vor.u32 4788187, %v9001
  %v9003 = vand.u32 2147483647, %v9002
  %v9005 = vcvt.s32.f32 %v8998
  %v9006 = vmul.f32 %v9005, %v9003
  %v9007 = vxor.u32 %v9006, 2147483648
  %v9008 = vsel %vm8925, %v9007, %v9006
  %v9009 = vsub.s32 4, %v8985
  %v9010 = vsel %vm8925, %v9009, %v8985
  %v9011 = vsel %vm8924, %v2782, %v9008
  %v9012 = vsel %vm8924, 0, %v9010
  %v9013 = vcosq.f32.pop %v9011
  %v9014 = vsinq.f32.pop %v9011
  %vm9015 = vweird.f32 %v2782
  %v9016 = vadd.s32 %v9012, 3
  %v9017 = vand.u32 %v9016, 3
  %vm9018 = vcmp.lt.s32.totalorder %v9017, 2
  %vm9019 = vcmp.eq.s32.totalorder %v9017, 0
  %v9020 = vxor.u32 %v9014, 2147483648
  %v9021 = vsel %vm9019, %v9013, %v9020
  %vm9022 = vcmp.eq.s32.totalorder %v9017, 2
  %v9023 = vxor.u32 %v9013, 2147483648
  %v9024 = vsel %vm9022, %v9023, %v9014
  %v9025 = vsel %vm9018, %v9021, %v9024
  %v9026 = vsel %vm9015, nan, %v9025
  %v9027 = vand.u32 2147483647, %v2783
  %vm9028 = vcmp.le.f32.partialorder %v9027, 0.7853982
  %vm9029 = vcmp.lt.s32.totalorder %v2783, 0
  %v9030 = vand.u32 %v2783, 2139095040
  %v9031 = vshrl.u32 %v9030, 23
  %v9032 = vsub.s32 %v9031, 127
  %v9033 = vand.u32 2147483647, %v2783
  %v9034 = vand.u32 %v9033, 8388607
  %v9035 = vor.u32 %v9034, 8388608
  %v9036 = vsub.s32 0, %v9035
  %v9037 = vadd.s32 %v9032, 1
  %vm9038 = vcmp.gt.s32.totalorder %v9037, 0
  %v9039 = vsel %vm9038, %v9037, 0
  %v9040 = vshrl.u32 %v9039, 5
  %v9041 = vand.u32 %v9039, 31
  %v9042 = vsub.s32 32, %v9041
  %v9043 = vshrl.u32 683565275, %v9042
  %v9044 = vshll.u32 683565275, %v9041
  %v9045 = vshrl.u32 2475754826, %v9042
  %v9046 = vor.u32 %v9044, %v9045
  %v9047 = vshll.u32 2475754826, %v9041
  %v9048 = vshrl.u32 2131351028, %v9042
  %v9049 = vor.u32 %v9047, %v9048
  %v9050 = vshll.u32 2131351028, %v9041
  %v9051 = vshrl.u32 2102212464, %v9042
  %v9052 = vor.u32 %v9050, %v9051
  %v9053 = vshll.u32 2102212464, %v9041
  %v9054 = vshrl.u32 920167782, %v9042
  %v9055 = vor.u32 %v9053, %v9054
  %v9056 = vshll.u32 920167782, %v9041
  %v9057 = vshrl.u32 1326507024, %v9042
  %v9058 = vor.u32 %v9056, %v9057
  %vm9059 = vcmp.lt.s32.totalorder %v9040, 1
  %vm9060 = vcmp.lt.s32.totalorder %v9040, 2
  %vm9061 = vcmp.lt.s32.totalorder %v9040, 3
  %vm9062 = vcmp.lt.s32.totalorder %v9040, 4
  %v9063 = vsel %vm9059, %v9043, %v9046
  %v9064 = vsel %vm9062, %v9052, 2102212464
  %v9065 = vsel %vm9061, %v9049, %v9064
  %v9066 = vsel %vm9060, %v9063, %v9065
  %v9067 = vsel %vm9059, %v9046, %v9049
  %v9068 = vsel %vm9062, %v9055, 920167782
  %v9069 = vsel %vm9061, %v9052, %v9068
  %v9070 = vsel %vm9060, %v9067, %v9069
  %v9071 = vsel %vm9059, %v9049, %v9052
  %v9072 = vsel %vm9062, %v9058, 1326507024
  %v9073 = vsel %vm9061, %v9055, %v9072
  %v9074 = vsel %vm9060, %v9071, %v9073
  %v9075 = vshll.u32 %v9035, 8
  %v9076 = vmul.u32.u64.compose %v9075, %v9074
  %v9077 = vextract.low.u32 %v9076
  %v9078 = vextract.high.u32 %v9076
  %v9079 = vmul.u32.u64.compose %v9075, %v9070
  %v9080 = vextract.low.u32 %v9079
  %v9081 = vextract.high.u32 %v9079
  %v9082 = vmul.u32 %v9075, %v9066
  %v9083 = vadd.s32 %v9078, %v9080
  %vm9084 = vc.u32 %v9078, %v9080
  %v9085 = vadd.s32 %v9081, 1
  %v9086 = vsel %vm9084, %v9085, %v9081
  %v9087 = vadd.s32 %v9082, %v9086
  %v9088 = vadd.s32 %v9087, 536870912
  %v9089 = vshrl.u32 %v9088, 30
  %v9090 = vshll.u32 %v9089, 30
  %v9091 = vsub.s32 %v9087, %v9090
  %vm9092 = vcmp.lt.s32.totalorder %v9091, 0
  %v9093 = vsub.s32 0, %v9091
  %v9094 = vsel %vm9092, %v9093, %v9091
  %v9095 = vclz %v9094
  %v9096 = vsub.s32 %v9095, 2
  %vm9097 = vcmp.gt.s32.totalorder 0, %v9096
  %v9098 = vsel %vm9097, 0, %v9096
  %v9099 = vsub.s32 32, %v9098
  %v9100 = vshll.u32 %v9091, %v9098
  %v9101 = vshrl.u32 %v9083, %v9099
  %v9102 = vor.u32 %v9100, %v9101
  %v9103 = vsub.s32 4294967266, %v9098
  %v9104 = vadd.s32 %v9103, 127
  %v9105 = vshll.u32 %v9104, 23
  %v9106 = vor.u32 4788187, %v9105
  %v9107 = vand.u32 2147483647, %v9106
  %v9109 = vcvt.s32.f32 %v9102
  %v9110 = vmul.f32 %v9109, %v9107
  %v9111 = vxor.u32 %v9110, 2147483648
  %v9112 = vsel %vm9029, %v9111, %v9110
  %v9113 = vsub.s32 4, %v9089
  %v9114 = vsel %vm9029, %v9113, %v9089
  %v9115 = vsel %vm9028, %v2783, %v9112
  %v9116 = vsel %vm9028, 0, %v9114
  %v9117 = vcosq.f32.pop %v9115
  %v9118 = vsinq.f32.pop %v9115
  %vm9119 = vweird.f32 %v2783
  %v9120 = vadd.s32 %v9116, 3
  %v9121 = vand.u32 %v9120, 3
  %vm9122 = vcmp.lt.s32.totalorder %v9121, 2
  %vm9123 = vcmp.eq.s32.totalorder %v9121, 0
  %v9124 = vxor.u32 %v9118, 2147483648
  %v9125 = vsel %vm9123, %v9117, %v9124
  %vm9126 = vcmp.eq.s32.totalorder %v9121, 2
  %v9127 = vxor.u32 %v9117, 2147483648
  %v9128 = vsel %vm9126, %v9127, %v9118
  %v9129 = vsel %vm9122, %v9125, %v9128
  %v9130 = vsel %vm9119, nan, %v9129
  %v9131 = vand.u32 2147483647, %v2784
  %vm9132 = vcmp.le.f32.partialorder %v9131, 0.7853982
  %vm9133 = vcmp.lt.s32.totalorder %v2784, 0
  %v9134 = vand.u32 %v2784, 2139095040
  %v9135 = vshrl.u32 %v9134, 23
  %v9136 = vsub.s32 %v9135, 127
  %v9137 = vand.u32 2147483647, %v2784
  %v9138 = vand.u32 %v9137, 8388607
  %v9139 = vor.u32 %v9138, 8388608
  %v9140 = vsub.s32 0, %v9139
  %v9141 = vadd.s32 %v9136, 1
  %vm9142 = vcmp.gt.s32.totalorder %v9141, 0
  %v9143 = vsel %vm9142, %v9141, 0
  %v9144 = vshrl.u32 %v9143, 5
  %v9145 = vand.u32 %v9143, 31
  %v9146 = vsub.s32 32, %v9145
  %v9147 = vshrl.u32 683565275, %v9146
  %v9148 = vshll.u32 683565275, %v9145
  %v9149 = vshrl.u32 2475754826, %v9146
  %v9150 = vor.u32 %v9148, %v9149
  %v9151 = vshll.u32 2475754826, %v9145
  %v9152 = vshrl.u32 2131351028, %v9146
  %v9153 = vor.u32 %v9151, %v9152
  %v9154 = vshll.u32 2131351028, %v9145
  %v9155 = vshrl.u32 2102212464, %v9146
  %v9156 = vor.u32 %v9154, %v9155
  %v9157 = vshll.u32 2102212464, %v9145
  %v9158 = vshrl.u32 920167782, %v9146
  %v9159 = vor.u32 %v9157, %v9158
  %v9160 = vshll.u32 920167782, %v9145
  %v9161 = vshrl.u32 1326507024, %v9146
  %v9162 = vor.u32 %v9160, %v9161
  %vm9163 = vcmp.lt.s32.totalorder %v9144, 1
  %vm9164 = vcmp.lt.s32.totalorder %v9144, 2
  %vm9165 = vcmp.lt.s32.totalorder %v9144, 3
  %vm9166 = vcmp.lt.s32.totalorder %v9144, 4
  %v9167 = vsel %vm9163, %v9147, %v9150
  %v9168 = vsel %vm9166, %v9156, 2102212464
  %v9169 = vsel %vm9165, %v9153, %v9168
  %v9170 = vsel %vm9164, %v9167, %v9169
  %v9171 = vsel %vm9163, %v9150, %v9153
  %v9172 = vsel %vm9166, %v9159, 920167782
  %v9173 = vsel %vm9165, %v9156, %v9172
  %v9174 = vsel %vm9164, %v9171, %v9173
  %v9175 = vsel %vm9163, %v9153, %v9156
  %v9176 = vsel %vm9166, %v9162, 1326507024
  %v9177 = vsel %vm9165, %v9159, %v9176
  %v9178 = vsel %vm9164, %v9175, %v9177
  %v9179 = vshll.u32 %v9139, 8
  %v9180 = vmul.u32.u64.compose %v9179, %v9178
  %v9181 = vextract.low.u32 %v9180
  %v9182 = vextract.high.u32 %v9180
  %v9183 = vmul.u32.u64.compose %v9179, %v9174
  %v9184 = vextract.low.u32 %v9183
  %v9185 = vextract.high.u32 %v9183
  %v9186 = vmul.u32 %v9179, %v9170
  %v9187 = vadd.s32 %v9182, %v9184
  %vm9188 = vc.u32 %v9182, %v9184
  %v9189 = vadd.s32 %v9185, 1
  %v9190 = vsel %vm9188, %v9189, %v9185
  %v9191 = vadd.s32 %v9186, %v9190
  %v9192 = vadd.s32 %v9191, 536870912
  %v9193 = vshrl.u32 %v9192, 30
  %v9194 = vshll.u32 %v9193, 30
  %v9195 = vsub.s32 %v9191, %v9194
  %vm9196 = vcmp.lt.s32.totalorder %v9195, 0
  %v9197 = vsub.s32 0, %v9195
  %v9198 = vsel %vm9196, %v9197, %v9195
  %v9199 = vclz %v9198
  %v9200 = vsub.s32 %v9199, 2
  %vm9201 = vcmp.gt.s32.totalorder 0, %v9200
  %v9202 = vsel %vm9201, 0, %v9200
  %v9203 = vsub.s32 32, %v9202
  %v9204 = vshll.u32 %v9195, %v9202
  %v9205 = vshrl.u32 %v9187, %v9203
  %v9206 = vor.u32 %v9204, %v9205
  %v9207 = vsub.s32 4294967266, %v9202
  %v9208 = vadd.s32 %v9207, 127
  %v9209 = vshll.u32 %v9208, 23
  %v9210 = vor.u32 4788187, %v9209
  %v9211 = vand.u32 2147483647, %v9210
  %v9213 = vcvt.s32.f32 %v9206
  %v9214 = vmul.f32 %v9213, %v9211
  %v9215 = vxor.u32 %v9214, 2147483648
  %v9216 = vsel %vm9133, %v9215, %v9214
  %v9217 = vsub.s32 4, %v9193
  %v9218 = vsel %vm9133, %v9217, %v9193
  %v9219 = vsel %vm9132, %v2784, %v9216
  %v9220 = vsel %vm9132, 0, %v9218
  %v9221 = vcosq.f32.pop %v9219
  %v9222 = vsinq.f32.pop %v9219
  %vm9223 = vweird.f32 %v2784
  %v9224 = vadd.s32 %v9220, 3
  %v9225 = vand.u32 %v9224, 3
  %vm9226 = vcmp.lt.s32.totalorder %v9225, 2
  %vm9227 = vcmp.eq.s32.totalorder %v9225, 0
  %v9228 = vxor.u32 %v9222, 2147483648
  %v9229 = vsel %vm9227, %v9221, %v9228
  %vm9230 = vcmp.eq.s32.totalorder %v9225, 2
  %v9231 = vxor.u32 %v9221, 2147483648
  %v9232 = vsel %vm9230, %v9231, %v9222
  %v9233 = vsel %vm9226, %v9229, %v9232
  %v9234 = vsel %vm9223, nan, %v9233
  %v9235 = vand.u32 2147483647, %v2785
  %vm9236 = vcmp.le.f32.partialorder %v9235, 0.7853982
  %vm9237 = vcmp.lt.s32.totalorder %v2785, 0
  %v9238 = vand.u32 %v2785, 2139095040
  %v9239 = vshrl.u32 %v9238, 23
  %v9240 = vsub.s32 %v9239, 127
  %v9241 = vand.u32 2147483647, %v2785
  %v9242 = vand.u32 %v9241, 8388607
  %v9243 = vor.u32 %v9242, 8388608
  %v9244 = vsub.s32 0, %v9243
  %v9245 = vadd.s32 %v9240, 1
  %vm9246 = vcmp.gt.s32.totalorder %v9245, 0
  %v9247 = vsel %vm9246, %v9245, 0
  %v9248 = vshrl.u32 %v9247, 5
  %v9249 = vand.u32 %v9247, 31
  %v9250 = vsub.s32 32, %v9249
  %v9251 = vshrl.u32 683565275, %v9250
  %v9252 = vshll.u32 683565275, %v9249
  %v9253 = vshrl.u32 2475754826, %v9250
  %v9254 = vor.u32 %v9252, %v9253
  %v9255 = vshll.u32 2475754826, %v9249
  %v9256 = vshrl.u32 2131351028, %v9250
  %v9257 = vor.u32 %v9255, %v9256
  %v9258 = vshll.u32 2131351028, %v9249
  %v9259 = vshrl.u32 2102212464, %v9250
  %v9260 = vor.u32 %v9258, %v9259
  %v9261 = vshll.u32 2102212464, %v9249
  %v9262 = vshrl.u32 920167782, %v9250
  %v9263 = vor.u32 %v9261, %v9262
  %v9264 = vshll.u32 920167782, %v9249
  %v9265 = vshrl.u32 1326507024, %v9250
  %v9266 = vor.u32 %v9264, %v9265
  %vm9267 = vcmp.lt.s32.totalorder %v9248, 1
  %vm9268 = vcmp.lt.s32.totalorder %v9248, 2
  %vm9269 = vcmp.lt.s32.totalorder %v9248, 3
  %vm9270 = vcmp.lt.s32.totalorder %v9248, 4
  %v9271 = vsel %vm9267, %v9251, %v9254
  %v9272 = vsel %vm9270, %v9260, 2102212464
  %v9273 = vsel %vm9269, %v9257, %v9272
  %v9274 = vsel %vm9268, %v9271, %v9273
  %v9275 = vsel %vm9267, %v9254, %v9257
  %v9276 = vsel %vm9270, %v9263, 920167782
  %v9277 = vsel %vm9269, %v9260, %v9276
  %v9278 = vsel %vm9268, %v9275, %v9277
  %v9279 = vsel %vm9267, %v9257, %v9260
  %v9280 = vsel %vm9270, %v9266, 1326507024
  %v9281 = vsel %vm9269, %v9263, %v9280
  %v9282 = vsel %vm9268, %v9279, %v9281
  %v9283 = vshll.u32 %v9243, 8
  %v9284 = vmul.u32.u64.compose %v9283, %v9282
  %v9285 = vextract.low.u32 %v9284
  %v9286 = vextract.high.u32 %v9284
  %v9287 = vmul.u32.u64.compose %v9283, %v9278
  %v9288 = vextract.low.u32 %v9287
  %v9289 = vextract.high.u32 %v9287
  %v9290 = vmul.u32 %v9283, %v9274
  %v9291 = vadd.s32 %v9286, %v9288
  %vm9292 = vc.u32 %v9286, %v9288
  %v9293 = vadd.s32 %v9289, 1
  %v9294 = vsel %vm9292, %v9293, %v9289
  %v9295 = vadd.s32 %v9290, %v9294
  %v9296 = vadd.s32 %v9295, 536870912
  %v9297 = vshrl.u32 %v9296, 30
  %v9298 = vshll.u32 %v9297, 30
  %v9299 = vsub.s32 %v9295, %v9298
  %vm9300 = vcmp.lt.s32.totalorder %v9299, 0
  %v9301 = vsub.s32 0, %v9299
  %v9302 = vsel %vm9300, %v9301, %v9299
  %v9303 = vclz %v9302
  %v9304 = vsub.s32 %v9303, 2
  %vm9305 = vcmp.gt.s32.totalorder 0, %v9304
  %v9306 = vsel %vm9305, 0, %v9304
  %v9307 = vsub.s32 32, %v9306
  %v9308 = vshll.u32 %v9299, %v9306
  %v9309 = vshrl.u32 %v9291, %v9307
  %v9310 = vor.u32 %v9308, %v9309
  %v9311 = vsub.s32 4294967266, %v9306
  %v9312 = vadd.s32 %v9311, 127
  %v9313 = vshll.u32 %v9312, 23
  %v9314 = vor.u32 4788187, %v9313
  %v9315 = vand.u32 2147483647, %v9314
  %v9317 = vcvt.s32.f32 %v9310
  %v9318 = vmul.f32 %v9317, %v9315
  %v9319 = vxor.u32 %v9318, 2147483648
  %v9320 = vsel %vm9237, %v9319, %v9318
  %v9321 = vsub.s32 4, %v9297
  %v9322 = vsel %vm9237, %v9321, %v9297
  %v9323 = vsel %vm9236, %v2785, %v9320
  %v9324 = vsel %vm9236, 0, %v9322
  %v9325 = vcosq.f32.pop %v9323
  %v9326 = vsinq.f32.pop %v9323
  %vm9327 = vweird.f32 %v2785
  %v9328 = vadd.s32 %v9324, 3
  %v9329 = vand.u32 %v9328, 3
  %vm9330 = vcmp.lt.s32.totalorder %v9329, 2
  %vm9331 = vcmp.eq.s32.totalorder %v9329, 0
  %v9332 = vxor.u32 %v9326, 2147483648
  %v9333 = vsel %vm9331, %v9325, %v9332
  %vm9334 = vcmp.eq.s32.totalorder %v9329, 2
  %v9335 = vxor.u32 %v9325, 2147483648
  %v9336 = vsel %vm9334, %v9335, %v9326
  %v9337 = vsel %vm9330, %v9333, %v9336
  %v9338 = vsel %vm9327, nan, %v9337
  %v9339 = vand.u32 2147483647, %v2786
  %vm9340 = vcmp.le.f32.partialorder %v9339, 0.7853982
  %vm9341 = vcmp.lt.s32.totalorder %v2786, 0
  %v9342 = vand.u32 %v2786, 2139095040
  %v9343 = vshrl.u32 %v9342, 23
  %v9344 = vsub.s32 %v9343, 127
  %v9345 = vand.u32 2147483647, %v2786
  %v9346 = vand.u32 %v9345, 8388607
  %v9347 = vor.u32 %v9346, 8388608
  %v9348 = vsub.s32 0, %v9347
  %v9349 = vadd.s32 %v9344, 1
  %vm9350 = vcmp.gt.s32.totalorder %v9349, 0
  %v9351 = vsel %vm9350, %v9349, 0
  %v9352 = vshrl.u32 %v9351, 5
  %v9353 = vand.u32 %v9351, 31
  %v9354 = vsub.s32 32, %v9353
  %v9355 = vshrl.u32 683565275, %v9354
  %v9356 = vshll.u32 683565275, %v9353
  %v9357 = vshrl.u32 2475754826, %v9354
  %v9358 = vor.u32 %v9356, %v9357
  %v9359 = vshll.u32 2475754826, %v9353
  %v9360 = vshrl.u32 2131351028, %v9354
  %v9361 = vor.u32 %v9359, %v9360
  %v9362 = vshll.u32 2131351028, %v9353
  %v9363 = vshrl.u32 2102212464, %v9354
  %v9364 = vor.u32 %v9362, %v9363
  %v9365 = vshll.u32 2102212464, %v9353
  %v9366 = vshrl.u32 920167782, %v9354
  %v9367 = vor.u32 %v9365, %v9366
  %v9368 = vshll.u32 920167782, %v9353
  %v9369 = vshrl.u32 1326507024, %v9354
  %v9370 = vor.u32 %v9368, %v9369
  %vm9371 = vcmp.lt.s32.totalorder %v9352, 1
  %vm9372 = vcmp.lt.s32.totalorder %v9352, 2
  %vm9373 = vcmp.lt.s32.totalorder %v9352, 3
  %vm9374 = vcmp.lt.s32.totalorder %v9352, 4
  %v9375 = vsel %vm9371, %v9355, %v9358
  %v9376 = vsel %vm9374, %v9364, 2102212464
  %v9377 = vsel %vm9373, %v9361, %v9376
  %v9378 = vsel %vm9372, %v9375, %v9377
  %v9379 = vsel %vm9371, %v9358, %v9361
  %v9380 = vsel %vm9374, %v9367, 920167782
  %v9381 = vsel %vm9373, %v9364, %v9380
  %v9382 = vsel %vm9372, %v9379, %v9381
  %v9383 = vsel %vm9371, %v9361, %v9364
  %v9384 = vsel %vm9374, %v9370, 1326507024
  %v9385 = vsel %vm9373, %v9367, %v9384
  %v9386 = vsel %vm9372, %v9383, %v9385
  %v9387 = vshll.u32 %v9347, 8
  %v9388 = vmul.u32.u64.compose %v9387, %v9386
  %v9389 = vextract.low.u32 %v9388
  %v9390 = vextract.high.u32 %v9388
  %v9391 = vmul.u32.u64.compose %v9387, %v9382
  %v9392 = vextract.low.u32 %v9391
  %v9393 = vextract.high.u32 %v9391
  %v9394 = vmul.u32 %v9387, %v9378
  %v9395 = vadd.s32 %v9390, %v9392
  %vm9396 = vc.u32 %v9390, %v9392
  %v9397 = vadd.s32 %v9393, 1
  %v9398 = vsel %vm9396, %v9397, %v9393
  %v9399 = vadd.s32 %v9394, %v9398
  %v9400 = vadd.s32 %v9399, 536870912
  %v9401 = vshrl.u32 %v9400, 30
  %v9402 = vshll.u32 %v9401, 30
  %v9403 = vsub.s32 %v9399, %v9402
  %vm9404 = vcmp.lt.s32.totalorder %v9403, 0
  %v9405 = vsub.s32 0, %v9403
  %v9406 = vsel %vm9404, %v9405, %v9403
  %v9407 = vclz %v9406
  %v9408 = vsub.s32 %v9407, 2
  %vm9409 = vcmp.gt.s32.totalorder 0, %v9408
  %v9410 = vsel %vm9409, 0, %v9408
  %v9411 = vsub.s32 32, %v9410
  %v9412 = vshll.u32 %v9403, %v9410
  %v9413 = vshrl.u32 %v9395, %v9411
  %v9414 = vor.u32 %v9412, %v9413
  %v9415 = vsub.s32 4294967266, %v9410
  %v9416 = vadd.s32 %v9415, 127
  %v9417 = vshll.u32 %v9416, 23
  %v9418 = vor.u32 4788187, %v9417
  %v9419 = vand.u32 2147483647, %v9418
  %v9421 = vcvt.s32.f32 %v9414
  %v9422 = vmul.f32 %v9421, %v9419
  %v9423 = vxor.u32 %v9422, 2147483648
  %v9424 = vsel %vm9341, %v9423, %v9422
  %v9425 = vsub.s32 4, %v9401
  %v9426 = vsel %vm9341, %v9425, %v9401
  %v9427 = vsel %vm9340, %v2786, %v9424
  %v9428 = vsel %vm9340, 0, %v9426
  %v9429 = vcosq.f32.pop %v9427
  %v9430 = vsinq.f32.pop %v9427
  %vm9431 = vweird.f32 %v2786
  %v9432 = vadd.s32 %v9428, 3
  %v9433 = vand.u32 %v9432, 3
  %vm9434 = vcmp.lt.s32.totalorder %v9433, 2
  %vm9435 = vcmp.eq.s32.totalorder %v9433, 0
  %v9436 = vxor.u32 %v9430, 2147483648
  %v9437 = vsel %vm9435, %v9429, %v9436
  %vm9438 = vcmp.eq.s32.totalorder %v9433, 2
  %v9439 = vxor.u32 %v9429, 2147483648
  %v9440 = vsel %vm9438, %v9439, %v9430
  %v9441 = vsel %vm9434, %v9437, %v9440
  %v9442 = vsel %vm9431, nan, %v9441
  %9507 = vrot.lane.b32.xlu0 %v2890, 3
  %v9508 = vpop.permute.xlu0 %9507
  %9509 = vrot.lane.b32.xlu0 %v2994, 3
  %v9510 = vpop.permute.xlu0 %9509
  %9511 = vrot.lane.b32.xlu0 %v3098, 3
  %v9512 = vpop.permute.xlu0 %9511
  %9513 = vrot.lane.b32.xlu0 %v3202, 3
  %v9514 = vpop.permute.xlu0 %9513
  %9515 = vrot.lane.b32.xlu0 %v3306, 3
  %v9516 = vpop.permute.xlu0 %9515
  %9517 = vrot.lane.b32.xlu0 %v3410, 3
  %v9518 = vpop.permute.xlu0 %9517
  %9519 = vrot.lane.b32.xlu0 %v3514, 3
  %v9520 = vpop.permute.xlu0 %9519
  %9521 = vrot.lane.b32.xlu0 %v3618, 3
  %v9522 = vpop.permute.xlu0 %9521
  %9523 = vrot.lane.b32.xlu0 %v3722, 3
  %v9524 = vpop.permute.xlu0 %9523
  %9525 = vrot.lane.b32.xlu0 %v3826, 3
  %v9526 = vpop.permute.xlu0 %9525
  %9527 = vrot.lane.b32.xlu0 %v3930, 3
  %v9528 = vpop.permute.xlu0 %9527
  %9529 = vrot.lane.b32.xlu0 %v4034, 3
  %v9530 = vpop.permute.xlu0 %9529
  %9531 = vrot.lane.b32.xlu0 %v4138, 3
  %v9532 = vpop.permute.xlu0 %9531
  %9533 = vrot.lane.b32.xlu0 %v4242, 3
  %v9534 = vpop.permute.xlu0 %9533
  %9535 = vrot.lane.b32.xlu0 %v4346, 3
  %v9536 = vpop.permute.xlu0 %9535
  %9537 = vrot.lane.b32.xlu0 %v4450, 3
  %v9538 = vpop.permute.xlu0 %9537
  %9539 = vrot.lane.b32.xlu0 %v4554, 3
  %v9540 = vpop.permute.xlu0 %9539
  %9541 = vrot.lane.b32.xlu0 %v4658, 3
  %v9542 = vpop.permute.xlu0 %9541
  %9543 = vrot.lane.b32.xlu0 %v4762, 3
  %v9544 = vpop.permute.xlu0 %9543
  %9545 = vrot.lane.b32.xlu0 %v4866, 3
  %v9546 = vpop.permute.xlu0 %9545
  %9547 = vrot.lane.b32.xlu0 %v4970, 3
  %v9548 = vpop.permute.xlu0 %9547
  %9549 = vrot.lane.b32.xlu0 %v5074, 3
  %v9550 = vpop.permute.xlu0 %9549
  %9551 = vrot.lane.b32.xlu0 %v5178, 3
  %v9552 = vpop.permute.xlu0 %9551
  %9553 = vrot.lane.b32.xlu0 %v5282, 3
  %v9554 = vpop.permute.xlu0 %9553
  %9555 = vrot.lane.b32.xlu0 %v5386, 3
  %v9556 = vpop.permute.xlu0 %9555
  %9557 = vrot.lane.b32.xlu0 %v5490, 3
  %v9558 = vpop.permute.xlu0 %9557
  %9559 = vrot.lane.b32.xlu0 %v5594, 3
  %v9560 = vpop.permute.xlu0 %9559
  %9561 = vrot.lane.b32.xlu0 %v5698, 3
  %v9562 = vpop.permute.xlu0 %9561
  %9563 = vrot.lane.b32.xlu0 %v5802, 3
  %v9564 = vpop.permute.xlu0 %9563
  %9565 = vrot.lane.b32.xlu0 %v5906, 3
  %v9566 = vpop.permute.xlu0 %9565
  %9567 = vrot.lane.b32.xlu0 %v6010, 3
  %v9568 = vpop.permute.xlu0 %9567
  %9569 = vrot.lane.b32.xlu0 %v6114, 3
  %v9570 = vpop.permute.xlu0 %9569
  %9571 = vrot.lane.b32.xlu0 %v6218, 3
  %v9572 = vpop.permute.xlu0 %9571
  %9573 = vrot.lane.b32.xlu0 %v6322, 3
  %v9574 = vpop.permute.xlu0 %9573
  %9575 = vrot.lane.b32.xlu0 %v6426, 3
  %v9576 = vpop.permute.xlu0 %9575
  %9577 = vrot.lane.b32.xlu0 %v6530, 3
  %v9578 = vpop.permute.xlu0 %9577
  %9579 = vrot.lane.b32.xlu0 %v6634, 3
  %v9580 = vpop.permute.xlu0 %9579
  %9581 = vrot.lane.b32.xlu0 %v6738, 3
  %v9582 = vpop.permute.xlu0 %9581
  %9583 = vrot.lane.b32.xlu0 %v6842, 3
  %v9584 = vpop.permute.xlu0 %9583
  %9585 = vrot.lane.b32.xlu0 %v6946, 3
  %v9586 = vpop.permute.xlu0 %9585
  %9587 = vrot.lane.b32.xlu0 %v7050, 3
  %v9588 = vpop.permute.xlu0 %9587
  %9589 = vrot.lane.b32.xlu0 %v7154, 3
  %v9590 = vpop.permute.xlu0 %9589
  %9591 = vrot.lane.b32.xlu0 %v7258, 3
  %v9592 = vpop.permute.xlu0 %9591
  %9593 = vrot.lane.b32.xlu0 %v7362, 3
  %v9594 = vpop.permute.xlu0 %9593
  %9595 = vrot.lane.b32.xlu0 %v7466, 3
  %v9596 = vpop.permute.xlu0 %9595
  %9597 = vrot.lane.b32.xlu0 %v7570, 3
  %v9598 = vpop.permute.xlu0 %9597
  %9599 = vrot.lane.b32.xlu0 %v7674, 3
  %v9600 = vpop.permute.xlu0 %9599
  %9601 = vrot.lane.b32.xlu0 %v7778, 3
  %v9602 = vpop.permute.xlu0 %9601
  %9603 = vrot.lane.b32.xlu0 %v7882, 3
  %v9604 = vpop.permute.xlu0 %9603
  %9605 = vrot.lane.b32.xlu0 %v7986, 3
  %v9606 = vpop.permute.xlu0 %9605
  %9607 = vrot.lane.b32.xlu0 %v8090, 3
  %v9608 = vpop.permute.xlu0 %9607
  %9609 = vrot.lane.b32.xlu0 %v8194, 3
  %v9610 = vpop.permute.xlu0 %9609
  %9611 = vrot.lane.b32.xlu0 %v8298, 3
  %v9612 = vpop.permute.xlu0 %9611
  %9613 = vrot.lane.b32.xlu0 %v8402, 3
  %v9614 = vpop.permute.xlu0 %9613
  %9615 = vrot.lane.b32.xlu0 %v8506, 3
  %v9616 = vpop.permute.xlu0 %9615
  %9617 = vrot.lane.b32.xlu0 %v8610, 3
  %v9618 = vpop.permute.xlu0 %9617
  %9619 = vrot.lane.b32.xlu0 %v8714, 3
  %v9620 = vpop.permute.xlu0 %9619
  %9621 = vrot.lane.b32.xlu0 %v8818, 3
  %v9622 = vpop.permute.xlu0 %9621
  %9623 = vrot.lane.b32.xlu0 %v8922, 3
  %v9624 = vpop.permute.xlu0 %9623
  %9625 = vrot.lane.b32.xlu0 %v9026, 3
  %v9626 = vpop.permute.xlu0 %9625
  %9627 = vrot.lane.b32.xlu0 %v9130, 3
  %v9628 = vpop.permute.xlu0 %9627
  %9629 = vrot.lane.b32.xlu0 %v9234, 3
  %v9630 = vpop.permute.xlu0 %9629
  %9631 = vrot.lane.b32.xlu0 %v9338, 3
  %v9632 = vpop.permute.xlu0 %9631
  %9633 = vrot.lane.b32.xlu0 %v9442, 3
  %v9634 = vpop.permute.xlu0 %9633
  %9699 = vrot.lane.b32.xlu0 %v14, 64
  %v9700 = vpop.permute.xlu0 %9699
  %9701 = vrot.lane.b32.xlu0 %v15, 64
  %v9702 = vpop.permute.xlu0 %9701
  %9703 = vrot.lane.b32.xlu0 %v16, 64
  %v9704 = vpop.permute.xlu0 %9703
  %9705 = vrot.lane.b32.xlu0 %v17, 64
  %v9706 = vpop.permute.xlu0 %9705
  %9707 = vrot.lane.b32.xlu0 %v18, 64
  %v9708 = vpop.permute.xlu0 %9707
  %9709 = vrot.lane.b32.xlu0 %v19, 64
  %v9710 = vpop.permute.xlu0 %9709
  %9711 = vrot.lane.b32.xlu0 %v20, 64
  %v9712 = vpop.permute.xlu0 %9711
  %9713 = vrot.lane.b32.xlu0 %v21, 64
  %v9714 = vpop.permute.xlu0 %9713
  %9715 = vrot.lane.b32.xlu0 %v22, 64
  %v9716 = vpop.permute.xlu0 %9715
  %9717 = vrot.lane.b32.xlu0 %v23, 64
  %v9718 = vpop.permute.xlu0 %9717
  %9719 = vrot.lane.b32.xlu0 %v24, 64
  %v9720 = vpop.permute.xlu0 %9719
  %9721 = vrot.lane.b32.xlu0 %v25, 64
  %v9722 = vpop.permute.xlu0 %9721
  %9723 = vrot.lane.b32.xlu0 %v26, 64
  %v9724 = vpop.permute.xlu0 %9723
  %9725 = vrot.lane.b32.xlu0 %v27, 64
  %v9726 = vpop.permute.xlu0 %9725
  %9727 = vrot.lane.b32.xlu0 %v28, 64
  %v9728 = vpop.permute.xlu0 %9727
  %9729 = vrot.lane.b32.xlu0 %v29, 64
  %v9730 = vpop.permute.xlu0 %9729
  %9731 = vrot.lane.b32.xlu0 %v30, 64
  %v9732 = vpop.permute.xlu0 %9731
  %9733 = vrot.lane.b32.xlu0 %v31, 64
  %v9734 = vpop.permute.xlu0 %9733
  %9735 = vrot.lane.b32.xlu0 %v32, 64
  %v9736 = vpop.permute.xlu0 %9735
  %9737 = vrot.lane.b32.xlu0 %v33, 64
  %v9738 = vpop.permute.xlu0 %9737
  %9739 = vrot.lane.b32.xlu0 %v34, 64
  %v9740 = vpop.permute.xlu0 %9739
  %9741 = vrot.lane.b32.xlu0 %v35, 64
  %v9742 = vpop.permute.xlu0 %9741
  %9743 = vrot.lane.b32.xlu0 %v36, 64
  %v9744 = vpop.permute.xlu0 %9743
  %9745 = vrot.lane.b32.xlu0 %v37, 64
  %v9746 = vpop.permute.xlu0 %9745
  %9747 = vrot.lane.b32.xlu0 %v38, 64
  %v9748 = vpop.permute.xlu0 %9747
  %9749 = vrot.lane.b32.xlu0 %v39, 64
  %v9750 = vpop.permute.xlu0 %9749
  %9751 = vrot.lane.b32.xlu0 %v40, 64
  %v9752 = vpop.permute.xlu0 %9751
  %9753 = vrot.lane.b32.xlu0 %v41, 64
  %v9754 = vpop.permute.xlu0 %9753
  %9755 = vrot.lane.b32.xlu0 %v42, 64
  %v9756 = vpop.permute.xlu0 %9755
  %9757 = vrot.lane.b32.xlu0 %v43, 64
  %v9758 = vpop.permute.xlu0 %9757
  %9759 = vrot.lane.b32.xlu0 %v44, 64
  %v9760 = vpop.permute.xlu0 %9759
  %9761 = vrot.lane.b32.xlu0 %v45, 64
  %v9762 = vpop.permute.xlu0 %9761
  %9763 = vrot.lane.b32.xlu0 %v46, 64
  %v9764 = vpop.permute.xlu0 %9763
  %9765 = vrot.lane.b32.xlu0 %v47, 64
  %v9766 = vpop.permute.xlu0 %9765
  %9767 = vrot.lane.b32.xlu0 %v48, 64
  %v9768 = vpop.permute.xlu0 %9767
  %9769 = vrot.lane.b32.xlu0 %v49, 64
  %v9770 = vpop.permute.xlu0 %9769
  %9771 = vrot.lane.b32.xlu0 %v50, 64
  %v9772 = vpop.permute.xlu0 %9771
  %9773 = vrot.lane.b32.xlu0 %v51, 64
  %v9774 = vpop.permute.xlu0 %9773
  %9775 = vrot.lane.b32.xlu0 %v52, 64
  %v9776 = vpop.permute.xlu0 %9775
  %9777 = vrot.lane.b32.xlu0 %v53, 64
  %v9778 = vpop.permute.xlu0 %9777
  %9779 = vrot.lane.b32.xlu0 %v54, 64
  %v9780 = vpop.permute.xlu0 %9779
  %9781 = vrot.lane.b32.xlu0 %v55, 64
  %v9782 = vpop.permute.xlu0 %9781
  %9783 = vrot.lane.b32.xlu0 %v56, 64
  %v9784 = vpop.permute.xlu0 %9783
  %9785 = vrot.lane.b32.xlu0 %v57, 64
  %v9786 = vpop.permute.xlu0 %9785
  %9787 = vrot.lane.b32.xlu0 %v58, 64
  %v9788 = vpop.permute.xlu0 %9787
  %9789 = vrot.lane.b32.xlu0 %v59, 64
  %v9790 = vpop.permute.xlu0 %9789
  %9791 = vrot.lane.b32.xlu0 %v60, 64
  %v9792 = vpop.permute.xlu0 %9791
  %9793 = vrot.lane.b32.xlu0 %v61, 64
  %v9794 = vpop.permute.xlu0 %9793
  %9795 = vrot.lane.b32.xlu0 %v62, 64
  %v9796 = vpop.permute.xlu0 %9795
  %9797 = vrot.lane.b32.xlu0 %v63, 64
  %v9798 = vpop.permute.xlu0 %9797
  %9799 = vrot.lane.b32.xlu0 %v64, 64
  %v9800 = vpop.permute.xlu0 %9799
  %9801 = vrot.lane.b32.xlu0 %v65, 64
  %v9802 = vpop.permute.xlu0 %9801
  %9803 = vrot.lane.b32.xlu0 %v66, 64
  %v9804 = vpop.permute.xlu0 %9803
  %9805 = vrot.lane.b32.xlu0 %v67, 64
  %v9806 = vpop.permute.xlu0 %9805
  %9807 = vrot.lane.b32.xlu0 %v68, 64
  %v9808 = vpop.permute.xlu0 %9807
  %9809 = vrot.lane.b32.xlu0 %v69, 64
  %v9810 = vpop.permute.xlu0 %9809
  %9811 = vrot.lane.b32.xlu0 %v70, 64
  %v9812 = vpop.permute.xlu0 %9811
  %9813 = vrot.lane.b32.xlu0 %v71, 64
  %v9814 = vpop.permute.xlu0 %9813
  %9815 = vrot.lane.b32.xlu0 %v72, 64
  %v9816 = vpop.permute.xlu0 %9815
  %9817 = vrot.lane.b32.xlu0 %v73, 64
  %v9818 = vpop.permute.xlu0 %9817
  %9819 = vrot.lane.b32.xlu0 %v74, 64
  %v9820 = vpop.permute.xlu0 %9819
  %9821 = vrot.lane.b32.xlu0 %v75, 64
  %v9822 = vpop.permute.xlu0 %9821
  %9823 = vrot.lane.b32.xlu0 %v76, 64
  %v9824 = vpop.permute.xlu0 %9823
  %9825 = vrot.lane.b32.xlu0 %v77, 64
  %v9826 = vpop.permute.xlu0 %9825
  %9891 = vrot.lane.b32.xlu0 %v2890, 6
  %v9892 = vpop.permute.xlu0 %9891
  %9893 = vrot.lane.b32.xlu0 %v2994, 6
  %v9894 = vpop.permute.xlu0 %9893
  %9895 = vrot.lane.b32.xlu0 %v3098, 6
  %v9896 = vpop.permute.xlu0 %9895
  %9897 = vrot.lane.b32.xlu0 %v3202, 6
  %v9898 = vpop.permute.xlu0 %9897
  %9899 = vrot.lane.b32.xlu0 %v3306, 6
  %v9900 = vpop.permute.xlu0 %9899
  %9901 = vrot.lane.b32.xlu0 %v3410, 6
  %v9902 = vpop.permute.xlu0 %9901
  %9903 = vrot.lane.b32.xlu0 %v3514, 6
  %v9904 = vpop.permute.xlu0 %9903
  %9905 = vrot.lane.b32.xlu0 %v3618, 6
  %v9906 = vpop.permute.xlu0 %9905
  %9907 = vrot.lane.b32.xlu0 %v3722, 6
  %v9908 = vpop.permute.xlu0 %9907
  %9909 = vrot.lane.b32.xlu0 %v3826, 6
  %v9910 = vpop.permute.xlu0 %9909
  %9911 = vrot.lane.b32.xlu0 %v3930, 6
  %v9912 = vpop.permute.xlu0 %9911
  %9913 = vrot.lane.b32.xlu0 %v4034, 6
  %v9914 = vpop.permute.xlu0 %9913
  %9915 = vrot.lane.b32.xlu0 %v4138, 6
  %v9916 = vpop.permute.xlu0 %9915
  %9917 = vrot.lane.b32.xlu0 %v4242, 6
  %v9918 = vpop.permute.xlu0 %9917
  %9919 = vrot.lane.b32.xlu0 %v4346, 6
  %v9920 = vpop.permute.xlu0 %9919
  %9921 = vrot.lane.b32.xlu0 %v4450, 6
  %v9922 = vpop.permute.xlu0 %9921
  %9923 = vrot.lane.b32.xlu0 %v4554, 6
  %v9924 = vpop.permute.xlu0 %9923
  %9925 = vrot.lane.b32.xlu0 %v4658, 6
  %v9926 = vpop.permute.xlu0 %9925
  %9927 = vrot.lane.b32.xlu0 %v4762, 6
  %v9928 = vpop.permute.xlu0 %9927
  %9929 = vrot.lane.b32.xlu0 %v4866, 6
  %v9930 = vpop.permute.xlu0 %9929
  %9931 = vrot.lane.b32.xlu0 %v4970, 6
  %v9932 = vpop.permute.xlu0 %9931
  %9933 = vrot.lane.b32.xlu0 %v5074, 6
  %v9934 = vpop.permute.xlu0 %9933
  %9935 = vrot.lane.b32.xlu0 %v5178, 6
  %v9936 = vpop.permute.xlu0 %9935
  %9937 = vrot.lane.b32.xlu0 %v5282, 6
  %v9938 = vpop.permute.xlu0 %9937
  %9939 = vrot.lane.b32.xlu0 %v5386, 6
  %v9940 = vpop.permute.xlu0 %9939
  %9941 = vrot.lane.b32.xlu0 %v5490, 6
  %v9942 = vpop.permute.xlu0 %9941
  %9943 = vrot.lane.b32.xlu0 %v5594, 6
  %v9944 = vpop.permute.xlu0 %9943
  %9945 = vrot.lane.b32.xlu0 %v5698, 6
  %v9946 = vpop.permute.xlu0 %9945
  %9947 = vrot.lane.b32.xlu0 %v5802, 6
  %v9948 = vpop.permute.xlu0 %9947
  %9949 = vrot.lane.b32.xlu0 %v5906, 6
  %v9950 = vpop.permute.xlu0 %9949
  %9951 = vrot.lane.b32.xlu0 %v6010, 6
  %v9952 = vpop.permute.xlu0 %9951
  %9953 = vrot.lane.b32.xlu0 %v6114, 6
  %v9954 = vpop.permute.xlu0 %9953
  %9955 = vrot.lane.b32.xlu0 %v6218, 6
  %v9956 = vpop.permute.xlu0 %9955
  %9957 = vrot.lane.b32.xlu0 %v6322, 6
  %v9958 = vpop.permute.xlu0 %9957
  %9959 = vrot.lane.b32.xlu0 %v6426, 6
  %v9960 = vpop.permute.xlu0 %9959
  %9961 = vrot.lane.b32.xlu0 %v6530, 6
  %v9962 = vpop.permute.xlu0 %9961
  %9963 = vrot.lane.b32.xlu0 %v6634, 6
  %v9964 = vpop.permute.xlu0 %9963
  %9965 = vrot.lane.b32.xlu0 %v6738, 6
  %v9966 = vpop.permute.xlu0 %9965
  %9967 = vrot.lane.b32.xlu0 %v6842, 6
  %v9968 = vpop.permute.xlu0 %9967
  %9969 = vrot.lane.b32.xlu0 %v6946, 6
  %v9970 = vpop.permute.xlu0 %9969
  %9971 = vrot.lane.b32.xlu0 %v7050, 6
  %v9972 = vpop.permute.xlu0 %9971
  %9973 = vrot.lane.b32.xlu0 %v7154, 6
  %v9974 = vpop.permute.xlu0 %9973
  %9975 = vrot.lane.b32.xlu0 %v7258, 6
  %v9976 = vpop.permute.xlu0 %9975
  %9977 = vrot.lane.b32.xlu0 %v7362, 6
  %v9978 = vpop.permute.xlu0 %9977
  %9979 = vrot.lane.b32.xlu0 %v7466, 6
  %v9980 = vpop.permute.xlu0 %9979
  %9981 = vrot.lane.b32.xlu0 %v7570, 6
  %v9982 = vpop.permute.xlu0 %9981
  %9983 = vrot.lane.b32.xlu0 %v7674, 6
  %v9984 = vpop.permute.xlu0 %9983
  %9985 = vrot.lane.b32.xlu0 %v7778, 6
  %v9986 = vpop.permute.xlu0 %9985
  %9987 = vrot.lane.b32.xlu0 %v7882, 6
  %v9988 = vpop.permute.xlu0 %9987
  %9989 = vrot.lane.b32.xlu0 %v7986, 6
  %v9990 = vpop.permute.xlu0 %9989
  %9991 = vrot.lane.b32.xlu0 %v8090, 6
  %v9992 = vpop.permute.xlu0 %9991
  %9993 = vrot.lane.b32.xlu0 %v8194, 6
  %v9994 = vpop.permute.xlu0 %9993
  %9995 = vrot.lane.b32.xlu0 %v8298, 6
  %v9996 = vpop.permute.xlu0 %9995
  %9997 = vrot.lane.b32.xlu0 %v8402, 6
  %v9998 = vpop.permute.xlu0 %9997
  %9999 = vrot.lane.b32.xlu0 %v8506, 6
  %v10000 = vpop.permute.xlu0 %9999
  %10001 = vrot.lane.b32.xlu0 %v8610, 6
  %v10002 = vpop.permute.xlu0 %10001
  %10003 = vrot.lane.b32.xlu0 %v8714, 6
  %v10004 = vpop.permute.xlu0 %10003
  %10005 = vrot.lane.b32.xlu0 %v8818, 6
  %v10006 = vpop.permute.xlu0 %10005
  %10007 = vrot.lane.b32.xlu0 %v8922, 6
  %v10008 = vpop.permute.xlu0 %10007
  %10009 = vrot.lane.b32.xlu0 %v9026, 6
  %v10010 = vpop.permute.xlu0 %10009
  %10011 = vrot.lane.b32.xlu0 %v9130, 6
  %v10012 = vpop.permute.xlu0 %10011
  %10013 = vrot.lane.b32.xlu0 %v9234, 6
  %v10014 = vpop.permute.xlu0 %10013
  %10015 = vrot.lane.b32.xlu0 %v9338, 6
  %v10016 = vpop.permute.xlu0 %10015
  %10017 = vrot.lane.b32.xlu0 %v9442, 6
  %v10018 = vpop.permute.xlu0 %10017
  %vm10083 = vcmask 23552
  %v10084 = vsel %vm10083, %v14, %v9508
  %v10085 = vsel %vm10083, %v15, %v9510
  %v10086 = vsel %vm10083, %v16, %v9512
  %v10087 = vsel %vm10083, %v17, %v9514
  %v10088 = vsel %vm10083, %v18, %v9516
  %v10089 = vsel %vm10083, %v19, %v9518
  %v10090 = vsel %vm10083, %v20, %v9520
  %v10091 = vsel %vm10083, %v21, %v9522
  %v10092 = vsel %vm10083, %v22, %v9524
  %v10093 = vsel %vm10083, %v23, %v9526
  %v10094 = vsel %vm10083, %v24, %v9528
  %v10095 = vsel %vm10083, %v25, %v9530
  %v10096 = vsel %vm10083, %v26, %v9532
  %v10097 = vsel %vm10083, %v27, %v9534
  %v10098 = vsel %vm10083, %v28, %v9536
  %v10099 = vsel %vm10083, %v29, %v9538
  %v10100 = vsel %vm10083, %v30, %v9540
  %v10101 = vsel %vm10083, %v31, %v9542
  %v10102 = vsel %vm10083, %v32, %v9544
  %v10103 = vsel %vm10083, %v33, %v9546
  %v10104 = vsel %vm10083, %v34, %v9548
  %v10105 = vsel %vm10083, %v35, %v9550
  %v10106 = vsel %vm10083, %v36, %v9552
  %v10107 = vsel %vm10083, %v37, %v9554
  %v10108 = vsel %vm10083, %v38, %v9556
  %v10109 = vsel %vm10083, %v39, %v9558
  %v10110 = vsel %vm10083, %v40, %v9560
  %v10111 = vsel %vm10083, %v41, %v9562
  %v10112 = vsel %vm10083, %v42, %v9564
  %v10113 = vsel %vm10083, %v43, %v9566
  %v10114 = vsel %vm10083, %v44, %v9568
  %v10115 = vsel %vm10083, %v45, %v9570
  %v10116 = vsel %vm10083, %v46, %v9572
  %v10117 = vsel %vm10083, %v47, %v9574
  %v10118 = vsel %vm10083, %v48, %v9576
  %v10119 = vsel %vm10083, %v49, %v9578
  %v10120 = vsel %vm10083, %v50, %v9580
  %v10121 = vsel %vm10083, %v51, %v9582
  %v10122 = vsel %vm10083, %v52, %v9584
  %v10123 = vsel %vm10083, %v53, %v9586
  %v10124 = vsel %vm10083, %v54, %v9588
  %v10125 = vsel %vm10083, %v55, %v9590
  %v10126 = vsel %vm10083, %v56, %v9592
  %v10127 = vsel %vm10083, %v57, %v9594
  %v10128 = vsel %vm10083, %v58, %v9596
  %v10129 = vsel %vm10083, %v59, %v9598
  %v10130 = vsel %vm10083, %v60, %v9600
  %v10131 = vsel %vm10083, %v61, %v9602
  %v10132 = vsel %vm10083, %v62, %v9604
  %v10133 = vsel %vm10083, %v63, %v9606
  %v10134 = vsel %vm10083, %v64, %v9608
  %v10135 = vsel %vm10083, %v65, %v9610
  %v10136 = vsel %vm10083, %v66, %v9612
  %v10137 = vsel %vm10083, %v67, %v9614
  %v10138 = vsel %vm10083, %v68, %v9616
  %v10139 = vsel %vm10083, %v69, %v9618
  %v10140 = vsel %vm10083, %v70, %v9620
  %v10141 = vsel %vm10083, %v71, %v9622
  %v10142 = vsel %vm10083, %v72, %v9624
  %v10143 = vsel %vm10083, %v73, %v9626
  %v10144 = vsel %vm10083, %v74, %v9628
  %v10145 = vsel %vm10083, %v75, %v9630
  %v10146 = vsel %vm10083, %v76, %v9632
  %v10147 = vsel %vm10083, %v77, %v9634
  %vm10148 = vcmask 547840
  %v10149 = vsel %vm10148, %v10084, %v9700
  %v10150 = vsel %vm10148, %v10085, %v9702
  %v10151 = vsel %vm10148, %v10086, %v9704
  %v10152 = vsel %vm10148, %v10087, %v9706
  %v10153 = vsel %vm10148, %v10088, %v9708
  %v10154 = vsel %vm10148, %v10089, %v9710
  %v10155 = vsel %vm10148, %v10090, %v9712
  %v10156 = vsel %vm10148, %v10091, %v9714
  %v10157 = vsel %vm10148, %v10092, %v9716
  %v10158 = vsel %vm10148, %v10093, %v9718
  %v10159 = vsel %vm10148, %v10094, %v9720
  %v10160 = vsel %vm10148, %v10095, %v9722
  %v10161 = vsel %vm10148, %v10096, %v9724
  %v10162 = vsel %vm10148, %v10097, %v9726
  %v10163 = vsel %vm10148, %v10098, %v9728
  %v10164 = vsel %vm10148, %v10099, %v9730
  %v10165 = vsel %vm10148, %v10100, %v9732
  %v10166 = vsel %vm10148, %v10101, %v9734
  %v10167 = vsel %vm10148, %v10102, %v9736
  %v10168 = vsel %vm10148, %v10103, %v9738
  %v10169 = vsel %vm10148, %v10104, %v9740
  %v10170 = vsel %vm10148, %v10105, %v9742
  %v10171 = vsel %vm10148, %v10106, %v9744
  %v10172 = vsel %vm10148, %v10107, %v9746
  %v10173 = vsel %vm10148, %v10108, %v9748
  %v10174 = vsel %vm10148, %v10109, %v9750
  %v10175 = vsel %vm10148, %v10110, %v9752
  %v10176 = vsel %vm10148, %v10111, %v9754
  %v10177 = vsel %vm10148, %v10112, %v9756
  %v10178 = vsel %vm10148, %v10113, %v9758
  %v10179 = vsel %vm10148, %v10114, %v9760
  %v10180 = vsel %vm10148, %v10115, %v9762
  %v10181 = vsel %vm10148, %v10116, %v9764
  %v10182 = vsel %vm10148, %v10117, %v9766
  %v10183 = vsel %vm10148, %v10118, %v9768
  %v10184 = vsel %vm10148, %v10119, %v9770
  %v10185 = vsel %vm10148, %v10120, %v9772
  %v10186 = vsel %vm10148, %v10121, %v9774
  %v10187 = vsel %vm10148, %v10122, %v9776
  %v10188 = vsel %vm10148, %v10123, %v9778
  %v10189 = vsel %vm10148, %v10124, %v9780
  %v10190 = vsel %vm10148, %v10125, %v9782
  %v10191 = vsel %vm10148, %v10126, %v9784
  %v10192 = vsel %vm10148, %v10127, %v9786
  %v10193 = vsel %vm10148, %v10128, %v9788
  %v10194 = vsel %vm10148, %v10129, %v9790
  %v10195 = vsel %vm10148, %v10130, %v9792
  %v10196 = vsel %vm10148, %v10131, %v9794
  %v10197 = vsel %vm10148, %v10132, %v9796
  %v10198 = vsel %vm10148, %v10133, %v9798
  %v10199 = vsel %vm10148, %v10134, %v9800
  %v10200 = vsel %vm10148, %v10135, %v9802
  %v10201 = vsel %vm10148, %v10136, %v9804
  %v10202 = vsel %vm10148, %v10137, %v9806
  %v10203 = vsel %vm10148, %v10138, %v9808
  %v10204 = vsel %vm10148, %v10139, %v9810
  %v10205 = vsel %vm10148, %v10140, %v9812
  %v10206 = vsel %vm10148, %v10141, %v9814
  %v10207 = vsel %vm10148, %v10142, %v9816
  %v10208 = vsel %vm10148, %v10143, %v9818
  %v10209 = vsel %vm10148, %v10144, %v9820
  %v10210 = vsel %vm10148, %v10145, %v9822
  %v10211 = vsel %vm10148, %v10146, %v9824
  %v10212 = vsel %vm10148, %v10147, %v9826
  %vm10213 = vcmask 572416
  %v10214 = vsel %vm10213, %v10149, %v9892
  %v10215 = vsel %vm10213, %v10150, %v9894
  %v10216 = vsel %vm10213, %v10151, %v9896
  %v10217 = vsel %vm10213, %v10152, %v9898
  %v10218 = vsel %vm10213, %v10153, %v9900
  %v10219 = vsel %vm10213, %v10154, %v9902
  %v10220 = vsel %vm10213, %v10155, %v9904
  %v10221 = vsel %vm10213, %v10156, %v9906
  %v10222 = vsel %vm10213, %v10157, %v9908
  %v10223 = vsel %vm10213, %v10158, %v9910
  %v10224 = vsel %vm10213, %v10159, %v9912
  %v10225 = vsel %vm10213, %v10160, %v9914
  %v10226 = vsel %vm10213, %v10161, %v9916
  %v10227 = vsel %vm10213, %v10162, %v9918
  %v10228 = vsel %vm10213, %v10163, %v9920
  %v10229 = vsel %vm10213, %v10164, %v9922
  %v10230 = vsel %vm10213, %v10165, %v9924
  %v10231 = vsel %vm10213, %v10166, %v9926
  %v10232 = vsel %vm10213, %v10167, %v9928
  %v10233 = vsel %vm10213, %v10168, %v9930
  %v10234 = vsel %vm10213, %v10169, %v9932
  %v10235 = vsel %vm10213, %v10170, %v9934
  %v10236 = vsel %vm10213, %v10171, %v9936
  %v10237 = vsel %vm10213, %v10172, %v9938
  %v10238 = vsel %vm10213, %v10173, %v9940
  %v10239 = vsel %vm10213, %v10174, %v9942
  %v10240 = vsel %vm10213, %v10175, %v9944
  %v10241 = vsel %vm10213, %v10176, %v9946
  %v10242 = vsel %vm10213, %v10177, %v9948
  %v10243 = vsel %vm10213, %v10178, %v9950
  %v10244 = vsel %vm10213, %v10179, %v9952
  %v10245 = vsel %vm10213, %v10180, %v9954
  %v10246 = vsel %vm10213, %v10181, %v9956
  %v10247 = vsel %vm10213, %v10182, %v9958
  %v10248 = vsel %vm10213, %v10183, %v9960
  %v10249 = vsel %vm10213, %v10184, %v9962
  %v10250 = vsel %vm10213, %v10185, %v9964
  %v10251 = vsel %vm10213, %v10186, %v9966
  %v10252 = vsel %vm10213, %v10187, %v9968
  %v10253 = vsel %vm10213, %v10188, %v9970
  %v10254 = vsel %vm10213, %v10189, %v9972
  %v10255 = vsel %vm10213, %v10190, %v9974
  %v10256 = vsel %vm10213, %v10191, %v9976
  %v10257 = vsel %vm10213, %v10192, %v9978
  %v10258 = vsel %vm10213, %v10193, %v9980
  %v10259 = vsel %vm10213, %v10194, %v9982
  %v10260 = vsel %vm10213, %v10195, %v9984
  %v10261 = vsel %vm10213, %v10196, %v9986
  %v10262 = vsel %vm10213, %v10197, %v9988
  %v10263 = vsel %vm10213, %v10198, %v9990
  %v10264 = vsel %vm10213, %v10199, %v9992
  %v10265 = vsel %vm10213, %v10200, %v9994
  %v10266 = vsel %vm10213, %v10201, %v9996
  %v10267 = vsel %vm10213, %v10202, %v9998
  %v10268 = vsel %vm10213, %v10203, %v10000
  %v10269 = vsel %vm10213, %v10204, %v10002
  %v10270 = vsel %vm10213, %v10205, %v10004
  %v10271 = vsel %vm10213, %v10206, %v10006
  %v10272 = vsel %vm10213, %v10207, %v10008
  %v10273 = vsel %vm10213, %v10208, %v10010
  %v10274 = vsel %vm10213, %v10209, %v10012
  %v10275 = vsel %vm10213, %v10210, %v10014
  %v10276 = vsel %vm10213, %v10211, %v10016
  %v10277 = vsel %vm10213, %v10212, %v10018
  %10278 = vst [vmem:[%s3] sm:$0xff] %v10214
  %vm10279 = vcmask 48128
  %10280 = vst.msk [vmem:[%s3 + $0x8] sm:$0xff] %vm10279, %v9892
  %10281 = vst [vmem:[%s3 + $0x10] sm:$0xff] %v10215
  %10282 = vst.msk [vmem:[%s3 + $0x18] sm:$0xff] %vm10279, %v9894
  %10283 = vst [vmem:[%s3 + $0x20] sm:$0xff] %v10216
  %10284 = vst.msk [vmem:[%s3 + $0x28] sm:$0xff] %vm10279, %v9896
  %10285 = vst [vmem:[%s3 + $0x30] sm:$0xff] %v10217
  %10286 = vst.msk [vmem:[%s3 + $0x38] sm:$0xff] %vm10279, %v9898
  %10287 = vst [vmem:[%s3 + $0x40] sm:$0xff] %v10218
  %10288 = vst.msk [vmem:[%s3 + $0x48] sm:$0xff] %vm10279, %v9900
  %10289 = vst [vmem:[%s3 + $0x50] sm:$0xff] %v10219
  %10290 = vst.msk [vmem:[%s3 + $0x58] sm:$0xff] %vm10279, %v9902
  %10291 = vst [vmem:[%s3 + $0x60] sm:$0xff] %v10220
  %10292 = vst.msk [vmem:[%s3 + $0x68] sm:$0xff] %vm10279, %v9904
  %10293 = vst [vmem:[%s3 + $0x70] sm:$0xff] %v10221
  %10294 = vst.msk [vmem:[%s3 + $0x78] sm:$0xff] %vm10279, %v9906
  %10295 = vst [vmem:[%s3 + $0x80] sm:$0xff] %v10222
  %10296 = vst.msk [vmem:[%s3 + $0x88] sm:$0xff] %vm10279, %v9908
  %10297 = vst [vmem:[%s3 + $0x90] sm:$0xff] %v10223
  %10298 = vst.msk [vmem:[%s3 + $0x98] sm:$0xff] %vm10279, %v9910
  %10299 = vst [vmem:[%s3 + $0xa0] sm:$0xff] %v10224
  %10300 = vst.msk [vmem:[%s3 + $0xa8] sm:$0xff] %vm10279, %v9912
  %10301 = vst [vmem:[%s3 + $0xb0] sm:$0xff] %v10225
  %10302 = vst.msk [vmem:[%s3 + $0xb8] sm:$0xff] %vm10279, %v9914
  %10303 = vst [vmem:[%s3 + $0xc0] sm:$0xff] %v10226
  %10304 = vst.msk [vmem:[%s3 + $0xc8] sm:$0xff] %vm10279, %v9916
  %10305 = vst [vmem:[%s3 + $0xd0] sm:$0xff] %v10227
  %10306 = vst.msk [vmem:[%s3 + $0xd8] sm:$0xff] %vm10279, %v9918
  %10307 = vst [vmem:[%s3 + $0xe0] sm:$0xff] %v10228
  %10308 = vst.msk [vmem:[%s3 + $0xe8] sm:$0xff] %vm10279, %v9920
  %10309 = vst [vmem:[%s3 + $0xf0] sm:$0xff] %v10229
  %10310 = vst.msk [vmem:[%s3 + $0xf8] sm:$0xff] %vm10279, %v9922
  %10311 = vst [vmem:[%s3 + $0x100] sm:$0xff] %v10230
  %10312 = vst.msk [vmem:[%s3 + $0x108] sm:$0xff] %vm10279, %v9924
  %10313 = vst [vmem:[%s3 + $0x110] sm:$0xff] %v10231
  %10314 = vst.msk [vmem:[%s3 + $0x118] sm:$0xff] %vm10279, %v9926
  %10315 = vst [vmem:[%s3 + $0x120] sm:$0xff] %v10232
  %10316 = vst.msk [vmem:[%s3 + $0x128] sm:$0xff] %vm10279, %v9928
  %10317 = vst [vmem:[%s3 + $0x130] sm:$0xff] %v10233
  %10318 = vst.msk [vmem:[%s3 + $0x138] sm:$0xff] %vm10279, %v9930
  %10319 = vst [vmem:[%s3 + $0x140] sm:$0xff] %v10234
  %10320 = vst.msk [vmem:[%s3 + $0x148] sm:$0xff] %vm10279, %v9932
  %10321 = vst [vmem:[%s3 + $0x150] sm:$0xff] %v10235
  %10322 = vst.msk [vmem:[%s3 + $0x158] sm:$0xff] %vm10279, %v9934
  %10323 = vst [vmem:[%s3 + $0x160] sm:$0xff] %v10236
  %10324 = vst.msk [vmem:[%s3 + $0x168] sm:$0xff] %vm10279, %v9936
  %10325 = vst [vmem:[%s3 + $0x170] sm:$0xff] %v10237
  %10326 = vst.msk [vmem:[%s3 + $0x178] sm:$0xff] %vm10279, %v9938
  %10327 = vst [vmem:[%s3 + $0x180] sm:$0xff] %v10238
  %10328 = vst.msk [vmem:[%s3 + $0x188] sm:$0xff] %vm10279, %v9940
  %10329 = vst [vmem:[%s3 + $0x190] sm:$0xff] %v10239
  %10330 = vst.msk [vmem:[%s3 + $0x198] sm:$0xff] %vm10279, %v9942
  %10331 = vst [vmem:[%s3 + $0x1a0] sm:$0xff] %v10240
  %10332 = vst.msk [vmem:[%s3 + $0x1a8] sm:$0xff] %vm10279, %v9944
  %10333 = vst [vmem:[%s3 + $0x1b0] sm:$0xff] %v10241
  %10334 = vst.msk [vmem:[%s3 + $0x1b8] sm:$0xff] %vm10279, %v9946
  %10335 = vst [vmem:[%s3 + $0x1c0] sm:$0xff] %v10242
  %10336 = vst.msk [vmem:[%s3 + $0x1c8] sm:$0xff] %vm10279, %v9948
  %10337 = vst [vmem:[%s3 + $0x1d0] sm:$0xff] %v10243
  %10338 = vst.msk [vmem:[%s3 + $0x1d8] sm:$0xff] %vm10279, %v9950
  %10339 = vst [vmem:[%s3 + $0x1e0] sm:$0xff] %v10244
  %10340 = vst.msk [vmem:[%s3 + $0x1e8] sm:$0xff] %vm10279, %v9952
  %10341 = vst [vmem:[%s3 + $0x1f0] sm:$0xff] %v10245
  %10342 = vst.msk [vmem:[%s3 + $0x1f8] sm:$0xff] %vm10279, %v9954
  %10343 = vst [vmem:[%s3 + $0x200] sm:$0xff] %v10246
  %10344 = vst.msk [vmem:[%s3 + $0x208] sm:$0xff] %vm10279, %v9956
  %10345 = vst [vmem:[%s3 + $0x210] sm:$0xff] %v10247
  %10346 = vst.msk [vmem:[%s3 + $0x218] sm:$0xff] %vm10279, %v9958
  %10347 = vst [vmem:[%s3 + $0x220] sm:$0xff] %v10248
  %10348 = vst.msk [vmem:[%s3 + $0x228] sm:$0xff] %vm10279, %v9960
  %10349 = vst [vmem:[%s3 + $0x230] sm:$0xff] %v10249
  %10350 = vst.msk [vmem:[%s3 + $0x238] sm:$0xff] %vm10279, %v9962
  %10351 = vst [vmem:[%s3 + $0x240] sm:$0xff] %v10250
  %10352 = vst.msk [vmem:[%s3 + $0x248] sm:$0xff] %vm10279, %v9964
  %10353 = vst [vmem:[%s3 + $0x250] sm:$0xff] %v10251
  %10354 = vst.msk [vmem:[%s3 + $0x258] sm:$0xff] %vm10279, %v9966
  %10355 = vst [vmem:[%s3 + $0x260] sm:$0xff] %v10252
  %10356 = vst.msk [vmem:[%s3 + $0x268] sm:$0xff] %vm10279, %v9968
  %10357 = vst [vmem:[%s3 + $0x270] sm:$0xff] %v10253
  %10358 = vst.msk [vmem:[%s3 + $0x278] sm:$0xff] %vm10279, %v9970
  %10359 = vst [vmem:[%s3 + $0x280] sm:$0xff] %v10254
  %10360 = vst.msk [vmem:[%s3 + $0x288] sm:$0xff] %vm10279, %v9972
  %10361 = vst [vmem:[%s3 + $0x290] sm:$0xff] %v10255
  %10362 = vst.msk [vmem:[%s3 + $0x298] sm:$0xff] %vm10279, %v9974
  %10363 = vst [vmem:[%s3 + $0x2a0] sm:$0xff] %v10256
  %10364 = vst.msk [vmem:[%s3 + $0x2a8] sm:$0xff] %vm10279, %v9976
  %10365 = vst [vmem:[%s3 + $0x2b0] sm:$0xff] %v10257
  %10366 = vst.msk [vmem:[%s3 + $0x2b8] sm:$0xff] %vm10279, %v9978
  %10367 = vst [vmem:[%s3 + $0x2c0] sm:$0xff] %v10258
  %10368 = vst.msk [vmem:[%s3 + $0x2c8] sm:$0xff] %vm10279, %v9980
  %10369 = vst [vmem:[%s3 + $0x2d0] sm:$0xff] %v10259
  %10370 = vst.msk [vmem:[%s3 + $0x2d8] sm:$0xff] %vm10279, %v9982
  %10371 = vst [vmem:[%s3 + $0x2e0] sm:$0xff] %v10260
  %10372 = vst.msk [vmem:[%s3 + $0x2e8] sm:$0xff] %vm10279, %v9984
  %10373 = vst [vmem:[%s3 + $0x2f0] sm:$0xff] %v10261
  %10374 = vst.msk [vmem:[%s3 + $0x2f8] sm:$0xff] %vm10279, %v9986
  %10375 = vst [vmem:[%s3 + $0x300] sm:$0xff] %v10262
  %10376 = vst.msk [vmem:[%s3 + $0x308] sm:$0xff] %vm10279, %v9988
  %10377 = vst [vmem:[%s3 + $0x310] sm:$0xff] %v10263
  %10378 = vst.msk [vmem:[%s3 + $0x318] sm:$0xff] %vm10279, %v9990
  %10379 = vst [vmem:[%s3 + $0x320] sm:$0xff] %v10264
  %10380 = vst.msk [vmem:[%s3 + $0x328] sm:$0xff] %vm10279, %v9992
  %10381 = vst [vmem:[%s3 + $0x330] sm:$0xff] %v10265
  %10382 = vst.msk [vmem:[%s3 + $0x338] sm:$0xff] %vm10279, %v9994
  %10383 = vst [vmem:[%s3 + $0x340] sm:$0xff] %v10266
  %10384 = vst.msk [vmem:[%s3 + $0x348] sm:$0xff] %vm10279, %v9996
  %10385 = vst [vmem:[%s3 + $0x350] sm:$0xff] %v10267
  %10386 = vst.msk [vmem:[%s3 + $0x358] sm:$0xff] %vm10279, %v9998
  %10387 = vst [vmem:[%s3 + $0x360] sm:$0xff] %v10268
  %10388 = vst.msk [vmem:[%s3 + $0x368] sm:$0xff] %vm10279, %v10000
  %10389 = vst [vmem:[%s3 + $0x370] sm:$0xff] %v10269
  %10390 = vst.msk [vmem:[%s3 + $0x378] sm:$0xff] %vm10279, %v10002
  %10391 = vst [vmem:[%s3 + $0x380] sm:$0xff] %v10270
  %10392 = vst.msk [vmem:[%s3 + $0x388] sm:$0xff] %vm10279, %v10004
  %10393 = vst [vmem:[%s3 + $0x390] sm:$0xff] %v10271
  %10394 = vst.msk [vmem:[%s3 + $0x398] sm:$0xff] %vm10279, %v10006
  %10395 = vst [vmem:[%s3 + $0x3a0] sm:$0xff] %v10272
  %10396 = vst.msk [vmem:[%s3 + $0x3a8] sm:$0xff] %vm10279, %v10008
  %10397 = vst [vmem:[%s3 + $0x3b0] sm:$0xff] %v10273
  %10398 = vst.msk [vmem:[%s3 + $0x3b8] sm:$0xff] %vm10279, %v10010
  %10399 = vst [vmem:[%s3 + $0x3c0] sm:$0xff] %v10274
  %10400 = vst.msk [vmem:[%s3 + $0x3c8] sm:$0xff] %vm10279, %v10012
  %10401 = vst [vmem:[%s3 + $0x3d0] sm:$0xff] %v10275
  %10402 = vst.msk [vmem:[%s3 + $0x3d8] sm:$0xff] %vm10279, %v10014
  %10403 = vst [vmem:[%s3 + $0x3e0] sm:$0xff] %v10276
  %10404 = vst.msk [vmem:[%s3 + $0x3e8] sm:$0xff] %vm10279, %v10016
  %10405 = vst [vmem:[%s3 + $0x3f0] sm:$0xff] %v10277
  %10406 = vst.msk [vmem:[%s3 + $0x3f8] sm:$0xff] %vm10279, %v10018
  // Predicated region
  $region14: #{gaussian_fourier_features.1} parent=0 // pred_check
    _
  $region15: #{gaussian_fourier_features.1} parent=0 // pred_check_branch
    %10408 = sbr.rel (0) target = $region17
  $region16: #{gaussian_fourier_features.1} parent=0 // pred_region
    _
  $region17: #{gaussian_fourier_features.1} parent=0 // pred_fallthru
    _
  // Predicated region
  $region18: #{gaussian_fourier_features.1} parent=0 // pred_check
    _
  $region19: #{gaussian_fourier_features.1} parent=0 // pred_check_branch
    %10410 = sbr.rel (0) target = $region21
  $region20: #{gaussian_fourier_features.1} parent=0 // pred_region
    _
  $region21: #{gaussian_fourier_features.1} parent=0 // pred_fallthru
    _

</llo_original>
